<compile_context>
chip_gen: v7x
topology: tpu7x:2x2x1
jax: 0.10.0
libtpu: 0.0.40
codegen_flags: <defaults>
</compile_context>

<pallas_src>
import jax
import jax.numpy as jnp
from jax.experimental import pallas as pl
from jax.experimental.pallas import tpu as pltpu

BN_EPS = 1e-5


def _sigmoid(x):
    # EUP-friendly sigmoid: exp + approximate reciprocal both live on the EUP slot.
    return pl.reciprocal(1.0 + jnp.exp(-x), approx=True)


# ----------------------------- Pallas kernels -----------------------------

def gated_block_kernel(p_ref, w_ref, b_ref, o_ref):
    # p_ref: (tm, K) bf16   w_ref: (K, 2N) bf16   b_ref: (1, 2N) f32   o_ref: (tm, N) f32
    # One fused MXU dot for conv + gate; split columns, gate in f32.
    y = jnp.dot(p_ref[...], w_ref[...], preferred_element_type=jnp.float32)
    y = y + b_ref[...]
    n = y.shape[1] // 2
    conv = y[:, :n]
    gate = _sigmoid(y[:, n:])
    o_ref[...] = conv * gate


def d_final_kernel(p_ref, w_ref, o_ref):
    # Discriminator l5: Cout == 1 -> VPU multiply + lane reduce (no 1-column matmul).
    # p_ref: (B*R, K) bf16   w_ref: (1, K) f32   o_ref: (B*R, 1) f32
    p = p_ref[...].astype(jnp.float32)
    y = jnp.sum(p * w_ref[...], axis=-1, keepdims=True)
    o_ref[...] = _sigmoid(y)


def c_final_kernel(p_ref, w_ref, o_ref):
    # Classifier head: conv (no bias) -> log_softmax over channels -> mean over time.
    # p_ref: (1, R, K) bf16   w_ref: (K, C) bf16   o_ref: (1, 1, C) f32
    logits = jnp.dot(p_ref[0], w_ref[...], preferred_element_type=jnp.float32)  # (R, C)
    m = jnp.max(logits, axis=1, keepdims=True)
    lse = m + jnp.log(jnp.sum(jnp.exp(logits - m), axis=1, keepdims=True))
    logp = logits - lse
    o_ref[0] = jnp.mean(logp, axis=0, keepdims=True)                            # (1, C)


# ------------------------------- JAX glue ----------------------------------

def im2col(x, kh, kw, sh, sw, ph, pw):
    """NHWC -> bf16 patches (B*OH*OW, kh*kw*C); (kh, kw, C) ordering, C fastest."""
    b, h, w, c = x.shape
    xp = jnp.pad(x, ((0, 0), (ph, ph), (pw, pw), (0, 0)))
    oh = (h + 2 * ph - kh) // sh + 1
    ow = (w + 2 * pw - kw) // sw + 1
    cols = []
    for di in range(kh):
        for dj in range(kw):
            cols.append(xp[:, di:di + sh * (oh - 1) + 1:sh,
                           dj:dj + sw * (ow - 1) + 1:sw, :])
    p = jnp.stack(cols, axis=3)                       # (B, OH, OW, kh*kw, C)
    p = p.reshape(b * oh * ow, kh * kw * c).astype(jnp.bfloat16)
    return p, oh, ow


def _row_grid(rows):
    # Prefer 2 row tiles (keeps both v7x TensorCores busy); fall back to one full tile.
    # 16-row multiple keeps the bf16 (16,128) / f32 (8,128) tiling constraints happy.
    if rows % 2 == 0 and (rows // 2) % 16 == 0:
        return 2, rows // 2
    return 1, rows


def gated_block_apply(x, params, ksize, stride, padding):
    kh, kw = ksize
    sh, sw = stride
    ph, pw = padding
    b = x.shape[0]
    p, oh, ow = im2col(x, kh, kw, sh, sw, ph, pw)     # (B*OH*OW, K) bf16
    rows, k = p.shape
    n2 = params["w"].shape[-1]
    n = n2 // 2
    gsteps, tm = _row_grid(rows)
    out = pl.pallas_call(
        gated_block_kernel,
        out_shape=jax.ShapeDtypeStruct((rows, n), jnp.float32),
        grid=(gsteps,),
        in_specs=[
            pl.BlockSpec((tm, k), lambda i: (i, 0)),
            pl.BlockSpec((k, n2), lambda i: (0, 0)),
            pl.BlockSpec((1, n2), lambda i: (0, 0)),
        ],
        out_specs=pl.BlockSpec((tm, n), lambda i: (i, 0)),
        compiler_params=pltpu.CompilerParams(dimension_semantics=("parallel",)),
    )(p, params["w"], params["b"])
    return out.reshape(b, oh, ow, n)


def d_final_apply(x, w):
    # Conv2d(32+c_dim -> 1, (5,40), stride (1,40), pad (2,0)) -> sigmoid -> mean(H).
    b = x.shape[0]
    p, oh, ow = im2col(x, 5, 40, 1, 40, 2, 0)
    assert ow == 1, "width must reduce to 1 (matches PyTorch squeeze(2))"
    rows, k = p.shape                                  # rows == B * OH
    s = pl.pallas_call(
        d_final_kernel,
        out_shape=jax.ShapeDtypeStruct((rows, 1), jnp.float32),
        grid=(1,),
        in_specs=[pl.BlockSpec((rows, k), lambda i: (0, 0)),
                  pl.BlockSpec((1, k), lambda i: (0, 0))],
        out_specs=pl.BlockSpec((rows, 1), lambda i: (0, 0)),
    )(p, w)
    # mean over the OH time frames of each batch element -> (B, 1)  (4 scalars; XLA glue)
    return jnp.mean(s.reshape(b, rows // b), axis=1, keepdims=True)


def c_final_apply(x, w):
    # Conv2d(8 -> c_dim, (3,5), stride (2,5), pad (1,1)) -> log_softmax(ch) -> mean(H).
    b = x.shape[0]
    p, oh, ow = im2col(x, 3, 5, 2, 5, 1, 1)
    assert ow == 1, "width must reduce to 1 (matches PyTorch squeeze(2))"
    r = oh * ow
    k = p.shape[-1]
    p = p.reshape(b, r, k)
    c_dim = w.shape[-1]
    out = pl.pallas_call(
        c_final_kernel,
        out_shape=jax.ShapeDtypeStruct((b, 1, c_dim), jnp.float32),
        grid=(b,),
        in_specs=[pl.BlockSpec((1, r, k), lambda i: (i, 0, 0)),
                  pl.BlockSpec((k, c_dim), lambda i: (0, 0))],
        out_specs=pl.BlockSpec((1, 1, c_dim), lambda i: (i, 0, 0)),
        compiler_params=pltpu.CompilerParams(dimension_semantics=("parallel",)),
    )(p, w)
    return out.reshape(b, c_dim)


def concat_x_c(x_nhwc, c):
    # torch: cat([x, c.view(B,c_dim,1,1).repeat(1,1,H,W)], dim=1)  (NHWC here)
    b, h, w, _ = x_nhwc.shape
    cmap = jnp.broadcast_to(c[:, None, None, :], (b, h, w, c.shape[1]))
    return jnp.concatenate([x_nhwc, cmap], axis=-1)


# --------------------------- parameter creation -----------------------------

def _fold_conv_weight(w, bias, cin, cout, kh, kw, bn_scale):
    # w: (Cout, Cin, KH, KW) PyTorch layout -> (KH*KW*Cin, Cout), BN folded in.
    wkn = jnp.transpose(w, (2, 3, 1, 0)).reshape(kh * kw * cin, cout) * bn_scale
    beff = (bias * bn_scale).reshape(1, cout)
    return wkn, beff


def init_gated_params(key, cin, cout, kh, kw):
    k1, k2, k3, k4 = jax.random.split(key, 4)
    wc = 0.05 * jax.random.normal(k1, (cout, cin, kh, kw), jnp.float32)
    bc = 0.05 * jax.random.normal(k2, (cout,), jnp.float32)
    wg = 0.05 * jax.random.normal(k3, (cout, cin, kh, kw), jnp.float32)
    bg = 0.05 * jax.random.normal(k4, (cout,), jnp.float32)
    # Eval-mode BatchNorm2d with fresh stats: gamma=1, beta=0, mean=0, var=1.
    s = 1.0 / (1.0 + BN_EPS) ** 0.5
    wc2, bc2 = _fold_conv_weight(wc, bc, cin, cout, kh, kw, s)
    wg2, bg2 = _fold_conv_weight(wg, bg, cin, cout, kh, kw, s)
    # Fuse conv + gate weights column-wise -> single (K, 2N) MXU dot in the kernel.
    return dict(w=jnp.concatenate([wc2, wg2], axis=1).astype(jnp.bfloat16),
                b=jnp.concatenate([bc2, bg2], axis=1))


def init_params(key, c_dim):
    ks = jax.random.split(key, 8)
    p = {}
    # Discriminator
    p["l1"] = init_gated_params(ks[0], 1 + c_dim, 32, 9, 3)
    p["l2"] = init_gated_params(ks[1], 32 + c_dim, 32, 8, 3)
    p["l3"] = init_gated_params(ks[2], 32 + c_dim, 32, 8, 3)
    p["l4"] = init_gated_params(ks[3], 32 + c_dim, 32, 6, 3)
    w5 = 0.05 * jax.random.normal(ks[4], (1, 32 + c_dim, 5, 40), jnp.float32)
    # l5 weight laid out as a (1, K) row (f32) for the in-kernel VPU reduce (Cout == 1).
    p["l5_w"] = jnp.transpose(w5, (2, 3, 1, 0)).reshape(1, 5 * 40 * (32 + c_dim))
    # Classifier
    p["c1"] = init_gated_params(ks[5], 1, 8, 4, 6)
    p["c2"] = init_gated_params(ks[6], 8, 8, 4, 6)
    w3 = 0.05 * jax.random.normal(ks[7], (c_dim, 8, 3, 5), jnp.float32)
    p["c3_w"] = (jnp.transpose(w3, (2, 3, 1, 0))
                 .reshape(3 * 5 * 8, c_dim).astype(jnp.bfloat16))
    return p


# ------------------------------ forward pass --------------------------------

def discriminator_forward(params, x_nhwc, c):
    x = gated_block_apply(concat_x_c(x_nhwc, c), params["l1"], (9, 3), (1, 1), (4, 1))
    x = gated_block_apply(concat_x_c(x, c), params["l2"], (8, 3), (2, 1), (3, 1))
    x = gated_block_apply(concat_x_c(x, c), params["l3"], (8, 3), (2, 1), (3, 1))
    x = gated_block_apply(concat_x_c(x, c), params["l4"], (6, 3), (2, 1), (2, 1))
    x = concat_x_c(x, c)
    return d_final_apply(x, params["l5_w"])                 # (B, 1)


def classifier_forward(params, x_nhwc):
    x = gated_block_apply(x_nhwc, params["c1"], (4, 6), (2, 4), (1, 1))
    # Dropout2d: eval-mode identity
    x = gated_block_apply(x, params["c2"], (4, 6), (2, 2), (1, 1))
    # Dropout2d: eval-mode identity
    return c_final_apply(x, params["c3_w"])                 # (B, c_dim)


@jax.jit
def unified_discriminator_forward(params, x_nchw, c):
    x = jnp.transpose(x_nchw, (0, 2, 3, 1))   # NCHW -> NHWC
    return discriminator_forward(params, x, c), classifier_forward(params, x)


# ----------------------------------- main ------------------------------------

if __name__ == "__main__":
    key = jax.random.PRNGKey(0)
    kx, kc, kp = jax.random.split(key, 3)

    c_dim = 4
    B, H, W = 2, 16, 40   # H = time frames (multiple of 8), W = 40 feature bins
                          # (required by the (.,40)/(.,5)-stride final convs).

    x = jax.random.normal(kx, (B, 1, H, W), jnp.float32)    # NCHW, like PyTorch
    c = jax.random.normal(kc, (B, c_dim), jnp.float32)
    params = init_params(kp, c_dim)

    d_out, c_out = unified_discriminator_forward(params, x, c)
    jax.block_until_ready((d_out, c_out))

    assert d_out.shape == (B, 1), d_out.shape
    assert c_out.shape == (B, c_dim), c_out.shape
    assert bool(jnp.all(jnp.isfinite(d_out))) and bool(jnp.all(jnp.isfinite(c_out)))
    print("KERNEL_OK")
</pallas_src>

<mosaic_0001>
module attributes {stable_mosaic.version = 11 : i64} {
  func.func @gated_block_kernel(%arg0: i32, %arg1: memref<80x24xbf16, #tpu.memory_space<vmem>>, %arg2: memref<24x16xbf16, #tpu.memory_space<vmem>>, %arg3: memref<1x16xf32, #tpu.memory_space<vmem>>, %arg4: memref<80x8xf32, #tpu.memory_space<vmem>>) attributes {dimension_semantics = [#tpu.dimension_semantics<parallel>], iteration_bounds = array<i64: 2>, scalar_prefetch = 0 : i64, scratch_operands = 0 : i64, tpu.core_type = #tpu.core_type<tc>, window_params = [{transform_indices = @transform_0, window_bounds = array<i64: 80, 24>}, {pipeline_mode = #tpu.pipeline_mode<synchronous>, transform_indices = @transform_1, window_bounds = array<i64: 24, 16>}, {pipeline_mode = #tpu.pipeline_mode<synchronous>, transform_indices = @transform_2, window_bounds = array<i64: 1, 16>}, {transform_indices = @transform_3, window_bounds = array<i64: 80, 8>}]} {
    %c0 = arith.constant 0 : index
    %c0_0 = arith.constant 0 : index
    %0 = vector.load %arg1[%c0, %c0_0] : memref<80x24xbf16, #tpu.memory_space<vmem>>, vector<80x24xbf16>
    %c0_1 = arith.constant 0 : index
    %c0_2 = arith.constant 0 : index
    %1 = vector.load %arg2[%c0_1, %c0_2] : memref<24x16xbf16, #tpu.memory_space<vmem>>, vector<24x16xbf16>
    %cst = arith.constant dense<0.000000e+00> : vector<80x16xf32>
    %2 = tpu.matmul %0, %1, %cst {dimension_numbers = #tpu.dot_dimension_numbers<[1], [0], [0], [1], [0, 0, 1, 1], [], []>} : vector<80x24xbf16>, vector<24x16xbf16>, vector<80x16xf32> -> vector<80x16xf32>
    %c0_3 = arith.constant 0 : index
    %c0_4 = arith.constant 0 : index
    %3 = vector.load %arg3[%c0_3, %c0_4] : memref<1x16xf32, #tpu.memory_space<vmem>>, vector<1x16xf32>
    %4 = vector.broadcast %3 : vector<1x16xf32> to vector<80x16xf32>
    %5 = arith.addf %2, %4 : vector<80x16xf32>
    %6 = vector.extract_strided_slice %5 {offsets = [0, 0], sizes = [80, 8], strides = [1, 1]} : vector<80x16xf32> to vector<80x8xf32>
    %7 = vector.extract_strided_slice %5 {offsets = [0, 8], sizes = [80, 8], strides = [1, 1]} : vector<80x16xf32> to vector<80x8xf32>
    %cst_5 = arith.constant 0.000000e+00 : f32
    %8 = vector.broadcast %cst_5 : f32 to vector<80x8xf32>
    %9 = arith.subf %8, %7 : vector<80x8xf32>
    %10 = math.exp %9 : vector<80x8xf32>
    %cst_6 = arith.constant 1.000000e+00 : f32
    %11 = vector.broadcast %cst_6 : f32 to vector<80x8xf32>
    %12 = arith.addf %11, %10 : vector<80x8xf32>
    %13 = tpu.reciprocal %12 {approx = true} : vector<80x8xf32> -> vector<80x8xf32>
    %14 = arith.mulf %6, %13 : vector<80x8xf32>
    %c0_7 = arith.constant 0 : index
    %c0_8 = arith.constant 0 : index
    %15 = vector.load %arg4[%c0_7, %c0_8] : memref<80x8xf32, #tpu.memory_space<vmem>>, vector<80x8xf32>
    tpu.vector_store %arg4[%c0_7, %c0_8], %14 {strides = array<i32>} : memref<80x8xf32, #tpu.memory_space<vmem>>, vector<80x8xf32>,
    return
  }
  func.func @transform_0(%arg0: i32) -> (i32, i32) {
    %c0_i32 = arith.constant 0 : i32
    %c0_i32_0 = arith.constant 0 : i32
    return %arg0, %c0_i32 : i32, i32
  }
  func.func @transform_1(%arg0: i32) -> (i32, i32) {
    %c0_i32 = arith.constant 0 : i32
    %c0_i32_0 = arith.constant 0 : i32
    %c0_i32_1 = arith.constant 0 : i32
    return %c0_i32, %c0_i32_0 : i32, i32
  }
  func.func @transform_2(%arg0: i32) -> (i32, i32) {
    %c0_i32 = arith.constant 0 : i32
    %c0_i32_0 = arith.constant 0 : i32
    %c0_i32_1 = arith.constant 0 : i32
    return %c0_i32, %c0_i32_0 : i32, i32
  }
  func.func @transform_3(%arg0: i32) -> (i32, i32) {
    %c0_i32 = arith.constant 0 : i32
    %c0_i32_0 = arith.constant 0 : i32
    return %arg0, %c0_i32 : i32, i32
  }
}

module attributes {stable_mosaic.version = 11 : i64} {
  func.func @gated_block_kernel(%arg0: i32, %arg1: memref<16x192xbf16, #tpu.memory_space<vmem>>, %arg2: memref<192x16xbf16, #tpu.memory_space<vmem>>, %arg3: memref<1x16xf32, #tpu.memory_space<vmem>>, %arg4: memref<16x8xf32, #tpu.memory_space<vmem>>) attributes {dimension_semantics = [#tpu.dimension_semantics<parallel>], iteration_bounds = array<i64: 2>, scalar_prefetch = 0 : i64, scratch_operands = 0 : i64, tpu.core_type = #tpu.core_type<tc>, window_params = [{transform_indices = @transform_0, window_bounds = array<i64: 16, 192>}, {pipeline_mode = #tpu.pipeline_mode<synchronous>, transform_indices = @transform_1, window_bounds = array<i64: 192, 16>}, {pipeline_mode = #tpu.pipeline_mode<synchronous>, transform_indices = @transform_2, window_bounds = array<i64: 1, 16>}, {transform_indices = @transform_3, window_bounds = array<i64: 16, 8>}]} {
    %c0 = arith.constant 0 : index
    %c0_0 = arith.constant 0 : index
    %0 = vector.load %arg1[%c0, %c0_0] : memref<16x192xbf16, #tpu.memory_space<vmem>>, vector<16x192xbf16>
    %c0_1 = arith.constant 0 : index
    %c0_2 = arith.constant 0 : index
    %1 = vector.load %arg2[%c0_1, %c0_2] : memref<192x16xbf16, #tpu.memory_space<vmem>>, vector<192x16xbf16>
    %cst = arith.constant dense<0.000000e+00> : vector<16x16xf32>
    %2 = tpu.matmul %0, %1, %cst {dimension_numbers = #tpu.dot_dimension_numbers<[1], [0], [0], [1], [0, 0, 1, 1], [], []>} : vector<16x192xbf16>, vector<192x16xbf16>, vector<16x16xf32> -> vector<16x16xf32>
    %c0_3 = arith.constant 0 : index
    %c0_4 = arith.constant 0 : index
    %3 = vector.load %arg3[%c0_3, %c0_4] : memref<1x16xf32, #tpu.memory_space<vmem>>, vector<1x16xf32>
    %4 = vector.broadcast %3 : vector<1x16xf32> to vector<16x16xf32>
    %5 = arith.addf %2, %4 : vector<16x16xf32>
    %6 = vector.extract_strided_slice %5 {offsets = [0, 0], sizes = [16, 8], strides = [1, 1]} : vector<16x16xf32> to vector<16x8xf32>
    %7 = vector.extract_strided_slice %5 {offsets = [0, 8], sizes = [16, 8], strides = [1, 1]} : vector<16x16xf32> to vector<16x8xf32>
    %cst_5 = arith.constant 0.000000e+00 : f32
    %8 = vector.broadcast %cst_5 : f32 to vector<16x8xf32>
    %9 = arith.subf %8, %7 : vector<16x8xf32>
    %10 = math.exp %9 : vector<16x8xf32>
    %cst_6 = arith.constant 1.000000e+00 : f32
    %11 = vector.broadcast %cst_6 : f32 to vector<16x8xf32>
    %12 = arith.addf %11, %10 : vector<16x8xf32>
    %13 = tpu.reciprocal %12 {approx = true} : vector<16x8xf32> -> vector<16x8xf32>
    %14 = arith.mulf %6, %13 : vector<16x8xf32>
    %c0_7 = arith.constant 0 : index
    %c0_8 = arith.constant 0 : index
    %15 = vector.load %arg4[%c0_7, %c0_8] : memref<16x8xf32, #tpu.memory_space<vmem>>, vector<16x8xf32>
    tpu.vector_store %arg4[%c0_7, %c0_8], %14 {strides = array<i32>} : memref<16x8xf32, #tpu.memory_space<vmem>>, vector<16x8xf32>,
    return
  }
  func.func @transform_0(%arg0: i32) -> (i32, i32) {
    %c0_i32 = arith.constant 0 : i32
    %c0_i32_0 = arith.constant 0 : i32
    return %arg0, %c0_i32 : i32, i32
  }
  func.func @transform_1(%arg0: i32) -> (i32, i32) {
    %c0_i32 = arith.constant 0 : i32
    %c0_i32_0 = arith.constant 0 : i32
    %c0_i32_1 = arith.constant 0 : i32
    return %c0_i32, %c0_i32_0 : i32, i32
  }
  func.func @transform_2(%arg0: i32) -> (i32, i32) {
    %c0_i32 = arith.constant 0 : i32
    %c0_i32_0 = arith.constant 0 : i32
    %c0_i32_1 = arith.constant 0 : i32
    return %c0_i32, %c0_i32_0 : i32, i32
  }
  func.func @transform_3(%arg0: i32) -> (i32, i32) {
    %c0_i32 = arith.constant 0 : i32
    %c0_i32_0 = arith.constant 0 : i32
    return %arg0, %c0_i32 : i32, i32
  }
}

module attributes {stable_mosaic.version = 11 : i64} {
  func.func @c_final_kernel(%arg0: i32, %arg1: memref<1x2x120xbf16, #tpu.memory_space<vmem>>, %arg2: memref<120x4xbf16, #tpu.memory_space<vmem>>, %arg3: memref<1x1x4xf32, #tpu.memory_space<vmem>>) attributes {dimension_semantics = [#tpu.dimension_semantics<parallel>], iteration_bounds = array<i64: 2>, scalar_prefetch = 0 : i64, scratch_operands = 0 : i64, tpu.core_type = #tpu.core_type<tc>, window_params = [{transform_indices = @transform_0, window_bounds = array<i64: 1, 2, 120>}, {pipeline_mode = #tpu.pipeline_mode<synchronous>, transform_indices = @transform_1, window_bounds = array<i64: 120, 4>}, {transform_indices = @transform_2, window_bounds = array<i64: 1, 1, 4>}]} {
    %c0 = arith.constant 0 : index
    %c0_0 = arith.constant 0 : index
    %c0_1 = arith.constant 0 : index
    %0 = vector.load %arg1[%c0, %c0_0, %c0_1] : memref<1x2x120xbf16, #tpu.memory_space<vmem>>, vector<1x2x120xbf16>
    %1 = vector.shape_cast %0 : vector<1x2x120xbf16> to vector<2x120xbf16>
    %c0_2 = arith.constant 0 : index
    %c0_3 = arith.constant 0 : index
    %2 = vector.load %arg2[%c0_2, %c0_3] : memref<120x4xbf16, #tpu.memory_space<vmem>>, vector<120x4xbf16>
    %cst = arith.constant dense<0.000000e+00> : vector<2x4xf32>
    %3 = tpu.matmul %1, %2, %cst {dimension_numbers = #tpu.dot_dimension_numbers<[1], [0], [0], [1], [0, 0, 1, 1], [], []>} : vector<2x120xbf16>, vector<120x4xbf16>, vector<2x4xf32> -> vector<2x4xf32>
    %cst_4 = arith.constant dense<0xFF800000> : vector<2xf32>
    %4 = vector.multi_reduction <maximumf>, %3, %cst_4 [1] : vector<2x4xf32> to vector<2xf32>
    %5 = vector.shape_cast %4 : vector<2xf32> to vector<2x1xf32>
    %6 = vector.broadcast %5 : vector<2x1xf32> to vector<2x4xf32>
    %7 = arith.subf %3, %6 : vector<2x4xf32>
    %8 = math.exp %7 : vector<2x4xf32>
    %cst_5 = arith.constant dense<0.000000e+00> : vector<2xf32>
    %9 = vector.multi_reduction <add>, %8, %cst_5 [1] : vector<2x4xf32> to vector<2xf32>
    %10 = vector.shape_cast %9 : vector<2xf32> to vector<2x1xf32>
    %11 = math.log %10 : vector<2x1xf32>
    %12 = arith.addf %5, %11 : vector<2x1xf32>
    %13 = vector.broadcast %12 : vector<2x1xf32> to vector<2x4xf32>
    %14 = arith.subf %3, %13 : vector<2x4xf32>
    %cst_6 = arith.constant dense<0.000000e+00> : vector<4xf32>
    %15 = vector.multi_reduction <add>, %14, %cst_6 [0] : vector<2x4xf32> to vector<4xf32>
    %16 = vector.shape_cast %15 : vector<4xf32> to vector<1x4xf32>
    %cst_7 = arith.constant 2.000000e+00 : f32
    %17 = vector.broadcast %cst_7 : f32 to vector<1x4xf32>
    %18 = arith.divf %16, %17 : vector<1x4xf32>
    %c0_8 = arith.constant 0 : index
    %c0_9 = arith.constant 0 : index
    %c0_10 = arith.constant 0 : index
    %19 = vector.load %arg3[%c0_8, %c0_9, %c0_10] : memref<1x1x4xf32, #tpu.memory_space<vmem>>, vector<1x1x4xf32>
    %20 = vector.shape_cast %19 : vector<1x1x4xf32> to vector<1x4xf32>
    %21 = vector.shape_cast %18 : vector<1x4xf32> to vector<1x1x4xf32>
    tpu.vector_store %arg3[%c0_8, %c0_9, %c0_10], %21 {strides = array<i32>} : memref<1x1x4xf32, #tpu.memory_space<vmem>>, vector<1x1x4xf32>,
    return
  }
  func.func @transform_0(%arg0: i32) -> (i32, i32, i32) {
    %c0_i32 = arith.constant 0 : i32
    %c0_i32_0 = arith.constant 0 : i32
    %c0_i32_1 = arith.constant 0 : i32
    return %arg0, %c0_i32, %c0_i32_0 : i32, i32, i32
  }
  func.func @transform_1(%arg0: i32) -> (i32, i32) {
    %c0_i32 = arith.constant 0 : i32
    %c0_i32_0 = arith.constant 0 : i32
    %c0_i32_1 = arith.constant 0 : i32
    return %c0_i32, %c0_i32_0 : i32, i32
  }
  func.func @transform_2(%arg0: i32) -> (i32, i32, i32) {
    %c0_i32 = arith.constant 0 : i32
    %c0_i32_0 = arith.constant 0 : i32
    %c0_i32_1 = arith.constant 0 : i32
    return %arg0, %c0_i32, %c0_i32_0 : i32, i32, i32
  }
}

module attributes {stable_mosaic.version = 11 : i64} {
  func.func @gated_block_kernel(%arg0: i32, %arg1: memref<640x135xbf16, #tpu.memory_space<vmem>>, %arg2: memref<135x64xbf16, #tpu.memory_space<vmem>>, %arg3: memref<1x64xf32, #tpu.memory_space<vmem>>, %arg4: memref<640x32xf32, #tpu.memory_space<vmem>>) attributes {dimension_semantics = [#tpu.dimension_semantics<parallel>], iteration_bounds = array<i64: 2>, scalar_prefetch = 0 : i64, scratch_operands = 0 : i64, tpu.core_type = #tpu.core_type<tc>, window_params = [{transform_indices = @transform_0, window_bounds = array<i64: 640, 135>}, {pipeline_mode = #tpu.pipeline_mode<synchronous>, transform_indices = @transform_1, window_bounds = array<i64: 135, 64>}, {pipeline_mode = #tpu.pipeline_mode<synchronous>, transform_indices = @transform_2, window_bounds = array<i64: 1, 64>}, {transform_indices = @transform_3, window_bounds = array<i64: 640, 32>}]} {
    %c0 = arith.constant 0 : index
    %c0_0 = arith.constant 0 : index
    %0 = vector.load %arg1[%c0, %c0_0] : memref<640x135xbf16, #tpu.memory_space<vmem>>, vector<640x135xbf16>
    %c0_1 = arith.constant 0 : index
    %c0_2 = arith.constant 0 : index
    %1 = vector.load %arg2[%c0_1, %c0_2] : memref<135x64xbf16, #tpu.memory_space<vmem>>, vector<135x64xbf16>
    %cst = arith.constant dense<0.000000e+00> : vector<640x64xf32>
    %2 = tpu.matmul %0, %1, %cst {dimension_numbers = #tpu.dot_dimension_numbers<[1], [0], [0], [1], [0, 0, 1, 1], [], []>} : vector<640x135xbf16>, vector<135x64xbf16>, vector<640x64xf32> -> vector<640x64xf32>
    %c0_3 = arith.constant 0 : index
    %c0_4 = arith.constant 0 : index
    %3 = vector.load %arg3[%c0_3, %c0_4] : memref<1x64xf32, #tpu.memory_space<vmem>>, vector<1x64xf32>
    %4 = vector.broadcast %3 : vector<1x64xf32> to vector<640x64xf32>
    %5 = arith.addf %2, %4 : vector<640x64xf32>
    %6 = vector.extract_strided_slice %5 {offsets = [0, 0], sizes = [640, 32], strides = [1, 1]} : vector<640x64xf32> to vector<640x32xf32>
    %7 = vector.extract_strided_slice %5 {offsets = [0, 32], sizes = [640, 32], strides = [1, 1]} : vector<640x64xf32> to vector<640x32xf32>
    %cst_5 = arith.constant 0.000000e+00 : f32
    %8 = vector.broadcast %cst_5 : f32 to vector<640x32xf32>
    %9 = arith.subf %8, %7 : vector<640x32xf32>
    %10 = math.exp %9 : vector<640x32xf32>
    %cst_6 = arith.constant 1.000000e+00 : f32
    %11 = vector.broadcast %cst_6 : f32 to vector<640x32xf32>
    %12 = arith.addf %11, %10 : vector<640x32xf32>
    %13 = tpu.reciprocal %12 {approx = true} : vector<640x32xf32> -> vector<640x32xf32>
    %14 = arith.mulf %6, %13 : vector<640x32xf32>
    %c0_7 = arith.constant 0 : index
    %c0_8 = arith.constant 0 : index
    %15 = vector.load %arg4[%c0_7, %c0_8] : memref<640x32xf32, #tpu.memory_space<vmem>>, vector<640x32xf32>
    tpu.vector_store %arg4[%c0_7, %c0_8], %14 {strides = array<i32>} : memref<640x32xf32, #tpu.memory_space<vmem>>, vector<640x32xf32>,
    return
  }
  func.func @transform_0(%arg0: i32) -> (i32, i32) {
    %c0_i32 = arith.constant 0 : i32
    %c0_i32_0 = arith.constant 0 : i32
    return %arg0, %c0_i32 : i32, i32
  }
  func.func @transform_1(%arg0: i32) -> (i32, i32) {
    %c0_i32 = arith.constant 0 : i32
    %c0_i32_0 = arith.constant 0 : i32
    %c0_i32_1 = arith.constant 0 : i32
    return %c0_i32, %c0_i32_0 : i32, i32
  }
  func.func @transform_2(%arg0: i32) -> (i32, i32) {
    %c0_i32 = arith.constant 0 : i32
    %c0_i32_0 = arith.constant 0 : i32
    %c0_i32_1 = arith.constant 0 : i32
    return %c0_i32, %c0_i32_0 : i32, i32
  }
  func.func @transform_3(%arg0: i32) -> (i32, i32) {
    %c0_i32 = arith.constant 0 : i32
    %c0_i32_0 = arith.constant 0 : i32
    return %arg0, %c0_i32 : i32, i32
  }
}

module attributes {stable_mosaic.version = 11 : i64} {
  func.func @gated_block_kernel(%arg0: i32, %arg1: memref<320x864xbf16, #tpu.memory_space<vmem>>, %arg2: memref<864x64xbf16, #tpu.memory_space<vmem>>, %arg3: memref<1x64xf32, #tpu.memory_space<vmem>>, %arg4: memref<320x32xf32, #tpu.memory_space<vmem>>) attributes {dimension_semantics = [#tpu.dimension_semantics<parallel>], iteration_bounds = array<i64: 2>, scalar_prefetch = 0 : i64, scratch_operands = 0 : i64, tpu.core_type = #tpu.core_type<tc>, window_params = [{transform_indices = @transform_0, window_bounds = array<i64: 320, 864>}, {pipeline_mode = #tpu.pipeline_mode<synchronous>, transform_indices = @transform_1, window_bounds = array<i64: 864, 64>}, {pipeline_mode = #tpu.pipeline_mode<synchronous>, transform_indices = @transform_2, window_bounds = array<i64: 1, 64>}, {transform_indices = @transform_3, window_bounds = array<i64: 320, 32>}]} {
    %c0 = arith.constant 0 : index
    %c0_0 = arith.constant 0 : index
    %0 = vector.load %arg1[%c0, %c0_0] : memref<320x864xbf16, #tpu.memory_space<vmem>>, vector<320x864xbf16>
    %c0_1 = arith.constant 0 : index
    %c0_2 = arith.constant 0 : index
    %1 = vector.load %arg2[%c0_1, %c0_2] : memref<864x64xbf16, #tpu.memory_space<vmem>>, vector<864x64xbf16>
    %cst = arith.constant dense<0.000000e+00> : vector<320x64xf32>
    %2 = tpu.matmul %0, %1, %cst {dimension_numbers = #tpu.dot_dimension_numbers<[1], [0], [0], [1], [0, 0, 1, 1], [], []>} : vector<320x864xbf16>, vector<864x64xbf16>, vector<320x64xf32> -> vector<320x64xf32>
    %c0_3 = arith.constant 0 : index
    %c0_4 = arith.constant 0 : index
    %3 = vector.load %arg3[%c0_3, %c0_4] : memref<1x64xf32, #tpu.memory_space<vmem>>, vector<1x64xf32>
    %4 = vector.broadcast %3 : vector<1x64xf32> to vector<320x64xf32>
    %5 = arith.addf %2, %4 : vector<320x64xf32>
    %6 = vector.extract_strided_slice %5 {offsets = [0, 0], sizes = [320, 32], strides = [1, 1]} : vector<320x64xf32> to vector<320x32xf32>
    %7 = vector.extract_strided_slice %5 {offsets = [0, 32], sizes = [320, 32], strides = [1, 1]} : vector<320x64xf32> to vector<320x32xf32>
    %cst_5 = arith.constant 0.000000e+00 : f32
    %8 = vector.broadcast %cst_5 : f32 to vector<320x32xf32>
    %9 = arith.subf %8, %7 : vector<320x32xf32>
    %10 = math.exp %9 : vector<320x32xf32>
    %cst_6 = arith.constant 1.000000e+00 : f32
    %11 = vector.broadcast %cst_6 : f32 to vector<320x32xf32>
    %12 = arith.addf %11, %10 : vector<320x32xf32>
    %13 = tpu.reciprocal %12 {approx = true} : vector<320x32xf32> -> vector<320x32xf32>
    %14 = arith.mulf %6, %13 : vector<320x32xf32>
    %c0_7 = arith.constant 0 : index
    %c0_8 = arith.constant 0 : index
    %15 = vector.load %arg4[%c0_7, %c0_8] : memref<320x32xf32, #tpu.memory_space<vmem>>, vector<320x32xf32>
    tpu.vector_store %arg4[%c0_7, %c0_8], %14 {strides = array<i32>} : memref<320x32xf32, #tpu.memory_space<vmem>>, vector<320x32xf32>,
    return
  }
  func.func @transform_0(%arg0: i32) -> (i32, i32) {
    %c0_i32 = arith.constant 0 : i32
    %c0_i32_0 = arith.constant 0 : i32
    return %arg0, %c0_i32 : i32, i32
  }
  func.func @transform_1(%arg0: i32) -> (i32, i32) {
    %c0_i32 = arith.constant 0 : i32
    %c0_i32_0 = arith.constant 0 : i32
    %c0_i32_1 = arith.constant 0 : i32
    return %c0_i32, %c0_i32_0 : i32, i32
  }
  func.func @transform_2(%arg0: i32) -> (i32, i32) {
    %c0_i32 = arith.constant 0 : i32
    %c0_i32_0 = arith.constant 0 : i32
    %c0_i32_1 = arith.constant 0 : i32
    return %c0_i32, %c0_i32_0 : i32, i32
  }
  func.func @transform_3(%arg0: i32) -> (i32, i32) {
    %c0_i32 = arith.constant 0 : i32
    %c0_i32_0 = arith.constant 0 : i32
    return %arg0, %c0_i32 : i32, i32
  }
}

module attributes {stable_mosaic.version = 11 : i64} {
  func.func @gated_block_kernel(%arg0: i32, %arg1: memref<160x864xbf16, #tpu.memory_space<vmem>>, %arg2: memref<864x64xbf16, #tpu.memory_space<vmem>>, %arg3: memref<1x64xf32, #tpu.memory_space<vmem>>, %arg4: memref<160x32xf32, #tpu.memory_space<vmem>>) attributes {dimension_semantics = [#tpu.dimension_semantics<parallel>], iteration_bounds = array<i64: 2>, scalar_prefetch = 0 : i64, scratch_operands = 0 : i64, tpu.core_type = #tpu.core_type<tc>, window_params = [{transform_indices = @transform_0, window_bounds = array<i64: 160, 864>}, {pipeline_mode = #tpu.pipeline_mode<synchronous>, transform_indices = @transform_1, window_bounds = array<i64: 864, 64>}, {pipeline_mode = #tpu.pipeline_mode<synchronous>, transform_indices = @transform_2, window_bounds = array<i64: 1, 64>}, {transform_indices = @transform_3, window_bounds = array<i64: 160, 32>}]} {
    %c0 = arith.constant 0 : index
    %c0_0 = arith.constant 0 : index
    %0 = vector.load %arg1[%c0, %c0_0] : memref<160x864xbf16, #tpu.memory_space<vmem>>, vector<160x864xbf16>
    %c0_1 = arith.constant 0 : index
    %c0_2 = arith.constant 0 : index
    %1 = vector.load %arg2[%c0_1, %c0_2] : memref<864x64xbf16, #tpu.memory_space<vmem>>, vector<864x64xbf16>
    %cst = arith.constant dense<0.000000e+00> : vector<160x64xf32>
    %2 = tpu.matmul %0, %1, %cst {dimension_numbers = #tpu.dot_dimension_numbers<[1], [0], [0], [1], [0, 0, 1, 1], [], []>} : vector<160x864xbf16>, vector<864x64xbf16>, vector<160x64xf32> -> vector<160x64xf32>
    %c0_3 = arith.constant 0 : index
    %c0_4 = arith.constant 0 : index
    %3 = vector.load %arg3[%c0_3, %c0_4] : memref<1x64xf32, #tpu.memory_space<vmem>>, vector<1x64xf32>
    %4 = vector.broadcast %3 : vector<1x64xf32> to vector<160x64xf32>
    %5 = arith.addf %2, %4 : vector<160x64xf32>
    %6 = vector.extract_strided_slice %5 {offsets = [0, 0], sizes = [160, 32], strides = [1, 1]} : vector<160x64xf32> to vector<160x32xf32>
    %7 = vector.extract_strided_slice %5 {offsets = [0, 32], sizes = [160, 32], strides = [1, 1]} : vector<160x64xf32> to vector<160x32xf32>
    %cst_5 = arith.constant 0.000000e+00 : f32
    %8 = vector.broadcast %cst_5 : f32 to vector<160x32xf32>
    %9 = arith.subf %8, %7 : vector<160x32xf32>
    %10 = math.exp %9 : vector<160x32xf32>
    %cst_6 = arith.constant 1.000000e+00 : f32
    %11 = vector.broadcast %cst_6 : f32 to vector<160x32xf32>
    %12 = arith.addf %11, %10 : vector<160x32xf32>
    %13 = tpu.reciprocal %12 {approx = true} : vector<160x32xf32> -> vector<160x32xf32>
    %14 = arith.mulf %6, %13 : vector<160x32xf32>
    %c0_7 = arith.constant 0 : index
    %c0_8 = arith.constant 0 : index
    %15 = vector.load %arg4[%c0_7, %c0_8] : memref<160x32xf32, #tpu.memory_space<vmem>>, vector<160x32xf32>
    tpu.vector_store %arg4[%c0_7, %c0_8], %14 {strides = array<i32>} : memref<160x32xf32, #tpu.memory_space<vmem>>, vector<160x32xf32>,
    return
  }
  func.func @transform_0(%arg0: i32) -> (i32, i32) {
    %c0_i32 = arith.constant 0 : i32
    %c0_i32_0 = arith.constant 0 : i32
    return %arg0, %c0_i32 : i32, i32
  }
  func.func @transform_1(%arg0: i32) -> (i32, i32) {
    %c0_i32 = arith.constant 0 : i32
    %c0_i32_0 = arith.constant 0 : i32
    %c0_i32_1 = arith.constant 0 : i32
    return %c0_i32, %c0_i32_0 : i32, i32
  }
  func.func @transform_2(%arg0: i32) -> (i32, i32) {
    %c0_i32 = arith.constant 0 : i32
    %c0_i32_0 = arith.constant 0 : i32
    %c0_i32_1 = arith.constant 0 : i32
    return %c0_i32, %c0_i32_0 : i32, i32
  }
  func.func @transform_3(%arg0: i32) -> (i32, i32) {
    %c0_i32 = arith.constant 0 : i32
    %c0_i32_0 = arith.constant 0 : i32
    return %arg0, %c0_i32 : i32, i32
  }
}

module attributes {stable_mosaic.version = 11 : i64} {
  func.func @gated_block_kernel(%arg0: i32, %arg1: memref<80x648xbf16, #tpu.memory_space<vmem>>, %arg2: memref<648x64xbf16, #tpu.memory_space<vmem>>, %arg3: memref<1x64xf32, #tpu.memory_space<vmem>>, %arg4: memref<80x32xf32, #tpu.memory_space<vmem>>) attributes {dimension_semantics = [#tpu.dimension_semantics<parallel>], iteration_bounds = array<i64: 2>, scalar_prefetch = 0 : i64, scratch_operands = 0 : i64, tpu.core_type = #tpu.core_type<tc>, window_params = [{transform_indices = @transform_0, window_bounds = array<i64: 80, 648>}, {pipeline_mode = #tpu.pipeline_mode<synchronous>, transform_indices = @transform_1, window_bounds = array<i64: 648, 64>}, {pipeline_mode = #tpu.pipeline_mode<synchronous>, transform_indices = @transform_2, window_bounds = array<i64: 1, 64>}, {transform_indices = @transform_3, window_bounds = array<i64: 80, 32>}]} {
    %c0 = arith.constant 0 : index
    %c0_0 = arith.constant 0 : index
    %0 = vector.load %arg1[%c0, %c0_0] : memref<80x648xbf16, #tpu.memory_space<vmem>>, vector<80x648xbf16>
    %c0_1 = arith.constant 0 : index
    %c0_2 = arith.constant 0 : index
    %1 = vector.load %arg2[%c0_1, %c0_2] : memref<648x64xbf16, #tpu.memory_space<vmem>>, vector<648x64xbf16>
    %cst = arith.constant dense<0.000000e+00> : vector<80x64xf32>
    %2 = tpu.matmul %0, %1, %cst {dimension_numbers = #tpu.dot_dimension_numbers<[1], [0], [0], [1], [0, 0, 1, 1], [], []>} : vector<80x648xbf16>, vector<648x64xbf16>, vector<80x64xf32> -> vector<80x64xf32>
    %c0_3 = arith.constant 0 : index
    %c0_4 = arith.constant 0 : index
    %3 = vector.load %arg3[%c0_3, %c0_4] : memref<1x64xf32, #tpu.memory_space<vmem>>, vector<1x64xf32>
    %4 = vector.broadcast %3 : vector<1x64xf32> to vector<80x64xf32>
    %5 = arith.addf %2, %4 : vector<80x64xf32>
    %6 = vector.extract_strided_slice %5 {offsets = [0, 0], sizes = [80, 32], strides = [1, 1]} : vector<80x64xf32> to vector<80x32xf32>
    %7 = vector.extract_strided_slice %5 {offsets = [0, 32], sizes = [80, 32], strides = [1, 1]} : vector<80x64xf32> to vector<80x32xf32>
    %cst_5 = arith.constant 0.000000e+00 : f32
    %8 = vector.broadcast %cst_5 : f32 to vector<80x32xf32>
    %9 = arith.subf %8, %7 : vector<80x32xf32>
    %10 = math.exp %9 : vector<80x32xf32>
    %cst_6 = arith.constant 1.000000e+00 : f32
    %11 = vector.broadcast %cst_6 : f32 to vector<80x32xf32>
    %12 = arith.addf %11, %10 : vector<80x32xf32>
    %13 = tpu.reciprocal %12 {approx = true} : vector<80x32xf32> -> vector<80x32xf32>
    %14 = arith.mulf %6, %13 : vector<80x32xf32>
    %c0_7 = arith.constant 0 : index
    %c0_8 = arith.constant 0 : index
    %15 = vector.load %arg4[%c0_7, %c0_8] : memref<80x32xf32, #tpu.memory_space<vmem>>, vector<80x32xf32>
    tpu.vector_store %arg4[%c0_7, %c0_8], %14 {strides = array<i32>} : memref<80x32xf32, #tpu.memory_space<vmem>>, vector<80x32xf32>,
    return
  }
  func.func @transform_0(%arg0: i32) -> (i32, i32) {
    %c0_i32 = arith.constant 0 : i32
    %c0_i32_0 = arith.constant 0 : i32
    return %arg0, %c0_i32 : i32, i32
  }
  func.func @transform_1(%arg0: i32) -> (i32, i32) {
    %c0_i32 = arith.constant 0 : i32
    %c0_i32_0 = arith.constant 0 : i32
    %c0_i32_1 = arith.constant 0 : i32
    return %c0_i32, %c0_i32_0 : i32, i32
  }
  func.func @transform_2(%arg0: i32) -> (i32, i32) {
    %c0_i32 = arith.constant 0 : i32
    %c0_i32_0 = arith.constant 0 : i32
    %c0_i32_1 = arith.constant 0 : i32
    return %c0_i32, %c0_i32_0 : i32, i32
  }
  func.func @transform_3(%arg0: i32) -> (i32, i32) {
    %c0_i32 = arith.constant 0 : i32
    %c0_i32_0 = arith.constant 0 : i32
    return %arg0, %c0_i32 : i32, i32
  }
}

module attributes {stable_mosaic.version = 11 : i64} {
  func.func @d_final_kernel(%arg0: i32, %arg1: memref<4x7200xbf16, #tpu.memory_space<vmem>>, %arg2: memref<1x7200xf32, #tpu.memory_space<vmem>>, %arg3: memref<4x1xf32, #tpu.memory_space<vmem>>) attributes {dimension_semantics = [#tpu.dimension_semantics<arbitrary>], iteration_bounds = array<i64: 1>, scalar_prefetch = 0 : i64, scratch_operands = 0 : i64, tpu.core_type = #tpu.core_type<tc>, window_params = [{pipeline_mode = #tpu.pipeline_mode<synchronous>, transform_indices = @transform_0, window_bounds = array<i64: 4, 7200>}, {pipeline_mode = #tpu.pipeline_mode<synchronous>, transform_indices = @transform_1, window_bounds = array<i64: 1, 7200>}, {pipeline_mode = #tpu.pipeline_mode<synchronous>, transform_indices = @transform_2, window_bounds = array<i64: 4, 1>}]} {
    %c0 = arith.constant 0 : index
    %c0_0 = arith.constant 0 : index
    %0 = vector.load %arg1[%c0, %c0_0] : memref<4x7200xbf16, #tpu.memory_space<vmem>>, vector<4x7200xbf16>
    %1 = arith.extf %0 : vector<4x7200xbf16> to vector<4x7200xf32>
    %c0_1 = arith.constant 0 : index
    %c0_2 = arith.constant 0 : index
    %2 = vector.load %arg2[%c0_1, %c0_2] : memref<1x7200xf32, #tpu.memory_space<vmem>>, vector<1x7200xf32>
    %3 = vector.broadcast %2 : vector<1x7200xf32> to vector<4x7200xf32>
    %4 = arith.mulf %1, %3 : vector<4x7200xf32>
    %cst = arith.constant dense<0.000000e+00> : vector<4xf32>
    %5 = vector.multi_reduction <add>, %4, %cst [1] : vector<4x7200xf32> to vector<4xf32>
    %6 = vector.shape_cast %5 : vector<4xf32> to vector<4x1xf32>
    %cst_3 = arith.constant 0.000000e+00 : f32
    %7 = vector.broadcast %cst_3 : f32 to vector<4x1xf32>
    %8 = arith.subf %7, %6 : vector<4x1xf32>
    %9 = math.exp %8 : vector<4x1xf32>
    %cst_4 = arith.constant 1.000000e+00 : f32
    %10 = vector.broadcast %cst_4 : f32 to vector<4x1xf32>
    %11 = arith.addf %10, %9 : vector<4x1xf32>
    %12 = tpu.reciprocal %11 {approx = true} : vector<4x1xf32> -> vector<4x1xf32>
    %c0_5 = arith.constant 0 : index
    %c0_6 = arith.constant 0 : index
    %13 = vector.load %arg3[%c0_5, %c0_6] : memref<4x1xf32, #tpu.memory_space<vmem>>, vector<4x1xf32>
    tpu.vector_store %arg3[%c0_5, %c0_6], %12 {strides = array<i32>} : memref<4x1xf32, #tpu.memory_space<vmem>>, vector<4x1xf32>,
    return
  }
  func.func @transform_0(%arg0: i32) -> (i32, i32) {
    %c0_i32 = arith.constant 0 : i32
    %c0_i32_0 = arith.constant 0 : i32
    %c0_i32_1 = arith.constant 0 : i32
    return %c0_i32, %c0_i32_0 : i32, i32
  }
  func.func @transform_1(%arg0: i32) -> (i32, i32) {
    %c0_i32 = arith.constant 0 : i32
    %c0_i32_0 = arith.constant 0 : i32
    %c0_i32_1 = arith.constant 0 : i32
    return %c0_i32, %c0_i32_0 : i32, i32
  }
  func.func @transform_2(%arg0: i32) -> (i32, i32) {
    %c0_i32 = arith.constant 0 : i32
    %c0_i32_0 = arith.constant 0 : i32
    %c0_i32_1 = arith.constant 0 : i32
    return %c0_i32, %c0_i32_0 : i32, i32
  }
}

</mosaic_0001>

<llo_original>
// kernel: unified_discriminator_forward.13
$region0: #{unified_discriminator_forward.13}
  #allocation0 [shape = 'u32[]', space=smem, size = 0x4, offset = 0x4, fixed_abs, tag = 'smem constant byte address 0x4 - core index']
  #allocation1 [shape = 'u32[144,128]{1,0:T(1,128)}', space=vmem, size = 0x12000, scoped, tag = 'internal scratch']
  %s0 = inlined_call_operand.vmem [shape: bf16[160,24], index: 0, kind: input, shape index: {}]
  %s1 = inlined_call_operand.vmem [shape: bf16[24,16], index: 1, kind: input, shape index: {}]
  %s2 = inlined_call_operand.hbm [shape: f32[1,16], index: 2, kind: input, shape index: {}]
  %s3 = inlined_call_operand.vmem [shape: f32[160,8], index: 3, kind: output, shape index: {}]
  %s4 = sld [smem:[#allocation0]]
  $region49: #{unified_discriminator_forward.13} parent=0
    _
  %s6 = ssub.s32 1, %s4
  %s7 = scalar_select 0, %s6, %s4
  $region1: #{unified_discriminator_forward.13} parent=0
    #allocation2 [shape = 'u8[512]{0}', space=vmem, size = 0x400, scoped, tag = 'input window, operand 2, single buffered']
    #allocation3 [shape = 's32[2]{0}', space=sflag, size = 0x8, scoped, tag = 'scoped memory for unified_discriminator_forward.13']
    %8 = vsyncpa [#allocation3], 0
    loop: start=0, step=1, limit=4
    $region2: #{unified_discriminator_forward.13} parent=1 // loop_pre_header
      _
    $region3: #{unified_discriminator_forward.13} parent=1 // loop_header
      %s10 = sphi 0, %s14
      %p11 = scmp.ge.s32.totalorder %s10, 4
      %s20 = sphi 0, %s22
      %s23 = sphi 0, %s20
      %s24 = sphi 0, %s23
      %s40 = sphi 0, %s24
      %s44 = sphi 0, %s44
      %s46 = sphi 0, %s44
      %s47 = sphi 0, %s46
      %s61 = sphi 0, %s47
      %s65 = sphi 0, %s65
      %s67 = sphi 0, %s65
      %s68 = sphi 0, %s67
      %s82 = sphi 0, %s68
      %s88 = sphi 0, %s90
      %s91 = sphi 0, %s88
      %s92 = sphi 0, %s91
      %s108 = sphi 0, %s92
    $region4: #{unified_discriminator_forward.13} parent=1 // loop_header_branch
      %13 = sbr.rel (%p11) target = $region8
    $region5: #{unified_discriminator_forward.13} parent=1 // loop_body
      %s15 = ssub.s32 %s10, 1
      %s16 = ssub.s32 %s10, 2
      %s17 = sadd.s32 %s10, 1
      %s18 = ssub.s32 %s10, %s17
      %p19 = scmp.eq.s32.totalorder %s18, 0
      %s21 = sadd.s32 %s20, 1
      %s22 = scalar_select %p19, %s20, %s21
      %p25 = pneg %p19
      %p26 = scmp.eq.s32.totalorder %s10, 1
      %p27 = por %p25, %p26
      %p28 = scmp.ne.s32.totalorder %s20, %s23
      %p29 = scmp.eq.s32.totalorder %s10, 0
      %p30 = por %p28, %p29
      %p31 = scmp.ne.s32.totalorder %s20, %s23
      %p32 = scmp.eq.s32.totalorder %s15, 1
      %p33 = por %p31, %p32
      %p34 = scmp.ne.s32.totalorder %s23, %s24
      %p35 = scmp.eq.s32.totalorder %s15, 0
      %p36 = por %p34, %p35
      %p37 = scmp.ne.s32.totalorder %s23, %s24
      %p38 = scmp.eq.s32.totalorder %s16, 1
      %p39 = por %p37, %p38
      %p41 = scmp.ne.s32.totalorder %s24, %s40
      %p42 = scmp.eq.s32.totalorder %s16, 0
      %p43 = por %p41, %p42
      %s45 = sadd.s32 %s44, 1
      %p48 = scmp.eq.s32.totalorder %s10, 1
      %p49 = scmp.ne.s32.totalorder %s44, %s46
      %p50 = scmp.eq.s32.totalorder %s10, 0
      %p51 = por %p49, %p50
      %p52 = scmp.ne.s32.totalorder %s44, %s46
      %p53 = scmp.eq.s32.totalorder %s15, 1
      %p54 = por %p52, %p53
      %p55 = scmp.ne.s32.totalorder %s46, %s47
      %p56 = scmp.eq.s32.totalorder %s15, 0
      %p57 = por %p55, %p56
      %p58 = scmp.ne.s32.totalorder %s46, %s47
      %p59 = scmp.eq.s32.totalorder %s16, 1
      %p60 = por %p58, %p59
      %p62 = scmp.ne.s32.totalorder %s47, %s61
      %p63 = scmp.eq.s32.totalorder %s16, 0
      %p64 = por %p62, %p63
      %s66 = sadd.s32 %s65, 1
      %p69 = scmp.eq.s32.totalorder %s10, 1
      %p70 = scmp.ne.s32.totalorder %s65, %s67
      %p71 = scmp.eq.s32.totalorder %s10, 0
      %p72 = por %p70, %p71
      %p73 = scmp.ne.s32.totalorder %s65, %s67
      %p74 = scmp.eq.s32.totalorder %s15, 1
      %p75 = por %p73, %p74
      %p76 = scmp.ne.s32.totalorder %s67, %s68
      %p77 = scmp.eq.s32.totalorder %s15, 0
      %p78 = por %p76, %p77
      %p79 = scmp.ne.s32.totalorder %s67, %s68
      %p80 = scmp.eq.s32.totalorder %s16, 1
      %p81 = por %p79, %p80
      %p83 = scmp.ne.s32.totalorder %s68, %s82
      %p84 = scmp.eq.s32.totalorder %s16, 0
      %p85 = por %p83, %p84
      %s86 = ssub.s32 %s10, %s17
      %p87 = scmp.eq.s32.totalorder %s86, 0
      %s89 = sadd.s32 %s88, 1
      %s90 = scalar_select %p87, %s88, %s89
      %p93 = pneg %p87
      %p94 = scmp.eq.s32.totalorder %s10, 1
      %p95 = por %p93, %p94
      %p96 = scmp.ne.s32.totalorder %s88, %s91
      %p97 = scmp.eq.s32.totalorder %s10, 0
      %p98 = por %p96, %p97
      %p99 = scmp.ne.s32.totalorder %s88, %s91
      %p100 = scmp.eq.s32.totalorder %s15, 1
      %p101 = por %p99, %p100
      %p102 = scmp.ne.s32.totalorder %s91, %s92
      %p103 = scmp.eq.s32.totalorder %s15, 0
      %p104 = por %p102, %p103
      %p105 = scmp.ne.s32.totalorder %s91, %s92
      %p106 = scmp.eq.s32.totalorder %s16, 1
      %p107 = por %p105, %p106
      %p109 = scmp.ne.s32.totalorder %s92, %s108
      %p110 = scmp.eq.s32.totalorder %s16, 0
      %p111 = por %p109, %p110
      %p112 = scmp.le.s32.totalorder 1, %s10
      %p113 = scmp.lt.s32.totalorder %s10, 3
      %p114 = pnand %p112, %p113
      %p115 = pneg %p114
      // Predicated region
      $region9: #{unified_discriminator_forward.13} parent=5 // pred_check
        _
      $region10: #{unified_discriminator_forward.13} parent=5 // pred_check_branch
        %117 = sbr.rel (%p114) target = $region12
      $region11: #{unified_discriminator_forward.13} parent=5 // pred_region
        %s118 = ssub.s32 %s10, 1
        // Predicated region
        $region13: #{unified_discriminator_forward.13} parent=11 // pred_check
          %p119 = pneg %p57
        $region14: #{unified_discriminator_forward.13} parent=11 // pred_check_branch
          %121 = sbr.rel (%p119) target = $region16
        $region15: #{unified_discriminator_forward.13} parent=11 // pred_region
          _
        $region16: #{unified_discriminator_forward.13} parent=11 // pred_fallthru
          _
        // Predicated region
        $region17: #{unified_discriminator_forward.13} parent=11 // pred_check
          %p122 = pneg %p78
        $region18: #{unified_discriminator_forward.13} parent=11 // pred_check_branch
          %124 = sbr.rel (%p122) target = $region20
        $region19: #{unified_discriminator_forward.13} parent=11 // pred_region
          %s126 = ssub.s32 16, 16
          %127 = vsyncadd [#allocation3], %s126
          %s129 = sshll.u32 [#allocation2], 4
          %s130 = int_to_ptr.vmem [resolvable:$true] %s129
          %132 = dma.hbm_to_vmem [thread:$0]  %s2, 16, %s130, [#allocation3]
        $region20: #{unified_discriminator_forward.13} parent=11 // pred_fallthru
          _
      $region12: #{unified_discriminator_forward.13} parent=5 // pred_fallthru
        _
      %p133 = scmp.lt.s32.totalorder %s10, 2
      // Predicated region
      $region21: #{unified_discriminator_forward.13} parent=5 // pred_check
        %p134 = pneg %p133
      $region22: #{unified_discriminator_forward.13} parent=5 // pred_check_branch
        %136 = sbr.rel (%p134) target = $region24
      $region23: #{unified_discriminator_forward.13} parent=5 // pred_region
        // Predicated region
        $region25: #{unified_discriminator_forward.13} parent=23 // pred_check
          %p137 = pneg %p30
        $region26: #{unified_discriminator_forward.13} parent=23 // pred_check_branch
          %139 = sbr.rel (%p137) target = $region28
        $region27: #{unified_discriminator_forward.13} parent=23 // pred_region
          %s140 = smul.u32 10, %s10
          %p141 = scmp.lt.s32.totalorder %s140, 19
          %s142 = scalar_select %p141, %s140, 19
          %s143 = smul.addr %s142, 4
          %s144 = scalar_lea.vmem %s0, %s143
          %s145 = smul.u32 10, %s10
        $region28: #{unified_discriminator_forward.13} parent=23 // pred_fallthru
          _
      $region24: #{unified_discriminator_forward.13} parent=5 // pred_fallthru
        _
      %p146 = scmp.le.s32.totalorder 1, %s10
      %p147 = scmp.lt.s32.totalorder %s10, 3
      %p148 = pnand %p146, %p147
      %p149 = pneg %p148
      // Predicated region
      $region29: #{unified_discriminator_forward.13} parent=5 // pred_check
        _
      $region30: #{unified_discriminator_forward.13} parent=5 // pred_check_branch
        %151 = sbr.rel (%p148) target = $region32
      $region31: #{unified_discriminator_forward.13} parent=5 // pred_region
        %s152 = ssub.s32 %s10, 1
        // Predicated region
        $region33: #{unified_discriminator_forward.13} parent=31 // pred_check
          %p153 = pneg %p78
        $region34: #{unified_discriminator_forward.13} parent=31 // pred_check_branch
          %155 = sbr.rel (%p153) target = $region36
        $region35: #{unified_discriminator_forward.13} parent=31 // pred_region
          %156 = dma.done [#allocation3], 16
        $region36: #{unified_discriminator_forward.13} parent=31 // pred_fallthru
          _
        %s157 = smul.u32 10, %s15
        %p158 = scmp.lt.s32.totalorder %s157, 19
        %s159 = scalar_select %p158, %s157, 19
        %s160 = smul.addr %s159, 4
        %s161 = scalar_lea.vmem %s0, %s160
        %p162 = pneg %p36
        %p163 = pneg %p33
        %p164 = pneg %p57
        %p165 = pneg %p54
        %p166 = pneg %p78
        %p167 = pneg %p75
        %p168 = pneg %p104
        %p169 = pneg %p101
        %s170 = smul.u32 10, %s15
        %p171 = scmp.lt.s32.totalorder %s170, 19
        %s172 = scalar_select %p171, %s170, 19
        %s173 = smul.addr %s172, 8
        %s174 = scalar_lea.vmem %s3, %s173
        %s175 = smul.u32 10, %s15
        %p176 = scmp.lt.s32.totalorder %s175, 19
        %s177 = scalar_select %p176, %s175, 19
        %s178 = smul.addr %s177, 4
        %s179 = scalar_lea.vmem %s0, %s178
        %s180 = smul.u32 10, %s15
        %s181 = smul.u32 10, %s15
        %p182 = scmp.lt.s32.totalorder %s181, 19
        %s183 = scalar_select %p182, %s181, 19
        %s184 = smul.addr %s183, 8
        %s185 = scalar_lea.vmem %s3, %s184
        %s186 = smul.u32 10, %s15
        %v188 = vld [vmem:[%s179] sm:$0xf]
        %v189 = vld [vmem:[%s179 + $0x4] sm:$0xf]
        %v190 = vld [vmem:[%s179 + $0x8] sm:$0xf]
        %v191 = vld [vmem:[%s179 + $0xc] sm:$0xf]
        %v192 = vld [vmem:[%s179 + $0x10] sm:$0xf]
        %v193 = vld [vmem:[%s179 + $0x14] sm:$0xf]
        %v194 = vld [vmem:[%s179 + $0x18] sm:$0xf]
        %v195 = vld [vmem:[%s179 + $0x1c] sm:$0xf]
        %v196 = vld [vmem:[%s179 + $0x20] sm:$0xf]
        %v197 = vld [vmem:[%s179 + $0x24] sm:$0xf]
        %v198 = vld [vmem:[%s1] sm:$0xf]
        %v199 = vld [vmem:[%s1 + $0x4] sm:$0xf]
        %v200 = vld [vmem:[%s1 + $0x8] sm:$0xf]
        %v201 = vld [vmem:[#allocation2] sm:$0x1]
        %v203 = vlaneseq
        %v204 = vshrl.u32 %v203, 7
        %v205 = vsub.s32 0, %v204
        %v206 = vrot.slane %v201, %v205
        %v218 = vunpack.c.l.b16 %v188
        %v219 = vunpack.c.l.b16 %v189
        %v220 = vunpack.c.l.b16 %v190
        %v221 = vunpack.c.l.b16 %v191
        %v222 = vunpack.c.l.b16 %v192
        %v223 = vunpack.c.l.b16 %v193
        %v224 = vunpack.c.l.b16 %v194
        %v225 = vunpack.c.l.b16 %v195
        %v226 = vunpack.c.l.b16 %v196
        %v227 = vunpack.c.l.b16 %v197
        %v228 = vpack.c.b16 %v219, %v218
        %v229 = vpack.c.b16 %v221, %v220
        %v230 = vpack.c.b16 %v223, %v222
        %v231 = vpack.c.b16 %v225, %v224
        %v232 = vpack.c.b16 %v227, %v226
        %v236 = vunpack.c.l.b16 %v198
        %v237 = vunpack.c.l.b16 %v199
        %v238 = vunpack.c.l.b16 %v200
        %v239 = vpack.c.b16 %v237, %v236
        %v240 = vpack.c.b16 %v238, %v238
        %vm242 = vcmask 195584
        %v244 = vsel %vm242, %v228, 0
        %v247 = vsel %vm242, %v229, 0
        %v250 = vsel %vm242, %v230, 0
        %v253 = vsel %vm242, %v231, 0
        %v256 = vsel %vm242, %v232, 0
        %vm258 = vcmask 1043456
        %v260 = vsel %vm258, %v240, 0
        %262 = vmatprep.subr.bf16.mxu0 0
        %263 = vmatpush1.bf16.msra.mxu0 %v239
        %264 = vmatprep.subr.bf16.mxu0 0
        %265 = vmatpush1.bf16.msra.mxu0 %v260
        %266 = vmatprep.subr.bf16.mxu0 0
        %267 = vmatpush1.bf16.msra.mxu0 0
        %268 = vmatprep.subr.bf16.mxu0 0
        %269 = vmatpush1.bf16.msra.mxu0 0
        %270 = vmatprep.subr.bf16.mxu0 0
        %271 = vmatpush1.bf16.msra.mxu0 0
        %272 = vmatprep.subr.bf16.mxu0 0
        %273 = vmatpush1.bf16.msra.mxu0 0
        %274 = vmatprep.subr.bf16.mxu0 0
        %275 = vmatpush1.bf16.msra.mxu0 0
        %276 = vmatprep.subr.bf16.mxu0 0
        %277 = vmatpush1.bf16.msra.mxu0 0
        %278 = vmatprep.subr.bf16.mxu0 0
        %279 = vmatpush1.bf16.msra.mxu0 0
        %280 = vmatprep.subr.bf16.mxu0 0
        %281 = vmatpush1.bf16.msra.mxu0 0
        %282 = vmatprep.subr.bf16.mxu0 0
        %283 = vmatpush1.bf16.msra.mxu0 0
        %284 = vmatprep.subr.bf16.mxu0 0
        %285 = vmatpush1.bf16.msra.mxu0 0
        %286 = vmatprep.subr.bf16.mxu0 0
        %287 = vmatpush1.bf16.msra.mxu0 0
        %288 = vmatprep.subr.bf16.mxu0 0
        %289 = vmatpush1.bf16.msra.mxu0 0
        %290 = vmatprep.subr.bf16.mxu0 0
        %291 = vmatpush1.bf16.msra.mxu0 0
        %292 = vmatprep.subr.bf16.mxu0 0
        %293 = vmatpush1.bf16.msra.mxu0 0
        %294 = vmatprep.mubr.bf16.mxu0 0
        %295 = vmatmul.mubr.bf16.gmra.mrb[0].mxu0 %v244
        %v296 = vpop.f32.mrb[0].mxu0
        %v297 = vadd.f32 %v206, %v296
        %v298 = vpop.f32.mrb[0].mxu0
        %v299 = vpop.f32.mrb[0].mxu0
        %v300 = vadd.f32 %v206, %v299
        %v301 = vpop.f32.mrb[0].mxu0
        %302 = vmatprep.mubr.bf16.mxu0 0
        %303 = vmatmul.mubr.bf16.gmra.mrb[0].mxu0 %v247
        %v304 = vpop.f32.mrb[0].mxu0
        %v305 = vadd.f32 %v206, %v304
        %v306 = vpop.f32.mrb[0].mxu0
        %v307 = vpop.f32.mrb[0].mxu0
        %v308 = vadd.f32 %v206, %v307
        %v309 = vpop.f32.mrb[0].mxu0
        %310 = vmatprep.mubr.bf16.mxu0 0
        %311 = vmatmul.mubr.bf16.gmra.mrb[0].mxu0 %v250
        %v312 = vpop.f32.mrb[0].mxu0
        %v313 = vadd.f32 %v206, %v312
        %v314 = vpop.f32.mrb[0].mxu0
        %v315 = vpop.f32.mrb[0].mxu0
        %v316 = vadd.f32 %v206, %v315
        %v317 = vpop.f32.mrb[0].mxu0
        %318 = vmatprep.mubr.bf16.mxu0 0
        %319 = vmatmul.mubr.bf16.gmra.mrb[0].mxu0 %v253
        %v320 = vpop.f32.mrb[0].mxu0
        %v321 = vadd.f32 %v206, %v320
        %v322 = vpop.f32.mrb[0].mxu0
        %v323 = vpop.f32.mrb[0].mxu0
        %v324 = vadd.f32 %v206, %v323
        %v325 = vpop.f32.mrb[0].mxu0
        %326 = vmatprep.mubr.bf16.mxu0 0
        %327 = vmatmul.mubr.bf16.gmra.mrb[0].mxu0 %v256
        %v328 = vpop.f32.mrb[0].mxu0
        %v329 = vadd.f32 %v206, %v328
        %v330 = vpop.f32.mrb[0].mxu0
        %v331 = vpop.f32.mrb[0].mxu0
        %v332 = vadd.f32 %v206, %v331
        %v333 = vpop.f32.mrb[0].mxu0
        %334 = vdwg.mxu0
        %v335 = vsub.f32 0.0, %v297
        %v336 = vsub.f32 0.0, %v300
        %v337 = vsub.f32 0.0, %v305
        %v338 = vsub.f32 0.0, %v308
        %v339 = vsub.f32 0.0, %v313
        %v340 = vsub.f32 0.0, %v316
        %v341 = vsub.f32 0.0, %v321
        %v342 = vsub.f32 0.0, %v324
        %v343 = vsub.f32 0.0, %v329
        %v344 = vsub.f32 0.0, %v332
        %v345 = vmul.f32 %v335, 1.442695
        %v346 = vpow.pop %v345
        %v347 = vmul.f32 %v336, 1.442695
        %v348 = vpow.pop %v347
        %v349 = vmul.f32 %v337, 1.442695
        %v350 = vpow.pop %v349
        %v351 = vmul.f32 %v338, 1.442695
        %v352 = vpow.pop %v351
        %v353 = vmul.f32 %v339, 1.442695
        %v354 = vpow.pop %v353
        %v355 = vmul.f32 %v340, 1.442695
        %v356 = vpow.pop %v355
        %v357 = vmul.f32 %v341, 1.442695
        %v358 = vpow.pop %v357
        %v359 = vmul.f32 %v342, 1.442695
        %v360 = vpow.pop %v359
        %v361 = vmul.f32 %v343, 1.442695
        %v362 = vpow.pop %v361
        %v363 = vmul.f32 %v344, 1.442695
        %v364 = vpow.pop %v363
        %v365 = vadd.f32 %v346, 1.0
        %v366 = vadd.f32 %v348, 1.0
        %v367 = vadd.f32 %v350, 1.0
        %v368 = vadd.f32 %v352, 1.0
        %v369 = vadd.f32 %v354, 1.0
        %v370 = vadd.f32 %v356, 1.0
        %v371 = vadd.f32 %v358, 1.0
        %v372 = vadd.f32 %v360, 1.0
        %v373 = vadd.f32 %v362, 1.0
        %v374 = vadd.f32 %v364, 1.0
        %v375 = vrcp.pop %v365
        %v376 = vrcp.pop %v366
        %v377 = vrcp.pop %v367
        %v378 = vrcp.pop %v368
        %v379 = vrcp.pop %v369
        %v380 = vrcp.pop %v370
        %v381 = vrcp.pop %v371
        %v382 = vrcp.pop %v372
        %v383 = vrcp.pop %v373
        %v384 = vrcp.pop %v374
        %395 = vrot.lane.b32.xlu0 %v375, 120
        %v396 = vpop.permute.xlu0 %395
        %397 = vrot.lane.b32.xlu0 %v376, 120
        %v398 = vpop.permute.xlu0 %397
        %399 = vrot.lane.b32.xlu0 %v377, 120
        %v400 = vpop.permute.xlu0 %399
        %401 = vrot.lane.b32.xlu0 %v378, 120
        %v402 = vpop.permute.xlu0 %401
        %403 = vrot.lane.b32.xlu0 %v379, 120
        %v404 = vpop.permute.xlu0 %403
        %405 = vrot.lane.b32.xlu0 %v380, 120
        %v406 = vpop.permute.xlu0 %405
        %407 = vrot.lane.b32.xlu0 %v381, 120
        %v408 = vpop.permute.xlu0 %407
        %409 = vrot.lane.b32.xlu0 %v382, 120
        %v410 = vpop.permute.xlu0 %409
        %411 = vrot.lane.b32.xlu0 %v383, 120
        %v412 = vpop.permute.xlu0 %411
        %413 = vrot.lane.b32.xlu0 %v384, 120
        %v414 = vpop.permute.xlu0 %413
        %v425 = vmul.f32 %v297, %v396
        %v426 = vmul.f32 %v300, %v398
        %v427 = vmul.f32 %v305, %v400
        %v428 = vmul.f32 %v308, %v402
        %v429 = vmul.f32 %v313, %v404
        %v430 = vmul.f32 %v316, %v406
        %v431 = vmul.f32 %v321, %v408
        %v432 = vmul.f32 %v324, %v410
        %v433 = vmul.f32 %v329, %v412
        %v434 = vmul.f32 %v332, %v414
        %vm435 = vcmask 64512
        %436 = vst.msk [vmem:[%s185] sm:$0xff] %vm435, %v425
        %437 = vst.msk [vmem:[%s185 + $0x8] sm:$0xff] %vm435, %v426
        %438 = vst.msk [vmem:[%s185 + $0x10] sm:$0xff] %vm435, %v427
        %439 = vst.msk [vmem:[%s185 + $0x18] sm:$0xff] %vm435, %v428
        %440 = vst.msk [vmem:[%s185 + $0x20] sm:$0xff] %vm435, %v429
        %441 = vst.msk [vmem:[%s185 + $0x28] sm:$0xff] %vm435, %v430
        %442 = vst.msk [vmem:[%s185 + $0x30] sm:$0xff] %vm435, %v431
        %443 = vst.msk [vmem:[%s185 + $0x38] sm:$0xff] %vm435, %v432
        %444 = vst.msk [vmem:[%s185 + $0x40] sm:$0xff] %vm435, %v433
        %445 = vst.msk [vmem:[%s185 + $0x48] sm:$0xff] %vm435, %v434
        %s446 = smul.u32 10, %s15
        %p447 = scmp.lt.s32.totalorder %s446, 19
        %s448 = scalar_select %p447, %s446, 19
        %s449 = smul.addr %s448, 8
        %s450 = scalar_lea.vmem %s3, %s449
        // Predicated region
        $region37: #{unified_discriminator_forward.13} parent=31 // pred_check
          %p451 = pneg %p101
        $region38: #{unified_discriminator_forward.13} parent=31 // pred_check_branch
          %453 = sbr.rel (%p451) target = $region40
        $region39: #{unified_discriminator_forward.13} parent=31 // pred_region
          %s454 = smul.u32 10, %s15
        $region40: #{unified_discriminator_forward.13} parent=31 // pred_fallthru
          _
      $region32: #{unified_discriminator_forward.13} parent=5 // pred_fallthru
        _
      %p455 = scmp.le.s32.totalorder 2, %s10
      // Predicated region
      $region41: #{unified_discriminator_forward.13} parent=5 // pred_check
        %p456 = pneg %p455
      $region42: #{unified_discriminator_forward.13} parent=5 // pred_check_branch
        %458 = sbr.rel (%p456) target = $region44
      $region43: #{unified_discriminator_forward.13} parent=5 // pred_region
        %s459 = ssub.s32 %s10, 2
        // Predicated region
        $region45: #{unified_discriminator_forward.13} parent=43 // pred_check
          %p460 = pneg %p107
        $region46: #{unified_discriminator_forward.13} parent=43 // pred_check_branch
          %462 = sbr.rel (%p460) target = $region48
        $region47: #{unified_discriminator_forward.13} parent=43 // pred_region
          %s463 = smul.u32 10, %s16
          %p464 = scmp.lt.s32.totalorder %s463, 19
          %s465 = scalar_select %p464, %s463, 19
          %s466 = smul.addr %s465, 8
          %s467 = scalar_lea.vmem %s3, %s466
        $region48: #{unified_discriminator_forward.13} parent=43 // pred_fallthru
          _
      $region44: #{unified_discriminator_forward.13} parent=5 // pred_fallthru
        _
    $region6: #{unified_discriminator_forward.13} parent=1 // loop_footer
      %s14 = sadd.s32 1, %s10
    $region7: #{unified_discriminator_forward.13} parent=1 // loop_footer_branch
      %9 = sbr.rel target = $region3
    $region8: #{unified_discriminator_forward.13} parent=1 // loop_exit
      _
    %468 = vsyncpa [#allocation3], 1
    %s469 = scalar_lea.sflag [#allocation3], 1
    %470 = vsyncpa %s469, 1

// kernel: unified_discriminator_forward.14
$region0: #{unified_discriminator_forward.14}
  #allocation0 [shape = 'u32[]', space=smem, size = 0x4, offset = 0x4, fixed_abs, tag = 'smem constant byte address 0x4 - core index']
  #allocation1 [shape = 'u32[144,128]{1,0:T(1,128)}', space=vmem, size = 0x12000, scoped, tag = 'internal scratch']
  %s0 = inlined_call_operand.vmem [shape: bf16[32,192], index: 0, kind: input, shape index: {}]
  %s1 = inlined_call_operand.vmem [shape: bf16[192,16], index: 1, kind: input, shape index: {}]
  %s2 = inlined_call_operand.vmem [shape: f32[1,16], index: 2, kind: input, shape index: {}]
  %s3 = inlined_call_operand.vmem [shape: f32[32,8], index: 3, kind: output, shape index: {}]
  %s4 = sld [smem:[#allocation0]]
  $region45: #{unified_discriminator_forward.14} parent=0
    _
  %s6 = ssub.s32 1, %s4
  %s7 = scalar_select 0, %s6, %s4
  loop: start=0, step=1, limit=4
  $region2: #{unified_discriminator_forward.14} parent=0 // loop_pre_header
    _
  $region3: #{unified_discriminator_forward.14} parent=0 // loop_header
    %s9 = sphi 0, %s13
    %p10 = scmp.ge.s32.totalorder %s9, 4
    %s19 = sphi 0, %s21
    %s22 = sphi 0, %s19
    %s23 = sphi 0, %s22
    %s39 = sphi 0, %s23
    %s43 = sphi 0, %s43
    %s45 = sphi 0, %s43
    %s46 = sphi 0, %s45
    %s60 = sphi 0, %s46
    %s64 = sphi 0, %s64
    %s66 = sphi 0, %s64
    %s67 = sphi 0, %s66
    %s81 = sphi 0, %s67
    %s87 = sphi 0, %s89
    %s90 = sphi 0, %s87
    %s91 = sphi 0, %s90
    %s107 = sphi 0, %s91
  $region4: #{unified_discriminator_forward.14} parent=0 // loop_header_branch
    %12 = sbr.rel (%p10) target = $region8
  $region5: #{unified_discriminator_forward.14} parent=0 // loop_body
    %s14 = ssub.s32 %s9, 1
    %s15 = ssub.s32 %s9, 2
    %s16 = sadd.s32 %s9, 1
    %s17 = ssub.s32 %s9, %s16
    %p18 = scmp.eq.s32.totalorder %s17, 0
    %s20 = sadd.s32 %s19, 1
    %s21 = scalar_select %p18, %s19, %s20
    %p24 = pneg %p18
    %p25 = scmp.eq.s32.totalorder %s9, 1
    %p26 = por %p24, %p25
    %p27 = scmp.ne.s32.totalorder %s19, %s22
    %p28 = scmp.eq.s32.totalorder %s9, 0
    %p29 = por %p27, %p28
    %p30 = scmp.ne.s32.totalorder %s19, %s22
    %p31 = scmp.eq.s32.totalorder %s14, 1
    %p32 = por %p30, %p31
    %p33 = scmp.ne.s32.totalorder %s22, %s23
    %p34 = scmp.eq.s32.totalorder %s14, 0
    %p35 = por %p33, %p34
    %p36 = scmp.ne.s32.totalorder %s22, %s23
    %p37 = scmp.eq.s32.totalorder %s15, 1
    %p38 = por %p36, %p37
    %p40 = scmp.ne.s32.totalorder %s23, %s39
    %p41 = scmp.eq.s32.totalorder %s15, 0
    %p42 = por %p40, %p41
    %s44 = sadd.s32 %s43, 1
    %p47 = scmp.eq.s32.totalorder %s9, 1
    %p48 = scmp.ne.s32.totalorder %s43, %s45
    %p49 = scmp.eq.s32.totalorder %s9, 0
    %p50 = por %p48, %p49
    %p51 = scmp.ne.s32.totalorder %s43, %s45
    %p52 = scmp.eq.s32.totalorder %s14, 1
    %p53 = por %p51, %p52
    %p54 = scmp.ne.s32.totalorder %s45, %s46
    %p55 = scmp.eq.s32.totalorder %s14, 0
    %p56 = por %p54, %p55
    %p57 = scmp.ne.s32.totalorder %s45, %s46
    %p58 = scmp.eq.s32.totalorder %s15, 1
    %p59 = por %p57, %p58
    %p61 = scmp.ne.s32.totalorder %s46, %s60
    %p62 = scmp.eq.s32.totalorder %s15, 0
    %p63 = por %p61, %p62
    %s65 = sadd.s32 %s64, 1
    %p68 = scmp.eq.s32.totalorder %s9, 1
    %p69 = scmp.ne.s32.totalorder %s64, %s66
    %p70 = scmp.eq.s32.totalorder %s9, 0
    %p71 = por %p69, %p70
    %p72 = scmp.ne.s32.totalorder %s64, %s66
    %p73 = scmp.eq.s32.totalorder %s14, 1
    %p74 = por %p72, %p73
    %p75 = scmp.ne.s32.totalorder %s66, %s67
    %p76 = scmp.eq.s32.totalorder %s14, 0
    %p77 = por %p75, %p76
    %p78 = scmp.ne.s32.totalorder %s66, %s67
    %p79 = scmp.eq.s32.totalorder %s15, 1
    %p80 = por %p78, %p79
    %p82 = scmp.ne.s32.totalorder %s67, %s81
    %p83 = scmp.eq.s32.totalorder %s15, 0
    %p84 = por %p82, %p83
    %s85 = ssub.s32 %s9, %s16
    %p86 = scmp.eq.s32.totalorder %s85, 0
    %s88 = sadd.s32 %s87, 1
    %s89 = scalar_select %p86, %s87, %s88
    %p92 = pneg %p86
    %p93 = scmp.eq.s32.totalorder %s9, 1
    %p94 = por %p92, %p93
    %p95 = scmp.ne.s32.totalorder %s87, %s90
    %p96 = scmp.eq.s32.totalorder %s9, 0
    %p97 = por %p95, %p96
    %p98 = scmp.ne.s32.totalorder %s87, %s90
    %p99 = scmp.eq.s32.totalorder %s14, 1
    %p100 = por %p98, %p99
    %p101 = scmp.ne.s32.totalorder %s90, %s91
    %p102 = scmp.eq.s32.totalorder %s14, 0
    %p103 = por %p101, %p102
    %p104 = scmp.ne.s32.totalorder %s90, %s91
    %p105 = scmp.eq.s32.totalorder %s15, 1
    %p106 = por %p104, %p105
    %p108 = scmp.ne.s32.totalorder %s91, %s107
    %p109 = scmp.eq.s32.totalorder %s15, 0
    %p110 = por %p108, %p109
    %p111 = scmp.le.s32.totalorder 1, %s9
    %p112 = scmp.lt.s32.totalorder %s9, 3
    %p113 = pnand %p111, %p112
    %p114 = pneg %p113
    // Predicated region
    $region9: #{unified_discriminator_forward.14} parent=5 // pred_check
      _
    $region10: #{unified_discriminator_forward.14} parent=5 // pred_check_branch
      %116 = sbr.rel (%p113) target = $region12
    $region11: #{unified_discriminator_forward.14} parent=5 // pred_region
      %s117 = ssub.s32 %s9, 1
      // Predicated region
      $region13: #{unified_discriminator_forward.14} parent=11 // pred_check
        %p118 = pneg %p56
      $region14: #{unified_discriminator_forward.14} parent=11 // pred_check_branch
        %120 = sbr.rel (%p118) target = $region16
      $region15: #{unified_discriminator_forward.14} parent=11 // pred_region
        _
      $region16: #{unified_discriminator_forward.14} parent=11 // pred_fallthru
        _
      // Predicated region
      $region17: #{unified_discriminator_forward.14} parent=11 // pred_check
        %p121 = pneg %p77
      $region18: #{unified_discriminator_forward.14} parent=11 // pred_check_branch
        %123 = sbr.rel (%p121) target = $region20
      $region19: #{unified_discriminator_forward.14} parent=11 // pred_region
        _
      $region20: #{unified_discriminator_forward.14} parent=11 // pred_fallthru
        _
    $region12: #{unified_discriminator_forward.14} parent=5 // pred_fallthru
      _
    %p124 = scmp.lt.s32.totalorder %s9, 2
    // Predicated region
    $region21: #{unified_discriminator_forward.14} parent=5 // pred_check
      %p125 = pneg %p124
    $region22: #{unified_discriminator_forward.14} parent=5 // pred_check_branch
      %127 = sbr.rel (%p125) target = $region24
    $region23: #{unified_discriminator_forward.14} parent=5 // pred_region
      // Predicated region
      $region25: #{unified_discriminator_forward.14} parent=23 // pred_check
        %p128 = pneg %p29
      $region26: #{unified_discriminator_forward.14} parent=23 // pred_check_branch
        %130 = sbr.rel (%p128) target = $region28
      $region27: #{unified_discriminator_forward.14} parent=23 // pred_region
        %s131 = smul.u32 2, %s9
        %p132 = scmp.lt.s32.totalorder %s131, 3
        %s133 = scalar_select %p132, %s131, 3
        %s134 = smul.addr %s133, 2
        %s135 = smul.addr %s134, 4
        %s136 = scalar_lea.vmem %s0, %s135
        %s137 = smul.u32 2, %s9
      $region28: #{unified_discriminator_forward.14} parent=23 // pred_fallthru
        _
    $region24: #{unified_discriminator_forward.14} parent=5 // pred_fallthru
      _
    %p138 = scmp.le.s32.totalorder 1, %s9
    %p139 = scmp.lt.s32.totalorder %s9, 3
    %p140 = pnand %p138, %p139
    %p141 = pneg %p140
    // Predicated region
    $region29: #{unified_discriminator_forward.14} parent=5 // pred_check
      _
    $region30: #{unified_discriminator_forward.14} parent=5 // pred_check_branch
      %143 = sbr.rel (%p140) target = $region32
    $region31: #{unified_discriminator_forward.14} parent=5 // pred_region
      %s144 = ssub.s32 %s9, 1
      %s145 = smul.u32 2, %s14
      %p146 = scmp.lt.s32.totalorder %s145, 3
      %s147 = scalar_select %p146, %s145, 3
      %s148 = smul.addr %s147, 2
      %s149 = smul.addr %s148, 4
      %s150 = scalar_lea.vmem %s0, %s149
      %p151 = pneg %p35
      %p152 = pneg %p32
      %p153 = pneg %p56
      %p154 = pneg %p53
      %p155 = pneg %p77
      %p156 = pneg %p74
      %p157 = pneg %p103
      %p158 = pneg %p100
      %s159 = smul.u32 2, %s14
      %p160 = scmp.lt.s32.totalorder %s159, 3
      %s161 = scalar_select %p160, %s159, 3
      %s162 = smul.addr %s161, 8
      %s163 = scalar_lea.vmem %s3, %s162
      %s164 = smul.u32 2, %s14
      %p165 = scmp.lt.s32.totalorder %s164, 3
      %s166 = scalar_select %p165, %s164, 3
      %s167 = smul.addr %s166, 2
      %s168 = smul.addr %s167, 4
      %s169 = scalar_lea.vmem %s0, %s168
      %s170 = smul.u32 2, %s14
      %s171 = smul.u32 2, %s14
      %p172 = scmp.lt.s32.totalorder %s171, 3
      %s173 = scalar_select %p172, %s171, 3
      %s174 = smul.addr %s173, 8
      %s175 = scalar_lea.vmem %s3, %s174
      %s176 = smul.u32 2, %s14
      %v178 = vld [vmem:[%s169] sm:$0xff]
      %v179 = vld [vmem:[%s169 + $0x8] sm:$0xff]
      %v180 = vld [vmem:[%s1] sm:$0xf]
      %v181 = vld [vmem:[%s1 + $0x4] sm:$0xf]
      %v182 = vld [vmem:[%s1 + $0x8] sm:$0xf]
      %v183 = vld [vmem:[%s1 + $0xc] sm:$0xf]
      %v184 = vld [vmem:[%s1 + $0x10] sm:$0xf]
      %v185 = vld [vmem:[%s1 + $0x14] sm:$0xf]
      %v186 = vld [vmem:[%s1 + $0x18] sm:$0xf]
      %v187 = vld [vmem:[%s1 + $0x1c] sm:$0xf]
      %v188 = vld [vmem:[%s1 + $0x20] sm:$0xf]
      %v189 = vld [vmem:[%s1 + $0x24] sm:$0xf]
      %v190 = vld [vmem:[%s1 + $0x28] sm:$0xf]
      %v191 = vld [vmem:[%s1 + $0x2c] sm:$0xf]
      %v192 = vld [vmem:[%s1 + $0x30] sm:$0xf]
      %v193 = vld [vmem:[%s1 + $0x34] sm:$0xf]
      %v194 = vld [vmem:[%s1 + $0x38] sm:$0xf]
      %v195 = vld [vmem:[%s1 + $0x3c] sm:$0xf]
      %v196 = vld [vmem:[%s1 + $0x40] sm:$0xf]
      %v197 = vld [vmem:[%s1 + $0x44] sm:$0xf]
      %v198 = vld [vmem:[%s1 + $0x48] sm:$0xf]
      %v199 = vld [vmem:[%s1 + $0x4c] sm:$0xf]
      %v200 = vld [vmem:[%s1 + $0x50] sm:$0xf]
      %v201 = vld [vmem:[%s1 + $0x54] sm:$0xf]
      %v202 = vld [vmem:[%s1 + $0x58] sm:$0xf]
      %v203 = vld [vmem:[%s1 + $0x5c] sm:$0xf]
      %v204 = vld [vmem:[%s2] sm:$0x1]
      %v206 = vlaneseq
      %v207 = vshrl.u32 %v206, 7
      %v208 = vsub.s32 0, %v207
      %v209 = vrot.slane %v204, %v208
      %v213 = vunpack.c.l.b16 %v178
      %v214 = vunpack.c.h.b16 %v178
      %v215 = vunpack.c.l.b16 %v179
      %v216 = vunpack.c.h.b16 %v179
      %v217 = vpack.c.b16 %v215, %v213
      %v218 = vpack.c.b16 %v216, %v214
      %v244 = vunpack.c.l.b16 %v180
      %v245 = vunpack.c.l.b16 %v181
      %v246 = vunpack.c.l.b16 %v182
      %v247 = vunpack.c.l.b16 %v183
      %v248 = vunpack.c.l.b16 %v184
      %v249 = vunpack.c.l.b16 %v185
      %v250 = vunpack.c.l.b16 %v186
      %v251 = vunpack.c.l.b16 %v187
      %v252 = vunpack.c.l.b16 %v188
      %v253 = vunpack.c.l.b16 %v189
      %v254 = vunpack.c.l.b16 %v190
      %v255 = vunpack.c.l.b16 %v191
      %v256 = vunpack.c.l.b16 %v192
      %v257 = vunpack.c.l.b16 %v193
      %v258 = vunpack.c.l.b16 %v194
      %v259 = vunpack.c.l.b16 %v195
      %v260 = vunpack.c.l.b16 %v196
      %v261 = vunpack.c.l.b16 %v197
      %v262 = vunpack.c.l.b16 %v198
      %v263 = vunpack.c.l.b16 %v199
      %v264 = vunpack.c.l.b16 %v200
      %v265 = vunpack.c.l.b16 %v201
      %v266 = vunpack.c.l.b16 %v202
      %v267 = vunpack.c.l.b16 %v203
      %v268 = vpack.c.b16 %v245, %v244
      %v269 = vpack.c.b16 %v247, %v246
      %v270 = vpack.c.b16 %v249, %v248
      %v271 = vpack.c.b16 %v251, %v250
      %v272 = vpack.c.b16 %v253, %v252
      %v273 = vpack.c.b16 %v255, %v254
      %v274 = vpack.c.b16 %v257, %v256
      %v275 = vpack.c.b16 %v259, %v258
      %v276 = vpack.c.b16 %v261, %v260
      %v277 = vpack.c.b16 %v263, %v262
      %v278 = vpack.c.b16 %v265, %v264
      %v279 = vpack.c.b16 %v267, %v266
      %vm292 = vcmask 523264
      %v294 = vsel %vm292, %v218, 0
      %296 = vmatprep.subr.bf16.mxu0 0
      %297 = vmatpush1.bf16.msra.mxu0 %v268
      %298 = vmatprep.subr.bf16.mxu0 0
      %299 = vmatpush1.bf16.msra.mxu0 %v269
      %300 = vmatprep.subr.bf16.mxu0 0
      %301 = vmatpush1.bf16.msra.mxu0 %v270
      %302 = vmatprep.subr.bf16.mxu0 0
      %303 = vmatpush1.bf16.msra.mxu0 %v271
      %304 = vmatprep.subr.bf16.mxu0 0
      %305 = vmatpush1.bf16.msra.mxu0 %v272
      %306 = vmatprep.subr.bf16.mxu0 0
      %307 = vmatpush1.bf16.msra.mxu0 %v273
      %308 = vmatprep.subr.bf16.mxu0 0
      %309 = vmatpush1.bf16.msra.mxu0 %v274
      %310 = vmatprep.subr.bf16.mxu0 0
      %311 = vmatpush1.bf16.msra.mxu0 %v275
      %312 = vmatprep.subr.bf16.mxu0 0
      %313 = vmatpush1.bf16.msra.mxu0 %v276
      %314 = vmatprep.subr.bf16.mxu0 0
      %315 = vmatpush1.bf16.msra.mxu0 %v277
      %316 = vmatprep.subr.bf16.mxu0 0
      %317 = vmatpush1.bf16.msra.mxu0 %v278
      %318 = vmatprep.subr.bf16.mxu0 0
      %319 = vmatpush1.bf16.msra.mxu0 %v279
      %320 = vmatprep.subr.bf16.mxu0 0
      %321 = vmatpush1.bf16.msra.mxu0 0
      %322 = vmatprep.subr.bf16.mxu0 0
      %323 = vmatpush1.bf16.msra.mxu0 0
      %324 = vmatprep.subr.bf16.mxu0 0
      %325 = vmatpush1.bf16.msra.mxu0 0
      %326 = vmatprep.subr.bf16.mxu0 0
      %327 = vmatpush1.bf16.msra.mxu0 0
      %328 = vmatprep.mubr.bf16.mxu0 %v294
      %329 = vmatmul.mubr.bf16.gmra.mrb[0].mxu0 %v217
      %v330 = vpop.f32.mrb[0].mxu0
      %v331 = vadd.f32 %v209, %v330
      %v332 = vpop.f32.mrb[0].mxu0
      %v333 = vpop.f32.mrb[0].mxu0
      %v334 = vadd.f32 %v209, %v333
      %v335 = vpop.f32.mrb[0].mxu0
      %336 = vdwg.mxu0
      %v337 = vsub.f32 0.0, %v331
      %v338 = vsub.f32 0.0, %v334
      %v339 = vmul.f32 %v337, 1.442695
      %v340 = vpow.pop %v339
      %v341 = vmul.f32 %v338, 1.442695
      %v342 = vpow.pop %v341
      %v343 = vadd.f32 %v340, 1.0
      %v344 = vadd.f32 %v342, 1.0
      %v345 = vrcp.pop %v343
      %v346 = vrcp.pop %v344
      %349 = vrot.lane.b32.xlu0 %v345, 120
      %v350 = vpop.permute.xlu0 %349
      %351 = vrot.lane.b32.xlu0 %v346, 120
      %v352 = vpop.permute.xlu0 %351
      %v355 = vmul.f32 %v331, %v350
      %v356 = vmul.f32 %v334, %v352
      %vm357 = vcmask 64512
      %358 = vst.msk [vmem:[%s175] sm:$0xff] %vm357, %v355
      %359 = vst.msk [vmem:[%s175 + $0x8] sm:$0xff] %vm357, %v356
      %s360 = smul.u32 2, %s14
      %p361 = scmp.lt.s32.totalorder %s360, 3
      %s362 = scalar_select %p361, %s360, 3
      %s363 = smul.addr %s362, 8
      %s364 = scalar_lea.vmem %s3, %s363
      // Predicated region
      $region33: #{unified_discriminator_forward.14} parent=31 // pred_check
        %p365 = pneg %p100
      $region34: #{unified_discriminator_forward.14} parent=31 // pred_check_branch
        %367 = sbr.rel (%p365) target = $region36
      $region35: #{unified_discriminator_forward.14} parent=31 // pred_region
        %s368 = smul.u32 2, %s14
      $region36: #{unified_discriminator_forward.14} parent=31 // pred_fallthru
        _
    $region32: #{unified_discriminator_forward.14} parent=5 // pred_fallthru
      _
    %p369 = scmp.le.s32.totalorder 2, %s9
    // Predicated region
    $region37: #{unified_discriminator_forward.14} parent=5 // pred_check
      %p370 = pneg %p369
    $region38: #{unified_discriminator_forward.14} parent=5 // pred_check_branch
      %372 = sbr.rel (%p370) target = $region40
    $region39: #{unified_discriminator_forward.14} parent=5 // pred_region
      %s373 = ssub.s32 %s9, 2
      // Predicated region
      $region41: #{unified_discriminator_forward.14} parent=39 // pred_check
        %p374 = pneg %p106
      $region42: #{unified_discriminator_forward.14} parent=39 // pred_check_branch
        %376 = sbr.rel (%p374) target = $region44
      $region43: #{unified_discriminator_forward.14} parent=39 // pred_region
        %s377 = smul.u32 2, %s15
        %p378 = scmp.lt.s32.totalorder %s377, 3
        %s379 = scalar_select %p378, %s377, 3
        %s380 = smul.addr %s379, 8
        %s381 = scalar_lea.vmem %s3, %s380
      $region44: #{unified_discriminator_forward.14} parent=39 // pred_fallthru
        _
    $region40: #{unified_discriminator_forward.14} parent=5 // pred_fallthru
      _
  $region6: #{unified_discriminator_forward.14} parent=0 // loop_footer
    %s13 = sadd.s32 1, %s9
  $region7: #{unified_discriminator_forward.14} parent=0 // loop_footer_branch
    %8 = sbr.rel target = $region3
  $region8: #{unified_discriminator_forward.14} parent=0 // loop_exit
    _

// kernel: unified_discriminator_forward.15
$region0: #{unified_discriminator_forward.15}
  #allocation0 [shape = 'u32[]', space=smem, size = 0x4, offset = 0x4, fixed_abs, tag = 'smem constant byte address 0x4 - core index']
  #allocation1 [shape = 'u32[144,128]{1,0:T(1,128)}', space=vmem, size = 0x12000, scoped, tag = 'internal scratch']
  %s0 = inlined_call_operand.vmem [shape: bf16[2,2,120], index: 0, kind: input, shape index: {}]
  %s1 = inlined_call_operand.vmem [shape: bf16[120,4], index: 1, kind: input, shape index: {}]
  %s2 = inlined_call_operand.hbm [shape: f32[2,1,4], index: 2, kind: output, shape index: {}]
  %s3 = sld [smem:[#allocation0]]
  $region41: #{unified_discriminator_forward.15} parent=0
    _
  %s5 = ssub.s32 1, %s3
  %s6 = scalar_select 0, %s5, %s3
  $region1: #{unified_discriminator_forward.15} parent=0
    #allocation2 [shape = 'u8[1024]{0}', space=vmem, size = 0x400, scoped, tag = 'output window, operand 0']
    #allocation3 [shape = 's32[2]{0}', space=sflag, size = 0x8, scoped, tag = 'scoped memory for unified_discriminator_forward.15']
    %7 = vsyncpa [#allocation3], 0
    %s8 = scalar_lea.sflag [#allocation3], 1
    %9 = vsyncpa %s8, 0
    loop: start=0, step=1, limit=4
    $region2: #{unified_discriminator_forward.15} parent=1 // loop_pre_header
      _
    $region3: #{unified_discriminator_forward.15} parent=1 // loop_header
      %s11 = sphi 0, %s15
      %p12 = scmp.ge.s32.totalorder %s11, 4
      %s21 = sphi 0, %s23
      %s24 = sphi 0, %s21
      %s25 = sphi 0, %s24
      %s41 = sphi 0, %s25
      %s45 = sphi 0, %s45
      %s47 = sphi 0, %s45
      %s48 = sphi 0, %s47
      %s62 = sphi 0, %s48
      %s68 = sphi 0, %s70
      %s71 = sphi 0, %s68
      %s72 = sphi 0, %s71
      %s88 = sphi 0, %s72
    $region4: #{unified_discriminator_forward.15} parent=1 // loop_header_branch
      %14 = sbr.rel (%p12) target = $region8
    $region5: #{unified_discriminator_forward.15} parent=1 // loop_body
      %s16 = ssub.s32 %s11, 1
      %s17 = ssub.s32 %s11, 2
      %s18 = sadd.s32 %s11, 1
      %s19 = ssub.s32 %s11, %s18
      %p20 = scmp.eq.s32.totalorder %s19, 0
      %s22 = sadd.s32 %s21, 1
      %s23 = scalar_select %p20, %s21, %s22
      %p26 = pneg %p20
      %p27 = scmp.eq.s32.totalorder %s11, 1
      %p28 = por %p26, %p27
      %p29 = scmp.ne.s32.totalorder %s21, %s24
      %p30 = scmp.eq.s32.totalorder %s11, 0
      %p31 = por %p29, %p30
      %p32 = scmp.ne.s32.totalorder %s21, %s24
      %p33 = scmp.eq.s32.totalorder %s16, 1
      %p34 = por %p32, %p33
      %p35 = scmp.ne.s32.totalorder %s24, %s25
      %p36 = scmp.eq.s32.totalorder %s16, 0
      %p37 = por %p35, %p36
      %p38 = scmp.ne.s32.totalorder %s24, %s25
      %p39 = scmp.eq.s32.totalorder %s17, 1
      %p40 = por %p38, %p39
      %p42 = scmp.ne.s32.totalorder %s25, %s41
      %p43 = scmp.eq.s32.totalorder %s17, 0
      %p44 = por %p42, %p43
      %s46 = sadd.s32 %s45, 1
      %p49 = scmp.eq.s32.totalorder %s11, 1
      %p50 = scmp.ne.s32.totalorder %s45, %s47
      %p51 = scmp.eq.s32.totalorder %s11, 0
      %p52 = por %p50, %p51
      %p53 = scmp.ne.s32.totalorder %s45, %s47
      %p54 = scmp.eq.s32.totalorder %s16, 1
      %p55 = por %p53, %p54
      %p56 = scmp.ne.s32.totalorder %s47, %s48
      %p57 = scmp.eq.s32.totalorder %s16, 0
      %p58 = por %p56, %p57
      %p59 = scmp.ne.s32.totalorder %s47, %s48
      %p60 = scmp.eq.s32.totalorder %s17, 1
      %p61 = por %p59, %p60
      %p63 = scmp.ne.s32.totalorder %s48, %s62
      %p64 = scmp.eq.s32.totalorder %s17, 0
      %p65 = por %p63, %p64
      %s66 = ssub.s32 %s11, %s18
      %p67 = scmp.eq.s32.totalorder %s66, 0
      %s69 = sadd.s32 %s68, 1
      %s70 = scalar_select %p67, %s68, %s69
      %p73 = pneg %p67
      %p74 = scmp.eq.s32.totalorder %s11, 1
      %p75 = por %p73, %p74
      %p76 = scmp.ne.s32.totalorder %s68, %s71
      %p77 = scmp.eq.s32.totalorder %s11, 0
      %p78 = por %p76, %p77
      %p79 = scmp.ne.s32.totalorder %s68, %s71
      %p80 = scmp.eq.s32.totalorder %s16, 1
      %p81 = por %p79, %p80
      %p82 = scmp.ne.s32.totalorder %s71, %s72
      %p83 = scmp.eq.s32.totalorder %s16, 0
      %p84 = por %p82, %p83
      %p85 = scmp.ne.s32.totalorder %s71, %s72
      %p86 = scmp.eq.s32.totalorder %s17, 1
      %p87 = por %p85, %p86
      %p89 = scmp.ne.s32.totalorder %s72, %s88
      %p90 = scmp.eq.s32.totalorder %s17, 0
      %p91 = por %p89, %p90
      %p92 = scmp.le.s32.totalorder 1, %s11
      %p93 = scmp.lt.s32.totalorder %s11, 3
      %p94 = pnand %p92, %p93
      %p95 = pneg %p94
      // Predicated region
      $region9: #{unified_discriminator_forward.15} parent=5 // pred_check
        _
      $region10: #{unified_discriminator_forward.15} parent=5 // pred_check_branch
        %97 = sbr.rel (%p94) target = $region12
      $region11: #{unified_discriminator_forward.15} parent=5 // pred_region
        %s98 = ssub.s32 %s11, 1
        // Predicated region
        $region13: #{unified_discriminator_forward.15} parent=11 // pred_check
          %p99 = pneg %p58
        $region14: #{unified_discriminator_forward.15} parent=11 // pred_check_branch
          %101 = sbr.rel (%p99) target = $region16
        $region15: #{unified_discriminator_forward.15} parent=11 // pred_region
          _
        $region16: #{unified_discriminator_forward.15} parent=11 // pred_fallthru
          _
      $region12: #{unified_discriminator_forward.15} parent=5 // pred_fallthru
        _
      %p102 = scmp.lt.s32.totalorder %s11, 2
      // Predicated region
      $region17: #{unified_discriminator_forward.15} parent=5 // pred_check
        %p103 = pneg %p102
      $region18: #{unified_discriminator_forward.15} parent=5 // pred_check_branch
        %105 = sbr.rel (%p103) target = $region20
      $region19: #{unified_discriminator_forward.15} parent=5 // pred_region
        // Predicated region
        $region21: #{unified_discriminator_forward.15} parent=19 // pred_check
          %p106 = pneg %p31
        $region22: #{unified_discriminator_forward.15} parent=19 // pred_check_branch
          %108 = sbr.rel (%p106) target = $region24
        $region23: #{unified_discriminator_forward.15} parent=19 // pred_region
          %p109 = scmp.lt.s32.totalorder %s11, 1
          %s110 = scalar_select %p109, %s11, 1
          %s111 = scalar_lea.vmem %s0, %s110
        $region24: #{unified_discriminator_forward.15} parent=19 // pred_fallthru
          _
      $region20: #{unified_discriminator_forward.15} parent=5 // pred_fallthru
        _
      %p112 = scmp.le.s32.totalorder 1, %s11
      %p113 = scmp.lt.s32.totalorder %s11, 3
      %p114 = pnand %p112, %p113
      %p115 = pneg %p114
      // Predicated region
      $region25: #{unified_discriminator_forward.15} parent=5 // pred_check
        _
      $region26: #{unified_discriminator_forward.15} parent=5 // pred_check_branch
        %117 = sbr.rel (%p114) target = $region28
      $region27: #{unified_discriminator_forward.15} parent=5 // pred_region
        %s118 = ssub.s32 %s11, 1
        %p119 = scmp.lt.s32.totalorder %s16, 1
        %s120 = scalar_select %p119, %s16, 1
        %s121 = scalar_lea.vmem %s0, %s120
        %p122 = pneg %p37
        %p123 = pneg %p34
        %p124 = pneg %p58
        %p125 = pneg %p55
        %p126 = pneg %p84
        %p127 = pneg %p81
        %s128 = sand.u32 %s71, 1
        %s129 = scalar_lea.sflag [#allocation3], %s128
        %s130 = sand.u32 %s71, 1
        %s131 = scalar_lea.vmem [#allocation2], %s130
        %p132 = scmp.lt.s32.totalorder %s16, 1
        %s133 = scalar_select %p132, %s16, 1
        %s134 = scalar_lea.vmem %s0, %s133
        %v136 = vld [vmem:[%s134] sm:$0x1]
        %v137 = vld [vmem:[%s1] sm:$0xf]
        %v138 = vld [vmem:[%s1 + $0x4] sm:$0xf]
        %v139 = vld [vmem:[%s1 + $0x8] sm:$0xf]
        %v140 = vld [vmem:[%s1 + $0xc] sm:$0xf]
        %v141 = vld [vmem:[%s1 + $0x10] sm:$0xf]
        %v142 = vld [vmem:[%s1 + $0x14] sm:$0xf]
        %v143 = vld [vmem:[%s1 + $0x18] sm:$0xf]
        %v144 = vld [vmem:[%s1 + $0x1c] sm:$0xf]
        %v145 = vld [vmem:[%s1 + $0x20] sm:$0xf]
        %v146 = vld [vmem:[%s1 + $0x24] sm:$0xf]
        %v147 = vld [vmem:[%s1 + $0x28] sm:$0xf]
        %v148 = vld [vmem:[%s1 + $0x2c] sm:$0xf]
        %v149 = vld [vmem:[%s1 + $0x30] sm:$0xf]
        %v150 = vld [vmem:[%s1 + $0x34] sm:$0xf]
        %v151 = vld [vmem:[%s1 + $0x38] sm:$0xf]
        %v167 = vunpack.c.l.b16 %v137
        %v168 = vunpack.c.l.b16 %v138
        %v169 = vunpack.c.l.b16 %v139
        %v170 = vunpack.c.l.b16 %v140
        %v171 = vunpack.c.l.b16 %v141
        %v172 = vunpack.c.l.b16 %v142
        %v173 = vunpack.c.l.b16 %v143
        %v174 = vunpack.c.l.b16 %v144
        %v175 = vunpack.c.l.b16 %v145
        %v176 = vunpack.c.l.b16 %v146
        %v177 = vunpack.c.l.b16 %v147
        %v178 = vunpack.c.l.b16 %v148
        %v179 = vunpack.c.l.b16 %v149
        %v180 = vunpack.c.l.b16 %v150
        %v181 = vunpack.c.l.b16 %v151
        %v182 = vpack.c.b16 %v168, %v167
        %v183 = vpack.c.b16 %v170, %v169
        %v184 = vpack.c.b16 %v172, %v171
        %v185 = vpack.c.b16 %v174, %v173
        %v186 = vpack.c.b16 %v176, %v175
        %v187 = vpack.c.b16 %v178, %v177
        %v188 = vpack.c.b16 %v180, %v179
        %v189 = vpack.c.b16 %v181, %v181
        %vm197 = vcmask 982016
        %v199 = vsel %vm197, %v136, 0
        %vm201 = vcmask 1043456
        %v203 = vsel %vm201, %v189, 0
        %205 = vmatprep.subr.bf16.mxu0 0
        %206 = vmatpush1.bf16.msra.mxu0 %v182
        %207 = vmatprep.subr.bf16.mxu0 0
        %208 = vmatpush1.bf16.msra.mxu0 %v183
        %209 = vmatprep.subr.bf16.mxu0 0
        %210 = vmatpush1.bf16.msra.mxu0 %v184
        %211 = vmatprep.subr.bf16.mxu0 0
        %212 = vmatpush1.bf16.msra.mxu0 %v185
        %213 = vmatprep.subr.bf16.mxu0 0
        %214 = vmatpush1.bf16.msra.mxu0 %v186
        %215 = vmatprep.subr.bf16.mxu0 0
        %216 = vmatpush1.bf16.msra.mxu0 %v187
        %217 = vmatprep.subr.bf16.mxu0 0
        %218 = vmatpush1.bf16.msra.mxu0 %v188
        %219 = vmatprep.subr.bf16.mxu0 0
        %220 = vmatpush1.bf16.msra.mxu0 %v203
        %221 = vmatprep.subr.bf16.mxu0 0
        %222 = vmatpush1.bf16.msra.mxu0 0
        %223 = vmatprep.subr.bf16.mxu0 0
        %224 = vmatpush1.bf16.msra.mxu0 0
        %225 = vmatprep.subr.bf16.mxu0 0
        %226 = vmatpush1.bf16.msra.mxu0 0
        %227 = vmatprep.subr.bf16.mxu0 0
        %228 = vmatpush1.bf16.msra.mxu0 0
        %229 = vmatprep.subr.bf16.mxu0 0
        %230 = vmatpush1.bf16.msra.mxu0 0
        %231 = vmatprep.subr.bf16.mxu0 0
        %232 = vmatpush1.bf16.msra.mxu0 0
        %233 = vmatprep.subr.bf16.mxu0 0
        %234 = vmatpush1.bf16.msra.mxu0 0
        %235 = vmatprep.subr.bf16.mxu0 0
        %236 = vmatpush1.bf16.msra.mxu0 0
        %237 = vmatprep.mubr.bf16.mxu0 0
        %238 = vmatmul.mubr.bf16.gmra.mrb[0].mxu0 %v199
        %v239 = vpop.f32.mrb[0].mxu0
        %v240 = vadd.f32 0.0, %v239
        %v241 = vpop.f32.mrb[0].mxu0
        %v242 = vpop.f32.mrb[0].mxu0
        %v243 = vpop.f32.mrb[0].mxu0
        %244 = vdwg.mxu0
        %vm245 = vcmask 25600
        %v246 = vsel %vm245, %v240, -inf
        %247 = vmax.xlane.f32.xlu0 %v246
        %v248 = vpop.xlane.xlu0 %247
        %v249 = vsub.f32 %v240, %v248
        %v250 = vmul.f32 %v249, 1.442695
        %v251 = vpow.pop %v250
        %v252 = vsel %vm245, %v251, 0.0
        %253 = vadd.xlane.f32.xlu0 %v252
        %v254 = vpop.xlane.xlu0 %253
        %v255 = vlog2.pop %v254
        %v256 = vmul.f32 %v255, 0.6931472
        %v257 = vadd.f32 %v248, %v256
        %v258 = vsub.f32 %v240, %v257
        %v259 = vsel %vm245, %v258, 0.0
        %v260 = vrot.slane %v259, 4
        %v261 = vadd.f32 %v259, %v260
        %v262 = vrot.slane %v261, 2
        %v263 = vadd.f32 %v261, %v262
        %v264 = vrot.slane %v263, 1
        %v265 = vadd.f32 %v263, %v264
        %v266 = vrcp.pop 2.0
        %v267 = vmul.f32 %v265, %v266
        %vm268 = vcmask 24576
        %269 = vst.msk [vmem:[%s131] sm:$0x1] %vm268, %v267
        %s270 = sand.u32 %s71, 1
        %s271 = scalar_lea.sflag [#allocation3], %s270
        %s272 = sand.u32 %s71, 1
        %s273 = scalar_lea.vmem [#allocation2], %s272
        // Predicated region
        $region29: #{unified_discriminator_forward.15} parent=27 // pred_check
          %p274 = pneg %p81
        $region30: #{unified_discriminator_forward.15} parent=27 // pred_check_branch
          %276 = sbr.rel (%p274) target = $region32
        $region31: #{unified_discriminator_forward.15} parent=27 // pred_region
          %s278 = ssub.s32 16, 16
          %279 = vsyncadd %s271, %s278
          %s280 = smul.addr %s16, 16
          %s281 = scalar_lea.hbm %s2, %s280
          %s283 = sshll.u32 %s273, 4
          %s284 = int_to_ptr.vmem [resolvable:$true] %s283
          %286 = dma.vmem_to_hbm [thread:$0]  %s284, 16, %s281, %s271
        $region32: #{unified_discriminator_forward.15} parent=27 // pred_fallthru
          _
      $region28: #{unified_discriminator_forward.15} parent=5 // pred_fallthru
        _
      %p287 = scmp.le.s32.totalorder 2, %s11
      // Predicated region
      $region33: #{unified_discriminator_forward.15} parent=5 // pred_check
        %p288 = pneg %p287
      $region34: #{unified_discriminator_forward.15} parent=5 // pred_check_branch
        %290 = sbr.rel (%p288) target = $region36
      $region35: #{unified_discriminator_forward.15} parent=5 // pred_region
        %s291 = ssub.s32 %s11, 2
        // Predicated region
        $region37: #{unified_discriminator_forward.15} parent=35 // pred_check
          %p292 = pneg %p87
        $region38: #{unified_discriminator_forward.15} parent=35 // pred_check_branch
          %294 = sbr.rel (%p292) target = $region40
        $region39: #{unified_discriminator_forward.15} parent=35 // pred_region
          %s295 = sand.u32 %s72, 1
          %s296 = scalar_lea.sflag [#allocation3], %s295
          %s297 = sand.u32 %s72, 1
          %s298 = scalar_lea.vmem [#allocation2], %s297
          %299 = dma.done %s296, 16
        $region40: #{unified_discriminator_forward.15} parent=35 // pred_fallthru
          _
      $region36: #{unified_discriminator_forward.15} parent=5 // pred_fallthru
        _
    $region6: #{unified_discriminator_forward.15} parent=1 // loop_footer
      %s15 = sadd.s32 1, %s11
    $region7: #{unified_discriminator_forward.15} parent=1 // loop_footer_branch
      %10 = sbr.rel target = $region3
    $region8: #{unified_discriminator_forward.15} parent=1 // loop_exit
      _
    %300 = vsyncpa [#allocation3], 1
    %s301 = scalar_lea.sflag [#allocation3], 1
    %302 = vsyncpa %s301, 1

// kernel: unified_discriminator_forward.8
$region0: #{unified_discriminator_forward.8}
  #allocation0 [shape = 'u32[]', space=smem, size = 0x4, offset = 0x4, fixed_abs, tag = 'smem constant byte address 0x4 - core index']
  #allocation1 [shape = 'u32[144,128]{1,0:T(1,128)}', space=vmem, size = 0x12000, scoped, tag = 'internal scratch']
  %s0 = inlined_call_operand.vmem [shape: bf16[1280,135], index: 0, kind: input, shape index: {}]
  %s1 = inlined_call_operand.vmem [shape: bf16[135,64], index: 1, kind: input, shape index: {}]
  %s2 = inlined_call_operand.vmem [shape: f32[1,64], index: 2, kind: input, shape index: {}]
  %s3 = inlined_call_operand.vmem [shape: f32[1280,32], index: 3, kind: output, shape index: {}]
  %s4 = sld [smem:[#allocation0]]
  $region45: #{unified_discriminator_forward.8} parent=0
    _
  %s6 = ssub.s32 1, %s4
  %s7 = scalar_select 0, %s6, %s4
  loop: start=0, step=1, limit=4
  $region2: #{unified_discriminator_forward.8} parent=0 // loop_pre_header
    _
  $region3: #{unified_discriminator_forward.8} parent=0 // loop_header
    %s9 = sphi 0, %s13
    %p10 = scmp.ge.s32.totalorder %s9, 4
    %s19 = sphi 0, %s21
    %s22 = sphi 0, %s19
    %s23 = sphi 0, %s22
    %s39 = sphi 0, %s23
    %s43 = sphi 0, %s43
    %s45 = sphi 0, %s43
    %s46 = sphi 0, %s45
    %s60 = sphi 0, %s46
    %s64 = sphi 0, %s64
    %s66 = sphi 0, %s64
    %s67 = sphi 0, %s66
    %s81 = sphi 0, %s67
    %s87 = sphi 0, %s89
    %s90 = sphi 0, %s87
    %s91 = sphi 0, %s90
    %s107 = sphi 0, %s91
  $region4: #{unified_discriminator_forward.8} parent=0 // loop_header_branch
    %12 = sbr.rel (%p10) target = $region8
  $region5: #{unified_discriminator_forward.8} parent=0 // loop_body
    %s14 = ssub.s32 %s9, 1
    %s15 = ssub.s32 %s9, 2
    %s16 = sadd.s32 %s9, 1
    %s17 = ssub.s32 %s9, %s16
    %p18 = scmp.eq.s32.totalorder %s17, 0
    %s20 = sadd.s32 %s19, 1
    %s21 = scalar_select %p18, %s19, %s20
    %p24 = pneg %p18
    %p25 = scmp.eq.s32.totalorder %s9, 1
    %p26 = por %p24, %p25
    %p27 = scmp.ne.s32.totalorder %s19, %s22
    %p28 = scmp.eq.s32.totalorder %s9, 0
    %p29 = por %p27, %p28
    %p30 = scmp.ne.s32.totalorder %s19, %s22
    %p31 = scmp.eq.s32.totalorder %s14, 1
    %p32 = por %p30, %p31
    %p33 = scmp.ne.s32.totalorder %s22, %s23
    %p34 = scmp.eq.s32.totalorder %s14, 0
    %p35 = por %p33, %p34
    %p36 = scmp.ne.s32.totalorder %s22, %s23
    %p37 = scmp.eq.s32.totalorder %s15, 1
    %p38 = por %p36, %p37
    %p40 = scmp.ne.s32.totalorder %s23, %s39
    %p41 = scmp.eq.s32.totalorder %s15, 0
    %p42 = por %p40, %p41
    %s44 = sadd.s32 %s43, 1
    %p47 = scmp.eq.s32.totalorder %s9, 1
    %p48 = scmp.ne.s32.totalorder %s43, %s45
    %p49 = scmp.eq.s32.totalorder %s9, 0
    %p50 = por %p48, %p49
    %p51 = scmp.ne.s32.totalorder %s43, %s45
    %p52 = scmp.eq.s32.totalorder %s14, 1
    %p53 = por %p51, %p52
    %p54 = scmp.ne.s32.totalorder %s45, %s46
    %p55 = scmp.eq.s32.totalorder %s14, 0
    %p56 = por %p54, %p55
    %p57 = scmp.ne.s32.totalorder %s45, %s46
    %p58 = scmp.eq.s32.totalorder %s15, 1
    %p59 = por %p57, %p58
    %p61 = scmp.ne.s32.totalorder %s46, %s60
    %p62 = scmp.eq.s32.totalorder %s15, 0
    %p63 = por %p61, %p62
    %s65 = sadd.s32 %s64, 1
    %p68 = scmp.eq.s32.totalorder %s9, 1
    %p69 = scmp.ne.s32.totalorder %s64, %s66
    %p70 = scmp.eq.s32.totalorder %s9, 0
    %p71 = por %p69, %p70
    %p72 = scmp.ne.s32.totalorder %s64, %s66
    %p73 = scmp.eq.s32.totalorder %s14, 1
    %p74 = por %p72, %p73
    %p75 = scmp.ne.s32.totalorder %s66, %s67
    %p76 = scmp.eq.s32.totalorder %s14, 0
    %p77 = por %p75, %p76
    %p78 = scmp.ne.s32.totalorder %s66, %s67
    %p79 = scmp.eq.s32.totalorder %s15, 1
    %p80 = por %p78, %p79
    %p82 = scmp.ne.s32.totalorder %s67, %s81
    %p83 = scmp.eq.s32.totalorder %s15, 0
    %p84 = por %p82, %p83
    %s85 = ssub.s32 %s9, %s16
    %p86 = scmp.eq.s32.totalorder %s85, 0
    %s88 = sadd.s32 %s87, 1
    %s89 = scalar_select %p86, %s87, %s88
    %p92 = pneg %p86
    %p93 = scmp.eq.s32.totalorder %s9, 1
    %p94 = por %p92, %p93
    %p95 = scmp.ne.s32.totalorder %s87, %s90
    %p96 = scmp.eq.s32.totalorder %s9, 0
    %p97 = por %p95, %p96
    %p98 = scmp.ne.s32.totalorder %s87, %s90
    %p99 = scmp.eq.s32.totalorder %s14, 1
    %p100 = por %p98, %p99
    %p101 = scmp.ne.s32.totalorder %s90, %s91
    %p102 = scmp.eq.s32.totalorder %s14, 0
    %p103 = por %p101, %p102
    %p104 = scmp.ne.s32.totalorder %s90, %s91
    %p105 = scmp.eq.s32.totalorder %s15, 1
    %p106 = por %p104, %p105
    %p108 = scmp.ne.s32.totalorder %s91, %s107
    %p109 = scmp.eq.s32.totalorder %s15, 0
    %p110 = por %p108, %p109
    %p111 = scmp.le.s32.totalorder 1, %s9
    %p112 = scmp.lt.s32.totalorder %s9, 3
    %p113 = pnand %p111, %p112
    %p114 = pneg %p113
    // Predicated region
    $region9: #{unified_discriminator_forward.8} parent=5 // pred_check
      _
    $region10: #{unified_discriminator_forward.8} parent=5 // pred_check_branch
      %116 = sbr.rel (%p113) target = $region12
    $region11: #{unified_discriminator_forward.8} parent=5 // pred_region
      %s117 = ssub.s32 %s9, 1
      // Predicated region
      $region13: #{unified_discriminator_forward.8} parent=11 // pred_check
        %p118 = pneg %p56
      $region14: #{unified_discriminator_forward.8} parent=11 // pred_check_branch
        %120 = sbr.rel (%p118) target = $region16
      $region15: #{unified_discriminator_forward.8} parent=11 // pred_region
        _
      $region16: #{unified_discriminator_forward.8} parent=11 // pred_fallthru
        _
      // Predicated region
      $region17: #{unified_discriminator_forward.8} parent=11 // pred_check
        %p121 = pneg %p77
      $region18: #{unified_discriminator_forward.8} parent=11 // pred_check_branch
        %123 = sbr.rel (%p121) target = $region20
      $region19: #{unified_discriminator_forward.8} parent=11 // pred_region
        _
      $region20: #{unified_discriminator_forward.8} parent=11 // pred_fallthru
        _
    $region12: #{unified_discriminator_forward.8} parent=5 // pred_fallthru
      _
    %p124 = scmp.lt.s32.totalorder %s9, 2
    // Predicated region
    $region21: #{unified_discriminator_forward.8} parent=5 // pred_check
      %p125 = pneg %p124
    $region22: #{unified_discriminator_forward.8} parent=5 // pred_check_branch
      %127 = sbr.rel (%p125) target = $region24
    $region23: #{unified_discriminator_forward.8} parent=5 // pred_region
      // Predicated region
      $region25: #{unified_discriminator_forward.8} parent=23 // pred_check
        %p128 = pneg %p29
      $region26: #{unified_discriminator_forward.8} parent=23 // pred_check_branch
        %130 = sbr.rel (%p128) target = $region28
      $region27: #{unified_discriminator_forward.8} parent=23 // pred_region
        %s131 = smul.u32 80, %s9
        %p132 = scmp.lt.s32.totalorder %s131, 159
        %s133 = scalar_select %p132, %s131, 159
        %s134 = smul.addr %s133, 2
        %s135 = smul.addr %s134, 4
        %s136 = scalar_lea.vmem %s0, %s135
        %s137 = smul.u32 80, %s9
      $region28: #{unified_discriminator_forward.8} parent=23 // pred_fallthru
        _
    $region24: #{unified_discriminator_forward.8} parent=5 // pred_fallthru
      _
    %p138 = scmp.le.s32.totalorder 1, %s9
    %p139 = scmp.lt.s32.totalorder %s9, 3
    %p140 = pnand %p138, %p139
    %p141 = pneg %p140
    // Predicated region
    $region29: #{unified_discriminator_forward.8} parent=5 // pred_check
      _
    $region30: #{unified_discriminator_forward.8} parent=5 // pred_check_branch
      %143 = sbr.rel (%p140) target = $region32
    $region31: #{unified_discriminator_forward.8} parent=5 // pred_region
      %s144 = ssub.s32 %s9, 1
      %s145 = smul.u32 80, %s14
      %p146 = scmp.lt.s32.totalorder %s145, 159
      %s147 = scalar_select %p146, %s145, 159
      %s148 = smul.addr %s147, 2
      %s149 = smul.addr %s148, 4
      %s150 = scalar_lea.vmem %s0, %s149
      %p151 = pneg %p35
      %p152 = pneg %p32
      %p153 = pneg %p56
      %p154 = pneg %p53
      %p155 = pneg %p77
      %p156 = pneg %p74
      %p157 = pneg %p103
      %p158 = pneg %p100
      %s159 = smul.u32 80, %s14
      %p160 = scmp.lt.s32.totalorder %s159, 159
      %s161 = scalar_select %p160, %s159, 159
      %s162 = smul.addr %s161, 8
      %s163 = scalar_lea.vmem %s3, %s162
      %s164 = smul.u32 80, %s14
      %p165 = scmp.lt.s32.totalorder %s164, 159
      %s166 = scalar_select %p165, %s164, 159
      %s167 = smul.addr %s166, 2
      %s168 = smul.addr %s167, 4
      %s169 = scalar_lea.vmem %s0, %s168
      %s170 = smul.u32 80, %s14
      %s171 = smul.u32 80, %s14
      %p172 = scmp.lt.s32.totalorder %s171, 159
      %s173 = scalar_select %p172, %s171, 159
      %s174 = smul.addr %s173, 8
      %s175 = scalar_lea.vmem %s3, %s174
      %s176 = smul.u32 80, %s14
      %v178 = vld [vmem:[%s169] sm:$0xff]
      %v179 = vld [vmem:[%s169 + $0x8] sm:$0xff]
      %v180 = vld [vmem:[%s169 + $0x10] sm:$0xff]
      %v181 = vld [vmem:[%s169 + $0x18] sm:$0xff]
      %v182 = vld [vmem:[%s169 + $0x20] sm:$0xff]
      %v183 = vld [vmem:[%s169 + $0x28] sm:$0xff]
      %v184 = vld [vmem:[%s169 + $0x30] sm:$0xff]
      %v185 = vld [vmem:[%s169 + $0x38] sm:$0xff]
      %v186 = vld [vmem:[%s169 + $0x40] sm:$0xff]
      %v187 = vld [vmem:[%s169 + $0x48] sm:$0xff]
      %v188 = vld [vmem:[%s169 + $0x50] sm:$0xff]
      %v189 = vld [vmem:[%s169 + $0x58] sm:$0xff]
      %v190 = vld [vmem:[%s169 + $0x60] sm:$0xff]
      %v191 = vld [vmem:[%s169 + $0x68] sm:$0xff]
      %v192 = vld [vmem:[%s169 + $0x70] sm:$0xff]
      %v193 = vld [vmem:[%s169 + $0x78] sm:$0xff]
      %v194 = vld [vmem:[%s169 + $0x80] sm:$0xff]
      %v195 = vld [vmem:[%s169 + $0x88] sm:$0xff]
      %v196 = vld [vmem:[%s169 + $0x90] sm:$0xff]
      %v197 = vld [vmem:[%s169 + $0x98] sm:$0xff]
      %v198 = vld [vmem:[%s169 + $0xa0] sm:$0xff]
      %v199 = vld [vmem:[%s169 + $0xa8] sm:$0xff]
      %v200 = vld [vmem:[%s169 + $0xb0] sm:$0xff]
      %v201 = vld [vmem:[%s169 + $0xb8] sm:$0xff]
      %v202 = vld [vmem:[%s169 + $0xc0] sm:$0xff]
      %v203 = vld [vmem:[%s169 + $0xc8] sm:$0xff]
      %v204 = vld [vmem:[%s169 + $0xd0] sm:$0xff]
      %v205 = vld [vmem:[%s169 + $0xd8] sm:$0xff]
      %v206 = vld [vmem:[%s169 + $0xe0] sm:$0xff]
      %v207 = vld [vmem:[%s169 + $0xe8] sm:$0xff]
      %v208 = vld [vmem:[%s169 + $0xf0] sm:$0xff]
      %v209 = vld [vmem:[%s169 + $0xf8] sm:$0xff]
      %v210 = vld [vmem:[%s169 + $0x100] sm:$0xff]
      %v211 = vld [vmem:[%s169 + $0x108] sm:$0xff]
      %v212 = vld [vmem:[%s169 + $0x110] sm:$0xff]
      %v213 = vld [vmem:[%s169 + $0x118] sm:$0xff]
      %v214 = vld [vmem:[%s169 + $0x120] sm:$0xff]
      %v215 = vld [vmem:[%s169 + $0x128] sm:$0xff]
      %v216 = vld [vmem:[%s169 + $0x130] sm:$0xff]
      %v217 = vld [vmem:[%s169 + $0x138] sm:$0xff]
      %v218 = vld [vmem:[%s169 + $0x140] sm:$0xff]
      %v219 = vld [vmem:[%s169 + $0x148] sm:$0xff]
      %v220 = vld [vmem:[%s169 + $0x150] sm:$0xff]
      %v221 = vld [vmem:[%s169 + $0x158] sm:$0xff]
      %v222 = vld [vmem:[%s169 + $0x160] sm:$0xff]
      %v223 = vld [vmem:[%s169 + $0x168] sm:$0xff]
      %v224 = vld [vmem:[%s169 + $0x170] sm:$0xff]
      %v225 = vld [vmem:[%s169 + $0x178] sm:$0xff]
      %v226 = vld [vmem:[%s169 + $0x180] sm:$0xff]
      %v227 = vld [vmem:[%s169 + $0x188] sm:$0xff]
      %v228 = vld [vmem:[%s169 + $0x190] sm:$0xff]
      %v229 = vld [vmem:[%s169 + $0x198] sm:$0xff]
      %v230 = vld [vmem:[%s169 + $0x1a0] sm:$0xff]
      %v231 = vld [vmem:[%s169 + $0x1a8] sm:$0xff]
      %v232 = vld [vmem:[%s169 + $0x1b0] sm:$0xff]
      %v233 = vld [vmem:[%s169 + $0x1b8] sm:$0xff]
      %v234 = vld [vmem:[%s169 + $0x1c0] sm:$0xff]
      %v235 = vld [vmem:[%s169 + $0x1c8] sm:$0xff]
      %v236 = vld [vmem:[%s169 + $0x1d0] sm:$0xff]
      %v237 = vld [vmem:[%s169 + $0x1d8] sm:$0xff]
      %v238 = vld [vmem:[%s169 + $0x1e0] sm:$0xff]
      %v239 = vld [vmem:[%s169 + $0x1e8] sm:$0xff]
      %v240 = vld [vmem:[%s169 + $0x1f0] sm:$0xff]
      %v241 = vld [vmem:[%s169 + $0x1f8] sm:$0xff]
      %v242 = vld [vmem:[%s169 + $0x200] sm:$0xff]
      %v243 = vld [vmem:[%s169 + $0x208] sm:$0xff]
      %v244 = vld [vmem:[%s169 + $0x210] sm:$0xff]
      %v245 = vld [vmem:[%s169 + $0x218] sm:$0xff]
      %v246 = vld [vmem:[%s169 + $0x220] sm:$0xff]
      %v247 = vld [vmem:[%s169 + $0x228] sm:$0xff]
      %v248 = vld [vmem:[%s169 + $0x230] sm:$0xff]
      %v249 = vld [vmem:[%s169 + $0x238] sm:$0xff]
      %v250 = vld [vmem:[%s169 + $0x240] sm:$0xff]
      %v251 = vld [vmem:[%s169 + $0x248] sm:$0xff]
      %v252 = vld [vmem:[%s169 + $0x250] sm:$0xff]
      %v253 = vld [vmem:[%s169 + $0x258] sm:$0xff]
      %v254 = vld [vmem:[%s169 + $0x260] sm:$0xff]
      %v255 = vld [vmem:[%s169 + $0x268] sm:$0xff]
      %v256 = vld [vmem:[%s169 + $0x270] sm:$0xff]
      %v257 = vld [vmem:[%s169 + $0x278] sm:$0xff]
      %v258 = vld [vmem:[%s1] sm:$0xf]
      %v259 = vld [vmem:[%s1 + $0x4] sm:$0xf]
      %v260 = vld [vmem:[%s1 + $0x8] sm:$0xf]
      %v261 = vld [vmem:[%s1 + $0xc] sm:$0xf]
      %v262 = vld [vmem:[%s1 + $0x10] sm:$0xf]
      %v263 = vld [vmem:[%s1 + $0x14] sm:$0xf]
      %v264 = vld [vmem:[%s1 + $0x18] sm:$0xf]
      %v265 = vld [vmem:[%s1 + $0x1c] sm:$0xf]
      %v266 = vld [vmem:[%s1 + $0x20] sm:$0xf]
      %v267 = vld [vmem:[%s1 + $0x24] sm:$0xf]
      %v268 = vld [vmem:[%s1 + $0x28] sm:$0xf]
      %v269 = vld [vmem:[%s1 + $0x2c] sm:$0xf]
      %v270 = vld [vmem:[%s1 + $0x30] sm:$0xf]
      %v271 = vld [vmem:[%s1 + $0x34] sm:$0xf]
      %v272 = vld [vmem:[%s1 + $0x38] sm:$0xf]
      %v273 = vld [vmem:[%s1 + $0x3c] sm:$0xf]
      %v274 = vld [vmem:[%s1 + $0x40] sm:$0xf]
      %v275 = vld [vmem:[%s2] sm:$0x1]
      %v277 = vlaneseq
      %v278 = vshrl.u32 %v277, 7
      %v279 = vsub.s32 0, %v278
      %v280 = vrot.slane %v275, %v279
      %v362 = vunpack.c.l.b16 %v178
      %v363 = vunpack.c.h.b16 %v178
      %v364 = vunpack.c.l.b16 %v179
      %v365 = vunpack.c.h.b16 %v179
      %v366 = vunpack.c.l.b16 %v180
      %v367 = vunpack.c.h.b16 %v180
      %v368 = vunpack.c.l.b16 %v181
      %v369 = vunpack.c.h.b16 %v181
      %v370 = vunpack.c.l.b16 %v182
      %v371 = vunpack.c.h.b16 %v182
      %v372 = vunpack.c.l.b16 %v183
      %v373 = vunpack.c.h.b16 %v183
      %v374 = vunpack.c.l.b16 %v184
      %v375 = vunpack.c.h.b16 %v184
      %v376 = vunpack.c.l.b16 %v185
      %v377 = vunpack.c.h.b16 %v185
      %v378 = vunpack.c.l.b16 %v186
      %v379 = vunpack.c.h.b16 %v186
      %v380 = vunpack.c.l.b16 %v187
      %v381 = vunpack.c.h.b16 %v187
      %v382 = vunpack.c.l.b16 %v188
      %v383 = vunpack.c.h.b16 %v188
      %v384 = vunpack.c.l.b16 %v189
      %v385 = vunpack.c.h.b16 %v189
      %v386 = vunpack.c.l.b16 %v190
      %v387 = vunpack.c.h.b16 %v190
      %v388 = vunpack.c.l.b16 %v191
      %v389 = vunpack.c.h.b16 %v191
      %v390 = vunpack.c.l.b16 %v192
      %v391 = vunpack.c.h.b16 %v192
      %v392 = vunpack.c.l.b16 %v193
      %v393 = vunpack.c.h.b16 %v193
      %v394 = vunpack.c.l.b16 %v194
      %v395 = vunpack.c.h.b16 %v194
      %v396 = vunpack.c.l.b16 %v195
      %v397 = vunpack.c.h.b16 %v195
      %v398 = vunpack.c.l.b16 %v196
      %v399 = vunpack.c.h.b16 %v196
      %v400 = vunpack.c.l.b16 %v197
      %v401 = vunpack.c.h.b16 %v197
      %v402 = vunpack.c.l.b16 %v198
      %v403 = vunpack.c.h.b16 %v198
      %v404 = vunpack.c.l.b16 %v199
      %v405 = vunpack.c.h.b16 %v199
      %v406 = vunpack.c.l.b16 %v200
      %v407 = vunpack.c.h.b16 %v200
      %v408 = vunpack.c.l.b16 %v201
      %v409 = vunpack.c.h.b16 %v201
      %v410 = vunpack.c.l.b16 %v202
      %v411 = vunpack.c.h.b16 %v202
      %v412 = vunpack.c.l.b16 %v203
      %v413 = vunpack.c.h.b16 %v203
      %v414 = vunpack.c.l.b16 %v204
      %v415 = vunpack.c.h.b16 %v204
      %v416 = vunpack.c.l.b16 %v205
      %v417 = vunpack.c.h.b16 %v205
      %v418 = vunpack.c.l.b16 %v206
      %v419 = vunpack.c.h.b16 %v206
      %v420 = vunpack.c.l.b16 %v207
      %v421 = vunpack.c.h.b16 %v207
      %v422 = vunpack.c.l.b16 %v208
      %v423 = vunpack.c.h.b16 %v208
      %v424 = vunpack.c.l.b16 %v209
      %v425 = vunpack.c.h.b16 %v209
      %v426 = vunpack.c.l.b16 %v210
      %v427 = vunpack.c.h.b16 %v210
      %v428 = vunpack.c.l.b16 %v211
      %v429 = vunpack.c.h.b16 %v211
      %v430 = vunpack.c.l.b16 %v212
      %v431 = vunpack.c.h.b16 %v212
      %v432 = vunpack.c.l.b16 %v213
      %v433 = vunpack.c.h.b16 %v213
      %v434 = vunpack.c.l.b16 %v214
      %v435 = vunpack.c.h.b16 %v214
      %v436 = vunpack.c.l.b16 %v215
      %v437 = vunpack.c.h.b16 %v215
      %v438 = vunpack.c.l.b16 %v216
      %v439 = vunpack.c.h.b16 %v216
      %v440 = vunpack.c.l.b16 %v217
      %v441 = vunpack.c.h.b16 %v217
      %v442 = vunpack.c.l.b16 %v218
      %v443 = vunpack.c.h.b16 %v218
      %v444 = vunpack.c.l.b16 %v219
      %v445 = vunpack.c.h.b16 %v219
      %v446 = vunpack.c.l.b16 %v220
      %v447 = vunpack.c.h.b16 %v220
      %v448 = vunpack.c.l.b16 %v221
      %v449 = vunpack.c.h.b16 %v221
      %v450 = vunpack.c.l.b16 %v222
      %v451 = vunpack.c.h.b16 %v222
      %v452 = vunpack.c.l.b16 %v223
      %v453 = vunpack.c.h.b16 %v223
      %v454 = vunpack.c.l.b16 %v224
      %v455 = vunpack.c.h.b16 %v224
      %v456 = vunpack.c.l.b16 %v225
      %v457 = vunpack.c.h.b16 %v225
      %v458 = vunpack.c.l.b16 %v226
      %v459 = vunpack.c.h.b16 %v226
      %v460 = vunpack.c.l.b16 %v227
      %v461 = vunpack.c.h.b16 %v227
      %v462 = vunpack.c.l.b16 %v228
      %v463 = vunpack.c.h.b16 %v228
      %v464 = vunpack.c.l.b16 %v229
      %v465 = vunpack.c.h.b16 %v229
      %v466 = vunpack.c.l.b16 %v230
      %v467 = vunpack.c.h.b16 %v230
      %v468 = vunpack.c.l.b16 %v231
      %v469 = vunpack.c.h.b16 %v231
      %v470 = vunpack.c.l.b16 %v232
      %v471 = vunpack.c.h.b16 %v232
      %v472 = vunpack.c.l.b16 %v233
      %v473 = vunpack.c.h.b16 %v233
      %v474 = vunpack.c.l.b16 %v234
      %v475 = vunpack.c.h.b16 %v234
      %v476 = vunpack.c.l.b16 %v235
      %v477 = vunpack.c.h.b16 %v235
      %v478 = vunpack.c.l.b16 %v236
      %v479 = vunpack.c.h.b16 %v236
      %v480 = vunpack.c.l.b16 %v237
      %v481 = vunpack.c.h.b16 %v237
      %v482 = vunpack.c.l.b16 %v238
      %v483 = vunpack.c.h.b16 %v238
      %v484 = vunpack.c.l.b16 %v239
      %v485 = vunpack.c.h.b16 %v239
      %v486 = vunpack.c.l.b16 %v240
      %v487 = vunpack.c.h.b16 %v240
      %v488 = vunpack.c.l.b16 %v241
      %v489 = vunpack.c.h.b16 %v241
      %v490 = vunpack.c.l.b16 %v242
      %v491 = vunpack.c.h.b16 %v242
      %v492 = vunpack.c.l.b16 %v243
      %v493 = vunpack.c.h.b16 %v243
      %v494 = vunpack.c.l.b16 %v244
      %v495 = vunpack.c.h.b16 %v244
      %v496 = vunpack.c.l.b16 %v245
      %v497 = vunpack.c.h.b16 %v245
      %v498 = vunpack.c.l.b16 %v246
      %v499 = vunpack.c.h.b16 %v246
      %v500 = vunpack.c.l.b16 %v247
      %v501 = vunpack.c.h.b16 %v247
      %v502 = vunpack.c.l.b16 %v248
      %v503 = vunpack.c.h.b16 %v248
      %v504 = vunpack.c.l.b16 %v249
      %v505 = vunpack.c.h.b16 %v249
      %v506 = vunpack.c.l.b16 %v250
      %v507 = vunpack.c.h.b16 %v250
      %v508 = vunpack.c.l.b16 %v251
      %v509 = vunpack.c.h.b16 %v251
      %v510 = vunpack.c.l.b16 %v252
      %v511 = vunpack.c.h.b16 %v252
      %v512 = vunpack.c.l.b16 %v253
      %v513 = vunpack.c.h.b16 %v253
      %v514 = vunpack.c.l.b16 %v254
      %v515 = vunpack.c.h.b16 %v254
      %v516 = vunpack.c.l.b16 %v255
      %v517 = vunpack.c.h.b16 %v255
      %v518 = vunpack.c.l.b16 %v256
      %v519 = vunpack.c.h.b16 %v256
      %v520 = vunpack.c.l.b16 %v257
      %v521 = vunpack.c.h.b16 %v257
      %v522 = vpack.c.b16 %v364, %v362
      %v523 = vpack.c.b16 %v365, %v363
      %v524 = vpack.c.b16 %v368, %v366
      %v525 = vpack.c.b16 %v369, %v367
      %v526 = vpack.c.b16 %v372, %v370
      %v527 = vpack.c.b16 %v373, %v371
      %v528 = vpack.c.b16 %v376, %v374
      %v529 = vpack.c.b16 %v377, %v375
      %v530 = vpack.c.b16 %v380, %v378
      %v531 = vpack.c.b16 %v381, %v379
      %v532 = vpack.c.b16 %v384, %v382
      %v533 = vpack.c.b16 %v385, %v383
      %v534 = vpack.c.b16 %v388, %v386
      %v535 = vpack.c.b16 %v389, %v387
      %v536 = vpack.c.b16 %v392, %v390
      %v537 = vpack.c.b16 %v393, %v391
      %v538 = vpack.c.b16 %v396, %v394
      %v539 = vpack.c.b16 %v397, %v395
      %v540 = vpack.c.b16 %v400, %v398
      %v541 = vpack.c.b16 %v401, %v399
      %v542 = vpack.c.b16 %v404, %v402
      %v543 = vpack.c.b16 %v405, %v403
      %v544 = vpack.c.b16 %v408, %v406
      %v545 = vpack.c.b16 %v409, %v407
      %v546 = vpack.c.b16 %v412, %v410
      %v547 = vpack.c.b16 %v413, %v411
      %v548 = vpack.c.b16 %v416, %v414
      %v549 = vpack.c.b16 %v417, %v415
      %v550 = vpack.c.b16 %v420, %v418
      %v551 = vpack.c.b16 %v421, %v419
      %v552 = vpack.c.b16 %v424, %v422
      %v553 = vpack.c.b16 %v425, %v423
      %v554 = vpack.c.b16 %v428, %v426
      %v555 = vpack.c.b16 %v429, %v427
      %v556 = vpack.c.b16 %v432, %v430
      %v557 = vpack.c.b16 %v433, %v431
      %v558 = vpack.c.b16 %v436, %v434
      %v559 = vpack.c.b16 %v437, %v435
      %v560 = vpack.c.b16 %v440, %v438
      %v561 = vpack.c.b16 %v441, %v439
      %v562 = vpack.c.b16 %v444, %v442
      %v563 = vpack.c.b16 %v445, %v443
      %v564 = vpack.c.b16 %v448, %v446
      %v565 = vpack.c.b16 %v449, %v447
      %v566 = vpack.c.b16 %v452, %v450
      %v567 = vpack.c.b16 %v453, %v451
      %v568 = vpack.c.b16 %v456, %v454
      %v569 = vpack.c.b16 %v457, %v455
      %v570 = vpack.c.b16 %v460, %v458
      %v571 = vpack.c.b16 %v461, %v459
      %v572 = vpack.c.b16 %v464, %v462
      %v573 = vpack.c.b16 %v465, %v463
      %v574 = vpack.c.b16 %v468, %v466
      %v575 = vpack.c.b16 %v469, %v467
      %v576 = vpack.c.b16 %v472, %v470
      %v577 = vpack.c.b16 %v473, %v471
      %v578 = vpack.c.b16 %v476, %v474
      %v579 = vpack.c.b16 %v477, %v475
      %v580 = vpack.c.b16 %v480, %v478
      %v581 = vpack.c.b16 %v481, %v479
      %v582 = vpack.c.b16 %v484, %v482
      %v583 = vpack.c.b16 %v485, %v483
      %v584 = vpack.c.b16 %v488, %v486
      %v585 = vpack.c.b16 %v489, %v487
      %v586 = vpack.c.b16 %v492, %v490
      %v587 = vpack.c.b16 %v493, %v491
      %v588 = vpack.c.b16 %v496, %v494
      %v589 = vpack.c.b16 %v497, %v495
      %v590 = vpack.c.b16 %v500, %v498
      %v591 = vpack.c.b16 %v501, %v499
      %v592 = vpack.c.b16 %v504, %v502
      %v593 = vpack.c.b16 %v505, %v503
      %v594 = vpack.c.b16 %v508, %v506
      %v595 = vpack.c.b16 %v509, %v507
      %v596 = vpack.c.b16 %v512, %v510
      %v597 = vpack.c.b16 %v513, %v511
      %v598 = vpack.c.b16 %v516, %v514
      %v599 = vpack.c.b16 %v517, %v515
      %v600 = vpack.c.b16 %v520, %v518
      %v601 = vpack.c.b16 %v521, %v519
      %v659 = vunpack.c.l.b16 %v258
      %v660 = vunpack.c.l.b16 %v259
      %v661 = vunpack.c.l.b16 %v260
      %v662 = vunpack.c.l.b16 %v261
      %v663 = vunpack.c.l.b16 %v262
      %v664 = vunpack.c.l.b16 %v263
      %v665 = vunpack.c.l.b16 %v264
      %v666 = vunpack.c.l.b16 %v265
      %v667 = vunpack.c.l.b16 %v266
      %v668 = vunpack.c.l.b16 %v267
      %v669 = vunpack.c.l.b16 %v268
      %v670 = vunpack.c.l.b16 %v269
      %v671 = vunpack.c.l.b16 %v270
      %v672 = vunpack.c.l.b16 %v271
      %v673 = vunpack.c.l.b16 %v272
      %v674 = vunpack.c.l.b16 %v273
      %v675 = vunpack.c.l.b16 %v274
      %v676 = vpack.c.b16 %v660, %v659
      %v677 = vpack.c.b16 %v662, %v661
      %v678 = vpack.c.b16 %v664, %v663
      %v679 = vpack.c.b16 %v666, %v665
      %v680 = vpack.c.b16 %v668, %v667
      %v681 = vpack.c.b16 %v670, %v669
      %v682 = vpack.c.b16 %v672, %v671
      %v683 = vpack.c.b16 %v674, %v673
      %v684 = vpack.c.b16 %v675, %v675
      %vm693 = vcmask 56320
      %v695 = vsel %vm693, %v523, 0
      %v698 = vsel %vm693, %v525, 0
      %v701 = vsel %vm693, %v527, 0
      %v704 = vsel %vm693, %v529, 0
      %v707 = vsel %vm693, %v531, 0
      %v710 = vsel %vm693, %v533, 0
      %v713 = vsel %vm693, %v535, 0
      %v716 = vsel %vm693, %v537, 0
      %v719 = vsel %vm693, %v539, 0
      %v722 = vsel %vm693, %v541, 0
      %v725 = vsel %vm693, %v543, 0
      %v728 = vsel %vm693, %v545, 0
      %v731 = vsel %vm693, %v547, 0
      %v734 = vsel %vm693, %v549, 0
      %v737 = vsel %vm693, %v551, 0
      %v740 = vsel %vm693, %v553, 0
      %v743 = vsel %vm693, %v555, 0
      %v746 = vsel %vm693, %v557, 0
      %v749 = vsel %vm693, %v559, 0
      %v752 = vsel %vm693, %v561, 0
      %v755 = vsel %vm693, %v563, 0
      %v758 = vsel %vm693, %v565, 0
      %v761 = vsel %vm693, %v567, 0
      %v764 = vsel %vm693, %v569, 0
      %v767 = vsel %vm693, %v571, 0
      %v770 = vsel %vm693, %v573, 0
      %v773 = vsel %vm693, %v575, 0
      %v776 = vsel %vm693, %v577, 0
      %v779 = vsel %vm693, %v579, 0
      %v782 = vsel %vm693, %v581, 0
      %v785 = vsel %vm693, %v583, 0
      %v788 = vsel %vm693, %v585, 0
      %v791 = vsel %vm693, %v587, 0
      %v794 = vsel %vm693, %v589, 0
      %v797 = vsel %vm693, %v591, 0
      %v800 = vsel %vm693, %v593, 0
      %v803 = vsel %vm693, %v595, 0
      %v806 = vsel %vm693, %v597, 0
      %v809 = vsel %vm693, %v599, 0
      %v812 = vsel %vm693, %v601, 0
      %vm814 = vcmask 1042432
      %vm815 = vcmask 1043456
      %v816 = vsel %vm814, 4294967295, 65535
      %v817 = vsel %vm815, %v816, 0
      %v819 = vand.u32 %v684, %v817
      %821 = vmatprep.subr.bf16.mxu0 0
      %822 = vmatpush1.bf16.msra.mxu0 %v676
      %823 = vmatprep.subr.bf16.mxu0 0
      %824 = vmatpush1.bf16.msra.mxu0 %v677
      %825 = vmatprep.subr.bf16.mxu0 0
      %826 = vmatpush1.bf16.msra.mxu0 %v678
      %827 = vmatprep.subr.bf16.mxu0 0
      %828 = vmatpush1.bf16.msra.mxu0 %v679
      %829 = vmatprep.subr.bf16.mxu0 0
      %830 = vmatpush1.bf16.msra.mxu0 %v680
      %831 = vmatprep.subr.bf16.mxu0 0
      %832 = vmatpush1.bf16.msra.mxu0 %v681
      %833 = vmatprep.subr.bf16.mxu0 0
      %834 = vmatpush1.bf16.msra.mxu0 %v682
      %835 = vmatprep.subr.bf16.mxu0 0
      %836 = vmatpush1.bf16.msra.mxu0 %v683
      %837 = vmatprep.subr.bf16.mxu0 0
      %838 = vmatpush1.bf16.msra.mxu0 %v819
      %839 = vmatprep.subr.bf16.mxu0 0
      %840 = vmatpush1.bf16.msra.mxu0 0
      %841 = vmatprep.subr.bf16.mxu0 0
      %842 = vmatpush1.bf16.msra.mxu0 0
      %843 = vmatprep.subr.bf16.mxu0 0
      %844 = vmatpush1.bf16.msra.mxu0 0
      %845 = vmatprep.subr.bf16.mxu0 0
      %846 = vmatpush1.bf16.msra.mxu0 0
      %847 = vmatprep.subr.bf16.mxu0 0
      %848 = vmatpush1.bf16.msra.mxu0 0
      %849 = vmatprep.subr.bf16.mxu0 0
      %850 = vmatpush1.bf16.msra.mxu0 0
      %851 = vmatprep.subr.bf16.mxu0 0
      %852 = vmatpush1.bf16.msra.mxu0 0
      %853 = vmatprep.mubr.bf16.mxu0 %v695
      %854 = vmatmul.mubr.bf16.gmra.mrb[0].mxu0 %v522
      %v855 = vpop.f32.mrb[0].mxu0
      %v856 = vadd.f32 %v280, %v855
      %v857 = vpop.f32.mrb[0].mxu0
      %v858 = vpop.f32.mrb[0].mxu0
      %v859 = vadd.f32 %v280, %v858
      %v860 = vpop.f32.mrb[0].mxu0
      %861 = vmatprep.mubr.bf16.mxu0 %v698
      %862 = vmatmul.mubr.bf16.gmra.mrb[0].mxu0 %v524
      %v863 = vpop.f32.mrb[0].mxu0
      %v864 = vadd.f32 %v280, %v863
      %v865 = vpop.f32.mrb[0].mxu0
      %v866 = vpop.f32.mrb[0].mxu0
      %v867 = vadd.f32 %v280, %v866
      %v868 = vpop.f32.mrb[0].mxu0
      %869 = vmatprep.mubr.bf16.mxu0 %v701
      %870 = vmatmul.mubr.bf16.gmra.mrb[0].mxu0 %v526
      %v871 = vpop.f32.mrb[0].mxu0
      %v872 = vadd.f32 %v280, %v871
      %v873 = vpop.f32.mrb[0].mxu0
      %v874 = vpop.f32.mrb[0].mxu0
      %v875 = vadd.f32 %v280, %v874
      %v876 = vpop.f32.mrb[0].mxu0
      %877 = vmatprep.mubr.bf16.mxu0 %v704
      %878 = vmatmul.mubr.bf16.gmra.mrb[0].mxu0 %v528
      %v879 = vpop.f32.mrb[0].mxu0
      %v880 = vadd.f32 %v280, %v879
      %v881 = vpop.f32.mrb[0].mxu0
      %v882 = vpop.f32.mrb[0].mxu0
      %v883 = vadd.f32 %v280, %v882
      %v884 = vpop.f32.mrb[0].mxu0
      %885 = vmatprep.mubr.bf16.mxu0 %v707
      %886 = vmatmul.mubr.bf16.gmra.mrb[0].mxu0 %v530
      %v887 = vpop.f32.mrb[0].mxu0
      %v888 = vadd.f32 %v280, %v887
      %v889 = vpop.f32.mrb[0].mxu0
      %v890 = vpop.f32.mrb[0].mxu0
      %v891 = vadd.f32 %v280, %v890
      %v892 = vpop.f32.mrb[0].mxu0
      %893 = vmatprep.mubr.bf16.mxu0 %v710
      %894 = vmatmul.mubr.bf16.gmra.mrb[0].mxu0 %v532
      %v895 = vpop.f32.mrb[0].mxu0
      %v896 = vadd.f32 %v280, %v895
      %v897 = vpop.f32.mrb[0].mxu0
      %v898 = vpop.f32.mrb[0].mxu0
      %v899 = vadd.f32 %v280, %v898
      %v900 = vpop.f32.mrb[0].mxu0
      %901 = vmatprep.mubr.bf16.mxu0 %v713
      %902 = vmatmul.mubr.bf16.gmra.mrb[0].mxu0 %v534
      %v903 = vpop.f32.mrb[0].mxu0
      %v904 = vadd.f32 %v280, %v903
      %v905 = vpop.f32.mrb[0].mxu0
      %v906 = vpop.f32.mrb[0].mxu0
      %v907 = vadd.f32 %v280, %v906
      %v908 = vpop.f32.mrb[0].mxu0
      %909 = vmatprep.mubr.bf16.mxu0 %v716
      %910 = vmatmul.mubr.bf16.gmra.mrb[0].mxu0 %v536
      %v911 = vpop.f32.mrb[0].mxu0
      %v912 = vadd.f32 %v280, %v911
      %v913 = vpop.f32.mrb[0].mxu0
      %v914 = vpop.f32.mrb[0].mxu0
      %v915 = vadd.f32 %v280, %v914
      %v916 = vpop.f32.mrb[0].mxu0
      %917 = vmatprep.mubr.bf16.mxu0 %v719
      %918 = vmatmul.mubr.bf16.gmra.mrb[0].mxu0 %v538
      %v919 = vpop.f32.mrb[0].mxu0
      %v920 = vadd.f32 %v280, %v919
      %v921 = vpop.f32.mrb[0].mxu0
      %v922 = vpop.f32.mrb[0].mxu0
      %v923 = vadd.f32 %v280, %v922
      %v924 = vpop.f32.mrb[0].mxu0
      %925 = vmatprep.mubr.bf16.mxu0 %v722
      %926 = vmatmul.mubr.bf16.gmra.mrb[0].mxu0 %v540
      %v927 = vpop.f32.mrb[0].mxu0
      %v928 = vadd.f32 %v280, %v927
      %v929 = vpop.f32.mrb[0].mxu0
      %v930 = vpop.f32.mrb[0].mxu0
      %v931 = vadd.f32 %v280, %v930
      %v932 = vpop.f32.mrb[0].mxu0
      %933 = vmatprep.mubr.bf16.mxu0 %v725
      %934 = vmatmul.mubr.bf16.gmra.mrb[0].mxu0 %v542
      %v935 = vpop.f32.mrb[0].mxu0
      %v936 = vadd.f32 %v280, %v935
      %v937 = vpop.f32.mrb[0].mxu0
      %v938 = vpop.f32.mrb[0].mxu0
      %v939 = vadd.f32 %v280, %v938
      %v940 = vpop.f32.mrb[0].mxu0
      %941 = vmatprep.mubr.bf16.mxu0 %v728
      %942 = vmatmul.mubr.bf16.gmra.mrb[0].mxu0 %v544
      %v943 = vpop.f32.mrb[0].mxu0
      %v944 = vadd.f32 %v280, %v943
      %v945 = vpop.f32.mrb[0].mxu0
      %v946 = vpop.f32.mrb[0].mxu0
      %v947 = vadd.f32 %v280, %v946
      %v948 = vpop.f32.mrb[0].mxu0
      %949 = vmatprep.mubr.bf16.mxu0 %v731
      %950 = vmatmul.mubr.bf16.gmra.mrb[0].mxu0 %v546
      %v951 = vpop.f32.mrb[0].mxu0
      %v952 = vadd.f32 %v280, %v951
      %v953 = vpop.f32.mrb[0].mxu0
      %v954 = vpop.f32.mrb[0].mxu0
      %v955 = vadd.f32 %v280, %v954
      %v956 = vpop.f32.mrb[0].mxu0
      %957 = vmatprep.mubr.bf16.mxu0 %v734
      %958 = vmatmul.mubr.bf16.gmra.mrb[0].mxu0 %v548
      %v959 = vpop.f32.mrb[0].mxu0
      %v960 = vadd.f32 %v280, %v959
      %v961 = vpop.f32.mrb[0].mxu0
      %v962 = vpop.f32.mrb[0].mxu0
      %v963 = vadd.f32 %v280, %v962
      %v964 = vpop.f32.mrb[0].mxu0
      %965 = vmatprep.mubr.bf16.mxu0 %v737
      %966 = vmatmul.mubr.bf16.gmra.mrb[0].mxu0 %v550
      %v967 = vpop.f32.mrb[0].mxu0
      %v968 = vadd.f32 %v280, %v967
      %v969 = vpop.f32.mrb[0].mxu0
      %v970 = vpop.f32.mrb[0].mxu0
      %v971 = vadd.f32 %v280, %v970
      %v972 = vpop.f32.mrb[0].mxu0
      %973 = vmatprep.mubr.bf16.mxu0 %v740
      %974 = vmatmul.mubr.bf16.gmra.mrb[0].mxu0 %v552
      %v975 = vpop.f32.mrb[0].mxu0
      %v976 = vadd.f32 %v280, %v975
      %v977 = vpop.f32.mrb[0].mxu0
      %v978 = vpop.f32.mrb[0].mxu0
      %v979 = vadd.f32 %v280, %v978
      %v980 = vpop.f32.mrb[0].mxu0
      %981 = vmatprep.mubr.bf16.mxu0 %v743
      %982 = vmatmul.mubr.bf16.gmra.mrb[0].mxu0 %v554
      %v983 = vpop.f32.mrb[0].mxu0
      %v984 = vadd.f32 %v280, %v983
      %v985 = vpop.f32.mrb[0].mxu0
      %v986 = vpop.f32.mrb[0].mxu0
      %v987 = vadd.f32 %v280, %v986
      %v988 = vpop.f32.mrb[0].mxu0
      %989 = vmatprep.mubr.bf16.mxu0 %v746
      %990 = vmatmul.mubr.bf16.gmra.mrb[0].mxu0 %v556
      %v991 = vpop.f32.mrb[0].mxu0
      %v992 = vadd.f32 %v280, %v991
      %v993 = vpop.f32.mrb[0].mxu0
      %v994 = vpop.f32.mrb[0].mxu0
      %v995 = vadd.f32 %v280, %v994
      %v996 = vpop.f32.mrb[0].mxu0
      %997 = vmatprep.mubr.bf16.mxu0 %v749
      %998 = vmatmul.mubr.bf16.gmra.mrb[0].mxu0 %v558
      %v999 = vpop.f32.mrb[0].mxu0
      %v1000 = vadd.f32 %v280, %v999
      %v1001 = vpop.f32.mrb[0].mxu0
      %v1002 = vpop.f32.mrb[0].mxu0
      %v1003 = vadd.f32 %v280, %v1002
      %v1004 = vpop.f32.mrb[0].mxu0
      %1005 = vmatprep.mubr.bf16.mxu0 %v752
      %1006 = vmatmul.mubr.bf16.gmra.mrb[0].mxu0 %v560
      %v1007 = vpop.f32.mrb[0].mxu0
      %v1008 = vadd.f32 %v280, %v1007
      %v1009 = vpop.f32.mrb[0].mxu0
      %v1010 = vpop.f32.mrb[0].mxu0
      %v1011 = vadd.f32 %v280, %v1010
      %v1012 = vpop.f32.mrb[0].mxu0
      %1013 = vmatprep.mubr.bf16.mxu0 %v755
      %1014 = vmatmul.mubr.bf16.gmra.mrb[0].mxu0 %v562
      %v1015 = vpop.f32.mrb[0].mxu0
      %v1016 = vadd.f32 %v280, %v1015
      %v1017 = vpop.f32.mrb[0].mxu0
      %v1018 = vpop.f32.mrb[0].mxu0
      %v1019 = vadd.f32 %v280, %v1018
      %v1020 = vpop.f32.mrb[0].mxu0
      %1021 = vmatprep.mubr.bf16.mxu0 %v758
      %1022 = vmatmul.mubr.bf16.gmra.mrb[0].mxu0 %v564
      %v1023 = vpop.f32.mrb[0].mxu0
      %v1024 = vadd.f32 %v280, %v1023
      %v1025 = vpop.f32.mrb[0].mxu0
      %v1026 = vpop.f32.mrb[0].mxu0
      %v1027 = vadd.f32 %v280, %v1026
      %v1028 = vpop.f32.mrb[0].mxu0
      %1029 = vmatprep.mubr.bf16.mxu0 %v761
      %1030 = vmatmul.mubr.bf16.gmra.mrb[0].mxu0 %v566
      %v1031 = vpop.f32.mrb[0].mxu0
      %v1032 = vadd.f32 %v280, %v1031
      %v1033 = vpop.f32.mrb[0].mxu0
      %v1034 = vpop.f32.mrb[0].mxu0
      %v1035 = vadd.f32 %v280, %v1034
      %v1036 = vpop.f32.mrb[0].mxu0
      %1037 = vmatprep.mubr.bf16.mxu0 %v764
      %1038 = vmatmul.mubr.bf16.gmra.mrb[0].mxu0 %v568
      %v1039 = vpop.f32.mrb[0].mxu0
      %v1040 = vadd.f32 %v280, %v1039
      %v1041 = vpop.f32.mrb[0].mxu0
      %v1042 = vpop.f32.mrb[0].mxu0
      %v1043 = vadd.f32 %v280, %v1042
      %v1044 = vpop.f32.mrb[0].mxu0
      %1045 = vmatprep.mubr.bf16.mxu0 %v767
      %1046 = vmatmul.mubr.bf16.gmra.mrb[0].mxu0 %v570
      %v1047 = vpop.f32.mrb[0].mxu0
      %v1048 = vadd.f32 %v280, %v1047
      %v1049 = vpop.f32.mrb[0].mxu0
      %v1050 = vpop.f32.mrb[0].mxu0
      %v1051 = vadd.f32 %v280, %v1050
      %v1052 = vpop.f32.mrb[0].mxu0
      %1053 = vmatprep.mubr.bf16.mxu0 %v770
      %1054 = vmatmul.mubr.bf16.gmra.mrb[0].mxu0 %v572
      %v1055 = vpop.f32.mrb[0].mxu0
      %v1056 = vadd.f32 %v280, %v1055
      %v1057 = vpop.f32.mrb[0].mxu0
      %v1058 = vpop.f32.mrb[0].mxu0
      %v1059 = vadd.f32 %v280, %v1058
      %v1060 = vpop.f32.mrb[0].mxu0
      %1061 = vmatprep.mubr.bf16.mxu0 %v773
      %1062 = vmatmul.mubr.bf16.gmra.mrb[0].mxu0 %v574
      %v1063 = vpop.f32.mrb[0].mxu0
      %v1064 = vadd.f32 %v280, %v1063
      %v1065 = vpop.f32.mrb[0].mxu0
      %v1066 = vpop.f32.mrb[0].mxu0
      %v1067 = vadd.f32 %v280, %v1066
      %v1068 = vpop.f32.mrb[0].mxu0
      %1069 = vmatprep.mubr.bf16.mxu0 %v776
      %1070 = vmatmul.mubr.bf16.gmra.mrb[0].mxu0 %v576
      %v1071 = vpop.f32.mrb[0].mxu0
      %v1072 = vadd.f32 %v280, %v1071
      %v1073 = vpop.f32.mrb[0].mxu0
      %v1074 = vpop.f32.mrb[0].mxu0
      %v1075 = vadd.f32 %v280, %v1074
      %v1076 = vpop.f32.mrb[0].mxu0
      %1077 = vmatprep.mubr.bf16.mxu0 %v779
      %1078 = vmatmul.mubr.bf16.gmra.mrb[0].mxu0 %v578
      %v1079 = vpop.f32.mrb[0].mxu0
      %v1080 = vadd.f32 %v280, %v1079
      %v1081 = vpop.f32.mrb[0].mxu0
      %v1082 = vpop.f32.mrb[0].mxu0
      %v1083 = vadd.f32 %v280, %v1082
      %v1084 = vpop.f32.mrb[0].mxu0
      %1085 = vmatprep.mubr.bf16.mxu0 %v782
      %1086 = vmatmul.mubr.bf16.gmra.mrb[0].mxu0 %v580
      %v1087 = vpop.f32.mrb[0].mxu0
      %v1088 = vadd.f32 %v280, %v1087
      %v1089 = vpop.f32.mrb[0].mxu0
      %v1090 = vpop.f32.mrb[0].mxu0
      %v1091 = vadd.f32 %v280, %v1090
      %v1092 = vpop.f32.mrb[0].mxu0
      %1093 = vmatprep.mubr.bf16.mxu0 %v785
      %1094 = vmatmul.mubr.bf16.gmra.mrb[0].mxu0 %v582
      %v1095 = vpop.f32.mrb[0].mxu0
      %v1096 = vadd.f32 %v280, %v1095
      %v1097 = vpop.f32.mrb[0].mxu0
      %v1098 = vpop.f32.mrb[0].mxu0
      %v1099 = vadd.f32 %v280, %v1098
      %v1100 = vpop.f32.mrb[0].mxu0
      %1101 = vmatprep.mubr.bf16.mxu0 %v788
      %1102 = vmatmul.mubr.bf16.gmra.mrb[0].mxu0 %v584
      %v1103 = vpop.f32.mrb[0].mxu0
      %v1104 = vadd.f32 %v280, %v1103
      %v1105 = vpop.f32.mrb[0].mxu0
      %v1106 = vpop.f32.mrb[0].mxu0
      %v1107 = vadd.f32 %v280, %v1106
      %v1108 = vpop.f32.mrb[0].mxu0
      %1109 = vmatprep.mubr.bf16.mxu0 %v791
      %1110 = vmatmul.mubr.bf16.gmra.mrb[0].mxu0 %v586
      %v1111 = vpop.f32.mrb[0].mxu0
      %v1112 = vadd.f32 %v280, %v1111
      %v1113 = vpop.f32.mrb[0].mxu0
      %v1114 = vpop.f32.mrb[0].mxu0
      %v1115 = vadd.f32 %v280, %v1114
      %v1116 = vpop.f32.mrb[0].mxu0
      %1117 = vmatprep.mubr.bf16.mxu0 %v794
      %1118 = vmatmul.mubr.bf16.gmra.mrb[0].mxu0 %v588
      %v1119 = vpop.f32.mrb[0].mxu0
      %v1120 = vadd.f32 %v280, %v1119
      %v1121 = vpop.f32.mrb[0].mxu0
      %v1122 = vpop.f32.mrb[0].mxu0
      %v1123 = vadd.f32 %v280, %v1122
      %v1124 = vpop.f32.mrb[0].mxu0
      %1125 = vmatprep.mubr.bf16.mxu0 %v797
      %1126 = vmatmul.mubr.bf16.gmra.mrb[0].mxu0 %v590
      %v1127 = vpop.f32.mrb[0].mxu0
      %v1128 = vadd.f32 %v280, %v1127
      %v1129 = vpop.f32.mrb[0].mxu0
      %v1130 = vpop.f32.mrb[0].mxu0
      %v1131 = vadd.f32 %v280, %v1130
      %v1132 = vpop.f32.mrb[0].mxu0
      %1133 = vmatprep.mubr.bf16.mxu0 %v800
      %1134 = vmatmul.mubr.bf16.gmra.mrb[0].mxu0 %v592
      %v1135 = vpop.f32.mrb[0].mxu0
      %v1136 = vadd.f32 %v280, %v1135
      %v1137 = vpop.f32.mrb[0].mxu0
      %v1138 = vpop.f32.mrb[0].mxu0
      %v1139 = vadd.f32 %v280, %v1138
      %v1140 = vpop.f32.mrb[0].mxu0
      %1141 = vmatprep.mubr.bf16.mxu0 %v803
      %1142 = vmatmul.mubr.bf16.gmra.mrb[0].mxu0 %v594
      %v1143 = vpop.f32.mrb[0].mxu0
      %v1144 = vadd.f32 %v280, %v1143
      %v1145 = vpop.f32.mrb[0].mxu0
      %v1146 = vpop.f32.mrb[0].mxu0
      %v1147 = vadd.f32 %v280, %v1146
      %v1148 = vpop.f32.mrb[0].mxu0
      %1149 = vmatprep.mubr.bf16.mxu0 %v806
      %1150 = vmatmul.mubr.bf16.gmra.mrb[0].mxu0 %v596
      %v1151 = vpop.f32.mrb[0].mxu0
      %v1152 = vadd.f32 %v280, %v1151
      %v1153 = vpop.f32.mrb[0].mxu0
      %v1154 = vpop.f32.mrb[0].mxu0
      %v1155 = vadd.f32 %v280, %v1154
      %v1156 = vpop.f32.mrb[0].mxu0
      %1157 = vmatprep.mubr.bf16.mxu0 %v809
      %1158 = vmatmul.mubr.bf16.gmra.mrb[0].mxu0 %v598
      %v1159 = vpop.f32.mrb[0].mxu0
      %v1160 = vadd.f32 %v280, %v1159
      %v1161 = vpop.f32.mrb[0].mxu0
      %v1162 = vpop.f32.mrb[0].mxu0
      %v1163 = vadd.f32 %v280, %v1162
      %v1164 = vpop.f32.mrb[0].mxu0
      %1165 = vmatprep.mubr.bf16.mxu0 %v812
      %1166 = vmatmul.mubr.bf16.gmra.mrb[0].mxu0 %v600
      %v1167 = vpop.f32.mrb[0].mxu0
      %v1168 = vadd.f32 %v280, %v1167
      %v1169 = vpop.f32.mrb[0].mxu0
      %v1170 = vpop.f32.mrb[0].mxu0
      %v1171 = vadd.f32 %v280, %v1170
      %v1172 = vpop.f32.mrb[0].mxu0
      %1173 = vdwg.mxu0
      %v1174 = vsub.f32 0.0, %v856
      %v1175 = vsub.f32 0.0, %v859
      %v1176 = vsub.f32 0.0, %v864
      %v1177 = vsub.f32 0.0, %v867
      %v1178 = vsub.f32 0.0, %v872
      %v1179 = vsub.f32 0.0, %v875
      %v1180 = vsub.f32 0.0, %v880
      %v1181 = vsub.f32 0.0, %v883
      %v1182 = vsub.f32 0.0, %v888
      %v1183 = vsub.f32 0.0, %v891
      %v1184 = vsub.f32 0.0, %v896
      %v1185 = vsub.f32 0.0, %v899
      %v1186 = vsub.f32 0.0, %v904
      %v1187 = vsub.f32 0.0, %v907
      %v1188 = vsub.f32 0.0, %v912
      %v1189 = vsub.f32 0.0, %v915
      %v1190 = vsub.f32 0.0, %v920
      %v1191 = vsub.f32 0.0, %v923
      %v1192 = vsub.f32 0.0, %v928
      %v1193 = vsub.f32 0.0, %v931
      %v1194 = vsub.f32 0.0, %v936
      %v1195 = vsub.f32 0.0, %v939
      %v1196 = vsub.f32 0.0, %v944
      %v1197 = vsub.f32 0.0, %v947
      %v1198 = vsub.f32 0.0, %v952
      %v1199 = vsub.f32 0.0, %v955
      %v1200 = vsub.f32 0.0, %v960
      %v1201 = vsub.f32 0.0, %v963
      %v1202 = vsub.f32 0.0, %v968
      %v1203 = vsub.f32 0.0, %v971
      %v1204 = vsub.f32 0.0, %v976
      %v1205 = vsub.f32 0.0, %v979
      %v1206 = vsub.f32 0.0, %v984
      %v1207 = vsub.f32 0.0, %v987
      %v1208 = vsub.f32 0.0, %v992
      %v1209 = vsub.f32 0.0, %v995
      %v1210 = vsub.f32 0.0, %v1000
      %v1211 = vsub.f32 0.0, %v1003
      %v1212 = vsub.f32 0.0, %v1008
      %v1213 = vsub.f32 0.0, %v1011
      %v1214 = vsub.f32 0.0, %v1016
      %v1215 = vsub.f32 0.0, %v1019
      %v1216 = vsub.f32 0.0, %v1024
      %v1217 = vsub.f32 0.0, %v1027
      %v1218 = vsub.f32 0.0, %v1032
      %v1219 = vsub.f32 0.0, %v1035
      %v1220 = vsub.f32 0.0, %v1040
      %v1221 = vsub.f32 0.0, %v1043
      %v1222 = vsub.f32 0.0, %v1048
      %v1223 = vsub.f32 0.0, %v1051
      %v1224 = vsub.f32 0.0, %v1056
      %v1225 = vsub.f32 0.0, %v1059
      %v1226 = vsub.f32 0.0, %v1064
      %v1227 = vsub.f32 0.0, %v1067
      %v1228 = vsub.f32 0.0, %v1072
      %v1229 = vsub.f32 0.0, %v1075
      %v1230 = vsub.f32 0.0, %v1080
      %v1231 = vsub.f32 0.0, %v1083
      %v1232 = vsub.f32 0.0, %v1088
      %v1233 = vsub.f32 0.0, %v1091
      %v1234 = vsub.f32 0.0, %v1096
      %v1235 = vsub.f32 0.0, %v1099
      %v1236 = vsub.f32 0.0, %v1104
      %v1237 = vsub.f32 0.0, %v1107
      %v1238 = vsub.f32 0.0, %v1112
      %v1239 = vsub.f32 0.0, %v1115
      %v1240 = vsub.f32 0.0, %v1120
      %v1241 = vsub.f32 0.0, %v1123
      %v1242 = vsub.f32 0.0, %v1128
      %v1243 = vsub.f32 0.0, %v1131
      %v1244 = vsub.f32 0.0, %v1136
      %v1245 = vsub.f32 0.0, %v1139
      %v1246 = vsub.f32 0.0, %v1144
      %v1247 = vsub.f32 0.0, %v1147
      %v1248 = vsub.f32 0.0, %v1152
      %v1249 = vsub.f32 0.0, %v1155
      %v1250 = vsub.f32 0.0, %v1160
      %v1251 = vsub.f32 0.0, %v1163
      %v1252 = vsub.f32 0.0, %v1168
      %v1253 = vsub.f32 0.0, %v1171
      %v1254 = vmul.f32 %v1174, 1.442695
      %v1255 = vpow.pop %v1254
      %v1256 = vmul.f32 %v1175, 1.442695
      %v1257 = vpow.pop %v1256
      %v1258 = vmul.f32 %v1176, 1.442695
      %v1259 = vpow.pop %v1258
      %v1260 = vmul.f32 %v1177, 1.442695
      %v1261 = vpow.pop %v1260
      %v1262 = vmul.f32 %v1178, 1.442695
      %v1263 = vpow.pop %v1262
      %v1264 = vmul.f32 %v1179, 1.442695
      %v1265 = vpow.pop %v1264
      %v1266 = vmul.f32 %v1180, 1.442695
      %v1267 = vpow.pop %v1266
      %v1268 = vmul.f32 %v1181, 1.442695
      %v1269 = vpow.pop %v1268
      %v1270 = vmul.f32 %v1182, 1.442695
      %v1271 = vpow.pop %v1270
      %v1272 = vmul.f32 %v1183, 1.442695
      %v1273 = vpow.pop %v1272
      %v1274 = vmul.f32 %v1184, 1.442695
      %v1275 = vpow.pop %v1274
      %v1276 = vmul.f32 %v1185, 1.442695
      %v1277 = vpow.pop %v1276
      %v1278 = vmul.f32 %v1186, 1.442695
      %v1279 = vpow.pop %v1278
      %v1280 = vmul.f32 %v1187, 1.442695
      %v1281 = vpow.pop %v1280
      %v1282 = vmul.f32 %v1188, 1.442695
      %v1283 = vpow.pop %v1282
      %v1284 = vmul.f32 %v1189, 1.442695
      %v1285 = vpow.pop %v1284
      %v1286 = vmul.f32 %v1190, 1.442695
      %v1287 = vpow.pop %v1286
      %v1288 = vmul.f32 %v1191, 1.442695
      %v1289 = vpow.pop %v1288
      %v1290 = vmul.f32 %v1192, 1.442695
      %v1291 = vpow.pop %v1290
      %v1292 = vmul.f32 %v1193, 1.442695
      %v1293 = vpow.pop %v1292
      %v1294 = vmul.f32 %v1194, 1.442695
      %v1295 = vpow.pop %v1294
      %v1296 = vmul.f32 %v1195, 1.442695
      %v1297 = vpow.pop %v1296
      %v1298 = vmul.f32 %v1196, 1.442695
      %v1299 = vpow.pop %v1298
      %v1300 = vmul.f32 %v1197, 1.442695
      %v1301 = vpow.pop %v1300
      %v1302 = vmul.f32 %v1198, 1.442695
      %v1303 = vpow.pop %v1302
      %v1304 = vmul.f32 %v1199, 1.442695
      %v1305 = vpow.pop %v1304
      %v1306 = vmul.f32 %v1200, 1.442695
      %v1307 = vpow.pop %v1306
      %v1308 = vmul.f32 %v1201, 1.442695
      %v1309 = vpow.pop %v1308
      %v1310 = vmul.f32 %v1202, 1.442695
      %v1311 = vpow.pop %v1310
      %v1312 = vmul.f32 %v1203, 1.442695
      %v1313 = vpow.pop %v1312
      %v1314 = vmul.f32 %v1204, 1.442695
      %v1315 = vpow.pop %v1314
      %v1316 = vmul.f32 %v1205, 1.442695
      %v1317 = vpow.pop %v1316
      %v1318 = vmul.f32 %v1206, 1.442695
      %v1319 = vpow.pop %v1318
      %v1320 = vmul.f32 %v1207, 1.442695
      %v1321 = vpow.pop %v1320
      %v1322 = vmul.f32 %v1208, 1.442695
      %v1323 = vpow.pop %v1322
      %v1324 = vmul.f32 %v1209, 1.442695
      %v1325 = vpow.pop %v1324
      %v1326 = vmul.f32 %v1210, 1.442695
      %v1327 = vpow.pop %v1326
      %v1328 = vmul.f32 %v1211, 1.442695
      %v1329 = vpow.pop %v1328
      %v1330 = vmul.f32 %v1212, 1.442695
      %v1331 = vpow.pop %v1330
      %v1332 = vmul.f32 %v1213, 1.442695
      %v1333 = vpow.pop %v1332
      %v1334 = vmul.f32 %v1214, 1.442695
      %v1335 = vpow.pop %v1334
      %v1336 = vmul.f32 %v1215, 1.442695
      %v1337 = vpow.pop %v1336
      %v1338 = vmul.f32 %v1216, 1.442695
      %v1339 = vpow.pop %v1338
      %v1340 = vmul.f32 %v1217, 1.442695
      %v1341 = vpow.pop %v1340
      %v1342 = vmul.f32 %v1218, 1.442695
      %v1343 = vpow.pop %v1342
      %v1344 = vmul.f32 %v1219, 1.442695
      %v1345 = vpow.pop %v1344
      %v1346 = vmul.f32 %v1220, 1.442695
      %v1347 = vpow.pop %v1346
      %v1348 = vmul.f32 %v1221, 1.442695
      %v1349 = vpow.pop %v1348
      %v1350 = vmul.f32 %v1222, 1.442695
      %v1351 = vpow.pop %v1350
      %v1352 = vmul.f32 %v1223, 1.442695
      %v1353 = vpow.pop %v1352
      %v1354 = vmul.f32 %v1224, 1.442695
      %v1355 = vpow.pop %v1354
      %v1356 = vmul.f32 %v1225, 1.442695
      %v1357 = vpow.pop %v1356
      %v1358 = vmul.f32 %v1226, 1.442695
      %v1359 = vpow.pop %v1358
      %v1360 = vmul.f32 %v1227, 1.442695
      %v1361 = vpow.pop %v1360
      %v1362 = vmul.f32 %v1228, 1.442695
      %v1363 = vpow.pop %v1362
      %v1364 = vmul.f32 %v1229, 1.442695
      %v1365 = vpow.pop %v1364
      %v1366 = vmul.f32 %v1230, 1.442695
      %v1367 = vpow.pop %v1366
      %v1368 = vmul.f32 %v1231, 1.442695
      %v1369 = vpow.pop %v1368
      %v1370 = vmul.f32 %v1232, 1.442695
      %v1371 = vpow.pop %v1370
      %v1372 = vmul.f32 %v1233, 1.442695
      %v1373 = vpow.pop %v1372
      %v1374 = vmul.f32 %v1234, 1.442695
      %v1375 = vpow.pop %v1374
      %v1376 = vmul.f32 %v1235, 1.442695
      %v1377 = vpow.pop %v1376
      %v1378 = vmul.f32 %v1236, 1.442695
      %v1379 = vpow.pop %v1378
      %v1380 = vmul.f32 %v1237, 1.442695
      %v1381 = vpow.pop %v1380
      %v1382 = vmul.f32 %v1238, 1.442695
      %v1383 = vpow.pop %v1382
      %v1384 = vmul.f32 %v1239, 1.442695
      %v1385 = vpow.pop %v1384
      %v1386 = vmul.f32 %v1240, 1.442695
      %v1387 = vpow.pop %v1386
      %v1388 = vmul.f32 %v1241, 1.442695
      %v1389 = vpow.pop %v1388
      %v1390 = vmul.f32 %v1242, 1.442695
      %v1391 = vpow.pop %v1390
      %v1392 = vmul.f32 %v1243, 1.442695
      %v1393 = vpow.pop %v1392
      %v1394 = vmul.f32 %v1244, 1.442695
      %v1395 = vpow.pop %v1394
      %v1396 = vmul.f32 %v1245, 1.442695
      %v1397 = vpow.pop %v1396
      %v1398 = vmul.f32 %v1246, 1.442695
      %v1399 = vpow.pop %v1398
      %v1400 = vmul.f32 %v1247, 1.442695
      %v1401 = vpow.pop %v1400
      %v1402 = vmul.f32 %v1248, 1.442695
      %v1403 = vpow.pop %v1402
      %v1404 = vmul.f32 %v1249, 1.442695
      %v1405 = vpow.pop %v1404
      %v1406 = vmul.f32 %v1250, 1.442695
      %v1407 = vpow.pop %v1406
      %v1408 = vmul.f32 %v1251, 1.442695
      %v1409 = vpow.pop %v1408
      %v1410 = vmul.f32 %v1252, 1.442695
      %v1411 = vpow.pop %v1410
      %v1412 = vmul.f32 %v1253, 1.442695
      %v1413 = vpow.pop %v1412
      %v1414 = vadd.f32 %v1255, 1.0
      %v1415 = vadd.f32 %v1257, 1.0
      %v1416 = vadd.f32 %v1259, 1.0
      %v1417 = vadd.f32 %v1261, 1.0
      %v1418 = vadd.f32 %v1263, 1.0
      %v1419 = vadd.f32 %v1265, 1.0
      %v1420 = vadd.f32 %v1267, 1.0
      %v1421 = vadd.f32 %v1269, 1.0
      %v1422 = vadd.f32 %v1271, 1.0
      %v1423 = vadd.f32 %v1273, 1.0
      %v1424 = vadd.f32 %v1275, 1.0
      %v1425 = vadd.f32 %v1277, 1.0
      %v1426 = vadd.f32 %v1279, 1.0
      %v1427 = vadd.f32 %v1281, 1.0
      %v1428 = vadd.f32 %v1283, 1.0
      %v1429 = vadd.f32 %v1285, 1.0
      %v1430 = vadd.f32 %v1287, 1.0
      %v1431 = vadd.f32 %v1289, 1.0
      %v1432 = vadd.f32 %v1291, 1.0
      %v1433 = vadd.f32 %v1293, 1.0
      %v1434 = vadd.f32 %v1295, 1.0
      %v1435 = vadd.f32 %v1297, 1.0
      %v1436 = vadd.f32 %v1299, 1.0
      %v1437 = vadd.f32 %v1301, 1.0
      %v1438 = vadd.f32 %v1303, 1.0
      %v1439 = vadd.f32 %v1305, 1.0
      %v1440 = vadd.f32 %v1307, 1.0
      %v1441 = vadd.f32 %v1309, 1.0
      %v1442 = vadd.f32 %v1311, 1.0
      %v1443 = vadd.f32 %v1313, 1.0
      %v1444 = vadd.f32 %v1315, 1.0
      %v1445 = vadd.f32 %v1317, 1.0
      %v1446 = vadd.f32 %v1319, 1.0
      %v1447 = vadd.f32 %v1321, 1.0
      %v1448 = vadd.f32 %v1323, 1.0
      %v1449 = vadd.f32 %v1325, 1.0
      %v1450 = vadd.f32 %v1327, 1.0
      %v1451 = vadd.f32 %v1329, 1.0
      %v1452 = vadd.f32 %v1331, 1.0
      %v1453 = vadd.f32 %v1333, 1.0
      %v1454 = vadd.f32 %v1335, 1.0
      %v1455 = vadd.f32 %v1337, 1.0
      %v1456 = vadd.f32 %v1339, 1.0
      %v1457 = vadd.f32 %v1341, 1.0
      %v1458 = vadd.f32 %v1343, 1.0
      %v1459 = vadd.f32 %v1345, 1.0
      %v1460 = vadd.f32 %v1347, 1.0
      %v1461 = vadd.f32 %v1349, 1.0
      %v1462 = vadd.f32 %v1351, 1.0
      %v1463 = vadd.f32 %v1353, 1.0
      %v1464 = vadd.f32 %v1355, 1.0
      %v1465 = vadd.f32 %v1357, 1.0
      %v1466 = vadd.f32 %v1359, 1.0
      %v1467 = vadd.f32 %v1361, 1.0
      %v1468 = vadd.f32 %v1363, 1.0
      %v1469 = vadd.f32 %v1365, 1.0
      %v1470 = vadd.f32 %v1367, 1.0
      %v1471 = vadd.f32 %v1369, 1.0
      %v1472 = vadd.f32 %v1371, 1.0
      %v1473 = vadd.f32 %v1373, 1.0
      %v1474 = vadd.f32 %v1375, 1.0
      %v1475 = vadd.f32 %v1377, 1.0
      %v1476 = vadd.f32 %v1379, 1.0
      %v1477 = vadd.f32 %v1381, 1.0
      %v1478 = vadd.f32 %v1383, 1.0
      %v1479 = vadd.f32 %v1385, 1.0
      %v1480 = vadd.f32 %v1387, 1.0
      %v1481 = vadd.f32 %v1389, 1.0
      %v1482 = vadd.f32 %v1391, 1.0
      %v1483 = vadd.f32 %v1393, 1.0
      %v1484 = vadd.f32 %v1395, 1.0
      %v1485 = vadd.f32 %v1397, 1.0
      %v1486 = vadd.f32 %v1399, 1.0
      %v1487 = vadd.f32 %v1401, 1.0
      %v1488 = vadd.f32 %v1403, 1.0
      %v1489 = vadd.f32 %v1405, 1.0
      %v1490 = vadd.f32 %v1407, 1.0
      %v1491 = vadd.f32 %v1409, 1.0
      %v1492 = vadd.f32 %v1411, 1.0
      %v1493 = vadd.f32 %v1413, 1.0
      %v1494 = vrcp.pop %v1414
      %v1495 = vrcp.pop %v1415
      %v1496 = vrcp.pop %v1416
      %v1497 = vrcp.pop %v1417
      %v1498 = vrcp.pop %v1418
      %v1499 = vrcp.pop %v1419
      %v1500 = vrcp.pop %v1420
      %v1501 = vrcp.pop %v1421
      %v1502 = vrcp.pop %v1422
      %v1503 = vrcp.pop %v1423
      %v1504 = vrcp.pop %v1424
      %v1505 = vrcp.pop %v1425
      %v1506 = vrcp.pop %v1426
      %v1507 = vrcp.pop %v1427
      %v1508 = vrcp.pop %v1428
      %v1509 = vrcp.pop %v1429
      %v1510 = vrcp.pop %v1430
      %v1511 = vrcp.pop %v1431
      %v1512 = vrcp.pop %v1432
      %v1513 = vrcp.pop %v1433
      %v1514 = vrcp.pop %v1434
      %v1515 = vrcp.pop %v1435
      %v1516 = vrcp.pop %v1436
      %v1517 = vrcp.pop %v1437
      %v1518 = vrcp.pop %v1438
      %v1519 = vrcp.pop %v1439
      %v1520 = vrcp.pop %v1440
      %v1521 = vrcp.pop %v1441
      %v1522 = vrcp.pop %v1442
      %v1523 = vrcp.pop %v1443
      %v1524 = vrcp.pop %v1444
      %v1525 = vrcp.pop %v1445
      %v1526 = vrcp.pop %v1446
      %v1527 = vrcp.pop %v1447
      %v1528 = vrcp.pop %v1448
      %v1529 = vrcp.pop %v1449
      %v1530 = vrcp.pop %v1450
      %v1531 = vrcp.pop %v1451
      %v1532 = vrcp.pop %v1452
      %v1533 = vrcp.pop %v1453
      %v1534 = vrcp.pop %v1454
      %v1535 = vrcp.pop %v1455
      %v1536 = vrcp.pop %v1456
      %v1537 = vrcp.pop %v1457
      %v1538 = vrcp.pop %v1458
      %v1539 = vrcp.pop %v1459
      %v1540 = vrcp.pop %v1460
      %v1541 = vrcp.pop %v1461
      %v1542 = vrcp.pop %v1462
      %v1543 = vrcp.pop %v1463
      %v1544 = vrcp.pop %v1464
      %v1545 = vrcp.pop %v1465
      %v1546 = vrcp.pop %v1466
      %v1547 = vrcp.pop %v1467
      %v1548 = vrcp.pop %v1468
      %v1549 = vrcp.pop %v1469
      %v1550 = vrcp.pop %v1470
      %v1551 = vrcp.pop %v1471
      %v1552 = vrcp.pop %v1472
      %v1553 = vrcp.pop %v1473
      %v1554 = vrcp.pop %v1474
      %v1555 = vrcp.pop %v1475
      %v1556 = vrcp.pop %v1476
      %v1557 = vrcp.pop %v1477
      %v1558 = vrcp.pop %v1478
      %v1559 = vrcp.pop %v1479
      %v1560 = vrcp.pop %v1480
      %v1561 = vrcp.pop %v1481
      %v1562 = vrcp.pop %v1482
      %v1563 = vrcp.pop %v1483
      %v1564 = vrcp.pop %v1484
      %v1565 = vrcp.pop %v1485
      %v1566 = vrcp.pop %v1486
      %v1567 = vrcp.pop %v1487
      %v1568 = vrcp.pop %v1488
      %v1569 = vrcp.pop %v1489
      %v1570 = vrcp.pop %v1490
      %v1571 = vrcp.pop %v1491
      %v1572 = vrcp.pop %v1492
      %v1573 = vrcp.pop %v1493
      %1654 = vrot.lane.b32.xlu0 %v1494, 96
      %v1655 = vpop.permute.xlu0 %1654
      %1656 = vrot.lane.b32.xlu0 %v1495, 96
      %v1657 = vpop.permute.xlu0 %1656
      %1658 = vrot.lane.b32.xlu0 %v1496, 96
      %v1659 = vpop.permute.xlu0 %1658
      %1660 = vrot.lane.b32.xlu0 %v1497, 96
      %v1661 = vpop.permute.xlu0 %1660
      %1662 = vrot.lane.b32.xlu0 %v1498, 96
      %v1663 = vpop.permute.xlu0 %1662
      %1664 = vrot.lane.b32.xlu0 %v1499, 96
      %v1665 = vpop.permute.xlu0 %1664
      %1666 = vrot.lane.b32.xlu0 %v1500, 96
      %v1667 = vpop.permute.xlu0 %1666
      %1668 = vrot.lane.b32.xlu0 %v1501, 96
      %v1669 = vpop.permute.xlu0 %1668
      %1670 = vrot.lane.b32.xlu0 %v1502, 96
      %v1671 = vpop.permute.xlu0 %1670
      %1672 = vrot.lane.b32.xlu0 %v1503, 96
      %v1673 = vpop.permute.xlu0 %1672
      %1674 = vrot.lane.b32.xlu0 %v1504, 96
      %v1675 = vpop.permute.xlu0 %1674
      %1676 = vrot.lane.b32.xlu0 %v1505, 96
      %v1677 = vpop.permute.xlu0 %1676
      %1678 = vrot.lane.b32.xlu0 %v1506, 96
      %v1679 = vpop.permute.xlu0 %1678
      %1680 = vrot.lane.b32.xlu0 %v1507, 96
      %v1681 = vpop.permute.xlu0 %1680
      %1682 = vrot.lane.b32.xlu0 %v1508, 96
      %v1683 = vpop.permute.xlu0 %1682
      %1684 = vrot.lane.b32.xlu0 %v1509, 96
      %v1685 = vpop.permute.xlu0 %1684
      %1686 = vrot.lane.b32.xlu0 %v1510, 96
      %v1687 = vpop.permute.xlu0 %1686
      %1688 = vrot.lane.b32.xlu0 %v1511, 96
      %v1689 = vpop.permute.xlu0 %1688
      %1690 = vrot.lane.b32.xlu0 %v1512, 96
      %v1691 = vpop.permute.xlu0 %1690
      %1692 = vrot.lane.b32.xlu0 %v1513, 96
      %v1693 = vpop.permute.xlu0 %1692
      %1694 = vrot.lane.b32.xlu0 %v1514, 96
      %v1695 = vpop.permute.xlu0 %1694
      %1696 = vrot.lane.b32.xlu0 %v1515, 96
      %v1697 = vpop.permute.xlu0 %1696
      %1698 = vrot.lane.b32.xlu0 %v1516, 96
      %v1699 = vpop.permute.xlu0 %1698
      %1700 = vrot.lane.b32.xlu0 %v1517, 96
      %v1701 = vpop.permute.xlu0 %1700
      %1702 = vrot.lane.b32.xlu0 %v1518, 96
      %v1703 = vpop.permute.xlu0 %1702
      %1704 = vrot.lane.b32.xlu0 %v1519, 96
      %v1705 = vpop.permute.xlu0 %1704
      %1706 = vrot.lane.b32.xlu0 %v1520, 96
      %v1707 = vpop.permute.xlu0 %1706
      %1708 = vrot.lane.b32.xlu0 %v1521, 96
      %v1709 = vpop.permute.xlu0 %1708
      %1710 = vrot.lane.b32.xlu0 %v1522, 96
      %v1711 = vpop.permute.xlu0 %1710
      %1712 = vrot.lane.b32.xlu0 %v1523, 96
      %v1713 = vpop.permute.xlu0 %1712
      %1714 = vrot.lane.b32.xlu0 %v1524, 96
      %v1715 = vpop.permute.xlu0 %1714
      %1716 = vrot.lane.b32.xlu0 %v1525, 96
      %v1717 = vpop.permute.xlu0 %1716
      %1718 = vrot.lane.b32.xlu0 %v1526, 96
      %v1719 = vpop.permute.xlu0 %1718
      %1720 = vrot.lane.b32.xlu0 %v1527, 96
      %v1721 = vpop.permute.xlu0 %1720
      %1722 = vrot.lane.b32.xlu0 %v1528, 96
      %v1723 = vpop.permute.xlu0 %1722
      %1724 = vrot.lane.b32.xlu0 %v1529, 96
      %v1725 = vpop.permute.xlu0 %1724
      %1726 = vrot.lane.b32.xlu0 %v1530, 96
      %v1727 = vpop.permute.xlu0 %1726
      %1728 = vrot.lane.b32.xlu0 %v1531, 96
      %v1729 = vpop.permute.xlu0 %1728
      %1730 = vrot.lane.b32.xlu0 %v1532, 96
      %v1731 = vpop.permute.xlu0 %1730
      %1732 = vrot.lane.b32.xlu0 %v1533, 96
      %v1733 = vpop.permute.xlu0 %1732
      %1734 = vrot.lane.b32.xlu0 %v1534, 96
      %v1735 = vpop.permute.xlu0 %1734
      %1736 = vrot.lane.b32.xlu0 %v1535, 96
      %v1737 = vpop.permute.xlu0 %1736
      %1738 = vrot.lane.b32.xlu0 %v1536, 96
      %v1739 = vpop.permute.xlu0 %1738
      %1740 = vrot.lane.b32.xlu0 %v1537, 96
      %v1741 = vpop.permute.xlu0 %1740
      %1742 = vrot.lane.b32.xlu0 %v1538, 96
      %v1743 = vpop.permute.xlu0 %1742
      %1744 = vrot.lane.b32.xlu0 %v1539, 96
      %v1745 = vpop.permute.xlu0 %1744
      %1746 = vrot.lane.b32.xlu0 %v1540, 96
      %v1747 = vpop.permute.xlu0 %1746
      %1748 = vrot.lane.b32.xlu0 %v1541, 96
      %v1749 = vpop.permute.xlu0 %1748
      %1750 = vrot.lane.b32.xlu0 %v1542, 96
      %v1751 = vpop.permute.xlu0 %1750
      %1752 = vrot.lane.b32.xlu0 %v1543, 96
      %v1753 = vpop.permute.xlu0 %1752
      %1754 = vrot.lane.b32.xlu0 %v1544, 96
      %v1755 = vpop.permute.xlu0 %1754
      %1756 = vrot.lane.b32.xlu0 %v1545, 96
      %v1757 = vpop.permute.xlu0 %1756
      %1758 = vrot.lane.b32.xlu0 %v1546, 96
      %v1759 = vpop.permute.xlu0 %1758
      %1760 = vrot.lane.b32.xlu0 %v1547, 96
      %v1761 = vpop.permute.xlu0 %1760
      %1762 = vrot.lane.b32.xlu0 %v1548, 96
      %v1763 = vpop.permute.xlu0 %1762
      %1764 = vrot.lane.b32.xlu0 %v1549, 96
      %v1765 = vpop.permute.xlu0 %1764
      %1766 = vrot.lane.b32.xlu0 %v1550, 96
      %v1767 = vpop.permute.xlu0 %1766
      %1768 = vrot.lane.b32.xlu0 %v1551, 96
      %v1769 = vpop.permute.xlu0 %1768
      %1770 = vrot.lane.b32.xlu0 %v1552, 96
      %v1771 = vpop.permute.xlu0 %1770
      %1772 = vrot.lane.b32.xlu0 %v1553, 96
      %v1773 = vpop.permute.xlu0 %1772
      %1774 = vrot.lane.b32.xlu0 %v1554, 96
      %v1775 = vpop.permute.xlu0 %1774
      %1776 = vrot.lane.b32.xlu0 %v1555, 96
      %v1777 = vpop.permute.xlu0 %1776
      %1778 = vrot.lane.b32.xlu0 %v1556, 96
      %v1779 = vpop.permute.xlu0 %1778
      %1780 = vrot.lane.b32.xlu0 %v1557, 96
      %v1781 = vpop.permute.xlu0 %1780
      %1782 = vrot.lane.b32.xlu0 %v1558, 96
      %v1783 = vpop.permute.xlu0 %1782
      %1784 = vrot.lane.b32.xlu0 %v1559, 96
      %v1785 = vpop.permute.xlu0 %1784
      %1786 = vrot.lane.b32.xlu0 %v1560, 96
      %v1787 = vpop.permute.xlu0 %1786
      %1788 = vrot.lane.b32.xlu0 %v1561, 96
      %v1789 = vpop.permute.xlu0 %1788
      %1790 = vrot.lane.b32.xlu0 %v1562, 96
      %v1791 = vpop.permute.xlu0 %1790
      %1792 = vrot.lane.b32.xlu0 %v1563, 96
      %v1793 = vpop.permute.xlu0 %1792
      %1794 = vrot.lane.b32.xlu0 %v1564, 96
      %v1795 = vpop.permute.xlu0 %1794
      %1796 = vrot.lane.b32.xlu0 %v1565, 96
      %v1797 = vpop.permute.xlu0 %1796
      %1798 = vrot.lane.b32.xlu0 %v1566, 96
      %v1799 = vpop.permute.xlu0 %1798
      %1800 = vrot.lane.b32.xlu0 %v1567, 96
      %v1801 = vpop.permute.xlu0 %1800
      %1802 = vrot.lane.b32.xlu0 %v1568, 96
      %v1803 = vpop.permute.xlu0 %1802
      %1804 = vrot.lane.b32.xlu0 %v1569, 96
      %v1805 = vpop.permute.xlu0 %1804
      %1806 = vrot.lane.b32.xlu0 %v1570, 96
      %v1807 = vpop.permute.xlu0 %1806
      %1808 = vrot.lane.b32.xlu0 %v1571, 96
      %v1809 = vpop.permute.xlu0 %1808
      %1810 = vrot.lane.b32.xlu0 %v1572, 96
      %v1811 = vpop.permute.xlu0 %1810
      %1812 = vrot.lane.b32.xlu0 %v1573, 96
      %v1813 = vpop.permute.xlu0 %1812
      %v1894 = vmul.f32 %v856, %v1655
      %v1895 = vmul.f32 %v859, %v1657
      %v1896 = vmul.f32 %v864, %v1659
      %v1897 = vmul.f32 %v867, %v1661
      %v1898 = vmul.f32 %v872, %v1663
      %v1899 = vmul.f32 %v875, %v1665
      %v1900 = vmul.f32 %v880, %v1667
      %v1901 = vmul.f32 %v883, %v1669
      %v1902 = vmul.f32 %v888, %v1671
      %v1903 = vmul.f32 %v891, %v1673
      %v1904 = vmul.f32 %v896, %v1675
      %v1905 = vmul.f32 %v899, %v1677
      %v1906 = vmul.f32 %v904, %v1679
      %v1907 = vmul.f32 %v907, %v1681
      %v1908 = vmul.f32 %v912, %v1683
      %v1909 = vmul.f32 %v915, %v1685
      %v1910 = vmul.f32 %v920, %v1687
      %v1911 = vmul.f32 %v923, %v1689
      %v1912 = vmul.f32 %v928, %v1691
      %v1913 = vmul.f32 %v931, %v1693
      %v1914 = vmul.f32 %v936, %v1695
      %v1915 = vmul.f32 %v939, %v1697
      %v1916 = vmul.f32 %v944, %v1699
      %v1917 = vmul.f32 %v947, %v1701
      %v1918 = vmul.f32 %v952, %v1703
      %v1919 = vmul.f32 %v955, %v1705
      %v1920 = vmul.f32 %v960, %v1707
      %v1921 = vmul.f32 %v963, %v1709
      %v1922 = vmul.f32 %v968, %v1711
      %v1923 = vmul.f32 %v971, %v1713
      %v1924 = vmul.f32 %v976, %v1715
      %v1925 = vmul.f32 %v979, %v1717
      %v1926 = vmul.f32 %v984, %v1719
      %v1927 = vmul.f32 %v987, %v1721
      %v1928 = vmul.f32 %v992, %v1723
      %v1929 = vmul.f32 %v995, %v1725
      %v1930 = vmul.f32 %v1000, %v1727
      %v1931 = vmul.f32 %v1003, %v1729
      %v1932 = vmul.f32 %v1008, %v1731
      %v1933 = vmul.f32 %v1011, %v1733
      %v1934 = vmul.f32 %v1016, %v1735
      %v1935 = vmul.f32 %v1019, %v1737
      %v1936 = vmul.f32 %v1024, %v1739
      %v1937 = vmul.f32 %v1027, %v1741
      %v1938 = vmul.f32 %v1032, %v1743
      %v1939 = vmul.f32 %v1035, %v1745
      %v1940 = vmul.f32 %v1040, %v1747
      %v1941 = vmul.f32 %v1043, %v1749
      %v1942 = vmul.f32 %v1048, %v1751
      %v1943 = vmul.f32 %v1051, %v1753
      %v1944 = vmul.f32 %v1056, %v1755
      %v1945 = vmul.f32 %v1059, %v1757
      %v1946 = vmul.f32 %v1064, %v1759
      %v1947 = vmul.f32 %v1067, %v1761
      %v1948 = vmul.f32 %v1072, %v1763
      %v1949 = vmul.f32 %v1075, %v1765
      %v1950 = vmul.f32 %v1080, %v1767
      %v1951 = vmul.f32 %v1083, %v1769
      %v1952 = vmul.f32 %v1088, %v1771
      %v1953 = vmul.f32 %v1091, %v1773
      %v1954 = vmul.f32 %v1096, %v1775
      %v1955 = vmul.f32 %v1099, %v1777
      %v1956 = vmul.f32 %v1104, %v1779
      %v1957 = vmul.f32 %v1107, %v1781
      %v1958 = vmul.f32 %v1112, %v1783
      %v1959 = vmul.f32 %v1115, %v1785
      %v1960 = vmul.f32 %v1120, %v1787
      %v1961 = vmul.f32 %v1123, %v1789
      %v1962 = vmul.f32 %v1128, %v1791
      %v1963 = vmul.f32 %v1131, %v1793
      %v1964 = vmul.f32 %v1136, %v1795
      %v1965 = vmul.f32 %v1139, %v1797
      %v1966 = vmul.f32 %v1144, %v1799
      %v1967 = vmul.f32 %v1147, %v1801
      %v1968 = vmul.f32 %v1152, %v1803
      %v1969 = vmul.f32 %v1155, %v1805
      %v1970 = vmul.f32 %v1160, %v1807
      %v1971 = vmul.f32 %v1163, %v1809
      %v1972 = vmul.f32 %v1168, %v1811
      %v1973 = vmul.f32 %v1171, %v1813
      %vm1974 = vcmask 261120
      %1975 = vst.msk [vmem:[%s175] sm:$0xff] %vm1974, %v1894
      %1976 = vst.msk [vmem:[%s175 + $0x8] sm:$0xff] %vm1974, %v1895
      %1977 = vst.msk [vmem:[%s175 + $0x10] sm:$0xff] %vm1974, %v1896
      %1978 = vst.msk [vmem:[%s175 + $0x18] sm:$0xff] %vm1974, %v1897
      %1979 = vst.msk [vmem:[%s175 + $0x20] sm:$0xff] %vm1974, %v1898
      %1980 = vst.msk [vmem:[%s175 + $0x28] sm:$0xff] %vm1974, %v1899
      %1981 = vst.msk [vmem:[%s175 + $0x30] sm:$0xff] %vm1974, %v1900
      %1982 = vst.msk [vmem:[%s175 + $0x38] sm:$0xff] %vm1974, %v1901
      %1983 = vst.msk [vmem:[%s175 + $0x40] sm:$0xff] %vm1974, %v1902
      %1984 = vst.msk [vmem:[%s175 + $0x48] sm:$0xff] %vm1974, %v1903
      %1985 = vst.msk [vmem:[%s175 + $0x50] sm:$0xff] %vm1974, %v1904
      %1986 = vst.msk [vmem:[%s175 + $0x58] sm:$0xff] %vm1974, %v1905
      %1987 = vst.msk [vmem:[%s175 + $0x60] sm:$0xff] %vm1974, %v1906
      %1988 = vst.msk [vmem:[%s175 + $0x68] sm:$0xff] %vm1974, %v1907
      %1989 = vst.msk [vmem:[%s175 + $0x70] sm:$0xff] %vm1974, %v1908
      %1990 = vst.msk [vmem:[%s175 + $0x78] sm:$0xff] %vm1974, %v1909
      %1991 = vst.msk [vmem:[%s175 + $0x80] sm:$0xff] %vm1974, %v1910
      %1992 = vst.msk [vmem:[%s175 + $0x88] sm:$0xff] %vm1974, %v1911
      %1993 = vst.msk [vmem:[%s175 + $0x90] sm:$0xff] %vm1974, %v1912
      %1994 = vst.msk [vmem:[%s175 + $0x98] sm:$0xff] %vm1974, %v1913
      %1995 = vst.msk [vmem:[%s175 + $0xa0] sm:$0xff] %vm1974, %v1914
      %1996 = vst.msk [vmem:[%s175 + $0xa8] sm:$0xff] %vm1974, %v1915
      %1997 = vst.msk [vmem:[%s175 + $0xb0] sm:$0xff] %vm1974, %v1916
      %1998 = vst.msk [vmem:[%s175 + $0xb8] sm:$0xff] %vm1974, %v1917
      %1999 = vst.msk [vmem:[%s175 + $0xc0] sm:$0xff] %vm1974, %v1918
      %2000 = vst.msk [vmem:[%s175 + $0xc8] sm:$0xff] %vm1974, %v1919
      %2001 = vst.msk [vmem:[%s175 + $0xd0] sm:$0xff] %vm1974, %v1920
      %2002 = vst.msk [vmem:[%s175 + $0xd8] sm:$0xff] %vm1974, %v1921
      %2003 = vst.msk [vmem:[%s175 + $0xe0] sm:$0xff] %vm1974, %v1922
      %2004 = vst.msk [vmem:[%s175 + $0xe8] sm:$0xff] %vm1974, %v1923
      %2005 = vst.msk [vmem:[%s175 + $0xf0] sm:$0xff] %vm1974, %v1924
      %2006 = vst.msk [vmem:[%s175 + $0xf8] sm:$0xff] %vm1974, %v1925
      %2007 = vst.msk [vmem:[%s175 + $0x100] sm:$0xff] %vm1974, %v1926
      %2008 = vst.msk [vmem:[%s175 + $0x108] sm:$0xff] %vm1974, %v1927
      %2009 = vst.msk [vmem:[%s175 + $0x110] sm:$0xff] %vm1974, %v1928
      %2010 = vst.msk [vmem:[%s175 + $0x118] sm:$0xff] %vm1974, %v1929
      %2011 = vst.msk [vmem:[%s175 + $0x120] sm:$0xff] %vm1974, %v1930
      %2012 = vst.msk [vmem:[%s175 + $0x128] sm:$0xff] %vm1974, %v1931
      %2013 = vst.msk [vmem:[%s175 + $0x130] sm:$0xff] %vm1974, %v1932
      %2014 = vst.msk [vmem:[%s175 + $0x138] sm:$0xff] %vm1974, %v1933
      %2015 = vst.msk [vmem:[%s175 + $0x140] sm:$0xff] %vm1974, %v1934
      %2016 = vst.msk [vmem:[%s175 + $0x148] sm:$0xff] %vm1974, %v1935
      %2017 = vst.msk [vmem:[%s175 + $0x150] sm:$0xff] %vm1974, %v1936
      %2018 = vst.msk [vmem:[%s175 + $0x158] sm:$0xff] %vm1974, %v1937
      %2019 = vst.msk [vmem:[%s175 + $0x160] sm:$0xff] %vm1974, %v1938
      %2020 = vst.msk [vmem:[%s175 + $0x168] sm:$0xff] %vm1974, %v1939
      %2021 = vst.msk [vmem:[%s175 + $0x170] sm:$0xff] %vm1974, %v1940
      %2022 = vst.msk [vmem:[%s175 + $0x178] sm:$0xff] %vm1974, %v1941
      %2023 = vst.msk [vmem:[%s175 + $0x180] sm:$0xff] %vm1974, %v1942
      %2024 = vst.msk [vmem:[%s175 + $0x188] sm:$0xff] %vm1974, %v1943
      %2025 = vst.msk [vmem:[%s175 + $0x190] sm:$0xff] %vm1974, %v1944
      %2026 = vst.msk [vmem:[%s175 + $0x198] sm:$0xff] %vm1974, %v1945
      %2027 = vst.msk [vmem:[%s175 + $0x1a0] sm:$0xff] %vm1974, %v1946
      %2028 = vst.msk [vmem:[%s175 + $0x1a8] sm:$0xff] %vm1974, %v1947
      %2029 = vst.msk [vmem:[%s175 + $0x1b0] sm:$0xff] %vm1974, %v1948
      %2030 = vst.msk [vmem:[%s175 + $0x1b8] sm:$0xff] %vm1974, %v1949
      %2031 = vst.msk [vmem:[%s175 + $0x1c0] sm:$0xff] %vm1974, %v1950
      %2032 = vst.msk [vmem:[%s175 + $0x1c8] sm:$0xff] %vm1974, %v1951
      %2033 = vst.msk [vmem:[%s175 + $0x1d0] sm:$0xff] %vm1974, %v1952
      %2034 = vst.msk [vmem:[%s175 + $0x1d8] sm:$0xff] %vm1974, %v1953
      %2035 = vst.msk [vmem:[%s175 + $0x1e0] sm:$0xff] %vm1974, %v1954
      %2036 = vst.msk [vmem:[%s175 + $0x1e8] sm:$0xff] %vm1974, %v1955
      %2037 = vst.msk [vmem:[%s175 + $0x1f0] sm:$0xff] %vm1974, %v1956
      %2038 = vst.msk [vmem:[%s175 + $0x1f8] sm:$0xff] %vm1974, %v1957
      %2039 = vst.msk [vmem:[%s175 + $0x200] sm:$0xff] %vm1974, %v1958
      %2040 = vst.msk [vmem:[%s175 + $0x208] sm:$0xff] %vm1974, %v1959
      %2041 = vst.msk [vmem:[%s175 + $0x210] sm:$0xff] %vm1974, %v1960
      %2042 = vst.msk [vmem:[%s175 + $0x218] sm:$0xff] %vm1974, %v1961
      %2043 = vst.msk [vmem:[%s175 + $0x220] sm:$0xff] %vm1974, %v1962
      %2044 = vst.msk [vmem:[%s175 + $0x228] sm:$0xff] %vm1974, %v1963
      %2045 = vst.msk [vmem:[%s175 + $0x230] sm:$0xff] %vm1974, %v1964
      %2046 = vst.msk [vmem:[%s175 + $0x238] sm:$0xff] %vm1974, %v1965
      %2047 = vst.msk [vmem:[%s175 + $0x240] sm:$0xff] %vm1974, %v1966
      %2048 = vst.msk [vmem:[%s175 + $0x248] sm:$0xff] %vm1974, %v1967
      %2049 = vst.msk [vmem:[%s175 + $0x250] sm:$0xff] %vm1974, %v1968
      %2050 = vst.msk [vmem:[%s175 + $0x258] sm:$0xff] %vm1974, %v1969
      %2051 = vst.msk [vmem:[%s175 + $0x260] sm:$0xff] %vm1974, %v1970
      %2052 = vst.msk [vmem:[%s175 + $0x268] sm:$0xff] %vm1974, %v1971
      %2053 = vst.msk [vmem:[%s175 + $0x270] sm:$0xff] %vm1974, %v1972
      %2054 = vst.msk [vmem:[%s175 + $0x278] sm:$0xff] %vm1974, %v1973
      %s2055 = smul.u32 80, %s14
      %p2056 = scmp.lt.s32.totalorder %s2055, 159
      %s2057 = scalar_select %p2056, %s2055, 159
      %s2058 = smul.addr %s2057, 8
      %s2059 = scalar_lea.vmem %s3, %s2058
      // Predicated region
      $region33: #{unified_discriminator_forward.8} parent=31 // pred_check
        %p2060 = pneg %p100
      $region34: #{unified_discriminator_forward.8} parent=31 // pred_check_branch
        %2062 = sbr.rel (%p2060) target = $region36
      $region35: #{unified_discriminator_forward.8} parent=31 // pred_region
        %s2063 = smul.u32 80, %s14
      $region36: #{unified_discriminator_forward.8} parent=31 // pred_fallthru
        _
    $region32: #{unified_discriminator_forward.8} parent=5 // pred_fallthru
      _
    %p2064 = scmp.le.s32.totalorder 2, %s9
    // Predicated region
    $region37: #{unified_discriminator_forward.8} parent=5 // pred_check
      %p2065 = pneg %p2064
    $region38: #{unified_discriminator_forward.8} parent=5 // pred_check_branch
      %2067 = sbr.rel (%p2065) target = $region40
    $region39: #{unified_discriminator_forward.8} parent=5 // pred_region
      %s2068 = ssub.s32 %s9, 2
      // Predicated region
      $region41: #{unified_discriminator_forward.8} parent=39 // pred_check
        %p2069 = pneg %p106
      $region42: #{unified_discriminator_forward.8} parent=39 // pred_check_branch
        %2071 = sbr.rel (%p2069) target = $region44
      $region43: #{unified_discriminator_forward.8} parent=39 // pred_region
        %s2072 = smul.u32 80, %s15
        %p2073 = scmp.lt.s32.totalorder %s2072, 159
        %s2074 = scalar_select %p2073, %s2072, 159
        %s2075 = smul.addr %s2074, 8
        %s2076 = scalar_lea.vmem %s3, %s2075
      $region44: #{unified_discriminator_forward.8} parent=39 // pred_fallthru
        _
    $region40: #{unified_discriminator_forward.8} parent=5 // pred_fallthru
      _
  $region6: #{unified_discriminator_forward.8} parent=0 // loop_footer
    %s13 = sadd.s32 1, %s9
  $region7: #{unified_discriminator_forward.8} parent=0 // loop_footer_branch
    %8 = sbr.rel target = $region3
  $region8: #{unified_discriminator_forward.8} parent=0 // loop_exit
    _

// kernel: unified_discriminator_forward.9
$region0: #{unified_discriminator_forward.9}
  #allocation0 [shape = 'u32[]', space=smem, size = 0x4, offset = 0x4, fixed_abs, tag = 'smem constant byte address 0x4 - core index']
  #allocation1 [shape = 'u32[144,128]{1,0:T(1,128)}', space=vmem, size = 0x12000, scoped, tag = 'internal scratch']
  %s0 = inlined_call_operand.vmem [shape: bf16[640,864], index: 0, kind: input, shape index: {}]
  %s1 = inlined_call_operand.vmem [shape: bf16[864,64], index: 1, kind: input, shape index: {}]
  %s2 = inlined_call_operand.vmem [shape: f32[1,64], index: 2, kind: input, shape index: {}]
  %s3 = inlined_call_operand.vmem [shape: f32[640,32], index: 3, kind: output, shape index: {}]
  %s4 = sld [smem:[#allocation0]]
  $region45: #{unified_discriminator_forward.9} parent=0
    _
  %s6 = ssub.s32 1, %s4
  %s7 = scalar_select 0, %s6, %s4
  loop: start=0, step=1, limit=4
  $region2: #{unified_discriminator_forward.9} parent=0 // loop_pre_header
    _
  $region3: #{unified_discriminator_forward.9} parent=0 // loop_header
    %s9 = sphi 0, %s13
    %p10 = scmp.ge.s32.totalorder %s9, 4
    %s19 = sphi 0, %s21
    %s22 = sphi 0, %s19
    %s23 = sphi 0, %s22
    %s39 = sphi 0, %s23
    %s43 = sphi 0, %s43
    %s45 = sphi 0, %s43
    %s46 = sphi 0, %s45
    %s60 = sphi 0, %s46
    %s64 = sphi 0, %s64
    %s66 = sphi 0, %s64
    %s67 = sphi 0, %s66
    %s81 = sphi 0, %s67
    %s87 = sphi 0, %s89
    %s90 = sphi 0, %s87
    %s91 = sphi 0, %s90
    %s107 = sphi 0, %s91
  $region4: #{unified_discriminator_forward.9} parent=0 // loop_header_branch
    %12 = sbr.rel (%p10) target = $region8
  $region5: #{unified_discriminator_forward.9} parent=0 // loop_body
    %s14 = ssub.s32 %s9, 1
    %s15 = ssub.s32 %s9, 2
    %s16 = sadd.s32 %s9, 1
    %s17 = ssub.s32 %s9, %s16
    %p18 = scmp.eq.s32.totalorder %s17, 0
    %s20 = sadd.s32 %s19, 1
    %s21 = scalar_select %p18, %s19, %s20
    %p24 = pneg %p18
    %p25 = scmp.eq.s32.totalorder %s9, 1
    %p26 = por %p24, %p25
    %p27 = scmp.ne.s32.totalorder %s19, %s22
    %p28 = scmp.eq.s32.totalorder %s9, 0
    %p29 = por %p27, %p28
    %p30 = scmp.ne.s32.totalorder %s19, %s22
    %p31 = scmp.eq.s32.totalorder %s14, 1
    %p32 = por %p30, %p31
    %p33 = scmp.ne.s32.totalorder %s22, %s23
    %p34 = scmp.eq.s32.totalorder %s14, 0
    %p35 = por %p33, %p34
    %p36 = scmp.ne.s32.totalorder %s22, %s23
    %p37 = scmp.eq.s32.totalorder %s15, 1
    %p38 = por %p36, %p37
    %p40 = scmp.ne.s32.totalorder %s23, %s39
    %p41 = scmp.eq.s32.totalorder %s15, 0
    %p42 = por %p40, %p41
    %s44 = sadd.s32 %s43, 1
    %p47 = scmp.eq.s32.totalorder %s9, 1
    %p48 = scmp.ne.s32.totalorder %s43, %s45
    %p49 = scmp.eq.s32.totalorder %s9, 0
    %p50 = por %p48, %p49
    %p51 = scmp.ne.s32.totalorder %s43, %s45
    %p52 = scmp.eq.s32.totalorder %s14, 1
    %p53 = por %p51, %p52
    %p54 = scmp.ne.s32.totalorder %s45, %s46
    %p55 = scmp.eq.s32.totalorder %s14, 0
    %p56 = por %p54, %p55
    %p57 = scmp.ne.s32.totalorder %s45, %s46
    %p58 = scmp.eq.s32.totalorder %s15, 1
    %p59 = por %p57, %p58
    %p61 = scmp.ne.s32.totalorder %s46, %s60
    %p62 = scmp.eq.s32.totalorder %s15, 0
    %p63 = por %p61, %p62
    %s65 = sadd.s32 %s64, 1
    %p68 = scmp.eq.s32.totalorder %s9, 1
    %p69 = scmp.ne.s32.totalorder %s64, %s66
    %p70 = scmp.eq.s32.totalorder %s9, 0
    %p71 = por %p69, %p70
    %p72 = scmp.ne.s32.totalorder %s64, %s66
    %p73 = scmp.eq.s32.totalorder %s14, 1
    %p74 = por %p72, %p73
    %p75 = scmp.ne.s32.totalorder %s66, %s67
    %p76 = scmp.eq.s32.totalorder %s14, 0
    %p77 = por %p75, %p76
    %p78 = scmp.ne.s32.totalorder %s66, %s67
    %p79 = scmp.eq.s32.totalorder %s15, 1
    %p80 = por %p78, %p79
    %p82 = scmp.ne.s32.totalorder %s67, %s81
    %p83 = scmp.eq.s32.totalorder %s15, 0
    %p84 = por %p82, %p83
    %s85 = ssub.s32 %s9, %s16
    %p86 = scmp.eq.s32.totalorder %s85, 0
    %s88 = sadd.s32 %s87, 1
    %s89 = scalar_select %p86, %s87, %s88
    %p92 = pneg %p86
    %p93 = scmp.eq.s32.totalorder %s9, 1
    %p94 = por %p92, %p93
    %p95 = scmp.ne.s32.totalorder %s87, %s90
    %p96 = scmp.eq.s32.totalorder %s9, 0
    %p97 = por %p95, %p96
    %p98 = scmp.ne.s32.totalorder %s87, %s90
    %p99 = scmp.eq.s32.totalorder %s14, 1
    %p100 = por %p98, %p99
    %p101 = scmp.ne.s32.totalorder %s90, %s91
    %p102 = scmp.eq.s32.totalorder %s14, 0
    %p103 = por %p101, %p102
    %p104 = scmp.ne.s32.totalorder %s90, %s91
    %p105 = scmp.eq.s32.totalorder %s15, 1
    %p106 = por %p104, %p105
    %p108 = scmp.ne.s32.totalorder %s91, %s107
    %p109 = scmp.eq.s32.totalorder %s15, 0
    %p110 = por %p108, %p109
    %p111 = scmp.le.s32.totalorder 1, %s9
    %p112 = scmp.lt.s32.totalorder %s9, 3
    %p113 = pnand %p111, %p112
    %p114 = pneg %p113
    // Predicated region
    $region9: #{unified_discriminator_forward.9} parent=5 // pred_check
      _
    $region10: #{unified_discriminator_forward.9} parent=5 // pred_check_branch
      %116 = sbr.rel (%p113) target = $region12
    $region11: #{unified_discriminator_forward.9} parent=5 // pred_region
      %s117 = ssub.s32 %s9, 1
      // Predicated region
      $region13: #{unified_discriminator_forward.9} parent=11 // pred_check
        %p118 = pneg %p56
      $region14: #{unified_discriminator_forward.9} parent=11 // pred_check_branch
        %120 = sbr.rel (%p118) target = $region16
      $region15: #{unified_discriminator_forward.9} parent=11 // pred_region
        _
      $region16: #{unified_discriminator_forward.9} parent=11 // pred_fallthru
        _
      // Predicated region
      $region17: #{unified_discriminator_forward.9} parent=11 // pred_check
        %p121 = pneg %p77
      $region18: #{unified_discriminator_forward.9} parent=11 // pred_check_branch
        %123 = sbr.rel (%p121) target = $region20
      $region19: #{unified_discriminator_forward.9} parent=11 // pred_region
        _
      $region20: #{unified_discriminator_forward.9} parent=11 // pred_fallthru
        _
    $region12: #{unified_discriminator_forward.9} parent=5 // pred_fallthru
      _
    %p124 = scmp.lt.s32.totalorder %s9, 2
    // Predicated region
    $region21: #{unified_discriminator_forward.9} parent=5 // pred_check
      %p125 = pneg %p124
    $region22: #{unified_discriminator_forward.9} parent=5 // pred_check_branch
      %127 = sbr.rel (%p125) target = $region24
    $region23: #{unified_discriminator_forward.9} parent=5 // pred_region
      // Predicated region
      $region25: #{unified_discriminator_forward.9} parent=23 // pred_check
        %p128 = pneg %p29
      $region26: #{unified_discriminator_forward.9} parent=23 // pred_check_branch
        %130 = sbr.rel (%p128) target = $region28
      $region27: #{unified_discriminator_forward.9} parent=23 // pred_region
        %s131 = smul.u32 40, %s9
        %p132 = scmp.lt.s32.totalorder %s131, 79
        %s133 = scalar_select %p132, %s131, 79
        %s134 = smul.addr %s133, 7
        %s135 = smul.addr %s134, 4
        %s136 = scalar_lea.vmem %s0, %s135
        %s137 = smul.u32 40, %s9
      $region28: #{unified_discriminator_forward.9} parent=23 // pred_fallthru
        _
    $region24: #{unified_discriminator_forward.9} parent=5 // pred_fallthru
      _
    %p138 = scmp.le.s32.totalorder 1, %s9
    %p139 = scmp.lt.s32.totalorder %s9, 3
    %p140 = pnand %p138, %p139
    %p141 = pneg %p140
    // Predicated region
    $region29: #{unified_discriminator_forward.9} parent=5 // pred_check
      _
    $region30: #{unified_discriminator_forward.9} parent=5 // pred_check_branch
      %143 = sbr.rel (%p140) target = $region32
    $region31: #{unified_discriminator_forward.9} parent=5 // pred_region
      %s144 = ssub.s32 %s9, 1
      %s145 = smul.u32 40, %s14
      %p146 = scmp.lt.s32.totalorder %s145, 79
      %s147 = scalar_select %p146, %s145, 79
      %s148 = smul.addr %s147, 7
      %s149 = smul.addr %s148, 4
      %s150 = scalar_lea.vmem %s0, %s149
      %p151 = pneg %p35
      %p152 = pneg %p32
      %p153 = pneg %p56
      %p154 = pneg %p53
      %p155 = pneg %p77
      %p156 = pneg %p74
      %p157 = pneg %p103
      %p158 = pneg %p100
      %s159 = smul.u32 40, %s14
      %p160 = scmp.lt.s32.totalorder %s159, 79
      %s161 = scalar_select %p160, %s159, 79
      %s162 = smul.addr %s161, 8
      %s163 = scalar_lea.vmem %s3, %s162
      %s164 = smul.u32 40, %s14
      %p165 = scmp.lt.s32.totalorder %s164, 79
      %s166 = scalar_select %p165, %s164, 79
      %s167 = smul.addr %s166, 7
      %s168 = smul.addr %s167, 4
      %s169 = scalar_lea.vmem %s0, %s168
      %s170 = smul.u32 40, %s14
      %s171 = smul.u32 40, %s14
      %p172 = scmp.lt.s32.totalorder %s171, 79
      %s173 = scalar_select %p172, %s171, 79
      %s174 = smul.addr %s173, 8
      %s175 = scalar_lea.vmem %s3, %s174
      %s176 = smul.u32 40, %s14
      %v178 = vld [vmem:[%s169] sm:$0xff]
      %v179 = vld [vmem:[%s169 + $0x8] sm:$0xff]
      %v180 = vld [vmem:[%s169 + $0x10] sm:$0xff]
      %v181 = vld [vmem:[%s169 + $0x18] sm:$0xf]
      %v182 = vld [vmem:[%s169 + $0x1c] sm:$0xff]
      %v183 = vld [vmem:[%s169 + $0x24] sm:$0xff]
      %v184 = vld [vmem:[%s169 + $0x2c] sm:$0xff]
      %v185 = vld [vmem:[%s169 + $0x34] sm:$0xf]
      %v186 = vld [vmem:[%s169 + $0x38] sm:$0xff]
      %v187 = vld [vmem:[%s169 + $0x40] sm:$0xff]
      %v188 = vld [vmem:[%s169 + $0x48] sm:$0xff]
      %v189 = vld [vmem:[%s169 + $0x50] sm:$0xf]
      %v190 = vld [vmem:[%s169 + $0x54] sm:$0xff]
      %v191 = vld [vmem:[%s169 + $0x5c] sm:$0xff]
      %v192 = vld [vmem:[%s169 + $0x64] sm:$0xff]
      %v193 = vld [vmem:[%s169 + $0x6c] sm:$0xf]
      %v194 = vld [vmem:[%s169 + $0x70] sm:$0xff]
      %v195 = vld [vmem:[%s169 + $0x78] sm:$0xff]
      %v196 = vld [vmem:[%s169 + $0x80] sm:$0xff]
      %v197 = vld [vmem:[%s169 + $0x88] sm:$0xf]
      %v198 = vld [vmem:[%s169 + $0x8c] sm:$0xff]
      %v199 = vld [vmem:[%s169 + $0x94] sm:$0xff]
      %v200 = vld [vmem:[%s169 + $0x9c] sm:$0xff]
      %v201 = vld [vmem:[%s169 + $0xa4] sm:$0xf]
      %v202 = vld [vmem:[%s169 + $0xa8] sm:$0xff]
      %v203 = vld [vmem:[%s169 + $0xb0] sm:$0xff]
      %v204 = vld [vmem:[%s169 + $0xb8] sm:$0xff]
      %v205 = vld [vmem:[%s169 + $0xc0] sm:$0xf]
      %v206 = vld [vmem:[%s169 + $0xc4] sm:$0xff]
      %v207 = vld [vmem:[%s169 + $0xcc] sm:$0xff]
      %v208 = vld [vmem:[%s169 + $0xd4] sm:$0xff]
      %v209 = vld [vmem:[%s169 + $0xdc] sm:$0xf]
      %v210 = vld [vmem:[%s169 + $0xe0] sm:$0xff]
      %v211 = vld [vmem:[%s169 + $0xe8] sm:$0xff]
      %v212 = vld [vmem:[%s169 + $0xf0] sm:$0xff]
      %v213 = vld [vmem:[%s169 + $0xf8] sm:$0xf]
      %v214 = vld [vmem:[%s169 + $0xfc] sm:$0xff]
      %v215 = vld [vmem:[%s169 + $0x104] sm:$0xff]
      %v216 = vld [vmem:[%s169 + $0x10c] sm:$0xff]
      %v217 = vld [vmem:[%s169 + $0x114] sm:$0xf]
      %v218 = vld [vmem:[%s169 + $0x118] sm:$0xff]
      %v219 = vld [vmem:[%s169 + $0x120] sm:$0xff]
      %v220 = vld [vmem:[%s169 + $0x128] sm:$0xff]
      %v221 = vld [vmem:[%s169 + $0x130] sm:$0xf]
      %v222 = vld [vmem:[%s169 + $0x134] sm:$0xff]
      %v223 = vld [vmem:[%s169 + $0x13c] sm:$0xff]
      %v224 = vld [vmem:[%s169 + $0x144] sm:$0xff]
      %v225 = vld [vmem:[%s169 + $0x14c] sm:$0xf]
      %v226 = vld [vmem:[%s169 + $0x150] sm:$0xff]
      %v227 = vld [vmem:[%s169 + $0x158] sm:$0xff]
      %v228 = vld [vmem:[%s169 + $0x160] sm:$0xff]
      %v229 = vld [vmem:[%s169 + $0x168] sm:$0xf]
      %v230 = vld [vmem:[%s169 + $0x16c] sm:$0xff]
      %v231 = vld [vmem:[%s169 + $0x174] sm:$0xff]
      %v232 = vld [vmem:[%s169 + $0x17c] sm:$0xff]
      %v233 = vld [vmem:[%s169 + $0x184] sm:$0xf]
      %v234 = vld [vmem:[%s169 + $0x188] sm:$0xff]
      %v235 = vld [vmem:[%s169 + $0x190] sm:$0xff]
      %v236 = vld [vmem:[%s169 + $0x198] sm:$0xff]
      %v237 = vld [vmem:[%s169 + $0x1a0] sm:$0xf]
      %v238 = vld [vmem:[%s169 + $0x1a4] sm:$0xff]
      %v239 = vld [vmem:[%s169 + $0x1ac] sm:$0xff]
      %v240 = vld [vmem:[%s169 + $0x1b4] sm:$0xff]
      %v241 = vld [vmem:[%s169 + $0x1bc] sm:$0xf]
      %v242 = vld [vmem:[%s169 + $0x1c0] sm:$0xff]
      %v243 = vld [vmem:[%s169 + $0x1c8] sm:$0xff]
      %v244 = vld [vmem:[%s169 + $0x1d0] sm:$0xff]
      %v245 = vld [vmem:[%s169 + $0x1d8] sm:$0xf]
      %v246 = vld [vmem:[%s169 + $0x1dc] sm:$0xff]
      %v247 = vld [vmem:[%s169 + $0x1e4] sm:$0xff]
      %v248 = vld [vmem:[%s169 + $0x1ec] sm:$0xff]
      %v249 = vld [vmem:[%s169 + $0x1f4] sm:$0xf]
      %v250 = vld [vmem:[%s169 + $0x1f8] sm:$0xff]
      %v251 = vld [vmem:[%s169 + $0x200] sm:$0xff]
      %v252 = vld [vmem:[%s169 + $0x208] sm:$0xff]
      %v253 = vld [vmem:[%s169 + $0x210] sm:$0xf]
      %v254 = vld [vmem:[%s169 + $0x214] sm:$0xff]
      %v255 = vld [vmem:[%s169 + $0x21c] sm:$0xff]
      %v256 = vld [vmem:[%s169 + $0x224] sm:$0xff]
      %v257 = vld [vmem:[%s169 + $0x22c] sm:$0xf]
      %v258 = vld [vmem:[%s169 + $0x230] sm:$0xff]
      %v259 = vld [vmem:[%s169 + $0x238] sm:$0xff]
      %v260 = vld [vmem:[%s169 + $0x240] sm:$0xff]
      %v261 = vld [vmem:[%s169 + $0x248] sm:$0xf]
      %v262 = vld [vmem:[%s169 + $0x24c] sm:$0xff]
      %v263 = vld [vmem:[%s169 + $0x254] sm:$0xff]
      %v264 = vld [vmem:[%s169 + $0x25c] sm:$0xff]
      %v265 = vld [vmem:[%s169 + $0x264] sm:$0xf]
      %v266 = vld [vmem:[%s169 + $0x268] sm:$0xff]
      %v267 = vld [vmem:[%s169 + $0x270] sm:$0xff]
      %v268 = vld [vmem:[%s169 + $0x278] sm:$0xff]
      %v269 = vld [vmem:[%s169 + $0x280] sm:$0xf]
      %v270 = vld [vmem:[%s169 + $0x284] sm:$0xff]
      %v271 = vld [vmem:[%s169 + $0x28c] sm:$0xff]
      %v272 = vld [vmem:[%s169 + $0x294] sm:$0xff]
      %v273 = vld [vmem:[%s169 + $0x29c] sm:$0xf]
      %v274 = vld [vmem:[%s169 + $0x2a0] sm:$0xff]
      %v275 = vld [vmem:[%s169 + $0x2a8] sm:$0xff]
      %v276 = vld [vmem:[%s169 + $0x2b0] sm:$0xff]
      %v277 = vld [vmem:[%s169 + $0x2b8] sm:$0xf]
      %v278 = vld [vmem:[%s169 + $0x2bc] sm:$0xff]
      %v279 = vld [vmem:[%s169 + $0x2c4] sm:$0xff]
      %v280 = vld [vmem:[%s169 + $0x2cc] sm:$0xff]
      %v281 = vld [vmem:[%s169 + $0x2d4] sm:$0xf]
      %v282 = vld [vmem:[%s169 + $0x2d8] sm:$0xff]
      %v283 = vld [vmem:[%s169 + $0x2e0] sm:$0xff]
      %v284 = vld [vmem:[%s169 + $0x2e8] sm:$0xff]
      %v285 = vld [vmem:[%s169 + $0x2f0] sm:$0xf]
      %v286 = vld [vmem:[%s169 + $0x2f4] sm:$0xff]
      %v287 = vld [vmem:[%s169 + $0x2fc] sm:$0xff]
      %v288 = vld [vmem:[%s169 + $0x304] sm:$0xff]
      %v289 = vld [vmem:[%s169 + $0x30c] sm:$0xf]
      %v290 = vld [vmem:[%s169 + $0x310] sm:$0xff]
      %v291 = vld [vmem:[%s169 + $0x318] sm:$0xff]
      %v292 = vld [vmem:[%s169 + $0x320] sm:$0xff]
      %v293 = vld [vmem:[%s169 + $0x328] sm:$0xf]
      %v294 = vld [vmem:[%s169 + $0x32c] sm:$0xff]
      %v295 = vld [vmem:[%s169 + $0x334] sm:$0xff]
      %v296 = vld [vmem:[%s169 + $0x33c] sm:$0xff]
      %v297 = vld [vmem:[%s169 + $0x344] sm:$0xf]
      %v298 = vld [vmem:[%s169 + $0x348] sm:$0xff]
      %v299 = vld [vmem:[%s169 + $0x350] sm:$0xff]
      %v300 = vld [vmem:[%s169 + $0x358] sm:$0xff]
      %v301 = vld [vmem:[%s169 + $0x360] sm:$0xf]
      %v302 = vld [vmem:[%s169 + $0x364] sm:$0xff]
      %v303 = vld [vmem:[%s169 + $0x36c] sm:$0xff]
      %v304 = vld [vmem:[%s169 + $0x374] sm:$0xff]
      %v305 = vld [vmem:[%s169 + $0x37c] sm:$0xf]
      %v306 = vld [vmem:[%s169 + $0x380] sm:$0xff]
      %v307 = vld [vmem:[%s169 + $0x388] sm:$0xff]
      %v308 = vld [vmem:[%s169 + $0x390] sm:$0xff]
      %v309 = vld [vmem:[%s169 + $0x398] sm:$0xf]
      %v310 = vld [vmem:[%s169 + $0x39c] sm:$0xff]
      %v311 = vld [vmem:[%s169 + $0x3a4] sm:$0xff]
      %v312 = vld [vmem:[%s169 + $0x3ac] sm:$0xff]
      %v313 = vld [vmem:[%s169 + $0x3b4] sm:$0xf]
      %v314 = vld [vmem:[%s169 + $0x3b8] sm:$0xff]
      %v315 = vld [vmem:[%s169 + $0x3c0] sm:$0xff]
      %v316 = vld [vmem:[%s169 + $0x3c8] sm:$0xff]
      %v317 = vld [vmem:[%s169 + $0x3d0] sm:$0xf]
      %v318 = vld [vmem:[%s169 + $0x3d4] sm:$0xff]
      %v319 = vld [vmem:[%s169 + $0x3dc] sm:$0xff]
      %v320 = vld [vmem:[%s169 + $0x3e4] sm:$0xff]
      %v321 = vld [vmem:[%s169 + $0x3ec] sm:$0xf]
      %v322 = vld [vmem:[%s169 + $0x3f0] sm:$0xff]
      %v323 = vld [vmem:[%s169 + $0x3f8] sm:$0xff]
      %v324 = vld [vmem:[%s169 + $0x400] sm:$0xff]
      %v325 = vld [vmem:[%s169 + $0x408] sm:$0xf]
      %v326 = vld [vmem:[%s169 + $0x40c] sm:$0xff]
      %v327 = vld [vmem:[%s169 + $0x414] sm:$0xff]
      %v328 = vld [vmem:[%s169 + $0x41c] sm:$0xff]
      %v329 = vld [vmem:[%s169 + $0x424] sm:$0xf]
      %v330 = vld [vmem:[%s169 + $0x428] sm:$0xff]
      %v331 = vld [vmem:[%s169 + $0x430] sm:$0xff]
      %v332 = vld [vmem:[%s169 + $0x438] sm:$0xff]
      %v333 = vld [vmem:[%s169 + $0x440] sm:$0xf]
      %v334 = vld [vmem:[%s169 + $0x444] sm:$0xff]
      %v335 = vld [vmem:[%s169 + $0x44c] sm:$0xff]
      %v336 = vld [vmem:[%s169 + $0x454] sm:$0xff]
      %v337 = vld [vmem:[%s169 + $0x45c] sm:$0xf]
      %v338 = vld [vmem:[%s1] sm:$0xf]
      %v339 = vld [vmem:[%s1 + $0x4] sm:$0xf]
      %v340 = vld [vmem:[%s1 + $0x8] sm:$0xf]
      %v341 = vld [vmem:[%s1 + $0xc] sm:$0xf]
      %v342 = vld [vmem:[%s1 + $0x10] sm:$0xf]
      %v343 = vld [vmem:[%s1 + $0x14] sm:$0xf]
      %v344 = vld [vmem:[%s1 + $0x18] sm:$0xf]
      %v345 = vld [vmem:[%s1 + $0x1c] sm:$0xf]
      %v346 = vld [vmem:[%s1 + $0x20] sm:$0xf]
      %v347 = vld [vmem:[%s1 + $0x24] sm:$0xf]
      %v348 = vld [vmem:[%s1 + $0x28] sm:$0xf]
      %v349 = vld [vmem:[%s1 + $0x2c] sm:$0xf]
      %v350 = vld [vmem:[%s1 + $0x30] sm:$0xf]
      %v351 = vld [vmem:[%s1 + $0x34] sm:$0xf]
      %v352 = vld [vmem:[%s1 + $0x38] sm:$0xf]
      %v353 = vld [vmem:[%s1 + $0x3c] sm:$0xf]
      %v354 = vld [vmem:[%s1 + $0x40] sm:$0xf]
      %v355 = vld [vmem:[%s1 + $0x44] sm:$0xf]
      %v356 = vld [vmem:[%s1 + $0x48] sm:$0xf]
      %v357 = vld [vmem:[%s1 + $0x4c] sm:$0xf]
      %v358 = vld [vmem:[%s1 + $0x50] sm:$0xf]
      %v359 = vld [vmem:[%s1 + $0x54] sm:$0xf]
      %v360 = vld [vmem:[%s1 + $0x58] sm:$0xf]
      %v361 = vld [vmem:[%s1 + $0x5c] sm:$0xf]
      %v362 = vld [vmem:[%s1 + $0x60] sm:$0xf]
      %v363 = vld [vmem:[%s1 + $0x64] sm:$0xf]
      %v364 = vld [vmem:[%s1 + $0x68] sm:$0xf]
      %v365 = vld [vmem:[%s1 + $0x6c] sm:$0xf]
      %v366 = vld [vmem:[%s1 + $0x70] sm:$0xf]
      %v367 = vld [vmem:[%s1 + $0x74] sm:$0xf]
      %v368 = vld [vmem:[%s1 + $0x78] sm:$0xf]
      %v369 = vld [vmem:[%s1 + $0x7c] sm:$0xf]
      %v370 = vld [vmem:[%s1 + $0x80] sm:$0xf]
      %v371 = vld [vmem:[%s1 + $0x84] sm:$0xf]
      %v372 = vld [vmem:[%s1 + $0x88] sm:$0xf]
      %v373 = vld [vmem:[%s1 + $0x8c] sm:$0xf]
      %v374 = vld [vmem:[%s1 + $0x90] sm:$0xf]
      %v375 = vld [vmem:[%s1 + $0x94] sm:$0xf]
      %v376 = vld [vmem:[%s1 + $0x98] sm:$0xf]
      %v377 = vld [vmem:[%s1 + $0x9c] sm:$0xf]
      %v378 = vld [vmem:[%s1 + $0xa0] sm:$0xf]
      %v379 = vld [vmem:[%s1 + $0xa4] sm:$0xf]
      %v380 = vld [vmem:[%s1 + $0xa8] sm:$0xf]
      %v381 = vld [vmem:[%s1 + $0xac] sm:$0xf]
      %v382 = vld [vmem:[%s1 + $0xb0] sm:$0xf]
      %v383 = vld [vmem:[%s1 + $0xb4] sm:$0xf]
      %v384 = vld [vmem:[%s1 + $0xb8] sm:$0xf]
      %v385 = vld [vmem:[%s1 + $0xbc] sm:$0xf]
      %v386 = vld [vmem:[%s1 + $0xc0] sm:$0xf]
      %v387 = vld [vmem:[%s1 + $0xc4] sm:$0xf]
      %v388 = vld [vmem:[%s1 + $0xc8] sm:$0xf]
      %v389 = vld [vmem:[%s1 + $0xcc] sm:$0xf]
      %v390 = vld [vmem:[%s1 + $0xd0] sm:$0xf]
      %v391 = vld [vmem:[%s1 + $0xd4] sm:$0xf]
      %v392 = vld [vmem:[%s1 + $0xd8] sm:$0xf]
      %v393 = vld [vmem:[%s1 + $0xdc] sm:$0xf]
      %v394 = vld [vmem:[%s1 + $0xe0] sm:$0xf]
      %v395 = vld [vmem:[%s1 + $0xe4] sm:$0xf]
      %v396 = vld [vmem:[%s1 + $0xe8] sm:$0xf]
      %v397 = vld [vmem:[%s1 + $0xec] sm:$0xf]
      %v398 = vld [vmem:[%s1 + $0xf0] sm:$0xf]
      %v399 = vld [vmem:[%s1 + $0xf4] sm:$0xf]
      %v400 = vld [vmem:[%s1 + $0xf8] sm:$0xf]
      %v401 = vld [vmem:[%s1 + $0xfc] sm:$0xf]
      %v402 = vld [vmem:[%s1 + $0x100] sm:$0xf]
      %v403 = vld [vmem:[%s1 + $0x104] sm:$0xf]
      %v404 = vld [vmem:[%s1 + $0x108] sm:$0xf]
      %v405 = vld [vmem:[%s1 + $0x10c] sm:$0xf]
      %v406 = vld [vmem:[%s1 + $0x110] sm:$0xf]
      %v407 = vld [vmem:[%s1 + $0x114] sm:$0xf]
      %v408 = vld [vmem:[%s1 + $0x118] sm:$0xf]
      %v409 = vld [vmem:[%s1 + $0x11c] sm:$0xf]
      %v410 = vld [vmem:[%s1 + $0x120] sm:$0xf]
      %v411 = vld [vmem:[%s1 + $0x124] sm:$0xf]
      %v412 = vld [vmem:[%s1 + $0x128] sm:$0xf]
      %v413 = vld [vmem:[%s1 + $0x12c] sm:$0xf]
      %v414 = vld [vmem:[%s1 + $0x130] sm:$0xf]
      %v415 = vld [vmem:[%s1 + $0x134] sm:$0xf]
      %v416 = vld [vmem:[%s1 + $0x138] sm:$0xf]
      %v417 = vld [vmem:[%s1 + $0x13c] sm:$0xf]
      %v418 = vld [vmem:[%s1 + $0x140] sm:$0xf]
      %v419 = vld [vmem:[%s1 + $0x144] sm:$0xf]
      %v420 = vld [vmem:[%s1 + $0x148] sm:$0xf]
      %v421 = vld [vmem:[%s1 + $0x14c] sm:$0xf]
      %v422 = vld [vmem:[%s1 + $0x150] sm:$0xf]
      %v423 = vld [vmem:[%s1 + $0x154] sm:$0xf]
      %v424 = vld [vmem:[%s1 + $0x158] sm:$0xf]
      %v425 = vld [vmem:[%s1 + $0x15c] sm:$0xf]
      %v426 = vld [vmem:[%s1 + $0x160] sm:$0xf]
      %v427 = vld [vmem:[%s1 + $0x164] sm:$0xf]
      %v428 = vld [vmem:[%s1 + $0x168] sm:$0xf]
      %v429 = vld [vmem:[%s1 + $0x16c] sm:$0xf]
      %v430 = vld [vmem:[%s1 + $0x170] sm:$0xf]
      %v431 = vld [vmem:[%s1 + $0x174] sm:$0xf]
      %v432 = vld [vmem:[%s1 + $0x178] sm:$0xf]
      %v433 = vld [vmem:[%s1 + $0x17c] sm:$0xf]
      %v434 = vld [vmem:[%s1 + $0x180] sm:$0xf]
      %v435 = vld [vmem:[%s1 + $0x184] sm:$0xf]
      %v436 = vld [vmem:[%s1 + $0x188] sm:$0xf]
      %v437 = vld [vmem:[%s1 + $0x18c] sm:$0xf]
      %v438 = vld [vmem:[%s1 + $0x190] sm:$0xf]
      %v439 = vld [vmem:[%s1 + $0x194] sm:$0xf]
      %v440 = vld [vmem:[%s1 + $0x198] sm:$0xf]
      %v441 = vld [vmem:[%s1 + $0x19c] sm:$0xf]
      %v442 = vld [vmem:[%s1 + $0x1a0] sm:$0xf]
      %v443 = vld [vmem:[%s1 + $0x1a4] sm:$0xf]
      %v444 = vld [vmem:[%s1 + $0x1a8] sm:$0xf]
      %v445 = vld [vmem:[%s1 + $0x1ac] sm:$0xf]
      %v446 = vld [vmem:[%s2] sm:$0x1]
      %v448 = vlaneseq
      %v449 = vshrl.u32 %v448, 7
      %v450 = vsub.s32 0, %v449
      %v451 = vrot.slane %v446, %v450
      %v613 = vunpack.c.l.b16 %v178
      %v614 = vunpack.c.h.b16 %v178
      %v615 = vunpack.c.l.b16 %v179
      %v616 = vunpack.c.h.b16 %v179
      %v617 = vunpack.c.l.b16 %v180
      %v618 = vunpack.c.h.b16 %v180
      %v619 = vunpack.c.l.b16 %v181
      %v620 = vunpack.c.l.b16 %v182
      %v621 = vunpack.c.h.b16 %v182
      %v622 = vunpack.c.l.b16 %v183
      %v623 = vunpack.c.h.b16 %v183
      %v624 = vunpack.c.l.b16 %v184
      %v625 = vunpack.c.h.b16 %v184
      %v626 = vunpack.c.l.b16 %v185
      %v627 = vunpack.c.l.b16 %v186
      %v628 = vunpack.c.h.b16 %v186
      %v629 = vunpack.c.l.b16 %v187
      %v630 = vunpack.c.h.b16 %v187
      %v631 = vunpack.c.l.b16 %v188
      %v632 = vunpack.c.h.b16 %v188
      %v633 = vunpack.c.l.b16 %v189
      %v634 = vunpack.c.l.b16 %v190
      %v635 = vunpack.c.h.b16 %v190
      %v636 = vunpack.c.l.b16 %v191
      %v637 = vunpack.c.h.b16 %v191
      %v638 = vunpack.c.l.b16 %v192
      %v639 = vunpack.c.h.b16 %v192
      %v640 = vunpack.c.l.b16 %v193
      %v641 = vunpack.c.l.b16 %v194
      %v642 = vunpack.c.h.b16 %v194
      %v643 = vunpack.c.l.b16 %v195
      %v644 = vunpack.c.h.b16 %v195
      %v645 = vunpack.c.l.b16 %v196
      %v646 = vunpack.c.h.b16 %v196
      %v647 = vunpack.c.l.b16 %v197
      %v648 = vunpack.c.l.b16 %v198
      %v649 = vunpack.c.h.b16 %v198
      %v650 = vunpack.c.l.b16 %v199
      %v651 = vunpack.c.h.b16 %v199
      %v652 = vunpack.c.l.b16 %v200
      %v653 = vunpack.c.h.b16 %v200
      %v654 = vunpack.c.l.b16 %v201
      %v655 = vunpack.c.l.b16 %v202
      %v656 = vunpack.c.h.b16 %v202
      %v657 = vunpack.c.l.b16 %v203
      %v658 = vunpack.c.h.b16 %v203
      %v659 = vunpack.c.l.b16 %v204
      %v660 = vunpack.c.h.b16 %v204
      %v661 = vunpack.c.l.b16 %v205
      %v662 = vunpack.c.l.b16 %v206
      %v663 = vunpack.c.h.b16 %v206
      %v664 = vunpack.c.l.b16 %v207
      %v665 = vunpack.c.h.b16 %v207
      %v666 = vunpack.c.l.b16 %v208
      %v667 = vunpack.c.h.b16 %v208
      %v668 = vunpack.c.l.b16 %v209
      %v669 = vunpack.c.l.b16 %v210
      %v670 = vunpack.c.h.b16 %v210
      %v671 = vunpack.c.l.b16 %v211
      %v672 = vunpack.c.h.b16 %v211
      %v673 = vunpack.c.l.b16 %v212
      %v674 = vunpack.c.h.b16 %v212
      %v675 = vunpack.c.l.b16 %v213
      %v676 = vunpack.c.l.b16 %v214
      %v677 = vunpack.c.h.b16 %v214
      %v678 = vunpack.c.l.b16 %v215
      %v679 = vunpack.c.h.b16 %v215
      %v680 = vunpack.c.l.b16 %v216
      %v681 = vunpack.c.h.b16 %v216
      %v682 = vunpack.c.l.b16 %v217
      %v683 = vunpack.c.l.b16 %v218
      %v684 = vunpack.c.h.b16 %v218
      %v685 = vunpack.c.l.b16 %v219
      %v686 = vunpack.c.h.b16 %v219
      %v687 = vunpack.c.l.b16 %v220
      %v688 = vunpack.c.h.b16 %v220
      %v689 = vunpack.c.l.b16 %v221
      %v690 = vunpack.c.l.b16 %v222
      %v691 = vunpack.c.h.b16 %v222
      %v692 = vunpack.c.l.b16 %v223
      %v693 = vunpack.c.h.b16 %v223
      %v694 = vunpack.c.l.b16 %v224
      %v695 = vunpack.c.h.b16 %v224
      %v696 = vunpack.c.l.b16 %v225
      %v697 = vunpack.c.l.b16 %v226
      %v698 = vunpack.c.h.b16 %v226
      %v699 = vunpack.c.l.b16 %v227
      %v700 = vunpack.c.h.b16 %v227
      %v701 = vunpack.c.l.b16 %v228
      %v702 = vunpack.c.h.b16 %v228
      %v703 = vunpack.c.l.b16 %v229
      %v704 = vunpack.c.l.b16 %v230
      %v705 = vunpack.c.h.b16 %v230
      %v706 = vunpack.c.l.b16 %v231
      %v707 = vunpack.c.h.b16 %v231
      %v708 = vunpack.c.l.b16 %v232
      %v709 = vunpack.c.h.b16 %v232
      %v710 = vunpack.c.l.b16 %v233
      %v711 = vunpack.c.l.b16 %v234
      %v712 = vunpack.c.h.b16 %v234
      %v713 = vunpack.c.l.b16 %v235
      %v714 = vunpack.c.h.b16 %v235
      %v715 = vunpack.c.l.b16 %v236
      %v716 = vunpack.c.h.b16 %v236
      %v717 = vunpack.c.l.b16 %v237
      %v718 = vunpack.c.l.b16 %v238
      %v719 = vunpack.c.h.b16 %v238
      %v720 = vunpack.c.l.b16 %v239
      %v721 = vunpack.c.h.b16 %v239
      %v722 = vunpack.c.l.b16 %v240
      %v723 = vunpack.c.h.b16 %v240
      %v724 = vunpack.c.l.b16 %v241
      %v725 = vunpack.c.l.b16 %v242
      %v726 = vunpack.c.h.b16 %v242
      %v727 = vunpack.c.l.b16 %v243
      %v728 = vunpack.c.h.b16 %v243
      %v729 = vunpack.c.l.b16 %v244
      %v730 = vunpack.c.h.b16 %v244
      %v731 = vunpack.c.l.b16 %v245
      %v732 = vunpack.c.l.b16 %v246
      %v733 = vunpack.c.h.b16 %v246
      %v734 = vunpack.c.l.b16 %v247
      %v735 = vunpack.c.h.b16 %v247
      %v736 = vunpack.c.l.b16 %v248
      %v737 = vunpack.c.h.b16 %v248
      %v738 = vunpack.c.l.b16 %v249
      %v739 = vunpack.c.l.b16 %v250
      %v740 = vunpack.c.h.b16 %v250
      %v741 = vunpack.c.l.b16 %v251
      %v742 = vunpack.c.h.b16 %v251
      %v743 = vunpack.c.l.b16 %v252
      %v744 = vunpack.c.h.b16 %v252
      %v745 = vunpack.c.l.b16 %v253
      %v746 = vunpack.c.l.b16 %v254
      %v747 = vunpack.c.h.b16 %v254
      %v748 = vunpack.c.l.b16 %v255
      %v749 = vunpack.c.h.b16 %v255
      %v750 = vunpack.c.l.b16 %v256
      %v751 = vunpack.c.h.b16 %v256
      %v752 = vunpack.c.l.b16 %v257
      %v753 = vunpack.c.l.b16 %v258
      %v754 = vunpack.c.h.b16 %v258
      %v755 = vunpack.c.l.b16 %v259
      %v756 = vunpack.c.h.b16 %v259
      %v757 = vunpack.c.l.b16 %v260
      %v758 = vunpack.c.h.b16 %v260
      %v759 = vunpack.c.l.b16 %v261
      %v760 = vunpack.c.l.b16 %v262
      %v761 = vunpack.c.h.b16 %v262
      %v762 = vunpack.c.l.b16 %v263
      %v763 = vunpack.c.h.b16 %v263
      %v764 = vunpack.c.l.b16 %v264
      %v765 = vunpack.c.h.b16 %v264
      %v766 = vunpack.c.l.b16 %v265
      %v767 = vunpack.c.l.b16 %v266
      %v768 = vunpack.c.h.b16 %v266
      %v769 = vunpack.c.l.b16 %v267
      %v770 = vunpack.c.h.b16 %v267
      %v771 = vunpack.c.l.b16 %v268
      %v772 = vunpack.c.h.b16 %v268
      %v773 = vunpack.c.l.b16 %v269
      %v774 = vunpack.c.l.b16 %v270
      %v775 = vunpack.c.h.b16 %v270
      %v776 = vunpack.c.l.b16 %v271
      %v777 = vunpack.c.h.b16 %v271
      %v778 = vunpack.c.l.b16 %v272
      %v779 = vunpack.c.h.b16 %v272
      %v780 = vunpack.c.l.b16 %v273
      %v781 = vunpack.c.l.b16 %v274
      %v782 = vunpack.c.h.b16 %v274
      %v783 = vunpack.c.l.b16 %v275
      %v784 = vunpack.c.h.b16 %v275
      %v785 = vunpack.c.l.b16 %v276
      %v786 = vunpack.c.h.b16 %v276
      %v787 = vunpack.c.l.b16 %v277
      %v788 = vunpack.c.l.b16 %v278
      %v789 = vunpack.c.h.b16 %v278
      %v790 = vunpack.c.l.b16 %v279
      %v791 = vunpack.c.h.b16 %v279
      %v792 = vunpack.c.l.b16 %v280
      %v793 = vunpack.c.h.b16 %v280
      %v794 = vunpack.c.l.b16 %v281
      %v795 = vunpack.c.l.b16 %v282
      %v796 = vunpack.c.h.b16 %v282
      %v797 = vunpack.c.l.b16 %v283
      %v798 = vunpack.c.h.b16 %v283
      %v799 = vunpack.c.l.b16 %v284
      %v800 = vunpack.c.h.b16 %v284
      %v801 = vunpack.c.l.b16 %v285
      %v802 = vunpack.c.l.b16 %v286
      %v803 = vunpack.c.h.b16 %v286
      %v804 = vunpack.c.l.b16 %v287
      %v805 = vunpack.c.h.b16 %v287
      %v806 = vunpack.c.l.b16 %v288
      %v807 = vunpack.c.h.b16 %v288
      %v808 = vunpack.c.l.b16 %v289
      %v809 = vunpack.c.l.b16 %v290
      %v810 = vunpack.c.h.b16 %v290
      %v811 = vunpack.c.l.b16 %v291
      %v812 = vunpack.c.h.b16 %v291
      %v813 = vunpack.c.l.b16 %v292
      %v814 = vunpack.c.h.b16 %v292
      %v815 = vunpack.c.l.b16 %v293
      %v816 = vunpack.c.l.b16 %v294
      %v817 = vunpack.c.h.b16 %v294
      %v818 = vunpack.c.l.b16 %v295
      %v819 = vunpack.c.h.b16 %v295
      %v820 = vunpack.c.l.b16 %v296
      %v821 = vunpack.c.h.b16 %v296
      %v822 = vunpack.c.l.b16 %v297
      %v823 = vunpack.c.l.b16 %v298
      %v824 = vunpack.c.h.b16 %v298
      %v825 = vunpack.c.l.b16 %v299
      %v826 = vunpack.c.h.b16 %v299
      %v827 = vunpack.c.l.b16 %v300
      %v828 = vunpack.c.h.b16 %v300
      %v829 = vunpack.c.l.b16 %v301
      %v830 = vunpack.c.l.b16 %v302
      %v831 = vunpack.c.h.b16 %v302
      %v832 = vunpack.c.l.b16 %v303
      %v833 = vunpack.c.h.b16 %v303
      %v834 = vunpack.c.l.b16 %v304
      %v835 = vunpack.c.h.b16 %v304
      %v836 = vunpack.c.l.b16 %v305
      %v837 = vunpack.c.l.b16 %v306
      %v838 = vunpack.c.h.b16 %v306
      %v839 = vunpack.c.l.b16 %v307
      %v840 = vunpack.c.h.b16 %v307
      %v841 = vunpack.c.l.b16 %v308
      %v842 = vunpack.c.h.b16 %v308
      %v843 = vunpack.c.l.b16 %v309
      %v844 = vunpack.c.l.b16 %v310
      %v845 = vunpack.c.h.b16 %v310
      %v846 = vunpack.c.l.b16 %v311
      %v847 = vunpack.c.h.b16 %v311
      %v848 = vunpack.c.l.b16 %v312
      %v849 = vunpack.c.h.b16 %v312
      %v850 = vunpack.c.l.b16 %v313
      %v851 = vunpack.c.l.b16 %v314
      %v852 = vunpack.c.h.b16 %v314
      %v853 = vunpack.c.l.b16 %v315
      %v854 = vunpack.c.h.b16 %v315
      %v855 = vunpack.c.l.b16 %v316
      %v856 = vunpack.c.h.b16 %v316
      %v857 = vunpack.c.l.b16 %v317
      %v858 = vunpack.c.l.b16 %v318
      %v859 = vunpack.c.h.b16 %v318
      %v860 = vunpack.c.l.b16 %v319
      %v861 = vunpack.c.h.b16 %v319
      %v862 = vunpack.c.l.b16 %v320
      %v863 = vunpack.c.h.b16 %v320
      %v864 = vunpack.c.l.b16 %v321
      %v865 = vunpack.c.l.b16 %v322
      %v866 = vunpack.c.h.b16 %v322
      %v867 = vunpack.c.l.b16 %v323
      %v868 = vunpack.c.h.b16 %v323
      %v869 = vunpack.c.l.b16 %v324
      %v870 = vunpack.c.h.b16 %v324
      %v871 = vunpack.c.l.b16 %v325
      %v872 = vunpack.c.l.b16 %v326
      %v873 = vunpack.c.h.b16 %v326
      %v874 = vunpack.c.l.b16 %v327
      %v875 = vunpack.c.h.b16 %v327
      %v876 = vunpack.c.l.b16 %v328
      %v877 = vunpack.c.h.b16 %v328
      %v878 = vunpack.c.l.b16 %v329
      %v879 = vunpack.c.l.b16 %v330
      %v880 = vunpack.c.h.b16 %v330
      %v881 = vunpack.c.l.b16 %v331
      %v882 = vunpack.c.h.b16 %v331
      %v883 = vunpack.c.l.b16 %v332
      %v884 = vunpack.c.h.b16 %v332
      %v885 = vunpack.c.l.b16 %v333
      %v886 = vunpack.c.l.b16 %v334
      %v887 = vunpack.c.h.b16 %v334
      %v888 = vunpack.c.l.b16 %v335
      %v889 = vunpack.c.h.b16 %v335
      %v890 = vunpack.c.l.b16 %v336
      %v891 = vunpack.c.h.b16 %v336
      %v892 = vunpack.c.l.b16 %v337
      %v893 = vpack.c.b16 %v620, %v613
      %v894 = vpack.c.b16 %v621, %v614
      %v895 = vpack.c.b16 %v622, %v615
      %v896 = vpack.c.b16 %v623, %v616
      %v897 = vpack.c.b16 %v624, %v617
      %v898 = vpack.c.b16 %v625, %v618
      %v899 = vpack.c.b16 %v626, %v619
      %v900 = vpack.c.b16 %v634, %v627
      %v901 = vpack.c.b16 %v635, %v628
      %v902 = vpack.c.b16 %v636, %v629
      %v903 = vpack.c.b16 %v637, %v630
      %v904 = vpack.c.b16 %v638, %v631
      %v905 = vpack.c.b16 %v639, %v632
      %v906 = vpack.c.b16 %v640, %v633
      %v907 = vpack.c.b16 %v648, %v641
      %v908 = vpack.c.b16 %v649, %v642
      %v909 = vpack.c.b16 %v650, %v643
      %v910 = vpack.c.b16 %v651, %v644
      %v911 = vpack.c.b16 %v652, %v645
      %v912 = vpack.c.b16 %v653, %v646
      %v913 = vpack.c.b16 %v654, %v647
      %v914 = vpack.c.b16 %v662, %v655
      %v915 = vpack.c.b16 %v663, %v656
      %v916 = vpack.c.b16 %v664, %v657
      %v917 = vpack.c.b16 %v665, %v658
      %v918 = vpack.c.b16 %v666, %v659
      %v919 = vpack.c.b16 %v667, %v660
      %v920 = vpack.c.b16 %v668, %v661
      %v921 = vpack.c.b16 %v676, %v669
      %v922 = vpack.c.b16 %v677, %v670
      %v923 = vpack.c.b16 %v678, %v671
      %v924 = vpack.c.b16 %v679, %v672
      %v925 = vpack.c.b16 %v680, %v673
      %v926 = vpack.c.b16 %v681, %v674
      %v927 = vpack.c.b16 %v682, %v675
      %v928 = vpack.c.b16 %v690, %v683
      %v929 = vpack.c.b16 %v691, %v684
      %v930 = vpack.c.b16 %v692, %v685
      %v931 = vpack.c.b16 %v693, %v686
      %v932 = vpack.c.b16 %v694, %v687
      %v933 = vpack.c.b16 %v695, %v688
      %v934 = vpack.c.b16 %v696, %v689
      %v935 = vpack.c.b16 %v704, %v697
      %v936 = vpack.c.b16 %v705, %v698
      %v937 = vpack.c.b16 %v706, %v699
      %v938 = vpack.c.b16 %v707, %v700
      %v939 = vpack.c.b16 %v708, %v701
      %v940 = vpack.c.b16 %v709, %v702
      %v941 = vpack.c.b16 %v710, %v703
      %v942 = vpack.c.b16 %v718, %v711
      %v943 = vpack.c.b16 %v719, %v712
      %v944 = vpack.c.b16 %v720, %v713
      %v945 = vpack.c.b16 %v721, %v714
      %v946 = vpack.c.b16 %v722, %v715
      %v947 = vpack.c.b16 %v723, %v716
      %v948 = vpack.c.b16 %v724, %v717
      %v949 = vpack.c.b16 %v732, %v725
      %v950 = vpack.c.b16 %v733, %v726
      %v951 = vpack.c.b16 %v734, %v727
      %v952 = vpack.c.b16 %v735, %v728
      %v953 = vpack.c.b16 %v736, %v729
      %v954 = vpack.c.b16 %v737, %v730
      %v955 = vpack.c.b16 %v738, %v731
      %v956 = vpack.c.b16 %v746, %v739
      %v957 = vpack.c.b16 %v747, %v740
      %v958 = vpack.c.b16 %v748, %v741
      %v959 = vpack.c.b16 %v749, %v742
      %v960 = vpack.c.b16 %v750, %v743
      %v961 = vpack.c.b16 %v751, %v744
      %v962 = vpack.c.b16 %v752, %v745
      %v963 = vpack.c.b16 %v760, %v753
      %v964 = vpack.c.b16 %v761, %v754
      %v965 = vpack.c.b16 %v762, %v755
      %v966 = vpack.c.b16 %v763, %v756
      %v967 = vpack.c.b16 %v764, %v757
      %v968 = vpack.c.b16 %v765, %v758
      %v969 = vpack.c.b16 %v766, %v759
      %v970 = vpack.c.b16 %v774, %v767
      %v971 = vpack.c.b16 %v775, %v768
      %v972 = vpack.c.b16 %v776, %v769
      %v973 = vpack.c.b16 %v777, %v770
      %v974 = vpack.c.b16 %v778, %v771
      %v975 = vpack.c.b16 %v779, %v772
      %v976 = vpack.c.b16 %v780, %v773
      %v977 = vpack.c.b16 %v788, %v781
      %v978 = vpack.c.b16 %v789, %v782
      %v979 = vpack.c.b16 %v790, %v783
      %v980 = vpack.c.b16 %v791, %v784
      %v981 = vpack.c.b16 %v792, %v785
      %v982 = vpack.c.b16 %v793, %v786
      %v983 = vpack.c.b16 %v794, %v787
      %v984 = vpack.c.b16 %v802, %v795
      %v985 = vpack.c.b16 %v803, %v796
      %v986 = vpack.c.b16 %v804, %v797
      %v987 = vpack.c.b16 %v805, %v798
      %v988 = vpack.c.b16 %v806, %v799
      %v989 = vpack.c.b16 %v807, %v800
      %v990 = vpack.c.b16 %v808, %v801
      %v991 = vpack.c.b16 %v816, %v809
      %v992 = vpack.c.b16 %v817, %v810
      %v993 = vpack.c.b16 %v818, %v811
      %v994 = vpack.c.b16 %v819, %v812
      %v995 = vpack.c.b16 %v820, %v813
      %v996 = vpack.c.b16 %v821, %v814
      %v997 = vpack.c.b16 %v822, %v815
      %v998 = vpack.c.b16 %v830, %v823
      %v999 = vpack.c.b16 %v831, %v824
      %v1000 = vpack.c.b16 %v832, %v825
      %v1001 = vpack.c.b16 %v833, %v826
      %v1002 = vpack.c.b16 %v834, %v827
      %v1003 = vpack.c.b16 %v835, %v828
      %v1004 = vpack.c.b16 %v836, %v829
      %v1005 = vpack.c.b16 %v844, %v837
      %v1006 = vpack.c.b16 %v845, %v838
      %v1007 = vpack.c.b16 %v846, %v839
      %v1008 = vpack.c.b16 %v847, %v840
      %v1009 = vpack.c.b16 %v848, %v841
      %v1010 = vpack.c.b16 %v849, %v842
      %v1011 = vpack.c.b16 %v850, %v843
      %v1012 = vpack.c.b16 %v858, %v851
      %v1013 = vpack.c.b16 %v859, %v852
      %v1014 = vpack.c.b16 %v860, %v853
      %v1015 = vpack.c.b16 %v861, %v854
      %v1016 = vpack.c.b16 %v862, %v855
      %v1017 = vpack.c.b16 %v863, %v856
      %v1018 = vpack.c.b16 %v864, %v857
      %v1019 = vpack.c.b16 %v872, %v865
      %v1020 = vpack.c.b16 %v873, %v866
      %v1021 = vpack.c.b16 %v874, %v867
      %v1022 = vpack.c.b16 %v875, %v868
      %v1023 = vpack.c.b16 %v876, %v869
      %v1024 = vpack.c.b16 %v877, %v870
      %v1025 = vpack.c.b16 %v878, %v871
      %v1026 = vpack.c.b16 %v886, %v879
      %v1027 = vpack.c.b16 %v887, %v880
      %v1028 = vpack.c.b16 %v888, %v881
      %v1029 = vpack.c.b16 %v889, %v882
      %v1030 = vpack.c.b16 %v890, %v883
      %v1031 = vpack.c.b16 %v891, %v884
      %v1032 = vpack.c.b16 %v892, %v885
      %v1261 = vunpack.c.l.b16 %v338
      %v1262 = vunpack.c.l.b16 %v339
      %v1263 = vunpack.c.l.b16 %v340
      %v1264 = vunpack.c.l.b16 %v341
      %v1265 = vunpack.c.l.b16 %v342
      %v1266 = vunpack.c.l.b16 %v343
      %v1267 = vunpack.c.l.b16 %v344
      %v1268 = vunpack.c.l.b16 %v345
      %v1269 = vunpack.c.l.b16 %v346
      %v1270 = vunpack.c.l.b16 %v347
      %v1271 = vunpack.c.l.b16 %v348
      %v1272 = vunpack.c.l.b16 %v349
      %v1273 = vunpack.c.l.b16 %v350
      %v1274 = vunpack.c.l.b16 %v351
      %v1275 = vunpack.c.l.b16 %v352
      %v1276 = vunpack.c.l.b16 %v353
      %v1277 = vunpack.c.l.b16 %v354
      %v1278 = vunpack.c.l.b16 %v355
      %v1279 = vunpack.c.l.b16 %v356
      %v1280 = vunpack.c.l.b16 %v357
      %v1281 = vunpack.c.l.b16 %v358
      %v1282 = vunpack.c.l.b16 %v359
      %v1283 = vunpack.c.l.b16 %v360
      %v1284 = vunpack.c.l.b16 %v361
      %v1285 = vunpack.c.l.b16 %v362
      %v1286 = vunpack.c.l.b16 %v363
      %v1287 = vunpack.c.l.b16 %v364
      %v1288 = vunpack.c.l.b16 %v365
      %v1289 = vunpack.c.l.b16 %v366
      %v1290 = vunpack.c.l.b16 %v367
      %v1291 = vunpack.c.l.b16 %v368
      %v1292 = vunpack.c.l.b16 %v369
      %v1293 = vunpack.c.l.b16 %v370
      %v1294 = vunpack.c.l.b16 %v371
      %v1295 = vunpack.c.l.b16 %v372
      %v1296 = vunpack.c.l.b16 %v373
      %v1297 = vunpack.c.l.b16 %v374
      %v1298 = vunpack.c.l.b16 %v375
      %v1299 = vunpack.c.l.b16 %v376
      %v1300 = vunpack.c.l.b16 %v377
      %v1301 = vunpack.c.l.b16 %v378
      %v1302 = vunpack.c.l.b16 %v379
      %v1303 = vunpack.c.l.b16 %v380
      %v1304 = vunpack.c.l.b16 %v381
      %v1305 = vunpack.c.l.b16 %v382
      %v1306 = vunpack.c.l.b16 %v383
      %v1307 = vunpack.c.l.b16 %v384
      %v1308 = vunpack.c.l.b16 %v385
      %v1309 = vunpack.c.l.b16 %v386
      %v1310 = vunpack.c.l.b16 %v387
      %v1311 = vunpack.c.l.b16 %v388
      %v1312 = vunpack.c.l.b16 %v389
      %v1313 = vunpack.c.l.b16 %v390
      %v1314 = vunpack.c.l.b16 %v391
      %v1315 = vunpack.c.l.b16 %v392
      %v1316 = vunpack.c.l.b16 %v393
      %v1317 = vunpack.c.l.b16 %v394
      %v1318 = vunpack.c.l.b16 %v395
      %v1319 = vunpack.c.l.b16 %v396
      %v1320 = vunpack.c.l.b16 %v397
      %v1321 = vunpack.c.l.b16 %v398
      %v1322 = vunpack.c.l.b16 %v399
      %v1323 = vunpack.c.l.b16 %v400
      %v1324 = vunpack.c.l.b16 %v401
      %v1325 = vunpack.c.l.b16 %v402
      %v1326 = vunpack.c.l.b16 %v403
      %v1327 = vunpack.c.l.b16 %v404
      %v1328 = vunpack.c.l.b16 %v405
      %v1329 = vunpack.c.l.b16 %v406
      %v1330 = vunpack.c.l.b16 %v407
      %v1331 = vunpack.c.l.b16 %v408
      %v1332 = vunpack.c.l.b16 %v409
      %v1333 = vunpack.c.l.b16 %v410
      %v1334 = vunpack.c.l.b16 %v411
      %v1335 = vunpack.c.l.b16 %v412
      %v1336 = vunpack.c.l.b16 %v413
      %v1337 = vunpack.c.l.b16 %v414
      %v1338 = vunpack.c.l.b16 %v415
      %v1339 = vunpack.c.l.b16 %v416
      %v1340 = vunpack.c.l.b16 %v417
      %v1341 = vunpack.c.l.b16 %v418
      %v1342 = vunpack.c.l.b16 %v419
      %v1343 = vunpack.c.l.b16 %v420
      %v1344 = vunpack.c.l.b16 %v421
      %v1345 = vunpack.c.l.b16 %v422
      %v1346 = vunpack.c.l.b16 %v423
      %v1347 = vunpack.c.l.b16 %v424
      %v1348 = vunpack.c.l.b16 %v425
      %v1349 = vunpack.c.l.b16 %v426
      %v1350 = vunpack.c.l.b16 %v427
      %v1351 = vunpack.c.l.b16 %v428
      %v1352 = vunpack.c.l.b16 %v429
      %v1353 = vunpack.c.l.b16 %v430
      %v1354 = vunpack.c.l.b16 %v431
      %v1355 = vunpack.c.l.b16 %v432
      %v1356 = vunpack.c.l.b16 %v433
      %v1357 = vunpack.c.l.b16 %v434
      %v1358 = vunpack.c.l.b16 %v435
      %v1359 = vunpack.c.l.b16 %v436
      %v1360 = vunpack.c.l.b16 %v437
      %v1361 = vunpack.c.l.b16 %v438
      %v1362 = vunpack.c.l.b16 %v439
      %v1363 = vunpack.c.l.b16 %v440
      %v1364 = vunpack.c.l.b16 %v441
      %v1365 = vunpack.c.l.b16 %v442
      %v1366 = vunpack.c.l.b16 %v443
      %v1367 = vunpack.c.l.b16 %v444
      %v1368 = vunpack.c.l.b16 %v445
      %v1369 = vpack.c.b16 %v1262, %v1261
      %v1370 = vpack.c.b16 %v1264, %v1263
      %v1371 = vpack.c.b16 %v1266, %v1265
      %v1372 = vpack.c.b16 %v1268, %v1267
      %v1373 = vpack.c.b16 %v1270, %v1269
      %v1374 = vpack.c.b16 %v1272, %v1271
      %v1375 = vpack.c.b16 %v1274, %v1273
      %v1376 = vpack.c.b16 %v1276, %v1275
      %v1377 = vpack.c.b16 %v1278, %v1277
      %v1378 = vpack.c.b16 %v1280, %v1279
      %v1379 = vpack.c.b16 %v1282, %v1281
      %v1380 = vpack.c.b16 %v1284, %v1283
      %v1381 = vpack.c.b16 %v1286, %v1285
      %v1382 = vpack.c.b16 %v1288, %v1287
      %v1383 = vpack.c.b16 %v1290, %v1289
      %v1384 = vpack.c.b16 %v1292, %v1291
      %v1385 = vpack.c.b16 %v1294, %v1293
      %v1386 = vpack.c.b16 %v1296, %v1295
      %v1387 = vpack.c.b16 %v1298, %v1297
      %v1388 = vpack.c.b16 %v1300, %v1299
      %v1389 = vpack.c.b16 %v1302, %v1301
      %v1390 = vpack.c.b16 %v1304, %v1303
      %v1391 = vpack.c.b16 %v1306, %v1305
      %v1392 = vpack.c.b16 %v1308, %v1307
      %v1393 = vpack.c.b16 %v1310, %v1309
      %v1394 = vpack.c.b16 %v1312, %v1311
      %v1395 = vpack.c.b16 %v1314, %v1313
      %v1396 = vpack.c.b16 %v1316, %v1315
      %v1397 = vpack.c.b16 %v1318, %v1317
      %v1398 = vpack.c.b16 %v1320, %v1319
      %v1399 = vpack.c.b16 %v1322, %v1321
      %v1400 = vpack.c.b16 %v1324, %v1323
      %v1401 = vpack.c.b16 %v1326, %v1325
      %v1402 = vpack.c.b16 %v1328, %v1327
      %v1403 = vpack.c.b16 %v1330, %v1329
      %v1404 = vpack.c.b16 %v1332, %v1331
      %v1405 = vpack.c.b16 %v1334, %v1333
      %v1406 = vpack.c.b16 %v1336, %v1335
      %v1407 = vpack.c.b16 %v1338, %v1337
      %v1408 = vpack.c.b16 %v1340, %v1339
      %v1409 = vpack.c.b16 %v1342, %v1341
      %v1410 = vpack.c.b16 %v1344, %v1343
      %v1411 = vpack.c.b16 %v1346, %v1345
      %v1412 = vpack.c.b16 %v1348, %v1347
      %v1413 = vpack.c.b16 %v1350, %v1349
      %v1414 = vpack.c.b16 %v1352, %v1351
      %v1415 = vpack.c.b16 %v1354, %v1353
      %v1416 = vpack.c.b16 %v1356, %v1355
      %v1417 = vpack.c.b16 %v1358, %v1357
      %v1418 = vpack.c.b16 %v1360, %v1359
      %v1419 = vpack.c.b16 %v1362, %v1361
      %v1420 = vpack.c.b16 %v1364, %v1363
      %v1421 = vpack.c.b16 %v1366, %v1365
      %v1422 = vpack.c.b16 %v1368, %v1367
      %vm1477 = vcmask 785408
      %v1479 = vsel %vm1477, %v899, 0
      %v1482 = vsel %vm1477, %v906, 0
      %v1485 = vsel %vm1477, %v913, 0
      %v1488 = vsel %vm1477, %v920, 0
      %v1491 = vsel %vm1477, %v927, 0
      %v1494 = vsel %vm1477, %v934, 0
      %v1497 = vsel %vm1477, %v941, 0
      %v1500 = vsel %vm1477, %v948, 0
      %v1503 = vsel %vm1477, %v955, 0
      %v1506 = vsel %vm1477, %v962, 0
      %v1509 = vsel %vm1477, %v969, 0
      %v1512 = vsel %vm1477, %v976, 0
      %v1515 = vsel %vm1477, %v983, 0
      %v1518 = vsel %vm1477, %v990, 0
      %v1521 = vsel %vm1477, %v997, 0
      %v1524 = vsel %vm1477, %v1004, 0
      %v1527 = vsel %vm1477, %v1011, 0
      %v1530 = vsel %vm1477, %v1018, 0
      %v1533 = vsel %vm1477, %v1025, 0
      %v1536 = vsel %vm1477, %v1032, 0
      %1538 = vmatprep.subr.bf16.mxu0 0
      %1539 = vmatpush1.bf16.msra.mxu0 %v1369
      %1540 = vmatprep.subr.bf16.mxu0 0
      %1541 = vmatpush1.bf16.msra.mxu0 %v1370
      %1542 = vmatprep.subr.bf16.mxu0 0
      %1543 = vmatpush1.bf16.msra.mxu0 %v1371
      %1544 = vmatprep.subr.bf16.mxu0 0
      %1545 = vmatpush1.bf16.msra.mxu0 %v1372
      %1546 = vmatprep.subr.bf16.mxu0 0
      %1547 = vmatpush1.bf16.msra.mxu0 %v1373
      %1548 = vmatprep.subr.bf16.mxu0 0
      %1549 = vmatpush1.bf16.msra.mxu0 %v1374
      %1550 = vmatprep.subr.bf16.mxu0 0
      %1551 = vmatpush1.bf16.msra.mxu0 %v1375
      %1552 = vmatprep.subr.bf16.mxu0 0
      %1553 = vmatpush1.bf16.msra.mxu0 %v1376
      %1554 = vmatprep.subr.bf16.mxu0 0
      %1555 = vmatpush1.bf16.msra.mxu0 %v1377
      %1556 = vmatprep.subr.bf16.mxu0 0
      %1557 = vmatpush1.bf16.msra.mxu0 %v1378
      %1558 = vmatprep.subr.bf16.mxu0 0
      %1559 = vmatpush1.bf16.msra.mxu0 %v1379
      %1560 = vmatprep.subr.bf16.mxu0 0
      %1561 = vmatpush1.bf16.msra.mxu0 %v1380
      %1562 = vmatprep.subr.bf16.mxu0 0
      %1563 = vmatpush1.bf16.msra.mxu0 %v1381
      %1564 = vmatprep.subr.bf16.mxu0 0
      %1565 = vmatpush1.bf16.msra.mxu0 %v1382
      %1566 = vmatprep.subr.bf16.mxu0 0
      %1567 = vmatpush1.bf16.msra.mxu0 %v1383
      %1568 = vmatprep.subr.bf16.mxu0 0
      %1569 = vmatpush1.bf16.msra.mxu0 %v1384
      %1570 = vmatprep.mubr.bf16.mxu0 %v894
      %1571 = vmatmul.mubr.bf16.gmra.mrb[0].mxu0 %v893
      %v1572 = vpop.f32.mrb[0].mxu0
      %v1573 = vadd.f32 %v451, %v1572
      %v1574 = vpop.f32.mrb[0].mxu0
      %v1575 = vpop.f32.mrb[0].mxu0
      %v1576 = vadd.f32 %v451, %v1575
      %v1577 = vpop.f32.mrb[0].mxu0
      %1578 = vmatprep.mubr.bf16.mxu0 %v901
      %1579 = vmatmul.mubr.bf16.gmra.mrb[0].mxu0 %v900
      %v1580 = vpop.f32.mrb[0].mxu0
      %v1581 = vadd.f32 %v451, %v1580
      %v1582 = vpop.f32.mrb[0].mxu0
      %v1583 = vpop.f32.mrb[0].mxu0
      %v1584 = vadd.f32 %v451, %v1583
      %v1585 = vpop.f32.mrb[0].mxu0
      %1586 = vmatprep.mubr.bf16.mxu0 %v908
      %1587 = vmatmul.mubr.bf16.gmra.mrb[0].mxu0 %v907
      %v1588 = vpop.f32.mrb[0].mxu0
      %v1589 = vadd.f32 %v451, %v1588
      %v1590 = vpop.f32.mrb[0].mxu0
      %v1591 = vpop.f32.mrb[0].mxu0
      %v1592 = vadd.f32 %v451, %v1591
      %v1593 = vpop.f32.mrb[0].mxu0
      %1594 = vmatprep.mubr.bf16.mxu0 %v915
      %1595 = vmatmul.mubr.bf16.gmra.mrb[0].mxu0 %v914
      %v1596 = vpop.f32.mrb[0].mxu0
      %v1597 = vadd.f32 %v451, %v1596
      %v1598 = vpop.f32.mrb[0].mxu0
      %v1599 = vpop.f32.mrb[0].mxu0
      %v1600 = vadd.f32 %v451, %v1599
      %v1601 = vpop.f32.mrb[0].mxu0
      %1602 = vmatprep.mubr.bf16.mxu0 %v922
      %1603 = vmatmul.mubr.bf16.gmra.mrb[0].mxu0 %v921
      %v1604 = vpop.f32.mrb[0].mxu0
      %v1605 = vadd.f32 %v451, %v1604
      %v1606 = vpop.f32.mrb[0].mxu0
      %v1607 = vpop.f32.mrb[0].mxu0
      %v1608 = vadd.f32 %v451, %v1607
      %v1609 = vpop.f32.mrb[0].mxu0
      %1610 = vmatprep.mubr.bf16.mxu0 %v929
      %1611 = vmatmul.mubr.bf16.gmra.mrb[0].mxu0 %v928
      %v1612 = vpop.f32.mrb[0].mxu0
      %v1613 = vadd.f32 %v451, %v1612
      %v1614 = vpop.f32.mrb[0].mxu0
      %v1615 = vpop.f32.mrb[0].mxu0
      %v1616 = vadd.f32 %v451, %v1615
      %v1617 = vpop.f32.mrb[0].mxu0
      %1618 = vmatprep.mubr.bf16.mxu0 %v936
      %1619 = vmatmul.mubr.bf16.gmra.mrb[0].mxu0 %v935
      %v1620 = vpop.f32.mrb[0].mxu0
      %v1621 = vadd.f32 %v451, %v1620
      %v1622 = vpop.f32.mrb[0].mxu0
      %v1623 = vpop.f32.mrb[0].mxu0
      %v1624 = vadd.f32 %v451, %v1623
      %v1625 = vpop.f32.mrb[0].mxu0
      %1626 = vmatprep.mubr.bf16.mxu0 %v943
      %1627 = vmatmul.mubr.bf16.gmra.mrb[0].mxu0 %v942
      %v1628 = vpop.f32.mrb[0].mxu0
      %v1629 = vadd.f32 %v451, %v1628
      %v1630 = vpop.f32.mrb[0].mxu0
      %v1631 = vpop.f32.mrb[0].mxu0
      %v1632 = vadd.f32 %v451, %v1631
      %v1633 = vpop.f32.mrb[0].mxu0
      %1634 = vmatprep.mubr.bf16.mxu0 %v950
      %1635 = vmatmul.mubr.bf16.gmra.mrb[0].mxu0 %v949
      %v1636 = vpop.f32.mrb[0].mxu0
      %v1637 = vadd.f32 %v451, %v1636
      %v1638 = vpop.f32.mrb[0].mxu0
      %v1639 = vpop.f32.mrb[0].mxu0
      %v1640 = vadd.f32 %v451, %v1639
      %v1641 = vpop.f32.mrb[0].mxu0
      %1642 = vmatprep.mubr.bf16.mxu0 %v957
      %1643 = vmatmul.mubr.bf16.gmra.mrb[0].mxu0 %v956
      %v1644 = vpop.f32.mrb[0].mxu0
      %v1645 = vadd.f32 %v451, %v1644
      %v1646 = vpop.f32.mrb[0].mxu0
      %v1647 = vpop.f32.mrb[0].mxu0
      %v1648 = vadd.f32 %v451, %v1647
      %v1649 = vpop.f32.mrb[0].mxu0
      %1650 = vmatprep.mubr.bf16.mxu0 %v964
      %1651 = vmatmul.mubr.bf16.gmra.mrb[0].mxu0 %v963
      %v1652 = vpop.f32.mrb[0].mxu0
      %v1653 = vadd.f32 %v451, %v1652
      %v1654 = vpop.f32.mrb[0].mxu0
      %v1655 = vpop.f32.mrb[0].mxu0
      %v1656 = vadd.f32 %v451, %v1655
      %v1657 = vpop.f32.mrb[0].mxu0
      %1658 = vmatprep.mubr.bf16.mxu0 %v971
      %1659 = vmatmul.mubr.bf16.gmra.mrb[0].mxu0 %v970
      %v1660 = vpop.f32.mrb[0].mxu0
      %v1661 = vadd.f32 %v451, %v1660
      %v1662 = vpop.f32.mrb[0].mxu0
      %v1663 = vpop.f32.mrb[0].mxu0
      %v1664 = vadd.f32 %v451, %v1663
      %v1665 = vpop.f32.mrb[0].mxu0
      %1666 = vmatprep.mubr.bf16.mxu0 %v978
      %1667 = vmatmul.mubr.bf16.gmra.mrb[0].mxu0 %v977
      %v1668 = vpop.f32.mrb[0].mxu0
      %v1669 = vadd.f32 %v451, %v1668
      %v1670 = vpop.f32.mrb[0].mxu0
      %v1671 = vpop.f32.mrb[0].mxu0
      %v1672 = vadd.f32 %v451, %v1671
      %v1673 = vpop.f32.mrb[0].mxu0
      %1674 = vmatprep.mubr.bf16.mxu0 %v985
      %1675 = vmatmul.mubr.bf16.gmra.mrb[0].mxu0 %v984
      %v1676 = vpop.f32.mrb[0].mxu0
      %v1677 = vadd.f32 %v451, %v1676
      %v1678 = vpop.f32.mrb[0].mxu0
      %v1679 = vpop.f32.mrb[0].mxu0
      %v1680 = vadd.f32 %v451, %v1679
      %v1681 = vpop.f32.mrb[0].mxu0
      %1682 = vmatprep.mubr.bf16.mxu0 %v992
      %1683 = vmatmul.mubr.bf16.gmra.mrb[0].mxu0 %v991
      %v1684 = vpop.f32.mrb[0].mxu0
      %v1685 = vadd.f32 %v451, %v1684
      %v1686 = vpop.f32.mrb[0].mxu0
      %v1687 = vpop.f32.mrb[0].mxu0
      %v1688 = vadd.f32 %v451, %v1687
      %v1689 = vpop.f32.mrb[0].mxu0
      %1690 = vmatprep.mubr.bf16.mxu0 %v999
      %1691 = vmatmul.mubr.bf16.gmra.mrb[0].mxu0 %v998
      %v1692 = vpop.f32.mrb[0].mxu0
      %v1693 = vadd.f32 %v451, %v1692
      %v1694 = vpop.f32.mrb[0].mxu0
      %v1695 = vpop.f32.mrb[0].mxu0
      %v1696 = vadd.f32 %v451, %v1695
      %v1697 = vpop.f32.mrb[0].mxu0
      %1698 = vmatprep.mubr.bf16.mxu0 %v1006
      %1699 = vmatmul.mubr.bf16.gmra.mrb[0].mxu0 %v1005
      %v1700 = vpop.f32.mrb[0].mxu0
      %v1701 = vadd.f32 %v451, %v1700
      %v1702 = vpop.f32.mrb[0].mxu0
      %v1703 = vpop.f32.mrb[0].mxu0
      %v1704 = vadd.f32 %v451, %v1703
      %v1705 = vpop.f32.mrb[0].mxu0
      %1706 = vmatprep.mubr.bf16.mxu0 %v1013
      %1707 = vmatmul.mubr.bf16.gmra.mrb[0].mxu0 %v1012
      %v1708 = vpop.f32.mrb[0].mxu0
      %v1709 = vadd.f32 %v451, %v1708
      %v1710 = vpop.f32.mrb[0].mxu0
      %v1711 = vpop.f32.mrb[0].mxu0
      %v1712 = vadd.f32 %v451, %v1711
      %v1713 = vpop.f32.mrb[0].mxu0
      %1714 = vmatprep.mubr.bf16.mxu0 %v1020
      %1715 = vmatmul.mubr.bf16.gmra.mrb[0].mxu0 %v1019
      %v1716 = vpop.f32.mrb[0].mxu0
      %v1717 = vadd.f32 %v451, %v1716
      %v1718 = vpop.f32.mrb[0].mxu0
      %v1719 = vpop.f32.mrb[0].mxu0
      %v1720 = vadd.f32 %v451, %v1719
      %v1721 = vpop.f32.mrb[0].mxu0
      %1722 = vmatprep.mubr.bf16.mxu0 %v1027
      %1723 = vmatmul.mubr.bf16.gmra.mrb[0].mxu0 %v1026
      %v1724 = vpop.f32.mrb[0].mxu0
      %v1725 = vadd.f32 %v451, %v1724
      %v1726 = vpop.f32.mrb[0].mxu0
      %v1727 = vpop.f32.mrb[0].mxu0
      %v1728 = vadd.f32 %v451, %v1727
      %v1729 = vpop.f32.mrb[0].mxu0
      %1730 = vdwg.mxu0
      %1731 = vmatprep.subr.bf16.mxu0 0
      %1732 = vmatpush1.bf16.msra.mxu0 %v1385
      %1733 = vmatprep.subr.bf16.mxu0 0
      %1734 = vmatpush1.bf16.msra.mxu0 %v1386
      %1735 = vmatprep.subr.bf16.mxu0 0
      %1736 = vmatpush1.bf16.msra.mxu0 %v1387
      %1737 = vmatprep.subr.bf16.mxu0 0
      %1738 = vmatpush1.bf16.msra.mxu0 %v1388
      %1739 = vmatprep.subr.bf16.mxu0 0
      %1740 = vmatpush1.bf16.msra.mxu0 %v1389
      %1741 = vmatprep.subr.bf16.mxu0 0
      %1742 = vmatpush1.bf16.msra.mxu0 %v1390
      %1743 = vmatprep.subr.bf16.mxu0 0
      %1744 = vmatpush1.bf16.msra.mxu0 %v1391
      %1745 = vmatprep.subr.bf16.mxu0 0
      %1746 = vmatpush1.bf16.msra.mxu0 %v1392
      %1747 = vmatprep.subr.bf16.mxu0 0
      %1748 = vmatpush1.bf16.msra.mxu0 %v1393
      %1749 = vmatprep.subr.bf16.mxu0 0
      %1750 = vmatpush1.bf16.msra.mxu0 %v1394
      %1751 = vmatprep.subr.bf16.mxu0 0
      %1752 = vmatpush1.bf16.msra.mxu0 %v1395
      %1753 = vmatprep.subr.bf16.mxu0 0
      %1754 = vmatpush1.bf16.msra.mxu0 %v1396
      %1755 = vmatprep.subr.bf16.mxu0 0
      %1756 = vmatpush1.bf16.msra.mxu0 %v1397
      %1757 = vmatprep.subr.bf16.mxu0 0
      %1758 = vmatpush1.bf16.msra.mxu0 %v1398
      %1759 = vmatprep.subr.bf16.mxu0 0
      %1760 = vmatpush1.bf16.msra.mxu0 %v1399
      %1761 = vmatprep.subr.bf16.mxu0 0
      %1762 = vmatpush1.bf16.msra.mxu0 %v1400
      %1763 = vmatprep.mubr.bf16.mxu0 %v896
      %1764 = vmatmul.mubr.bf16.gmra.mrb[0].mxu0 %v895
      %v1765 = vpop.f32.mrb[0].mxu0
      %v1766 = vadd.f32 %v1573, %v1765
      %v1767 = vpop.f32.mrb[0].mxu0
      %v1768 = vpop.f32.mrb[0].mxu0
      %v1769 = vadd.f32 %v1576, %v1768
      %v1770 = vpop.f32.mrb[0].mxu0
      %1771 = vmatprep.mubr.bf16.mxu0 %v903
      %1772 = vmatmul.mubr.bf16.gmra.mrb[0].mxu0 %v902
      %v1773 = vpop.f32.mrb[0].mxu0
      %v1774 = vadd.f32 %v1581, %v1773
      %v1775 = vpop.f32.mrb[0].mxu0
      %v1776 = vpop.f32.mrb[0].mxu0
      %v1777 = vadd.f32 %v1584, %v1776
      %v1778 = vpop.f32.mrb[0].mxu0
      %1779 = vmatprep.mubr.bf16.mxu0 %v910
      %1780 = vmatmul.mubr.bf16.gmra.mrb[0].mxu0 %v909
      %v1781 = vpop.f32.mrb[0].mxu0
      %v1782 = vadd.f32 %v1589, %v1781
      %v1783 = vpop.f32.mrb[0].mxu0
      %v1784 = vpop.f32.mrb[0].mxu0
      %v1785 = vadd.f32 %v1592, %v1784
      %v1786 = vpop.f32.mrb[0].mxu0
      %1787 = vmatprep.mubr.bf16.mxu0 %v917
      %1788 = vmatmul.mubr.bf16.gmra.mrb[0].mxu0 %v916
      %v1789 = vpop.f32.mrb[0].mxu0
      %v1790 = vadd.f32 %v1597, %v1789
      %v1791 = vpop.f32.mrb[0].mxu0
      %v1792 = vpop.f32.mrb[0].mxu0
      %v1793 = vadd.f32 %v1600, %v1792
      %v1794 = vpop.f32.mrb[0].mxu0
      %1795 = vmatprep.mubr.bf16.mxu0 %v924
      %1796 = vmatmul.mubr.bf16.gmra.mrb[0].mxu0 %v923
      %v1797 = vpop.f32.mrb[0].mxu0
      %v1798 = vadd.f32 %v1605, %v1797
      %v1799 = vpop.f32.mrb[0].mxu0
      %v1800 = vpop.f32.mrb[0].mxu0
      %v1801 = vadd.f32 %v1608, %v1800
      %v1802 = vpop.f32.mrb[0].mxu0
      %1803 = vmatprep.mubr.bf16.mxu0 %v931
      %1804 = vmatmul.mubr.bf16.gmra.mrb[0].mxu0 %v930
      %v1805 = vpop.f32.mrb[0].mxu0
      %v1806 = vadd.f32 %v1613, %v1805
      %v1807 = vpop.f32.mrb[0].mxu0
      %v1808 = vpop.f32.mrb[0].mxu0
      %v1809 = vadd.f32 %v1616, %v1808
      %v1810 = vpop.f32.mrb[0].mxu0
      %1811 = vmatprep.mubr.bf16.mxu0 %v938
      %1812 = vmatmul.mubr.bf16.gmra.mrb[0].mxu0 %v937
      %v1813 = vpop.f32.mrb[0].mxu0
      %v1814 = vadd.f32 %v1621, %v1813
      %v1815 = vpop.f32.mrb[0].mxu0
      %v1816 = vpop.f32.mrb[0].mxu0
      %v1817 = vadd.f32 %v1624, %v1816
      %v1818 = vpop.f32.mrb[0].mxu0
      %1819 = vmatprep.mubr.bf16.mxu0 %v945
      %1820 = vmatmul.mubr.bf16.gmra.mrb[0].mxu0 %v944
      %v1821 = vpop.f32.mrb[0].mxu0
      %v1822 = vadd.f32 %v1629, %v1821
      %v1823 = vpop.f32.mrb[0].mxu0
      %v1824 = vpop.f32.mrb[0].mxu0
      %v1825 = vadd.f32 %v1632, %v1824
      %v1826 = vpop.f32.mrb[0].mxu0
      %1827 = vmatprep.mubr.bf16.mxu0 %v952
      %1828 = vmatmul.mubr.bf16.gmra.mrb[0].mxu0 %v951
      %v1829 = vpop.f32.mrb[0].mxu0
      %v1830 = vadd.f32 %v1637, %v1829
      %v1831 = vpop.f32.mrb[0].mxu0
      %v1832 = vpop.f32.mrb[0].mxu0
      %v1833 = vadd.f32 %v1640, %v1832
      %v1834 = vpop.f32.mrb[0].mxu0
      %1835 = vmatprep.mubr.bf16.mxu0 %v959
      %1836 = vmatmul.mubr.bf16.gmra.mrb[0].mxu0 %v958
      %v1837 = vpop.f32.mrb[0].mxu0
      %v1838 = vadd.f32 %v1645, %v1837
      %v1839 = vpop.f32.mrb[0].mxu0
      %v1840 = vpop.f32.mrb[0].mxu0
      %v1841 = vadd.f32 %v1648, %v1840
      %v1842 = vpop.f32.mrb[0].mxu0
      %1843 = vmatprep.mubr.bf16.mxu0 %v966
      %1844 = vmatmul.mubr.bf16.gmra.mrb[0].mxu0 %v965
      %v1845 = vpop.f32.mrb[0].mxu0
      %v1846 = vadd.f32 %v1653, %v1845
      %v1847 = vpop.f32.mrb[0].mxu0
      %v1848 = vpop.f32.mrb[0].mxu0
      %v1849 = vadd.f32 %v1656, %v1848
      %v1850 = vpop.f32.mrb[0].mxu0
      %1851 = vmatprep.mubr.bf16.mxu0 %v973
      %1852 = vmatmul.mubr.bf16.gmra.mrb[0].mxu0 %v972
      %v1853 = vpop.f32.mrb[0].mxu0
      %v1854 = vadd.f32 %v1661, %v1853
      %v1855 = vpop.f32.mrb[0].mxu0
      %v1856 = vpop.f32.mrb[0].mxu0
      %v1857 = vadd.f32 %v1664, %v1856
      %v1858 = vpop.f32.mrb[0].mxu0
      %1859 = vmatprep.mubr.bf16.mxu0 %v980
      %1860 = vmatmul.mubr.bf16.gmra.mrb[0].mxu0 %v979
      %v1861 = vpop.f32.mrb[0].mxu0
      %v1862 = vadd.f32 %v1669, %v1861
      %v1863 = vpop.f32.mrb[0].mxu0
      %v1864 = vpop.f32.mrb[0].mxu0
      %v1865 = vadd.f32 %v1672, %v1864
      %v1866 = vpop.f32.mrb[0].mxu0
      %1867 = vmatprep.mubr.bf16.mxu0 %v987
      %1868 = vmatmul.mubr.bf16.gmra.mrb[0].mxu0 %v986
      %v1869 = vpop.f32.mrb[0].mxu0
      %v1870 = vadd.f32 %v1677, %v1869
      %v1871 = vpop.f32.mrb[0].mxu0
      %v1872 = vpop.f32.mrb[0].mxu0
      %v1873 = vadd.f32 %v1680, %v1872
      %v1874 = vpop.f32.mrb[0].mxu0
      %1875 = vmatprep.mubr.bf16.mxu0 %v994
      %1876 = vmatmul.mubr.bf16.gmra.mrb[0].mxu0 %v993
      %v1877 = vpop.f32.mrb[0].mxu0
      %v1878 = vadd.f32 %v1685, %v1877
      %v1879 = vpop.f32.mrb[0].mxu0
      %v1880 = vpop.f32.mrb[0].mxu0
      %v1881 = vadd.f32 %v1688, %v1880
      %v1882 = vpop.f32.mrb[0].mxu0
      %1883 = vmatprep.mubr.bf16.mxu0 %v1001
      %1884 = vmatmul.mubr.bf16.gmra.mrb[0].mxu0 %v1000
      %v1885 = vpop.f32.mrb[0].mxu0
      %v1886 = vadd.f32 %v1693, %v1885
      %v1887 = vpop.f32.mrb[0].mxu0
      %v1888 = vpop.f32.mrb[0].mxu0
      %v1889 = vadd.f32 %v1696, %v1888
      %v1890 = vpop.f32.mrb[0].mxu0
      %1891 = vmatprep.mubr.bf16.mxu0 %v1008
      %1892 = vmatmul.mubr.bf16.gmra.mrb[0].mxu0 %v1007
      %v1893 = vpop.f32.mrb[0].mxu0
      %v1894 = vadd.f32 %v1701, %v1893
      %v1895 = vpop.f32.mrb[0].mxu0
      %v1896 = vpop.f32.mrb[0].mxu0
      %v1897 = vadd.f32 %v1704, %v1896
      %v1898 = vpop.f32.mrb[0].mxu0
      %1899 = vmatprep.mubr.bf16.mxu0 %v1015
      %1900 = vmatmul.mubr.bf16.gmra.mrb[0].mxu0 %v1014
      %v1901 = vpop.f32.mrb[0].mxu0
      %v1902 = vadd.f32 %v1709, %v1901
      %v1903 = vpop.f32.mrb[0].mxu0
      %v1904 = vpop.f32.mrb[0].mxu0
      %v1905 = vadd.f32 %v1712, %v1904
      %v1906 = vpop.f32.mrb[0].mxu0
      %1907 = vmatprep.mubr.bf16.mxu0 %v1022
      %1908 = vmatmul.mubr.bf16.gmra.mrb[0].mxu0 %v1021
      %v1909 = vpop.f32.mrb[0].mxu0
      %v1910 = vadd.f32 %v1717, %v1909
      %v1911 = vpop.f32.mrb[0].mxu0
      %v1912 = vpop.f32.mrb[0].mxu0
      %v1913 = vadd.f32 %v1720, %v1912
      %v1914 = vpop.f32.mrb[0].mxu0
      %1915 = vmatprep.mubr.bf16.mxu0 %v1029
      %1916 = vmatmul.mubr.bf16.gmra.mrb[0].mxu0 %v1028
      %v1917 = vpop.f32.mrb[0].mxu0
      %v1918 = vadd.f32 %v1725, %v1917
      %v1919 = vpop.f32.mrb[0].mxu0
      %v1920 = vpop.f32.mrb[0].mxu0
      %v1921 = vadd.f32 %v1728, %v1920
      %v1922 = vpop.f32.mrb[0].mxu0
      %1923 = vdwg.mxu0
      %1924 = vmatprep.subr.bf16.mxu0 0
      %1925 = vmatpush1.bf16.msra.mxu0 %v1401
      %1926 = vmatprep.subr.bf16.mxu0 0
      %1927 = vmatpush1.bf16.msra.mxu0 %v1402
      %1928 = vmatprep.subr.bf16.mxu0 0
      %1929 = vmatpush1.bf16.msra.mxu0 %v1403
      %1930 = vmatprep.subr.bf16.mxu0 0
      %1931 = vmatpush1.bf16.msra.mxu0 %v1404
      %1932 = vmatprep.subr.bf16.mxu0 0
      %1933 = vmatpush1.bf16.msra.mxu0 %v1405
      %1934 = vmatprep.subr.bf16.mxu0 0
      %1935 = vmatpush1.bf16.msra.mxu0 %v1406
      %1936 = vmatprep.subr.bf16.mxu0 0
      %1937 = vmatpush1.bf16.msra.mxu0 %v1407
      %1938 = vmatprep.subr.bf16.mxu0 0
      %1939 = vmatpush1.bf16.msra.mxu0 %v1408
      %1940 = vmatprep.subr.bf16.mxu0 0
      %1941 = vmatpush1.bf16.msra.mxu0 %v1409
      %1942 = vmatprep.subr.bf16.mxu0 0
      %1943 = vmatpush1.bf16.msra.mxu0 %v1410
      %1944 = vmatprep.subr.bf16.mxu0 0
      %1945 = vmatpush1.bf16.msra.mxu0 %v1411
      %1946 = vmatprep.subr.bf16.mxu0 0
      %1947 = vmatpush1.bf16.msra.mxu0 %v1412
      %1948 = vmatprep.subr.bf16.mxu0 0
      %1949 = vmatpush1.bf16.msra.mxu0 %v1413
      %1950 = vmatprep.subr.bf16.mxu0 0
      %1951 = vmatpush1.bf16.msra.mxu0 %v1414
      %1952 = vmatprep.subr.bf16.mxu0 0
      %1953 = vmatpush1.bf16.msra.mxu0 %v1415
      %1954 = vmatprep.subr.bf16.mxu0 0
      %1955 = vmatpush1.bf16.msra.mxu0 %v1416
      %1956 = vmatprep.mubr.bf16.mxu0 %v898
      %1957 = vmatmul.mubr.bf16.gmra.mrb[0].mxu0 %v897
      %v1958 = vpop.f32.mrb[0].mxu0
      %v1959 = vadd.f32 %v1766, %v1958
      %v1960 = vpop.f32.mrb[0].mxu0
      %v1961 = vpop.f32.mrb[0].mxu0
      %v1962 = vadd.f32 %v1769, %v1961
      %v1963 = vpop.f32.mrb[0].mxu0
      %1964 = vmatprep.mubr.bf16.mxu0 %v905
      %1965 = vmatmul.mubr.bf16.gmra.mrb[0].mxu0 %v904
      %v1966 = vpop.f32.mrb[0].mxu0
      %v1967 = vadd.f32 %v1774, %v1966
      %v1968 = vpop.f32.mrb[0].mxu0
      %v1969 = vpop.f32.mrb[0].mxu0
      %v1970 = vadd.f32 %v1777, %v1969
      %v1971 = vpop.f32.mrb[0].mxu0
      %1972 = vmatprep.mubr.bf16.mxu0 %v912
      %1973 = vmatmul.mubr.bf16.gmra.mrb[0].mxu0 %v911
      %v1974 = vpop.f32.mrb[0].mxu0
      %v1975 = vadd.f32 %v1782, %v1974
      %v1976 = vpop.f32.mrb[0].mxu0
      %v1977 = vpop.f32.mrb[0].mxu0
      %v1978 = vadd.f32 %v1785, %v1977
      %v1979 = vpop.f32.mrb[0].mxu0
      %1980 = vmatprep.mubr.bf16.mxu0 %v919
      %1981 = vmatmul.mubr.bf16.gmra.mrb[0].mxu0 %v918
      %v1982 = vpop.f32.mrb[0].mxu0
      %v1983 = vadd.f32 %v1790, %v1982
      %v1984 = vpop.f32.mrb[0].mxu0
      %v1985 = vpop.f32.mrb[0].mxu0
      %v1986 = vadd.f32 %v1793, %v1985
      %v1987 = vpop.f32.mrb[0].mxu0
      %1988 = vmatprep.mubr.bf16.mxu0 %v926
      %1989 = vmatmul.mubr.bf16.gmra.mrb[0].mxu0 %v925
      %v1990 = vpop.f32.mrb[0].mxu0
      %v1991 = vadd.f32 %v1798, %v1990
      %v1992 = vpop.f32.mrb[0].mxu0
      %v1993 = vpop.f32.mrb[0].mxu0
      %v1994 = vadd.f32 %v1801, %v1993
      %v1995 = vpop.f32.mrb[0].mxu0
      %1996 = vmatprep.mubr.bf16.mxu0 %v933
      %1997 = vmatmul.mubr.bf16.gmra.mrb[0].mxu0 %v932
      %v1998 = vpop.f32.mrb[0].mxu0
      %v1999 = vadd.f32 %v1806, %v1998
      %v2000 = vpop.f32.mrb[0].mxu0
      %v2001 = vpop.f32.mrb[0].mxu0
      %v2002 = vadd.f32 %v1809, %v2001
      %v2003 = vpop.f32.mrb[0].mxu0
      %2004 = vmatprep.mubr.bf16.mxu0 %v940
      %2005 = vmatmul.mubr.bf16.gmra.mrb[0].mxu0 %v939
      %v2006 = vpop.f32.mrb[0].mxu0
      %v2007 = vadd.f32 %v1814, %v2006
      %v2008 = vpop.f32.mrb[0].mxu0
      %v2009 = vpop.f32.mrb[0].mxu0
      %v2010 = vadd.f32 %v1817, %v2009
      %v2011 = vpop.f32.mrb[0].mxu0
      %2012 = vmatprep.mubr.bf16.mxu0 %v947
      %2013 = vmatmul.mubr.bf16.gmra.mrb[0].mxu0 %v946
      %v2014 = vpop.f32.mrb[0].mxu0
      %v2015 = vadd.f32 %v1822, %v2014
      %v2016 = vpop.f32.mrb[0].mxu0
      %v2017 = vpop.f32.mrb[0].mxu0
      %v2018 = vadd.f32 %v1825, %v2017
      %v2019 = vpop.f32.mrb[0].mxu0
      %2020 = vmatprep.mubr.bf16.mxu0 %v954
      %2021 = vmatmul.mubr.bf16.gmra.mrb[0].mxu0 %v953
      %v2022 = vpop.f32.mrb[0].mxu0
      %v2023 = vadd.f32 %v1830, %v2022
      %v2024 = vpop.f32.mrb[0].mxu0
      %v2025 = vpop.f32.mrb[0].mxu0
      %v2026 = vadd.f32 %v1833, %v2025
      %v2027 = vpop.f32.mrb[0].mxu0
      %2028 = vmatprep.mubr.bf16.mxu0 %v961
      %2029 = vmatmul.mubr.bf16.gmra.mrb[0].mxu0 %v960
      %v2030 = vpop.f32.mrb[0].mxu0
      %v2031 = vadd.f32 %v1838, %v2030
      %v2032 = vpop.f32.mrb[0].mxu0
      %v2033 = vpop.f32.mrb[0].mxu0
      %v2034 = vadd.f32 %v1841, %v2033
      %v2035 = vpop.f32.mrb[0].mxu0
      %2036 = vmatprep.mubr.bf16.mxu0 %v968
      %2037 = vmatmul.mubr.bf16.gmra.mrb[0].mxu0 %v967
      %v2038 = vpop.f32.mrb[0].mxu0
      %v2039 = vadd.f32 %v1846, %v2038
      %v2040 = vpop.f32.mrb[0].mxu0
      %v2041 = vpop.f32.mrb[0].mxu0
      %v2042 = vadd.f32 %v1849, %v2041
      %v2043 = vpop.f32.mrb[0].mxu0
      %2044 = vmatprep.mubr.bf16.mxu0 %v975
      %2045 = vmatmul.mubr.bf16.gmra.mrb[0].mxu0 %v974
      %v2046 = vpop.f32.mrb[0].mxu0
      %v2047 = vadd.f32 %v1854, %v2046
      %v2048 = vpop.f32.mrb[0].mxu0
      %v2049 = vpop.f32.mrb[0].mxu0
      %v2050 = vadd.f32 %v1857, %v2049
      %v2051 = vpop.f32.mrb[0].mxu0
      %2052 = vmatprep.mubr.bf16.mxu0 %v982
      %2053 = vmatmul.mubr.bf16.gmra.mrb[0].mxu0 %v981
      %v2054 = vpop.f32.mrb[0].mxu0
      %v2055 = vadd.f32 %v1862, %v2054
      %v2056 = vpop.f32.mrb[0].mxu0
      %v2057 = vpop.f32.mrb[0].mxu0
      %v2058 = vadd.f32 %v1865, %v2057
      %v2059 = vpop.f32.mrb[0].mxu0
      %2060 = vmatprep.mubr.bf16.mxu0 %v989
      %2061 = vmatmul.mubr.bf16.gmra.mrb[0].mxu0 %v988
      %v2062 = vpop.f32.mrb[0].mxu0
      %v2063 = vadd.f32 %v1870, %v2062
      %v2064 = vpop.f32.mrb[0].mxu0
      %v2065 = vpop.f32.mrb[0].mxu0
      %v2066 = vadd.f32 %v1873, %v2065
      %v2067 = vpop.f32.mrb[0].mxu0
      %2068 = vmatprep.mubr.bf16.mxu0 %v996
      %2069 = vmatmul.mubr.bf16.gmra.mrb[0].mxu0 %v995
      %v2070 = vpop.f32.mrb[0].mxu0
      %v2071 = vadd.f32 %v1878, %v2070
      %v2072 = vpop.f32.mrb[0].mxu0
      %v2073 = vpop.f32.mrb[0].mxu0
      %v2074 = vadd.f32 %v1881, %v2073
      %v2075 = vpop.f32.mrb[0].mxu0
      %2076 = vmatprep.mubr.bf16.mxu0 %v1003
      %2077 = vmatmul.mubr.bf16.gmra.mrb[0].mxu0 %v1002
      %v2078 = vpop.f32.mrb[0].mxu0
      %v2079 = vadd.f32 %v1886, %v2078
      %v2080 = vpop.f32.mrb[0].mxu0
      %v2081 = vpop.f32.mrb[0].mxu0
      %v2082 = vadd.f32 %v1889, %v2081
      %v2083 = vpop.f32.mrb[0].mxu0
      %2084 = vmatprep.mubr.bf16.mxu0 %v1010
      %2085 = vmatmul.mubr.bf16.gmra.mrb[0].mxu0 %v1009
      %v2086 = vpop.f32.mrb[0].mxu0
      %v2087 = vadd.f32 %v1894, %v2086
      %v2088 = vpop.f32.mrb[0].mxu0
      %v2089 = vpop.f32.mrb[0].mxu0
      %v2090 = vadd.f32 %v1897, %v2089
      %v2091 = vpop.f32.mrb[0].mxu0
      %2092 = vmatprep.mubr.bf16.mxu0 %v1017
      %2093 = vmatmul.mubr.bf16.gmra.mrb[0].mxu0 %v1016
      %v2094 = vpop.f32.mrb[0].mxu0
      %v2095 = vadd.f32 %v1902, %v2094
      %v2096 = vpop.f32.mrb[0].mxu0
      %v2097 = vpop.f32.mrb[0].mxu0
      %v2098 = vadd.f32 %v1905, %v2097
      %v2099 = vpop.f32.mrb[0].mxu0
      %2100 = vmatprep.mubr.bf16.mxu0 %v1024
      %2101 = vmatmul.mubr.bf16.gmra.mrb[0].mxu0 %v1023
      %v2102 = vpop.f32.mrb[0].mxu0
      %v2103 = vadd.f32 %v1910, %v2102
      %v2104 = vpop.f32.mrb[0].mxu0
      %v2105 = vpop.f32.mrb[0].mxu0
      %v2106 = vadd.f32 %v1913, %v2105
      %v2107 = vpop.f32.mrb[0].mxu0
      %2108 = vmatprep.mubr.bf16.mxu0 %v1031
      %2109 = vmatmul.mubr.bf16.gmra.mrb[0].mxu0 %v1030
      %v2110 = vpop.f32.mrb[0].mxu0
      %v2111 = vadd.f32 %v1918, %v2110
      %v2112 = vpop.f32.mrb[0].mxu0
      %v2113 = vpop.f32.mrb[0].mxu0
      %v2114 = vadd.f32 %v1921, %v2113
      %v2115 = vpop.f32.mrb[0].mxu0
      %2116 = vdwg.mxu0
      %2117 = vmatprep.subr.bf16.mxu0 0
      %2118 = vmatpush1.bf16.msra.mxu0 %v1417
      %2119 = vmatprep.subr.bf16.mxu0 0
      %2120 = vmatpush1.bf16.msra.mxu0 %v1418
      %2121 = vmatprep.subr.bf16.mxu0 0
      %2122 = vmatpush1.bf16.msra.mxu0 %v1419
      %2123 = vmatprep.subr.bf16.mxu0 0
      %2124 = vmatpush1.bf16.msra.mxu0 %v1420
      %2125 = vmatprep.subr.bf16.mxu0 0
      %2126 = vmatpush1.bf16.msra.mxu0 %v1421
      %2127 = vmatprep.subr.bf16.mxu0 0
      %2128 = vmatpush1.bf16.msra.mxu0 %v1422
      %2129 = vmatprep.subr.bf16.mxu0 0
      %2130 = vmatpush1.bf16.msra.mxu0 0
      %2131 = vmatprep.subr.bf16.mxu0 0
      %2132 = vmatpush1.bf16.msra.mxu0 0
      %2133 = vmatprep.subr.bf16.mxu0 0
      %2134 = vmatpush1.bf16.msra.mxu0 0
      %2135 = vmatprep.subr.bf16.mxu0 0
      %2136 = vmatpush1.bf16.msra.mxu0 0
      %2137 = vmatprep.subr.bf16.mxu0 0
      %2138 = vmatpush1.bf16.msra.mxu0 0
      %2139 = vmatprep.subr.bf16.mxu0 0
      %2140 = vmatpush1.bf16.msra.mxu0 0
      %2141 = vmatprep.subr.bf16.mxu0 0
      %2142 = vmatpush1.bf16.msra.mxu0 0
      %2143 = vmatprep.subr.bf16.mxu0 0
      %2144 = vmatpush1.bf16.msra.mxu0 0
      %2145 = vmatprep.subr.bf16.mxu0 0
      %2146 = vmatpush1.bf16.msra.mxu0 0
      %2147 = vmatprep.subr.bf16.mxu0 0
      %2148 = vmatpush1.bf16.msra.mxu0 0
      %2149 = vmatprep.mubr.bf16.mxu0 0
      %2150 = vmatmul.mubr.bf16.gmra.mrb[0].mxu0 %v1479
      %v2151 = vpop.f32.mrb[0].mxu0
      %v2152 = vadd.f32 %v1959, %v2151
      %v2153 = vpop.f32.mrb[0].mxu0
      %v2154 = vpop.f32.mrb[0].mxu0
      %v2155 = vadd.f32 %v1962, %v2154
      %v2156 = vpop.f32.mrb[0].mxu0
      %2157 = vmatprep.mubr.bf16.mxu0 0
      %2158 = vmatmul.mubr.bf16.gmra.mrb[0].mxu0 %v1482
      %v2159 = vpop.f32.mrb[0].mxu0
      %v2160 = vadd.f32 %v1967, %v2159
      %v2161 = vpop.f32.mrb[0].mxu0
      %v2162 = vpop.f32.mrb[0].mxu0
      %v2163 = vadd.f32 %v1970, %v2162
      %v2164 = vpop.f32.mrb[0].mxu0
      %2165 = vmatprep.mubr.bf16.mxu0 0
      %2166 = vmatmul.mubr.bf16.gmra.mrb[0].mxu0 %v1485
      %v2167 = vpop.f32.mrb[0].mxu0
      %v2168 = vadd.f32 %v1975, %v2167
      %v2169 = vpop.f32.mrb[0].mxu0
      %v2170 = vpop.f32.mrb[0].mxu0
      %v2171 = vadd.f32 %v1978, %v2170
      %v2172 = vpop.f32.mrb[0].mxu0
      %2173 = vmatprep.mubr.bf16.mxu0 0
      %2174 = vmatmul.mubr.bf16.gmra.mrb[0].mxu0 %v1488
      %v2175 = vpop.f32.mrb[0].mxu0
      %v2176 = vadd.f32 %v1983, %v2175
      %v2177 = vpop.f32.mrb[0].mxu0
      %v2178 = vpop.f32.mrb[0].mxu0
      %v2179 = vadd.f32 %v1986, %v2178
      %v2180 = vpop.f32.mrb[0].mxu0
      %2181 = vmatprep.mubr.bf16.mxu0 0
      %2182 = vmatmul.mubr.bf16.gmra.mrb[0].mxu0 %v1491
      %v2183 = vpop.f32.mrb[0].mxu0
      %v2184 = vadd.f32 %v1991, %v2183
      %v2185 = vpop.f32.mrb[0].mxu0
      %v2186 = vpop.f32.mrb[0].mxu0
      %v2187 = vadd.f32 %v1994, %v2186
      %v2188 = vpop.f32.mrb[0].mxu0
      %2189 = vmatprep.mubr.bf16.mxu0 0
      %2190 = vmatmul.mubr.bf16.gmra.mrb[0].mxu0 %v1494
      %v2191 = vpop.f32.mrb[0].mxu0
      %v2192 = vadd.f32 %v1999, %v2191
      %v2193 = vpop.f32.mrb[0].mxu0
      %v2194 = vpop.f32.mrb[0].mxu0
      %v2195 = vadd.f32 %v2002, %v2194
      %v2196 = vpop.f32.mrb[0].mxu0
      %2197 = vmatprep.mubr.bf16.mxu0 0
      %2198 = vmatmul.mubr.bf16.gmra.mrb[0].mxu0 %v1497
      %v2199 = vpop.f32.mrb[0].mxu0
      %v2200 = vadd.f32 %v2007, %v2199
      %v2201 = vpop.f32.mrb[0].mxu0
      %v2202 = vpop.f32.mrb[0].mxu0
      %v2203 = vadd.f32 %v2010, %v2202
      %v2204 = vpop.f32.mrb[0].mxu0
      %2205 = vmatprep.mubr.bf16.mxu0 0
      %2206 = vmatmul.mubr.bf16.gmra.mrb[0].mxu0 %v1500
      %v2207 = vpop.f32.mrb[0].mxu0
      %v2208 = vadd.f32 %v2015, %v2207
      %v2209 = vpop.f32.mrb[0].mxu0
      %v2210 = vpop.f32.mrb[0].mxu0
      %v2211 = vadd.f32 %v2018, %v2210
      %v2212 = vpop.f32.mrb[0].mxu0
      %2213 = vmatprep.mubr.bf16.mxu0 0
      %2214 = vmatmul.mubr.bf16.gmra.mrb[0].mxu0 %v1503
      %v2215 = vpop.f32.mrb[0].mxu0
      %v2216 = vadd.f32 %v2023, %v2215
      %v2217 = vpop.f32.mrb[0].mxu0
      %v2218 = vpop.f32.mrb[0].mxu0
      %v2219 = vadd.f32 %v2026, %v2218
      %v2220 = vpop.f32.mrb[0].mxu0
      %2221 = vmatprep.mubr.bf16.mxu0 0
      %2222 = vmatmul.mubr.bf16.gmra.mrb[0].mxu0 %v1506
      %v2223 = vpop.f32.mrb[0].mxu0
      %v2224 = vadd.f32 %v2031, %v2223
      %v2225 = vpop.f32.mrb[0].mxu0
      %v2226 = vpop.f32.mrb[0].mxu0
      %v2227 = vadd.f32 %v2034, %v2226
      %v2228 = vpop.f32.mrb[0].mxu0
      %2229 = vmatprep.mubr.bf16.mxu0 0
      %2230 = vmatmul.mubr.bf16.gmra.mrb[0].mxu0 %v1509
      %v2231 = vpop.f32.mrb[0].mxu0
      %v2232 = vadd.f32 %v2039, %v2231
      %v2233 = vpop.f32.mrb[0].mxu0
      %v2234 = vpop.f32.mrb[0].mxu0
      %v2235 = vadd.f32 %v2042, %v2234
      %v2236 = vpop.f32.mrb[0].mxu0
      %2237 = vmatprep.mubr.bf16.mxu0 0
      %2238 = vmatmul.mubr.bf16.gmra.mrb[0].mxu0 %v1512
      %v2239 = vpop.f32.mrb[0].mxu0
      %v2240 = vadd.f32 %v2047, %v2239
      %v2241 = vpop.f32.mrb[0].mxu0
      %v2242 = vpop.f32.mrb[0].mxu0
      %v2243 = vadd.f32 %v2050, %v2242
      %v2244 = vpop.f32.mrb[0].mxu0
      %2245 = vmatprep.mubr.bf16.mxu0 0
      %2246 = vmatmul.mubr.bf16.gmra.mrb[0].mxu0 %v1515
      %v2247 = vpop.f32.mrb[0].mxu0
      %v2248 = vadd.f32 %v2055, %v2247
      %v2249 = vpop.f32.mrb[0].mxu0
      %v2250 = vpop.f32.mrb[0].mxu0
      %v2251 = vadd.f32 %v2058, %v2250
      %v2252 = vpop.f32.mrb[0].mxu0
      %2253 = vmatprep.mubr.bf16.mxu0 0
      %2254 = vmatmul.mubr.bf16.gmra.mrb[0].mxu0 %v1518
      %v2255 = vpop.f32.mrb[0].mxu0
      %v2256 = vadd.f32 %v2063, %v2255
      %v2257 = vpop.f32.mrb[0].mxu0
      %v2258 = vpop.f32.mrb[0].mxu0
      %v2259 = vadd.f32 %v2066, %v2258
      %v2260 = vpop.f32.mrb[0].mxu0
      %2261 = vmatprep.mubr.bf16.mxu0 0
      %2262 = vmatmul.mubr.bf16.gmra.mrb[0].mxu0 %v1521
      %v2263 = vpop.f32.mrb[0].mxu0
      %v2264 = vadd.f32 %v2071, %v2263
      %v2265 = vpop.f32.mrb[0].mxu0
      %v2266 = vpop.f32.mrb[0].mxu0
      %v2267 = vadd.f32 %v2074, %v2266
      %v2268 = vpop.f32.mrb[0].mxu0
      %2269 = vmatprep.mubr.bf16.mxu0 0
      %2270 = vmatmul.mubr.bf16.gmra.mrb[0].mxu0 %v1524
      %v2271 = vpop.f32.mrb[0].mxu0
      %v2272 = vadd.f32 %v2079, %v2271
      %v2273 = vpop.f32.mrb[0].mxu0
      %v2274 = vpop.f32.mrb[0].mxu0
      %v2275 = vadd.f32 %v2082, %v2274
      %v2276 = vpop.f32.mrb[0].mxu0
      %2277 = vmatprep.mubr.bf16.mxu0 0
      %2278 = vmatmul.mubr.bf16.gmra.mrb[0].mxu0 %v1527
      %v2279 = vpop.f32.mrb[0].mxu0
      %v2280 = vadd.f32 %v2087, %v2279
      %v2281 = vpop.f32.mrb[0].mxu0
      %v2282 = vpop.f32.mrb[0].mxu0
      %v2283 = vadd.f32 %v2090, %v2282
      %v2284 = vpop.f32.mrb[0].mxu0
      %2285 = vmatprep.mubr.bf16.mxu0 0
      %2286 = vmatmul.mubr.bf16.gmra.mrb[0].mxu0 %v1530
      %v2287 = vpop.f32.mrb[0].mxu0
      %v2288 = vadd.f32 %v2095, %v2287
      %v2289 = vpop.f32.mrb[0].mxu0
      %v2290 = vpop.f32.mrb[0].mxu0
      %v2291 = vadd.f32 %v2098, %v2290
      %v2292 = vpop.f32.mrb[0].mxu0
      %2293 = vmatprep.mubr.bf16.mxu0 0
      %2294 = vmatmul.mubr.bf16.gmra.mrb[0].mxu0 %v1533
      %v2295 = vpop.f32.mrb[0].mxu0
      %v2296 = vadd.f32 %v2103, %v2295
      %v2297 = vpop.f32.mrb[0].mxu0
      %v2298 = vpop.f32.mrb[0].mxu0
      %v2299 = vadd.f32 %v2106, %v2298
      %v2300 = vpop.f32.mrb[0].mxu0
      %2301 = vmatprep.mubr.bf16.mxu0 0
      %2302 = vmatmul.mubr.bf16.gmra.mrb[0].mxu0 %v1536
      %v2303 = vpop.f32.mrb[0].mxu0
      %v2304 = vadd.f32 %v2111, %v2303
      %v2305 = vpop.f32.mrb[0].mxu0
      %v2306 = vpop.f32.mrb[0].mxu0
      %v2307 = vadd.f32 %v2114, %v2306
      %v2308 = vpop.f32.mrb[0].mxu0
      %2309 = vdwg.mxu0
      %v2310 = vsub.f32 0.0, %v2152
      %v2311 = vsub.f32 0.0, %v2155
      %v2312 = vsub.f32 0.0, %v2160
      %v2313 = vsub.f32 0.0, %v2163
      %v2314 = vsub.f32 0.0, %v2168
      %v2315 = vsub.f32 0.0, %v2171
      %v2316 = vsub.f32 0.0, %v2176
      %v2317 = vsub.f32 0.0, %v2179
      %v2318 = vsub.f32 0.0, %v2184
      %v2319 = vsub.f32 0.0, %v2187
      %v2320 = vsub.f32 0.0, %v2192
      %v2321 = vsub.f32 0.0, %v2195
      %v2322 = vsub.f32 0.0, %v2200
      %v2323 = vsub.f32 0.0, %v2203
      %v2324 = vsub.f32 0.0, %v2208
      %v2325 = vsub.f32 0.0, %v2211
      %v2326 = vsub.f32 0.0, %v2216
      %v2327 = vsub.f32 0.0, %v2219
      %v2328 = vsub.f32 0.0, %v2224
      %v2329 = vsub.f32 0.0, %v2227
      %v2330 = vsub.f32 0.0, %v2232
      %v2331 = vsub.f32 0.0, %v2235
      %v2332 = vsub.f32 0.0, %v2240
      %v2333 = vsub.f32 0.0, %v2243
      %v2334 = vsub.f32 0.0, %v2248
      %v2335 = vsub.f32 0.0, %v2251
      %v2336 = vsub.f32 0.0, %v2256
      %v2337 = vsub.f32 0.0, %v2259
      %v2338 = vsub.f32 0.0, %v2264
      %v2339 = vsub.f32 0.0, %v2267
      %v2340 = vsub.f32 0.0, %v2272
      %v2341 = vsub.f32 0.0, %v2275
      %v2342 = vsub.f32 0.0, %v2280
      %v2343 = vsub.f32 0.0, %v2283
      %v2344 = vsub.f32 0.0, %v2288
      %v2345 = vsub.f32 0.0, %v2291
      %v2346 = vsub.f32 0.0, %v2296
      %v2347 = vsub.f32 0.0, %v2299
      %v2348 = vsub.f32 0.0, %v2304
      %v2349 = vsub.f32 0.0, %v2307
      %v2350 = vmul.f32 %v2310, 1.442695
      %v2351 = vpow.pop %v2350
      %v2352 = vmul.f32 %v2311, 1.442695
      %v2353 = vpow.pop %v2352
      %v2354 = vmul.f32 %v2312, 1.442695
      %v2355 = vpow.pop %v2354
      %v2356 = vmul.f32 %v2313, 1.442695
      %v2357 = vpow.pop %v2356
      %v2358 = vmul.f32 %v2314, 1.442695
      %v2359 = vpow.pop %v2358
      %v2360 = vmul.f32 %v2315, 1.442695
      %v2361 = vpow.pop %v2360
      %v2362 = vmul.f32 %v2316, 1.442695
      %v2363 = vpow.pop %v2362
      %v2364 = vmul.f32 %v2317, 1.442695
      %v2365 = vpow.pop %v2364
      %v2366 = vmul.f32 %v2318, 1.442695
      %v2367 = vpow.pop %v2366
      %v2368 = vmul.f32 %v2319, 1.442695
      %v2369 = vpow.pop %v2368
      %v2370 = vmul.f32 %v2320, 1.442695
      %v2371 = vpow.pop %v2370
      %v2372 = vmul.f32 %v2321, 1.442695
      %v2373 = vpow.pop %v2372
      %v2374 = vmul.f32 %v2322, 1.442695
      %v2375 = vpow.pop %v2374
      %v2376 = vmul.f32 %v2323, 1.442695
      %v2377 = vpow.pop %v2376
      %v2378 = vmul.f32 %v2324, 1.442695
      %v2379 = vpow.pop %v2378
      %v2380 = vmul.f32 %v2325, 1.442695
      %v2381 = vpow.pop %v2380
      %v2382 = vmul.f32 %v2326, 1.442695
      %v2383 = vpow.pop %v2382
      %v2384 = vmul.f32 %v2327, 1.442695
      %v2385 = vpow.pop %v2384
      %v2386 = vmul.f32 %v2328, 1.442695
      %v2387 = vpow.pop %v2386
      %v2388 = vmul.f32 %v2329, 1.442695
      %v2389 = vpow.pop %v2388
      %v2390 = vmul.f32 %v2330, 1.442695
      %v2391 = vpow.pop %v2390
      %v2392 = vmul.f32 %v2331, 1.442695
      %v2393 = vpow.pop %v2392
      %v2394 = vmul.f32 %v2332, 1.442695
      %v2395 = vpow.pop %v2394
      %v2396 = vmul.f32 %v2333, 1.442695
      %v2397 = vpow.pop %v2396
      %v2398 = vmul.f32 %v2334, 1.442695
      %v2399 = vpow.pop %v2398
      %v2400 = vmul.f32 %v2335, 1.442695
      %v2401 = vpow.pop %v2400
      %v2402 = vmul.f32 %v2336, 1.442695
      %v2403 = vpow.pop %v2402
      %v2404 = vmul.f32 %v2337, 1.442695
      %v2405 = vpow.pop %v2404
      %v2406 = vmul.f32 %v2338, 1.442695
      %v2407 = vpow.pop %v2406
      %v2408 = vmul.f32 %v2339, 1.442695
      %v2409 = vpow.pop %v2408
      %v2410 = vmul.f32 %v2340, 1.442695
      %v2411 = vpow.pop %v2410
      %v2412 = vmul.f32 %v2341, 1.442695
      %v2413 = vpow.pop %v2412
      %v2414 = vmul.f32 %v2342, 1.442695
      %v2415 = vpow.pop %v2414
      %v2416 = vmul.f32 %v2343, 1.442695
      %v2417 = vpow.pop %v2416
      %v2418 = vmul.f32 %v2344, 1.442695
      %v2419 = vpow.pop %v2418
      %v2420 = vmul.f32 %v2345, 1.442695
      %v2421 = vpow.pop %v2420
      %v2422 = vmul.f32 %v2346, 1.442695
      %v2423 = vpow.pop %v2422
      %v2424 = vmul.f32 %v2347, 1.442695
      %v2425 = vpow.pop %v2424
      %v2426 = vmul.f32 %v2348, 1.442695
      %v2427 = vpow.pop %v2426
      %v2428 = vmul.f32 %v2349, 1.442695
      %v2429 = vpow.pop %v2428
      %v2430 = vadd.f32 %v2351, 1.0
      %v2431 = vadd.f32 %v2353, 1.0
      %v2432 = vadd.f32 %v2355, 1.0
      %v2433 = vadd.f32 %v2357, 1.0
      %v2434 = vadd.f32 %v2359, 1.0
      %v2435 = vadd.f32 %v2361, 1.0
      %v2436 = vadd.f32 %v2363, 1.0
      %v2437 = vadd.f32 %v2365, 1.0
      %v2438 = vadd.f32 %v2367, 1.0
      %v2439 = vadd.f32 %v2369, 1.0
      %v2440 = vadd.f32 %v2371, 1.0
      %v2441 = vadd.f32 %v2373, 1.0
      %v2442 = vadd.f32 %v2375, 1.0
      %v2443 = vadd.f32 %v2377, 1.0
      %v2444 = vadd.f32 %v2379, 1.0
      %v2445 = vadd.f32 %v2381, 1.0
      %v2446 = vadd.f32 %v2383, 1.0
      %v2447 = vadd.f32 %v2385, 1.0
      %v2448 = vadd.f32 %v2387, 1.0
      %v2449 = vadd.f32 %v2389, 1.0
      %v2450 = vadd.f32 %v2391, 1.0
      %v2451 = vadd.f32 %v2393, 1.0
      %v2452 = vadd.f32 %v2395, 1.0
      %v2453 = vadd.f32 %v2397, 1.0
      %v2454 = vadd.f32 %v2399, 1.0
      %v2455 = vadd.f32 %v2401, 1.0
      %v2456 = vadd.f32 %v2403, 1.0
      %v2457 = vadd.f32 %v2405, 1.0
      %v2458 = vadd.f32 %v2407, 1.0
      %v2459 = vadd.f32 %v2409, 1.0
      %v2460 = vadd.f32 %v2411, 1.0
      %v2461 = vadd.f32 %v2413, 1.0
      %v2462 = vadd.f32 %v2415, 1.0
      %v2463 = vadd.f32 %v2417, 1.0
      %v2464 = vadd.f32 %v2419, 1.0
      %v2465 = vadd.f32 %v2421, 1.0
      %v2466 = vadd.f32 %v2423, 1.0
      %v2467 = vadd.f32 %v2425, 1.0
      %v2468 = vadd.f32 %v2427, 1.0
      %v2469 = vadd.f32 %v2429, 1.0
      %v2470 = vrcp.pop %v2430
      %v2471 = vrcp.pop %v2431
      %v2472 = vrcp.pop %v2432
      %v2473 = vrcp.pop %v2433
      %v2474 = vrcp.pop %v2434
      %v2475 = vrcp.pop %v2435
      %v2476 = vrcp.pop %v2436
      %v2477 = vrcp.pop %v2437
      %v2478 = vrcp.pop %v2438
      %v2479 = vrcp.pop %v2439
      %v2480 = vrcp.pop %v2440
      %v2481 = vrcp.pop %v2441
      %v2482 = vrcp.pop %v2442
      %v2483 = vrcp.pop %v2443
      %v2484 = vrcp.pop %v2444
      %v2485 = vrcp.pop %v2445
      %v2486 = vrcp.pop %v2446
      %v2487 = vrcp.pop %v2447
      %v2488 = vrcp.pop %v2448
      %v2489 = vrcp.pop %v2449
      %v2490 = vrcp.pop %v2450
      %v2491 = vrcp.pop %v2451
      %v2492 = vrcp.pop %v2452
      %v2493 = vrcp.pop %v2453
      %v2494 = vrcp.pop %v2454
      %v2495 = vrcp.pop %v2455
      %v2496 = vrcp.pop %v2456
      %v2497 = vrcp.pop %v2457
      %v2498 = vrcp.pop %v2458
      %v2499 = vrcp.pop %v2459
      %v2500 = vrcp.pop %v2460
      %v2501 = vrcp.pop %v2461
      %v2502 = vrcp.pop %v2462
      %v2503 = vrcp.pop %v2463
      %v2504 = vrcp.pop %v2464
      %v2505 = vrcp.pop %v2465
      %v2506 = vrcp.pop %v2466
      %v2507 = vrcp.pop %v2467
      %v2508 = vrcp.pop %v2468
      %v2509 = vrcp.pop %v2469
      %2550 = vrot.lane.b32.xlu0 %v2470, 96
      %v2551 = vpop.permute.xlu0 %2550
      %2552 = vrot.lane.b32.xlu0 %v2471, 96
      %v2553 = vpop.permute.xlu0 %2552
      %2554 = vrot.lane.b32.xlu0 %v2472, 96
      %v2555 = vpop.permute.xlu0 %2554
      %2556 = vrot.lane.b32.xlu0 %v2473, 96
      %v2557 = vpop.permute.xlu0 %2556
      %2558 = vrot.lane.b32.xlu0 %v2474, 96
      %v2559 = vpop.permute.xlu0 %2558
      %2560 = vrot.lane.b32.xlu0 %v2475, 96
      %v2561 = vpop.permute.xlu0 %2560
      %2562 = vrot.lane.b32.xlu0 %v2476, 96
      %v2563 = vpop.permute.xlu0 %2562
      %2564 = vrot.lane.b32.xlu0 %v2477, 96
      %v2565 = vpop.permute.xlu0 %2564
      %2566 = vrot.lane.b32.xlu0 %v2478, 96
      %v2567 = vpop.permute.xlu0 %2566
      %2568 = vrot.lane.b32.xlu0 %v2479, 96
      %v2569 = vpop.permute.xlu0 %2568
      %2570 = vrot.lane.b32.xlu0 %v2480, 96
      %v2571 = vpop.permute.xlu0 %2570
      %2572 = vrot.lane.b32.xlu0 %v2481, 96
      %v2573 = vpop.permute.xlu0 %2572
      %2574 = vrot.lane.b32.xlu0 %v2482, 96
      %v2575 = vpop.permute.xlu0 %2574
      %2576 = vrot.lane.b32.xlu0 %v2483, 96
      %v2577 = vpop.permute.xlu0 %2576
      %2578 = vrot.lane.b32.xlu0 %v2484, 96
      %v2579 = vpop.permute.xlu0 %2578
      %2580 = vrot.lane.b32.xlu0 %v2485, 96
      %v2581 = vpop.permute.xlu0 %2580
      %2582 = vrot.lane.b32.xlu0 %v2486, 96
      %v2583 = vpop.permute.xlu0 %2582
      %2584 = vrot.lane.b32.xlu0 %v2487, 96
      %v2585 = vpop.permute.xlu0 %2584
      %2586 = vrot.lane.b32.xlu0 %v2488, 96
      %v2587 = vpop.permute.xlu0 %2586
      %2588 = vrot.lane.b32.xlu0 %v2489, 96
      %v2589 = vpop.permute.xlu0 %2588
      %2590 = vrot.lane.b32.xlu0 %v2490, 96
      %v2591 = vpop.permute.xlu0 %2590
      %2592 = vrot.lane.b32.xlu0 %v2491, 96
      %v2593 = vpop.permute.xlu0 %2592
      %2594 = vrot.lane.b32.xlu0 %v2492, 96
      %v2595 = vpop.permute.xlu0 %2594
      %2596 = vrot.lane.b32.xlu0 %v2493, 96
      %v2597 = vpop.permute.xlu0 %2596
      %2598 = vrot.lane.b32.xlu0 %v2494, 96
      %v2599 = vpop.permute.xlu0 %2598
      %2600 = vrot.lane.b32.xlu0 %v2495, 96
      %v2601 = vpop.permute.xlu0 %2600
      %2602 = vrot.lane.b32.xlu0 %v2496, 96
      %v2603 = vpop.permute.xlu0 %2602
      %2604 = vrot.lane.b32.xlu0 %v2497, 96
      %v2605 = vpop.permute.xlu0 %2604
      %2606 = vrot.lane.b32.xlu0 %v2498, 96
      %v2607 = vpop.permute.xlu0 %2606
      %2608 = vrot.lane.b32.xlu0 %v2499, 96
      %v2609 = vpop.permute.xlu0 %2608
      %2610 = vrot.lane.b32.xlu0 %v2500, 96
      %v2611 = vpop.permute.xlu0 %2610
      %2612 = vrot.lane.b32.xlu0 %v2501, 96
      %v2613 = vpop.permute.xlu0 %2612
      %2614 = vrot.lane.b32.xlu0 %v2502, 96
      %v2615 = vpop.permute.xlu0 %2614
      %2616 = vrot.lane.b32.xlu0 %v2503, 96
      %v2617 = vpop.permute.xlu0 %2616
      %2618 = vrot.lane.b32.xlu0 %v2504, 96
      %v2619 = vpop.permute.xlu0 %2618
      %2620 = vrot.lane.b32.xlu0 %v2505, 96
      %v2621 = vpop.permute.xlu0 %2620
      %2622 = vrot.lane.b32.xlu0 %v2506, 96
      %v2623 = vpop.permute.xlu0 %2622
      %2624 = vrot.lane.b32.xlu0 %v2507, 96
      %v2625 = vpop.permute.xlu0 %2624
      %2626 = vrot.lane.b32.xlu0 %v2508, 96
      %v2627 = vpop.permute.xlu0 %2626
      %2628 = vrot.lane.b32.xlu0 %v2509, 96
      %v2629 = vpop.permute.xlu0 %2628
      %v2670 = vmul.f32 %v2152, %v2551
      %v2671 = vmul.f32 %v2155, %v2553
      %v2672 = vmul.f32 %v2160, %v2555
      %v2673 = vmul.f32 %v2163, %v2557
      %v2674 = vmul.f32 %v2168, %v2559
      %v2675 = vmul.f32 %v2171, %v2561
      %v2676 = vmul.f32 %v2176, %v2563
      %v2677 = vmul.f32 %v2179, %v2565
      %v2678 = vmul.f32 %v2184, %v2567
      %v2679 = vmul.f32 %v2187, %v2569
      %v2680 = vmul.f32 %v2192, %v2571
      %v2681 = vmul.f32 %v2195, %v2573
      %v2682 = vmul.f32 %v2200, %v2575
      %v2683 = vmul.f32 %v2203, %v2577
      %v2684 = vmul.f32 %v2208, %v2579
      %v2685 = vmul.f32 %v2211, %v2581
      %v2686 = vmul.f32 %v2216, %v2583
      %v2687 = vmul.f32 %v2219, %v2585
      %v2688 = vmul.f32 %v2224, %v2587
      %v2689 = vmul.f32 %v2227, %v2589
      %v2690 = vmul.f32 %v2232, %v2591
      %v2691 = vmul.f32 %v2235, %v2593
      %v2692 = vmul.f32 %v2240, %v2595
      %v2693 = vmul.f32 %v2243, %v2597
      %v2694 = vmul.f32 %v2248, %v2599
      %v2695 = vmul.f32 %v2251, %v2601
      %v2696 = vmul.f32 %v2256, %v2603
      %v2697 = vmul.f32 %v2259, %v2605
      %v2698 = vmul.f32 %v2264, %v2607
      %v2699 = vmul.f32 %v2267, %v2609
      %v2700 = vmul.f32 %v2272, %v2611
      %v2701 = vmul.f32 %v2275, %v2613
      %v2702 = vmul.f32 %v2280, %v2615
      %v2703 = vmul.f32 %v2283, %v2617
      %v2704 = vmul.f32 %v2288, %v2619
      %v2705 = vmul.f32 %v2291, %v2621
      %v2706 = vmul.f32 %v2296, %v2623
      %v2707 = vmul.f32 %v2299, %v2625
      %v2708 = vmul.f32 %v2304, %v2627
      %v2709 = vmul.f32 %v2307, %v2629
      %vm2710 = vcmask 261120
      %2711 = vst.msk [vmem:[%s175] sm:$0xff] %vm2710, %v2670
      %2712 = vst.msk [vmem:[%s175 + $0x8] sm:$0xff] %vm2710, %v2671
      %2713 = vst.msk [vmem:[%s175 + $0x10] sm:$0xff] %vm2710, %v2672
      %2714 = vst.msk [vmem:[%s175 + $0x18] sm:$0xff] %vm2710, %v2673
      %2715 = vst.msk [vmem:[%s175 + $0x20] sm:$0xff] %vm2710, %v2674
      %2716 = vst.msk [vmem:[%s175 + $0x28] sm:$0xff] %vm2710, %v2675
      %2717 = vst.msk [vmem:[%s175 + $0x30] sm:$0xff] %vm2710, %v2676
      %2718 = vst.msk [vmem:[%s175 + $0x38] sm:$0xff] %vm2710, %v2677
      %2719 = vst.msk [vmem:[%s175 + $0x40] sm:$0xff] %vm2710, %v2678
      %2720 = vst.msk [vmem:[%s175 + $0x48] sm:$0xff] %vm2710, %v2679
      %2721 = vst.msk [vmem:[%s175 + $0x50] sm:$0xff] %vm2710, %v2680
      %2722 = vst.msk [vmem:[%s175 + $0x58] sm:$0xff] %vm2710, %v2681
      %2723 = vst.msk [vmem:[%s175 + $0x60] sm:$0xff] %vm2710, %v2682
      %2724 = vst.msk [vmem:[%s175 + $0x68] sm:$0xff] %vm2710, %v2683
      %2725 = vst.msk [vmem:[%s175 + $0x70] sm:$0xff] %vm2710, %v2684
      %2726 = vst.msk [vmem:[%s175 + $0x78] sm:$0xff] %vm2710, %v2685
      %2727 = vst.msk [vmem:[%s175 + $0x80] sm:$0xff] %vm2710, %v2686
      %2728 = vst.msk [vmem:[%s175 + $0x88] sm:$0xff] %vm2710, %v2687
      %2729 = vst.msk [vmem:[%s175 + $0x90] sm:$0xff] %vm2710, %v2688
      %2730 = vst.msk [vmem:[%s175 + $0x98] sm:$0xff] %vm2710, %v2689
      %2731 = vst.msk [vmem:[%s175 + $0xa0] sm:$0xff] %vm2710, %v2690
      %2732 = vst.msk [vmem:[%s175 + $0xa8] sm:$0xff] %vm2710, %v2691
      %2733 = vst.msk [vmem:[%s175 + $0xb0] sm:$0xff] %vm2710, %v2692
      %2734 = vst.msk [vmem:[%s175 + $0xb8] sm:$0xff] %vm2710, %v2693
      %2735 = vst.msk [vmem:[%s175 + $0xc0] sm:$0xff] %vm2710, %v2694
      %2736 = vst.msk [vmem:[%s175 + $0xc8] sm:$0xff] %vm2710, %v2695
      %2737 = vst.msk [vmem:[%s175 + $0xd0] sm:$0xff] %vm2710, %v2696
      %2738 = vst.msk [vmem:[%s175 + $0xd8] sm:$0xff] %vm2710, %v2697
      %2739 = vst.msk [vmem:[%s175 + $0xe0] sm:$0xff] %vm2710, %v2698
      %2740 = vst.msk [vmem:[%s175 + $0xe8] sm:$0xff] %vm2710, %v2699
      %2741 = vst.msk [vmem:[%s175 + $0xf0] sm:$0xff] %vm2710, %v2700
      %2742 = vst.msk [vmem:[%s175 + $0xf8] sm:$0xff] %vm2710, %v2701
      %2743 = vst.msk [vmem:[%s175 + $0x100] sm:$0xff] %vm2710, %v2702
      %2744 = vst.msk [vmem:[%s175 + $0x108] sm:$0xff] %vm2710, %v2703
      %2745 = vst.msk [vmem:[%s175 + $0x110] sm:$0xff] %vm2710, %v2704
      %2746 = vst.msk [vmem:[%s175 + $0x118] sm:$0xff] %vm2710, %v2705
      %2747 = vst.msk [vmem:[%s175 + $0x120] sm:$0xff] %vm2710, %v2706
      %2748 = vst.msk [vmem:[%s175 + $0x128] sm:$0xff] %vm2710, %v2707
      %2749 = vst.msk [vmem:[%s175 + $0x130] sm:$0xff] %vm2710, %v2708
      %2750 = vst.msk [vmem:[%s175 + $0x138] sm:$0xff] %vm2710, %v2709
      %s2751 = smul.u32 40, %s14
      %p2752 = scmp.lt.s32.totalorder %s2751, 79
      %s2753 = scalar_select %p2752, %s2751, 79
      %s2754 = smul.addr %s2753, 8
      %s2755 = scalar_lea.vmem %s3, %s2754
      // Predicated region
      $region33: #{unified_discriminator_forward.9} parent=31 // pred_check
        %p2756 = pneg %p100
      $region34: #{unified_discriminator_forward.9} parent=31 // pred_check_branch
        %2758 = sbr.rel (%p2756) target = $region36
      $region35: #{unified_discriminator_forward.9} parent=31 // pred_region
        %s2759 = smul.u32 40, %s14
      $region36: #{unified_discriminator_forward.9} parent=31 // pred_fallthru
        _
    $region32: #{unified_discriminator_forward.9} parent=5 // pred_fallthru
      _
    %p2760 = scmp.le.s32.totalorder 2, %s9
    // Predicated region
    $region37: #{unified_discriminator_forward.9} parent=5 // pred_check
      %p2761 = pneg %p2760
    $region38: #{unified_discriminator_forward.9} parent=5 // pred_check_branch
      %2763 = sbr.rel (%p2761) target = $region40
    $region39: #{unified_discriminator_forward.9} parent=5 // pred_region
      %s2764 = ssub.s32 %s9, 2
      // Predicated region
      $region41: #{unified_discriminator_forward.9} parent=39 // pred_check
        %p2765 = pneg %p106
      $region42: #{unified_discriminator_forward.9} parent=39 // pred_check_branch
        %2767 = sbr.rel (%p2765) target = $region44
      $region43: #{unified_discriminator_forward.9} parent=39 // pred_region
        %s2768 = smul.u32 40, %s15
        %p2769 = scmp.lt.s32.totalorder %s2768, 79
        %s2770 = scalar_select %p2769, %s2768, 79
        %s2771 = smul.addr %s2770, 8
        %s2772 = scalar_lea.vmem %s3, %s2771
      $region44: #{unified_discriminator_forward.9} parent=39 // pred_fallthru
        _
    $region40: #{unified_discriminator_forward.9} parent=5 // pred_fallthru
      _
  $region6: #{unified_discriminator_forward.9} parent=0 // loop_footer
    %s13 = sadd.s32 1, %s9
  $region7: #{unified_discriminator_forward.9} parent=0 // loop_footer_branch
    %8 = sbr.rel target = $region3
  $region8: #{unified_discriminator_forward.9} parent=0 // loop_exit
    _

// kernel: unified_discriminator_forward.10
$region0: #{unified_discriminator_forward.10}
  #allocation0 [shape = 'u32[]', space=smem, size = 0x4, offset = 0x4, fixed_abs, tag = 'smem constant byte address 0x4 - core index']
  #allocation1 [shape = 'u32[144,128]{1,0:T(1,128)}', space=vmem, size = 0x12000, scoped, tag = 'internal scratch']
  %s0 = inlined_call_operand.vmem [shape: bf16[320,864], index: 0, kind: input, shape index: {}]
  %s1 = inlined_call_operand.vmem [shape: bf16[864,64], index: 1, kind: input, shape index: {}]
  %s2 = inlined_call_operand.vmem [shape: f32[1,64], index: 2, kind: input, shape index: {}]
  %s3 = inlined_call_operand.vmem [shape: f32[320,32], index: 3, kind: output, shape index: {}]
  %s4 = sld [smem:[#allocation0]]
  $region45: #{unified_discriminator_forward.10} parent=0
    _
  %s6 = ssub.s32 1, %s4
  %s7 = scalar_select 0, %s6, %s4
  loop: start=0, step=1, limit=4
  $region2: #{unified_discriminator_forward.10} parent=0 // loop_pre_header
    _
  $region3: #{unified_discriminator_forward.10} parent=0 // loop_header
    %s9 = sphi 0, %s13
    %p10 = scmp.ge.s32.totalorder %s9, 4
    %s19 = sphi 0, %s21
    %s22 = sphi 0, %s19
    %s23 = sphi 0, %s22
    %s39 = sphi 0, %s23
    %s43 = sphi 0, %s43
    %s45 = sphi 0, %s43
    %s46 = sphi 0, %s45
    %s60 = sphi 0, %s46
    %s64 = sphi 0, %s64
    %s66 = sphi 0, %s64
    %s67 = sphi 0, %s66
    %s81 = sphi 0, %s67
    %s87 = sphi 0, %s89
    %s90 = sphi 0, %s87
    %s91 = sphi 0, %s90
    %s107 = sphi 0, %s91
  $region4: #{unified_discriminator_forward.10} parent=0 // loop_header_branch
    %12 = sbr.rel (%p10) target = $region8
  $region5: #{unified_discriminator_forward.10} parent=0 // loop_body
    %s14 = ssub.s32 %s9, 1
    %s15 = ssub.s32 %s9, 2
    %s16 = sadd.s32 %s9, 1
    %s17 = ssub.s32 %s9, %s16
    %p18 = scmp.eq.s32.totalorder %s17, 0
    %s20 = sadd.s32 %s19, 1
    %s21 = scalar_select %p18, %s19, %s20
    %p24 = pneg %p18
    %p25 = scmp.eq.s32.totalorder %s9, 1
    %p26 = por %p24, %p25
    %p27 = scmp.ne.s32.totalorder %s19, %s22
    %p28 = scmp.eq.s32.totalorder %s9, 0
    %p29 = por %p27, %p28
    %p30 = scmp.ne.s32.totalorder %s19, %s22
    %p31 = scmp.eq.s32.totalorder %s14, 1
    %p32 = por %p30, %p31
    %p33 = scmp.ne.s32.totalorder %s22, %s23
    %p34 = scmp.eq.s32.totalorder %s14, 0
    %p35 = por %p33, %p34
    %p36 = scmp.ne.s32.totalorder %s22, %s23
    %p37 = scmp.eq.s32.totalorder %s15, 1
    %p38 = por %p36, %p37
    %p40 = scmp.ne.s32.totalorder %s23, %s39
    %p41 = scmp.eq.s32.totalorder %s15, 0
    %p42 = por %p40, %p41
    %s44 = sadd.s32 %s43, 1
    %p47 = scmp.eq.s32.totalorder %s9, 1
    %p48 = scmp.ne.s32.totalorder %s43, %s45
    %p49 = scmp.eq.s32.totalorder %s9, 0
    %p50 = por %p48, %p49
    %p51 = scmp.ne.s32.totalorder %s43, %s45
    %p52 = scmp.eq.s32.totalorder %s14, 1
    %p53 = por %p51, %p52
    %p54 = scmp.ne.s32.totalorder %s45, %s46
    %p55 = scmp.eq.s32.totalorder %s14, 0
    %p56 = por %p54, %p55
    %p57 = scmp.ne.s32.totalorder %s45, %s46
    %p58 = scmp.eq.s32.totalorder %s15, 1
    %p59 = por %p57, %p58
    %p61 = scmp.ne.s32.totalorder %s46, %s60
    %p62 = scmp.eq.s32.totalorder %s15, 0
    %p63 = por %p61, %p62
    %s65 = sadd.s32 %s64, 1
    %p68 = scmp.eq.s32.totalorder %s9, 1
    %p69 = scmp.ne.s32.totalorder %s64, %s66
    %p70 = scmp.eq.s32.totalorder %s9, 0
    %p71 = por %p69, %p70
    %p72 = scmp.ne.s32.totalorder %s64, %s66
    %p73 = scmp.eq.s32.totalorder %s14, 1
    %p74 = por %p72, %p73
    %p75 = scmp.ne.s32.totalorder %s66, %s67
    %p76 = scmp.eq.s32.totalorder %s14, 0
    %p77 = por %p75, %p76
    %p78 = scmp.ne.s32.totalorder %s66, %s67
    %p79 = scmp.eq.s32.totalorder %s15, 1
    %p80 = por %p78, %p79
    %p82 = scmp.ne.s32.totalorder %s67, %s81
    %p83 = scmp.eq.s32.totalorder %s15, 0
    %p84 = por %p82, %p83
    %s85 = ssub.s32 %s9, %s16
    %p86 = scmp.eq.s32.totalorder %s85, 0
    %s88 = sadd.s32 %s87, 1
    %s89 = scalar_select %p86, %s87, %s88
    %p92 = pneg %p86
    %p93 = scmp.eq.s32.totalorder %s9, 1
    %p94 = por %p92, %p93
    %p95 = scmp.ne.s32.totalorder %s87, %s90
    %p96 = scmp.eq.s32.totalorder %s9, 0
    %p97 = por %p95, %p96
    %p98 = scmp.ne.s32.totalorder %s87, %s90
    %p99 = scmp.eq.s32.totalorder %s14, 1
    %p100 = por %p98, %p99
    %p101 = scmp.ne.s32.totalorder %s90, %s91
    %p102 = scmp.eq.s32.totalorder %s14, 0
    %p103 = por %p101, %p102
    %p104 = scmp.ne.s32.totalorder %s90, %s91
    %p105 = scmp.eq.s32.totalorder %s15, 1
    %p106 = por %p104, %p105
    %p108 = scmp.ne.s32.totalorder %s91, %s107
    %p109 = scmp.eq.s32.totalorder %s15, 0
    %p110 = por %p108, %p109
    %p111 = scmp.le.s32.totalorder 1, %s9
    %p112 = scmp.lt.s32.totalorder %s9, 3
    %p113 = pnand %p111, %p112
    %p114 = pneg %p113
    // Predicated region
    $region9: #{unified_discriminator_forward.10} parent=5 // pred_check
      _
    $region10: #{unified_discriminator_forward.10} parent=5 // pred_check_branch
      %116 = sbr.rel (%p113) target = $region12
    $region11: #{unified_discriminator_forward.10} parent=5 // pred_region
      %s117 = ssub.s32 %s9, 1
      // Predicated region
      $region13: #{unified_discriminator_forward.10} parent=11 // pred_check
        %p118 = pneg %p56
      $region14: #{unified_discriminator_forward.10} parent=11 // pred_check_branch
        %120 = sbr.rel (%p118) target = $region16
      $region15: #{unified_discriminator_forward.10} parent=11 // pred_region
        _
      $region16: #{unified_discriminator_forward.10} parent=11 // pred_fallthru
        _
      // Predicated region
      $region17: #{unified_discriminator_forward.10} parent=11 // pred_check
        %p121 = pneg %p77
      $region18: #{unified_discriminator_forward.10} parent=11 // pred_check_branch
        %123 = sbr.rel (%p121) target = $region20
      $region19: #{unified_discriminator_forward.10} parent=11 // pred_region
        _
      $region20: #{unified_discriminator_forward.10} parent=11 // pred_fallthru
        _
    $region12: #{unified_discriminator_forward.10} parent=5 // pred_fallthru
      _
    %p124 = scmp.lt.s32.totalorder %s9, 2
    // Predicated region
    $region21: #{unified_discriminator_forward.10} parent=5 // pred_check
      %p125 = pneg %p124
    $region22: #{unified_discriminator_forward.10} parent=5 // pred_check_branch
      %127 = sbr.rel (%p125) target = $region24
    $region23: #{unified_discriminator_forward.10} parent=5 // pred_region
      // Predicated region
      $region25: #{unified_discriminator_forward.10} parent=23 // pred_check
        %p128 = pneg %p29
      $region26: #{unified_discriminator_forward.10} parent=23 // pred_check_branch
        %130 = sbr.rel (%p128) target = $region28
      $region27: #{unified_discriminator_forward.10} parent=23 // pred_region
        %s131 = smul.u32 20, %s9
        %p132 = scmp.lt.s32.totalorder %s131, 39
        %s133 = scalar_select %p132, %s131, 39
        %s134 = smul.addr %s133, 7
        %s135 = smul.addr %s134, 4
        %s136 = scalar_lea.vmem %s0, %s135
        %s137 = smul.u32 20, %s9
      $region28: #{unified_discriminator_forward.10} parent=23 // pred_fallthru
        _
    $region24: #{unified_discriminator_forward.10} parent=5 // pred_fallthru
      _
    %p138 = scmp.le.s32.totalorder 1, %s9
    %p139 = scmp.lt.s32.totalorder %s9, 3
    %p140 = pnand %p138, %p139
    %p141 = pneg %p140
    // Predicated region
    $region29: #{unified_discriminator_forward.10} parent=5 // pred_check
      _
    $region30: #{unified_discriminator_forward.10} parent=5 // pred_check_branch
      %143 = sbr.rel (%p140) target = $region32
    $region31: #{unified_discriminator_forward.10} parent=5 // pred_region
      %s144 = ssub.s32 %s9, 1
      %s145 = smul.u32 20, %s14
      %p146 = scmp.lt.s32.totalorder %s145, 39
      %s147 = scalar_select %p146, %s145, 39
      %s148 = smul.addr %s147, 7
      %s149 = smul.addr %s148, 4
      %s150 = scalar_lea.vmem %s0, %s149
      %p151 = pneg %p35
      %p152 = pneg %p32
      %p153 = pneg %p56
      %p154 = pneg %p53
      %p155 = pneg %p77
      %p156 = pneg %p74
      %p157 = pneg %p103
      %p158 = pneg %p100
      %s159 = smul.u32 20, %s14
      %p160 = scmp.lt.s32.totalorder %s159, 39
      %s161 = scalar_select %p160, %s159, 39
      %s162 = smul.addr %s161, 8
      %s163 = scalar_lea.vmem %s3, %s162
      %s164 = smul.u32 20, %s14
      %p165 = scmp.lt.s32.totalorder %s164, 39
      %s166 = scalar_select %p165, %s164, 39
      %s167 = smul.addr %s166, 7
      %s168 = smul.addr %s167, 4
      %s169 = scalar_lea.vmem %s0, %s168
      %s170 = smul.u32 20, %s14
      %s171 = smul.u32 20, %s14
      %p172 = scmp.lt.s32.totalorder %s171, 39
      %s173 = scalar_select %p172, %s171, 39
      %s174 = smul.addr %s173, 8
      %s175 = scalar_lea.vmem %s3, %s174
      %s176 = smul.u32 20, %s14
      %v178 = vld [vmem:[%s169] sm:$0xff]
      %v179 = vld [vmem:[%s169 + $0x8] sm:$0xff]
      %v180 = vld [vmem:[%s169 + $0x10] sm:$0xff]
      %v181 = vld [vmem:[%s169 + $0x18] sm:$0xf]
      %v182 = vld [vmem:[%s169 + $0x1c] sm:$0xff]
      %v183 = vld [vmem:[%s169 + $0x24] sm:$0xff]
      %v184 = vld [vmem:[%s169 + $0x2c] sm:$0xff]
      %v185 = vld [vmem:[%s169 + $0x34] sm:$0xf]
      %v186 = vld [vmem:[%s169 + $0x38] sm:$0xff]
      %v187 = vld [vmem:[%s169 + $0x40] sm:$0xff]
      %v188 = vld [vmem:[%s169 + $0x48] sm:$0xff]
      %v189 = vld [vmem:[%s169 + $0x50] sm:$0xf]
      %v190 = vld [vmem:[%s169 + $0x54] sm:$0xff]
      %v191 = vld [vmem:[%s169 + $0x5c] sm:$0xff]
      %v192 = vld [vmem:[%s169 + $0x64] sm:$0xff]
      %v193 = vld [vmem:[%s169 + $0x6c] sm:$0xf]
      %v194 = vld [vmem:[%s169 + $0x70] sm:$0xff]
      %v195 = vld [vmem:[%s169 + $0x78] sm:$0xff]
      %v196 = vld [vmem:[%s169 + $0x80] sm:$0xff]
      %v197 = vld [vmem:[%s169 + $0x88] sm:$0xf]
      %v198 = vld [vmem:[%s169 + $0x8c] sm:$0xff]
      %v199 = vld [vmem:[%s169 + $0x94] sm:$0xff]
      %v200 = vld [vmem:[%s169 + $0x9c] sm:$0xff]
      %v201 = vld [vmem:[%s169 + $0xa4] sm:$0xf]
      %v202 = vld [vmem:[%s169 + $0xa8] sm:$0xff]
      %v203 = vld [vmem:[%s169 + $0xb0] sm:$0xff]
      %v204 = vld [vmem:[%s169 + $0xb8] sm:$0xff]
      %v205 = vld [vmem:[%s169 + $0xc0] sm:$0xf]
      %v206 = vld [vmem:[%s169 + $0xc4] sm:$0xff]
      %v207 = vld [vmem:[%s169 + $0xcc] sm:$0xff]
      %v208 = vld [vmem:[%s169 + $0xd4] sm:$0xff]
      %v209 = vld [vmem:[%s169 + $0xdc] sm:$0xf]
      %v210 = vld [vmem:[%s169 + $0xe0] sm:$0xff]
      %v211 = vld [vmem:[%s169 + $0xe8] sm:$0xff]
      %v212 = vld [vmem:[%s169 + $0xf0] sm:$0xff]
      %v213 = vld [vmem:[%s169 + $0xf8] sm:$0xf]
      %v214 = vld [vmem:[%s169 + $0xfc] sm:$0xff]
      %v215 = vld [vmem:[%s169 + $0x104] sm:$0xff]
      %v216 = vld [vmem:[%s169 + $0x10c] sm:$0xff]
      %v217 = vld [vmem:[%s169 + $0x114] sm:$0xf]
      %v218 = vld [vmem:[%s169 + $0x118] sm:$0xff]
      %v219 = vld [vmem:[%s169 + $0x120] sm:$0xff]
      %v220 = vld [vmem:[%s169 + $0x128] sm:$0xff]
      %v221 = vld [vmem:[%s169 + $0x130] sm:$0xf]
      %v222 = vld [vmem:[%s169 + $0x134] sm:$0xff]
      %v223 = vld [vmem:[%s169 + $0x13c] sm:$0xff]
      %v224 = vld [vmem:[%s169 + $0x144] sm:$0xff]
      %v225 = vld [vmem:[%s169 + $0x14c] sm:$0xf]
      %v226 = vld [vmem:[%s169 + $0x150] sm:$0xff]
      %v227 = vld [vmem:[%s169 + $0x158] sm:$0xff]
      %v228 = vld [vmem:[%s169 + $0x160] sm:$0xff]
      %v229 = vld [vmem:[%s169 + $0x168] sm:$0xf]
      %v230 = vld [vmem:[%s169 + $0x16c] sm:$0xff]
      %v231 = vld [vmem:[%s169 + $0x174] sm:$0xff]
      %v232 = vld [vmem:[%s169 + $0x17c] sm:$0xff]
      %v233 = vld [vmem:[%s169 + $0x184] sm:$0xf]
      %v234 = vld [vmem:[%s169 + $0x188] sm:$0xff]
      %v235 = vld [vmem:[%s169 + $0x190] sm:$0xff]
      %v236 = vld [vmem:[%s169 + $0x198] sm:$0xff]
      %v237 = vld [vmem:[%s169 + $0x1a0] sm:$0xf]
      %v238 = vld [vmem:[%s169 + $0x1a4] sm:$0xff]
      %v239 = vld [vmem:[%s169 + $0x1ac] sm:$0xff]
      %v240 = vld [vmem:[%s169 + $0x1b4] sm:$0xff]
      %v241 = vld [vmem:[%s169 + $0x1bc] sm:$0xf]
      %v242 = vld [vmem:[%s169 + $0x1c0] sm:$0xff]
      %v243 = vld [vmem:[%s169 + $0x1c8] sm:$0xff]
      %v244 = vld [vmem:[%s169 + $0x1d0] sm:$0xff]
      %v245 = vld [vmem:[%s169 + $0x1d8] sm:$0xf]
      %v246 = vld [vmem:[%s169 + $0x1dc] sm:$0xff]
      %v247 = vld [vmem:[%s169 + $0x1e4] sm:$0xff]
      %v248 = vld [vmem:[%s169 + $0x1ec] sm:$0xff]
      %v249 = vld [vmem:[%s169 + $0x1f4] sm:$0xf]
      %v250 = vld [vmem:[%s169 + $0x1f8] sm:$0xff]
      %v251 = vld [vmem:[%s169 + $0x200] sm:$0xff]
      %v252 = vld [vmem:[%s169 + $0x208] sm:$0xff]
      %v253 = vld [vmem:[%s169 + $0x210] sm:$0xf]
      %v254 = vld [vmem:[%s169 + $0x214] sm:$0xff]
      %v255 = vld [vmem:[%s169 + $0x21c] sm:$0xff]
      %v256 = vld [vmem:[%s169 + $0x224] sm:$0xff]
      %v257 = vld [vmem:[%s169 + $0x22c] sm:$0xf]
      %v258 = vld [vmem:[%s1] sm:$0xf]
      %v259 = vld [vmem:[%s1 + $0x4] sm:$0xf]
      %v260 = vld [vmem:[%s1 + $0x8] sm:$0xf]
      %v261 = vld [vmem:[%s1 + $0xc] sm:$0xf]
      %v262 = vld [vmem:[%s1 + $0x10] sm:$0xf]
      %v263 = vld [vmem:[%s1 + $0x14] sm:$0xf]
      %v264 = vld [vmem:[%s1 + $0x18] sm:$0xf]
      %v265 = vld [vmem:[%s1 + $0x1c] sm:$0xf]
      %v266 = vld [vmem:[%s1 + $0x20] sm:$0xf]
      %v267 = vld [vmem:[%s1 + $0x24] sm:$0xf]
      %v268 = vld [vmem:[%s1 + $0x28] sm:$0xf]
      %v269 = vld [vmem:[%s1 + $0x2c] sm:$0xf]
      %v270 = vld [vmem:[%s1 + $0x30] sm:$0xf]
      %v271 = vld [vmem:[%s1 + $0x34] sm:$0xf]
      %v272 = vld [vmem:[%s1 + $0x38] sm:$0xf]
      %v273 = vld [vmem:[%s1 + $0x3c] sm:$0xf]
      %v274 = vld [vmem:[%s1 + $0x40] sm:$0xf]
      %v275 = vld [vmem:[%s1 + $0x44] sm:$0xf]
      %v276 = vld [vmem:[%s1 + $0x48] sm:$0xf]
      %v277 = vld [vmem:[%s1 + $0x4c] sm:$0xf]
      %v278 = vld [vmem:[%s1 + $0x50] sm:$0xf]
      %v279 = vld [vmem:[%s1 + $0x54] sm:$0xf]
      %v280 = vld [vmem:[%s1 + $0x58] sm:$0xf]
      %v281 = vld [vmem:[%s1 + $0x5c] sm:$0xf]
      %v282 = vld [vmem:[%s1 + $0x60] sm:$0xf]
      %v283 = vld [vmem:[%s1 + $0x64] sm:$0xf]
      %v284 = vld [vmem:[%s1 + $0x68] sm:$0xf]
      %v285 = vld [vmem:[%s1 + $0x6c] sm:$0xf]
      %v286 = vld [vmem:[%s1 + $0x70] sm:$0xf]
      %v287 = vld [vmem:[%s1 + $0x74] sm:$0xf]
      %v288 = vld [vmem:[%s1 + $0x78] sm:$0xf]
      %v289 = vld [vmem:[%s1 + $0x7c] sm:$0xf]
      %v290 = vld [vmem:[%s1 + $0x80] sm:$0xf]
      %v291 = vld [vmem:[%s1 + $0x84] sm:$0xf]
      %v292 = vld [vmem:[%s1 + $0x88] sm:$0xf]
      %v293 = vld [vmem:[%s1 + $0x8c] sm:$0xf]
      %v294 = vld [vmem:[%s1 + $0x90] sm:$0xf]
      %v295 = vld [vmem:[%s1 + $0x94] sm:$0xf]
      %v296 = vld [vmem:[%s1 + $0x98] sm:$0xf]
      %v297 = vld [vmem:[%s1 + $0x9c] sm:$0xf]
      %v298 = vld [vmem:[%s1 + $0xa0] sm:$0xf]
      %v299 = vld [vmem:[%s1 + $0xa4] sm:$0xf]
      %v300 = vld [vmem:[%s1 + $0xa8] sm:$0xf]
      %v301 = vld [vmem:[%s1 + $0xac] sm:$0xf]
      %v302 = vld [vmem:[%s1 + $0xb0] sm:$0xf]
      %v303 = vld [vmem:[%s1 + $0xb4] sm:$0xf]
      %v304 = vld [vmem:[%s1 + $0xb8] sm:$0xf]
      %v305 = vld [vmem:[%s1 + $0xbc] sm:$0xf]
      %v306 = vld [vmem:[%s1 + $0xc0] sm:$0xf]
      %v307 = vld [vmem:[%s1 + $0xc4] sm:$0xf]
      %v308 = vld [vmem:[%s1 + $0xc8] sm:$0xf]
      %v309 = vld [vmem:[%s1 + $0xcc] sm:$0xf]
      %v310 = vld [vmem:[%s1 + $0xd0] sm:$0xf]
      %v311 = vld [vmem:[%s1 + $0xd4] sm:$0xf]
      %v312 = vld [vmem:[%s1 + $0xd8] sm:$0xf]
      %v313 = vld [vmem:[%s1 + $0xdc] sm:$0xf]
      %v314 = vld [vmem:[%s1 + $0xe0] sm:$0xf]
      %v315 = vld [vmem:[%s1 + $0xe4] sm:$0xf]
      %v316 = vld [vmem:[%s1 + $0xe8] sm:$0xf]
      %v317 = vld [vmem:[%s1 + $0xec] sm:$0xf]
      %v318 = vld [vmem:[%s1 + $0xf0] sm:$0xf]
      %v319 = vld [vmem:[%s1 + $0xf4] sm:$0xf]
      %v320 = vld [vmem:[%s1 + $0xf8] sm:$0xf]
      %v321 = vld [vmem:[%s1 + $0xfc] sm:$0xf]
      %v322 = vld [vmem:[%s1 + $0x100] sm:$0xf]
      %v323 = vld [vmem:[%s1 + $0x104] sm:$0xf]
      %v324 = vld [vmem:[%s1 + $0x108] sm:$0xf]
      %v325 = vld [vmem:[%s1 + $0x10c] sm:$0xf]
      %v326 = vld [vmem:[%s1 + $0x110] sm:$0xf]
      %v327 = vld [vmem:[%s1 + $0x114] sm:$0xf]
      %v328 = vld [vmem:[%s1 + $0x118] sm:$0xf]
      %v329 = vld [vmem:[%s1 + $0x11c] sm:$0xf]
      %v330 = vld [vmem:[%s1 + $0x120] sm:$0xf]
      %v331 = vld [vmem:[%s1 + $0x124] sm:$0xf]
      %v332 = vld [vmem:[%s1 + $0x128] sm:$0xf]
      %v333 = vld [vmem:[%s1 + $0x12c] sm:$0xf]
      %v334 = vld [vmem:[%s1 + $0x130] sm:$0xf]
      %v335 = vld [vmem:[%s1 + $0x134] sm:$0xf]
      %v336 = vld [vmem:[%s1 + $0x138] sm:$0xf]
      %v337 = vld [vmem:[%s1 + $0x13c] sm:$0xf]
      %v338 = vld [vmem:[%s1 + $0x140] sm:$0xf]
      %v339 = vld [vmem:[%s1 + $0x144] sm:$0xf]
      %v340 = vld [vmem:[%s1 + $0x148] sm:$0xf]
      %v341 = vld [vmem:[%s1 + $0x14c] sm:$0xf]
      %v342 = vld [vmem:[%s1 + $0x150] sm:$0xf]
      %v343 = vld [vmem:[%s1 + $0x154] sm:$0xf]
      %v344 = vld [vmem:[%s1 + $0x158] sm:$0xf]
      %v345 = vld [vmem:[%s1 + $0x15c] sm:$0xf]
      %v346 = vld [vmem:[%s1 + $0x160] sm:$0xf]
      %v347 = vld [vmem:[%s1 + $0x164] sm:$0xf]
      %v348 = vld [vmem:[%s1 + $0x168] sm:$0xf]
      %v349 = vld [vmem:[%s1 + $0x16c] sm:$0xf]
      %v350 = vld [vmem:[%s1 + $0x170] sm:$0xf]
      %v351 = vld [vmem:[%s1 + $0x174] sm:$0xf]
      %v352 = vld [vmem:[%s1 + $0x178] sm:$0xf]
      %v353 = vld [vmem:[%s1 + $0x17c] sm:$0xf]
      %v354 = vld [vmem:[%s1 + $0x180] sm:$0xf]
      %v355 = vld [vmem:[%s1 + $0x184] sm:$0xf]
      %v356 = vld [vmem:[%s1 + $0x188] sm:$0xf]
      %v357 = vld [vmem:[%s1 + $0x18c] sm:$0xf]
      %v358 = vld [vmem:[%s1 + $0x190] sm:$0xf]
      %v359 = vld [vmem:[%s1 + $0x194] sm:$0xf]
      %v360 = vld [vmem:[%s1 + $0x198] sm:$0xf]
      %v361 = vld [vmem:[%s1 + $0x19c] sm:$0xf]
      %v362 = vld [vmem:[%s1 + $0x1a0] sm:$0xf]
      %v363 = vld [vmem:[%s1 + $0x1a4] sm:$0xf]
      %v364 = vld [vmem:[%s1 + $0x1a8] sm:$0xf]
      %v365 = vld [vmem:[%s1 + $0x1ac] sm:$0xf]
      %v366 = vld [vmem:[%s2] sm:$0x1]
      %v368 = vlaneseq
      %v369 = vshrl.u32 %v368, 7
      %v370 = vsub.s32 0, %v369
      %v371 = vrot.slane %v366, %v370
      %v453 = vunpack.c.l.b16 %v178
      %v454 = vunpack.c.h.b16 %v178
      %v455 = vunpack.c.l.b16 %v179
      %v456 = vunpack.c.h.b16 %v179
      %v457 = vunpack.c.l.b16 %v180
      %v458 = vunpack.c.h.b16 %v180
      %v459 = vunpack.c.l.b16 %v181
      %v460 = vunpack.c.l.b16 %v182
      %v461 = vunpack.c.h.b16 %v182
      %v462 = vunpack.c.l.b16 %v183
      %v463 = vunpack.c.h.b16 %v183
      %v464 = vunpack.c.l.b16 %v184
      %v465 = vunpack.c.h.b16 %v184
      %v466 = vunpack.c.l.b16 %v185
      %v467 = vunpack.c.l.b16 %v186
      %v468 = vunpack.c.h.b16 %v186
      %v469 = vunpack.c.l.b16 %v187
      %v470 = vunpack.c.h.b16 %v187
      %v471 = vunpack.c.l.b16 %v188
      %v472 = vunpack.c.h.b16 %v188
      %v473 = vunpack.c.l.b16 %v189
      %v474 = vunpack.c.l.b16 %v190
      %v475 = vunpack.c.h.b16 %v190
      %v476 = vunpack.c.l.b16 %v191
      %v477 = vunpack.c.h.b16 %v191
      %v478 = vunpack.c.l.b16 %v192
      %v479 = vunpack.c.h.b16 %v192
      %v480 = vunpack.c.l.b16 %v193
      %v481 = vunpack.c.l.b16 %v194
      %v482 = vunpack.c.h.b16 %v194
      %v483 = vunpack.c.l.b16 %v195
      %v484 = vunpack.c.h.b16 %v195
      %v485 = vunpack.c.l.b16 %v196
      %v486 = vunpack.c.h.b16 %v196
      %v487 = vunpack.c.l.b16 %v197
      %v488 = vunpack.c.l.b16 %v198
      %v489 = vunpack.c.h.b16 %v198
      %v490 = vunpack.c.l.b16 %v199
      %v491 = vunpack.c.h.b16 %v199
      %v492 = vunpack.c.l.b16 %v200
      %v493 = vunpack.c.h.b16 %v200
      %v494 = vunpack.c.l.b16 %v201
      %v495 = vunpack.c.l.b16 %v202
      %v496 = vunpack.c.h.b16 %v202
      %v497 = vunpack.c.l.b16 %v203
      %v498 = vunpack.c.h.b16 %v203
      %v499 = vunpack.c.l.b16 %v204
      %v500 = vunpack.c.h.b16 %v204
      %v501 = vunpack.c.l.b16 %v205
      %v502 = vunpack.c.l.b16 %v206
      %v503 = vunpack.c.h.b16 %v206
      %v504 = vunpack.c.l.b16 %v207
      %v505 = vunpack.c.h.b16 %v207
      %v506 = vunpack.c.l.b16 %v208
      %v507 = vunpack.c.h.b16 %v208
      %v508 = vunpack.c.l.b16 %v209
      %v509 = vunpack.c.l.b16 %v210
      %v510 = vunpack.c.h.b16 %v210
      %v511 = vunpack.c.l.b16 %v211
      %v512 = vunpack.c.h.b16 %v211
      %v513 = vunpack.c.l.b16 %v212
      %v514 = vunpack.c.h.b16 %v212
      %v515 = vunpack.c.l.b16 %v213
      %v516 = vunpack.c.l.b16 %v214
      %v517 = vunpack.c.h.b16 %v214
      %v518 = vunpack.c.l.b16 %v215
      %v519 = vunpack.c.h.b16 %v215
      %v520 = vunpack.c.l.b16 %v216
      %v521 = vunpack.c.h.b16 %v216
      %v522 = vunpack.c.l.b16 %v217
      %v523 = vunpack.c.l.b16 %v218
      %v524 = vunpack.c.h.b16 %v218
      %v525 = vunpack.c.l.b16 %v219
      %v526 = vunpack.c.h.b16 %v219
      %v527 = vunpack.c.l.b16 %v220
      %v528 = vunpack.c.h.b16 %v220
      %v529 = vunpack.c.l.b16 %v221
      %v530 = vunpack.c.l.b16 %v222
      %v531 = vunpack.c.h.b16 %v222
      %v532 = vunpack.c.l.b16 %v223
      %v533 = vunpack.c.h.b16 %v223
      %v534 = vunpack.c.l.b16 %v224
      %v535 = vunpack.c.h.b16 %v224
      %v536 = vunpack.c.l.b16 %v225
      %v537 = vunpack.c.l.b16 %v226
      %v538 = vunpack.c.h.b16 %v226
      %v539 = vunpack.c.l.b16 %v227
      %v540 = vunpack.c.h.b16 %v227
      %v541 = vunpack.c.l.b16 %v228
      %v542 = vunpack.c.h.b16 %v228
      %v543 = vunpack.c.l.b16 %v229
      %v544 = vunpack.c.l.b16 %v230
      %v545 = vunpack.c.h.b16 %v230
      %v546 = vunpack.c.l.b16 %v231
      %v547 = vunpack.c.h.b16 %v231
      %v548 = vunpack.c.l.b16 %v232
      %v549 = vunpack.c.h.b16 %v232
      %v550 = vunpack.c.l.b16 %v233
      %v551 = vunpack.c.l.b16 %v234
      %v552 = vunpack.c.h.b16 %v234
      %v553 = vunpack.c.l.b16 %v235
      %v554 = vunpack.c.h.b16 %v235
      %v555 = vunpack.c.l.b16 %v236
      %v556 = vunpack.c.h.b16 %v236
      %v557 = vunpack.c.l.b16 %v237
      %v558 = vunpack.c.l.b16 %v238
      %v559 = vunpack.c.h.b16 %v238
      %v560 = vunpack.c.l.b16 %v239
      %v561 = vunpack.c.h.b16 %v239
      %v562 = vunpack.c.l.b16 %v240
      %v563 = vunpack.c.h.b16 %v240
      %v564 = vunpack.c.l.b16 %v241
      %v565 = vunpack.c.l.b16 %v242
      %v566 = vunpack.c.h.b16 %v242
      %v567 = vunpack.c.l.b16 %v243
      %v568 = vunpack.c.h.b16 %v243
      %v569 = vunpack.c.l.b16 %v244
      %v570 = vunpack.c.h.b16 %v244
      %v571 = vunpack.c.l.b16 %v245
      %v572 = vunpack.c.l.b16 %v246
      %v573 = vunpack.c.h.b16 %v246
      %v574 = vunpack.c.l.b16 %v247
      %v575 = vunpack.c.h.b16 %v247
      %v576 = vunpack.c.l.b16 %v248
      %v577 = vunpack.c.h.b16 %v248
      %v578 = vunpack.c.l.b16 %v249
      %v579 = vunpack.c.l.b16 %v250
      %v580 = vunpack.c.h.b16 %v250
      %v581 = vunpack.c.l.b16 %v251
      %v582 = vunpack.c.h.b16 %v251
      %v583 = vunpack.c.l.b16 %v252
      %v584 = vunpack.c.h.b16 %v252
      %v585 = vunpack.c.l.b16 %v253
      %v586 = vunpack.c.l.b16 %v254
      %v587 = vunpack.c.h.b16 %v254
      %v588 = vunpack.c.l.b16 %v255
      %v589 = vunpack.c.h.b16 %v255
      %v590 = vunpack.c.l.b16 %v256
      %v591 = vunpack.c.h.b16 %v256
      %v592 = vunpack.c.l.b16 %v257
      %v593 = vpack.c.b16 %v460, %v453
      %v594 = vpack.c.b16 %v461, %v454
      %v595 = vpack.c.b16 %v462, %v455
      %v596 = vpack.c.b16 %v463, %v456
      %v597 = vpack.c.b16 %v464, %v457
      %v598 = vpack.c.b16 %v465, %v458
      %v599 = vpack.c.b16 %v466, %v459
      %v600 = vpack.c.b16 %v474, %v467
      %v601 = vpack.c.b16 %v475, %v468
      %v602 = vpack.c.b16 %v476, %v469
      %v603 = vpack.c.b16 %v477, %v470
      %v604 = vpack.c.b16 %v478, %v471
      %v605 = vpack.c.b16 %v479, %v472
      %v606 = vpack.c.b16 %v480, %v473
      %v607 = vpack.c.b16 %v488, %v481
      %v608 = vpack.c.b16 %v489, %v482
      %v609 = vpack.c.b16 %v490, %v483
      %v610 = vpack.c.b16 %v491, %v484
      %v611 = vpack.c.b16 %v492, %v485
      %v612 = vpack.c.b16 %v493, %v486
      %v613 = vpack.c.b16 %v494, %v487
      %v614 = vpack.c.b16 %v502, %v495
      %v615 = vpack.c.b16 %v503, %v496
      %v616 = vpack.c.b16 %v504, %v497
      %v617 = vpack.c.b16 %v505, %v498
      %v618 = vpack.c.b16 %v506, %v499
      %v619 = vpack.c.b16 %v507, %v500
      %v620 = vpack.c.b16 %v508, %v501
      %v621 = vpack.c.b16 %v516, %v509
      %v622 = vpack.c.b16 %v517, %v510
      %v623 = vpack.c.b16 %v518, %v511
      %v624 = vpack.c.b16 %v519, %v512
      %v625 = vpack.c.b16 %v520, %v513
      %v626 = vpack.c.b16 %v521, %v514
      %v627 = vpack.c.b16 %v522, %v515
      %v628 = vpack.c.b16 %v530, %v523
      %v629 = vpack.c.b16 %v531, %v524
      %v630 = vpack.c.b16 %v532, %v525
      %v631 = vpack.c.b16 %v533, %v526
      %v632 = vpack.c.b16 %v534, %v527
      %v633 = vpack.c.b16 %v535, %v528
      %v634 = vpack.c.b16 %v536, %v529
      %v635 = vpack.c.b16 %v544, %v537
      %v636 = vpack.c.b16 %v545, %v538
      %v637 = vpack.c.b16 %v546, %v539
      %v638 = vpack.c.b16 %v547, %v540
      %v639 = vpack.c.b16 %v548, %v541
      %v640 = vpack.c.b16 %v549, %v542
      %v641 = vpack.c.b16 %v550, %v543
      %v642 = vpack.c.b16 %v558, %v551
      %v643 = vpack.c.b16 %v559, %v552
      %v644 = vpack.c.b16 %v560, %v553
      %v645 = vpack.c.b16 %v561, %v554
      %v646 = vpack.c.b16 %v562, %v555
      %v647 = vpack.c.b16 %v563, %v556
      %v648 = vpack.c.b16 %v564, %v557
      %v649 = vpack.c.b16 %v572, %v565
      %v650 = vpack.c.b16 %v573, %v566
      %v651 = vpack.c.b16 %v574, %v567
      %v652 = vpack.c.b16 %v575, %v568
      %v653 = vpack.c.b16 %v576, %v569
      %v654 = vpack.c.b16 %v577, %v570
      %v655 = vpack.c.b16 %v578, %v571
      %v656 = vpack.c.b16 %v586, %v579
      %v657 = vpack.c.b16 %v587, %v580
      %v658 = vpack.c.b16 %v588, %v581
      %v659 = vpack.c.b16 %v589, %v582
      %v660 = vpack.c.b16 %v590, %v583
      %v661 = vpack.c.b16 %v591, %v584
      %v662 = vpack.c.b16 %v592, %v585
      %v831 = vunpack.c.l.b16 %v258
      %v832 = vunpack.c.l.b16 %v259
      %v833 = vunpack.c.l.b16 %v260
      %v834 = vunpack.c.l.b16 %v261
      %v835 = vunpack.c.l.b16 %v262
      %v836 = vunpack.c.l.b16 %v263
      %v837 = vunpack.c.l.b16 %v264
      %v838 = vunpack.c.l.b16 %v265
      %v839 = vunpack.c.l.b16 %v266
      %v840 = vunpack.c.l.b16 %v267
      %v841 = vunpack.c.l.b16 %v268
      %v842 = vunpack.c.l.b16 %v269
      %v843 = vunpack.c.l.b16 %v270
      %v844 = vunpack.c.l.b16 %v271
      %v845 = vunpack.c.l.b16 %v272
      %v846 = vunpack.c.l.b16 %v273
      %v847 = vunpack.c.l.b16 %v274
      %v848 = vunpack.c.l.b16 %v275
      %v849 = vunpack.c.l.b16 %v276
      %v850 = vunpack.c.l.b16 %v277
      %v851 = vunpack.c.l.b16 %v278
      %v852 = vunpack.c.l.b16 %v279
      %v853 = vunpack.c.l.b16 %v280
      %v854 = vunpack.c.l.b16 %v281
      %v855 = vunpack.c.l.b16 %v282
      %v856 = vunpack.c.l.b16 %v283
      %v857 = vunpack.c.l.b16 %v284
      %v858 = vunpack.c.l.b16 %v285
      %v859 = vunpack.c.l.b16 %v286
      %v860 = vunpack.c.l.b16 %v287
      %v861 = vunpack.c.l.b16 %v288
      %v862 = vunpack.c.l.b16 %v289
      %v863 = vunpack.c.l.b16 %v290
      %v864 = vunpack.c.l.b16 %v291
      %v865 = vunpack.c.l.b16 %v292
      %v866 = vunpack.c.l.b16 %v293
      %v867 = vunpack.c.l.b16 %v294
      %v868 = vunpack.c.l.b16 %v295
      %v869 = vunpack.c.l.b16 %v296
      %v870 = vunpack.c.l.b16 %v297
      %v871 = vunpack.c.l.b16 %v298
      %v872 = vunpack.c.l.b16 %v299
      %v873 = vunpack.c.l.b16 %v300
      %v874 = vunpack.c.l.b16 %v301
      %v875 = vunpack.c.l.b16 %v302
      %v876 = vunpack.c.l.b16 %v303
      %v877 = vunpack.c.l.b16 %v304
      %v878 = vunpack.c.l.b16 %v305
      %v879 = vunpack.c.l.b16 %v306
      %v880 = vunpack.c.l.b16 %v307
      %v881 = vunpack.c.l.b16 %v308
      %v882 = vunpack.c.l.b16 %v309
      %v883 = vunpack.c.l.b16 %v310
      %v884 = vunpack.c.l.b16 %v311
      %v885 = vunpack.c.l.b16 %v312
      %v886 = vunpack.c.l.b16 %v313
      %v887 = vunpack.c.l.b16 %v314
      %v888 = vunpack.c.l.b16 %v315
      %v889 = vunpack.c.l.b16 %v316
      %v890 = vunpack.c.l.b16 %v317
      %v891 = vunpack.c.l.b16 %v318
      %v892 = vunpack.c.l.b16 %v319
      %v893 = vunpack.c.l.b16 %v320
      %v894 = vunpack.c.l.b16 %v321
      %v895 = vunpack.c.l.b16 %v322
      %v896 = vunpack.c.l.b16 %v323
      %v897 = vunpack.c.l.b16 %v324
      %v898 = vunpack.c.l.b16 %v325
      %v899 = vunpack.c.l.b16 %v326
      %v900 = vunpack.c.l.b16 %v327
      %v901 = vunpack.c.l.b16 %v328
      %v902 = vunpack.c.l.b16 %v329
      %v903 = vunpack.c.l.b16 %v330
      %v904 = vunpack.c.l.b16 %v331
      %v905 = vunpack.c.l.b16 %v332
      %v906 = vunpack.c.l.b16 %v333
      %v907 = vunpack.c.l.b16 %v334
      %v908 = vunpack.c.l.b16 %v335
      %v909 = vunpack.c.l.b16 %v336
      %v910 = vunpack.c.l.b16 %v337
      %v911 = vunpack.c.l.b16 %v338
      %v912 = vunpack.c.l.b16 %v339
      %v913 = vunpack.c.l.b16 %v340
      %v914 = vunpack.c.l.b16 %v341
      %v915 = vunpack.c.l.b16 %v342
      %v916 = vunpack.c.l.b16 %v343
      %v917 = vunpack.c.l.b16 %v344
      %v918 = vunpack.c.l.b16 %v345
      %v919 = vunpack.c.l.b16 %v346
      %v920 = vunpack.c.l.b16 %v347
      %v921 = vunpack.c.l.b16 %v348
      %v922 = vunpack.c.l.b16 %v349
      %v923 = vunpack.c.l.b16 %v350
      %v924 = vunpack.c.l.b16 %v351
      %v925 = vunpack.c.l.b16 %v352
      %v926 = vunpack.c.l.b16 %v353
      %v927 = vunpack.c.l.b16 %v354
      %v928 = vunpack.c.l.b16 %v355
      %v929 = vunpack.c.l.b16 %v356
      %v930 = vunpack.c.l.b16 %v357
      %v931 = vunpack.c.l.b16 %v358
      %v932 = vunpack.c.l.b16 %v359
      %v933 = vunpack.c.l.b16 %v360
      %v934 = vunpack.c.l.b16 %v361
      %v935 = vunpack.c.l.b16 %v362
      %v936 = vunpack.c.l.b16 %v363
      %v937 = vunpack.c.l.b16 %v364
      %v938 = vunpack.c.l.b16 %v365
      %v939 = vpack.c.b16 %v832, %v831
      %v940 = vpack.c.b16 %v834, %v833
      %v941 = vpack.c.b16 %v836, %v835
      %v942 = vpack.c.b16 %v838, %v837
      %v943 = vpack.c.b16 %v840, %v839
      %v944 = vpack.c.b16 %v842, %v841
      %v945 = vpack.c.b16 %v844, %v843
      %v946 = vpack.c.b16 %v846, %v845
      %v947 = vpack.c.b16 %v848, %v847
      %v948 = vpack.c.b16 %v850, %v849
      %v949 = vpack.c.b16 %v852, %v851
      %v950 = vpack.c.b16 %v854, %v853
      %v951 = vpack.c.b16 %v856, %v855
      %v952 = vpack.c.b16 %v858, %v857
      %v953 = vpack.c.b16 %v860, %v859
      %v954 = vpack.c.b16 %v862, %v861
      %v955 = vpack.c.b16 %v864, %v863
      %v956 = vpack.c.b16 %v866, %v865
      %v957 = vpack.c.b16 %v868, %v867
      %v958 = vpack.c.b16 %v870, %v869
      %v959 = vpack.c.b16 %v872, %v871
      %v960 = vpack.c.b16 %v874, %v873
      %v961 = vpack.c.b16 %v876, %v875
      %v962 = vpack.c.b16 %v878, %v877
      %v963 = vpack.c.b16 %v880, %v879
      %v964 = vpack.c.b16 %v882, %v881
      %v965 = vpack.c.b16 %v884, %v883
      %v966 = vpack.c.b16 %v886, %v885
      %v967 = vpack.c.b16 %v888, %v887
      %v968 = vpack.c.b16 %v890, %v889
      %v969 = vpack.c.b16 %v892, %v891
      %v970 = vpack.c.b16 %v894, %v893
      %v971 = vpack.c.b16 %v896, %v895
      %v972 = vpack.c.b16 %v898, %v897
      %v973 = vpack.c.b16 %v900, %v899
      %v974 = vpack.c.b16 %v902, %v901
      %v975 = vpack.c.b16 %v904, %v903
      %v976 = vpack.c.b16 %v906, %v905
      %v977 = vpack.c.b16 %v908, %v907
      %v978 = vpack.c.b16 %v910, %v909
      %v979 = vpack.c.b16 %v912, %v911
      %v980 = vpack.c.b16 %v914, %v913
      %v981 = vpack.c.b16 %v916, %v915
      %v982 = vpack.c.b16 %v918, %v917
      %v983 = vpack.c.b16 %v920, %v919
      %v984 = vpack.c.b16 %v922, %v921
      %v985 = vpack.c.b16 %v924, %v923
      %v986 = vpack.c.b16 %v926, %v925
      %v987 = vpack.c.b16 %v928, %v927
      %v988 = vpack.c.b16 %v930, %v929
      %v989 = vpack.c.b16 %v932, %v931
      %v990 = vpack.c.b16 %v934, %v933
      %v991 = vpack.c.b16 %v936, %v935
      %v992 = vpack.c.b16 %v938, %v937
      %vm1047 = vcmask 785408
      %v1049 = vsel %vm1047, %v599, 0
      %v1052 = vsel %vm1047, %v606, 0
      %v1055 = vsel %vm1047, %v613, 0
      %v1058 = vsel %vm1047, %v620, 0
      %v1061 = vsel %vm1047, %v627, 0
      %v1064 = vsel %vm1047, %v634, 0
      %v1067 = vsel %vm1047, %v641, 0
      %v1070 = vsel %vm1047, %v648, 0
      %v1073 = vsel %vm1047, %v655, 0
      %v1076 = vsel %vm1047, %v662, 0
      %1078 = vmatprep.subr.bf16.mxu0 0
      %1079 = vmatpush1.bf16.msra.mxu0 %v939
      %1080 = vmatprep.subr.bf16.mxu0 0
      %1081 = vmatpush1.bf16.msra.mxu0 %v940
      %1082 = vmatprep.subr.bf16.mxu0 0
      %1083 = vmatpush1.bf16.msra.mxu0 %v941
      %1084 = vmatprep.subr.bf16.mxu0 0
      %1085 = vmatpush1.bf16.msra.mxu0 %v942
      %1086 = vmatprep.subr.bf16.mxu0 0
      %1087 = vmatpush1.bf16.msra.mxu0 %v943
      %1088 = vmatprep.subr.bf16.mxu0 0
      %1089 = vmatpush1.bf16.msra.mxu0 %v944
      %1090 = vmatprep.subr.bf16.mxu0 0
      %1091 = vmatpush1.bf16.msra.mxu0 %v945
      %1092 = vmatprep.subr.bf16.mxu0 0
      %1093 = vmatpush1.bf16.msra.mxu0 %v946
      %1094 = vmatprep.subr.bf16.mxu0 0
      %1095 = vmatpush1.bf16.msra.mxu0 %v947
      %1096 = vmatprep.subr.bf16.mxu0 0
      %1097 = vmatpush1.bf16.msra.mxu0 %v948
      %1098 = vmatprep.subr.bf16.mxu0 0
      %1099 = vmatpush1.bf16.msra.mxu0 %v949
      %1100 = vmatprep.subr.bf16.mxu0 0
      %1101 = vmatpush1.bf16.msra.mxu0 %v950
      %1102 = vmatprep.subr.bf16.mxu0 0
      %1103 = vmatpush1.bf16.msra.mxu0 %v951
      %1104 = vmatprep.subr.bf16.mxu0 0
      %1105 = vmatpush1.bf16.msra.mxu0 %v952
      %1106 = vmatprep.subr.bf16.mxu0 0
      %1107 = vmatpush1.bf16.msra.mxu0 %v953
      %1108 = vmatprep.subr.bf16.mxu0 0
      %1109 = vmatpush1.bf16.msra.mxu0 %v954
      %1110 = vmatprep.mubr.bf16.mxu0 %v594
      %1111 = vmatmul.mubr.bf16.gmra.mrb[0].mxu0 %v593
      %v1112 = vpop.f32.mrb[0].mxu0
      %v1113 = vadd.f32 %v371, %v1112
      %v1114 = vpop.f32.mrb[0].mxu0
      %v1115 = vpop.f32.mrb[0].mxu0
      %v1116 = vadd.f32 %v371, %v1115
      %v1117 = vpop.f32.mrb[0].mxu0
      %1118 = vmatprep.mubr.bf16.mxu0 %v601
      %1119 = vmatmul.mubr.bf16.gmra.mrb[0].mxu0 %v600
      %v1120 = vpop.f32.mrb[0].mxu0
      %v1121 = vadd.f32 %v371, %v1120
      %v1122 = vpop.f32.mrb[0].mxu0
      %v1123 = vpop.f32.mrb[0].mxu0
      %v1124 = vadd.f32 %v371, %v1123
      %v1125 = vpop.f32.mrb[0].mxu0
      %1126 = vmatprep.mubr.bf16.mxu0 %v608
      %1127 = vmatmul.mubr.bf16.gmra.mrb[0].mxu0 %v607
      %v1128 = vpop.f32.mrb[0].mxu0
      %v1129 = vadd.f32 %v371, %v1128
      %v1130 = vpop.f32.mrb[0].mxu0
      %v1131 = vpop.f32.mrb[0].mxu0
      %v1132 = vadd.f32 %v371, %v1131
      %v1133 = vpop.f32.mrb[0].mxu0
      %1134 = vmatprep.mubr.bf16.mxu0 %v615
      %1135 = vmatmul.mubr.bf16.gmra.mrb[0].mxu0 %v614
      %v1136 = vpop.f32.mrb[0].mxu0
      %v1137 = vadd.f32 %v371, %v1136
      %v1138 = vpop.f32.mrb[0].mxu0
      %v1139 = vpop.f32.mrb[0].mxu0
      %v1140 = vadd.f32 %v371, %v1139
      %v1141 = vpop.f32.mrb[0].mxu0
      %1142 = vmatprep.mubr.bf16.mxu0 %v622
      %1143 = vmatmul.mubr.bf16.gmra.mrb[0].mxu0 %v621
      %v1144 = vpop.f32.mrb[0].mxu0
      %v1145 = vadd.f32 %v371, %v1144
      %v1146 = vpop.f32.mrb[0].mxu0
      %v1147 = vpop.f32.mrb[0].mxu0
      %v1148 = vadd.f32 %v371, %v1147
      %v1149 = vpop.f32.mrb[0].mxu0
      %1150 = vmatprep.mubr.bf16.mxu0 %v629
      %1151 = vmatmul.mubr.bf16.gmra.mrb[0].mxu0 %v628
      %v1152 = vpop.f32.mrb[0].mxu0
      %v1153 = vadd.f32 %v371, %v1152
      %v1154 = vpop.f32.mrb[0].mxu0
      %v1155 = vpop.f32.mrb[0].mxu0
      %v1156 = vadd.f32 %v371, %v1155
      %v1157 = vpop.f32.mrb[0].mxu0
      %1158 = vmatprep.mubr.bf16.mxu0 %v636
      %1159 = vmatmul.mubr.bf16.gmra.mrb[0].mxu0 %v635
      %v1160 = vpop.f32.mrb[0].mxu0
      %v1161 = vadd.f32 %v371, %v1160
      %v1162 = vpop.f32.mrb[0].mxu0
      %v1163 = vpop.f32.mrb[0].mxu0
      %v1164 = vadd.f32 %v371, %v1163
      %v1165 = vpop.f32.mrb[0].mxu0
      %1166 = vmatprep.mubr.bf16.mxu0 %v643
      %1167 = vmatmul.mubr.bf16.gmra.mrb[0].mxu0 %v642
      %v1168 = vpop.f32.mrb[0].mxu0
      %v1169 = vadd.f32 %v371, %v1168
      %v1170 = vpop.f32.mrb[0].mxu0
      %v1171 = vpop.f32.mrb[0].mxu0
      %v1172 = vadd.f32 %v371, %v1171
      %v1173 = vpop.f32.mrb[0].mxu0
      %1174 = vmatprep.mubr.bf16.mxu0 %v650
      %1175 = vmatmul.mubr.bf16.gmra.mrb[0].mxu0 %v649
      %v1176 = vpop.f32.mrb[0].mxu0
      %v1177 = vadd.f32 %v371, %v1176
      %v1178 = vpop.f32.mrb[0].mxu0
      %v1179 = vpop.f32.mrb[0].mxu0
      %v1180 = vadd.f32 %v371, %v1179
      %v1181 = vpop.f32.mrb[0].mxu0
      %1182 = vmatprep.mubr.bf16.mxu0 %v657
      %1183 = vmatmul.mubr.bf16.gmra.mrb[0].mxu0 %v656
      %v1184 = vpop.f32.mrb[0].mxu0
      %v1185 = vadd.f32 %v371, %v1184
      %v1186 = vpop.f32.mrb[0].mxu0
      %v1187 = vpop.f32.mrb[0].mxu0
      %v1188 = vadd.f32 %v371, %v1187
      %v1189 = vpop.f32.mrb[0].mxu0
      %1190 = vdwg.mxu0
      %1191 = vmatprep.subr.bf16.mxu0 0
      %1192 = vmatpush1.bf16.msra.mxu0 %v955
      %1193 = vmatprep.subr.bf16.mxu0 0
      %1194 = vmatpush1.bf16.msra.mxu0 %v956
      %1195 = vmatprep.subr.bf16.mxu0 0
      %1196 = vmatpush1.bf16.msra.mxu0 %v957
      %1197 = vmatprep.subr.bf16.mxu0 0
      %1198 = vmatpush1.bf16.msra.mxu0 %v958
      %1199 = vmatprep.subr.bf16.mxu0 0
      %1200 = vmatpush1.bf16.msra.mxu0 %v959
      %1201 = vmatprep.subr.bf16.mxu0 0
      %1202 = vmatpush1.bf16.msra.mxu0 %v960
      %1203 = vmatprep.subr.bf16.mxu0 0
      %1204 = vmatpush1.bf16.msra.mxu0 %v961
      %1205 = vmatprep.subr.bf16.mxu0 0
      %1206 = vmatpush1.bf16.msra.mxu0 %v962
      %1207 = vmatprep.subr.bf16.mxu0 0
      %1208 = vmatpush1.bf16.msra.mxu0 %v963
      %1209 = vmatprep.subr.bf16.mxu0 0
      %1210 = vmatpush1.bf16.msra.mxu0 %v964
      %1211 = vmatprep.subr.bf16.mxu0 0
      %1212 = vmatpush1.bf16.msra.mxu0 %v965
      %1213 = vmatprep.subr.bf16.mxu0 0
      %1214 = vmatpush1.bf16.msra.mxu0 %v966
      %1215 = vmatprep.subr.bf16.mxu0 0
      %1216 = vmatpush1.bf16.msra.mxu0 %v967
      %1217 = vmatprep.subr.bf16.mxu0 0
      %1218 = vmatpush1.bf16.msra.mxu0 %v968
      %1219 = vmatprep.subr.bf16.mxu0 0
      %1220 = vmatpush1.bf16.msra.mxu0 %v969
      %1221 = vmatprep.subr.bf16.mxu0 0
      %1222 = vmatpush1.bf16.msra.mxu0 %v970
      %1223 = vmatprep.mubr.bf16.mxu0 %v596
      %1224 = vmatmul.mubr.bf16.gmra.mrb[0].mxu0 %v595
      %v1225 = vpop.f32.mrb[0].mxu0
      %v1226 = vadd.f32 %v1113, %v1225
      %v1227 = vpop.f32.mrb[0].mxu0
      %v1228 = vpop.f32.mrb[0].mxu0
      %v1229 = vadd.f32 %v1116, %v1228
      %v1230 = vpop.f32.mrb[0].mxu0
      %1231 = vmatprep.mubr.bf16.mxu0 %v603
      %1232 = vmatmul.mubr.bf16.gmra.mrb[0].mxu0 %v602
      %v1233 = vpop.f32.mrb[0].mxu0
      %v1234 = vadd.f32 %v1121, %v1233
      %v1235 = vpop.f32.mrb[0].mxu0
      %v1236 = vpop.f32.mrb[0].mxu0
      %v1237 = vadd.f32 %v1124, %v1236
      %v1238 = vpop.f32.mrb[0].mxu0
      %1239 = vmatprep.mubr.bf16.mxu0 %v610
      %1240 = vmatmul.mubr.bf16.gmra.mrb[0].mxu0 %v609
      %v1241 = vpop.f32.mrb[0].mxu0
      %v1242 = vadd.f32 %v1129, %v1241
      %v1243 = vpop.f32.mrb[0].mxu0
      %v1244 = vpop.f32.mrb[0].mxu0
      %v1245 = vadd.f32 %v1132, %v1244
      %v1246 = vpop.f32.mrb[0].mxu0
      %1247 = vmatprep.mubr.bf16.mxu0 %v617
      %1248 = vmatmul.mubr.bf16.gmra.mrb[0].mxu0 %v616
      %v1249 = vpop.f32.mrb[0].mxu0
      %v1250 = vadd.f32 %v1137, %v1249
      %v1251 = vpop.f32.mrb[0].mxu0
      %v1252 = vpop.f32.mrb[0].mxu0
      %v1253 = vadd.f32 %v1140, %v1252
      %v1254 = vpop.f32.mrb[0].mxu0
      %1255 = vmatprep.mubr.bf16.mxu0 %v624
      %1256 = vmatmul.mubr.bf16.gmra.mrb[0].mxu0 %v623
      %v1257 = vpop.f32.mrb[0].mxu0
      %v1258 = vadd.f32 %v1145, %v1257
      %v1259 = vpop.f32.mrb[0].mxu0
      %v1260 = vpop.f32.mrb[0].mxu0
      %v1261 = vadd.f32 %v1148, %v1260
      %v1262 = vpop.f32.mrb[0].mxu0
      %1263 = vmatprep.mubr.bf16.mxu0 %v631
      %1264 = vmatmul.mubr.bf16.gmra.mrb[0].mxu0 %v630
      %v1265 = vpop.f32.mrb[0].mxu0
      %v1266 = vadd.f32 %v1153, %v1265
      %v1267 = vpop.f32.mrb[0].mxu0
      %v1268 = vpop.f32.mrb[0].mxu0
      %v1269 = vadd.f32 %v1156, %v1268
      %v1270 = vpop.f32.mrb[0].mxu0
      %1271 = vmatprep.mubr.bf16.mxu0 %v638
      %1272 = vmatmul.mubr.bf16.gmra.mrb[0].mxu0 %v637
      %v1273 = vpop.f32.mrb[0].mxu0
      %v1274 = vadd.f32 %v1161, %v1273
      %v1275 = vpop.f32.mrb[0].mxu0
      %v1276 = vpop.f32.mrb[0].mxu0
      %v1277 = vadd.f32 %v1164, %v1276
      %v1278 = vpop.f32.mrb[0].mxu0
      %1279 = vmatprep.mubr.bf16.mxu0 %v645
      %1280 = vmatmul.mubr.bf16.gmra.mrb[0].mxu0 %v644
      %v1281 = vpop.f32.mrb[0].mxu0
      %v1282 = vadd.f32 %v1169, %v1281
      %v1283 = vpop.f32.mrb[0].mxu0
      %v1284 = vpop.f32.mrb[0].mxu0
      %v1285 = vadd.f32 %v1172, %v1284
      %v1286 = vpop.f32.mrb[0].mxu0
      %1287 = vmatprep.mubr.bf16.mxu0 %v652
      %1288 = vmatmul.mubr.bf16.gmra.mrb[0].mxu0 %v651
      %v1289 = vpop.f32.mrb[0].mxu0
      %v1290 = vadd.f32 %v1177, %v1289
      %v1291 = vpop.f32.mrb[0].mxu0
      %v1292 = vpop.f32.mrb[0].mxu0
      %v1293 = vadd.f32 %v1180, %v1292
      %v1294 = vpop.f32.mrb[0].mxu0
      %1295 = vmatprep.mubr.bf16.mxu0 %v659
      %1296 = vmatmul.mubr.bf16.gmra.mrb[0].mxu0 %v658
      %v1297 = vpop.f32.mrb[0].mxu0
      %v1298 = vadd.f32 %v1185, %v1297
      %v1299 = vpop.f32.mrb[0].mxu0
      %v1300 = vpop.f32.mrb[0].mxu0
      %v1301 = vadd.f32 %v1188, %v1300
      %v1302 = vpop.f32.mrb[0].mxu0
      %1303 = vdwg.mxu0
      %1304 = vmatprep.subr.bf16.mxu0 0
      %1305 = vmatpush1.bf16.msra.mxu0 %v971
      %1306 = vmatprep.subr.bf16.mxu0 0
      %1307 = vmatpush1.bf16.msra.mxu0 %v972
      %1308 = vmatprep.subr.bf16.mxu0 0
      %1309 = vmatpush1.bf16.msra.mxu0 %v973
      %1310 = vmatprep.subr.bf16.mxu0 0
      %1311 = vmatpush1.bf16.msra.mxu0 %v974
      %1312 = vmatprep.subr.bf16.mxu0 0
      %1313 = vmatpush1.bf16.msra.mxu0 %v975
      %1314 = vmatprep.subr.bf16.mxu0 0
      %1315 = vmatpush1.bf16.msra.mxu0 %v976
      %1316 = vmatprep.subr.bf16.mxu0 0
      %1317 = vmatpush1.bf16.msra.mxu0 %v977
      %1318 = vmatprep.subr.bf16.mxu0 0
      %1319 = vmatpush1.bf16.msra.mxu0 %v978
      %1320 = vmatprep.subr.bf16.mxu0 0
      %1321 = vmatpush1.bf16.msra.mxu0 %v979
      %1322 = vmatprep.subr.bf16.mxu0 0
      %1323 = vmatpush1.bf16.msra.mxu0 %v980
      %1324 = vmatprep.subr.bf16.mxu0 0
      %1325 = vmatpush1.bf16.msra.mxu0 %v981
      %1326 = vmatprep.subr.bf16.mxu0 0
      %1327 = vmatpush1.bf16.msra.mxu0 %v982
      %1328 = vmatprep.subr.bf16.mxu0 0
      %1329 = vmatpush1.bf16.msra.mxu0 %v983
      %1330 = vmatprep.subr.bf16.mxu0 0
      %1331 = vmatpush1.bf16.msra.mxu0 %v984
      %1332 = vmatprep.subr.bf16.mxu0 0
      %1333 = vmatpush1.bf16.msra.mxu0 %v985
      %1334 = vmatprep.subr.bf16.mxu0 0
      %1335 = vmatpush1.bf16.msra.mxu0 %v986
      %1336 = vmatprep.mubr.bf16.mxu0 %v598
      %1337 = vmatmul.mubr.bf16.gmra.mrb[0].mxu0 %v597
      %v1338 = vpop.f32.mrb[0].mxu0
      %v1339 = vadd.f32 %v1226, %v1338
      %v1340 = vpop.f32.mrb[0].mxu0
      %v1341 = vpop.f32.mrb[0].mxu0
      %v1342 = vadd.f32 %v1229, %v1341
      %v1343 = vpop.f32.mrb[0].mxu0
      %1344 = vmatprep.mubr.bf16.mxu0 %v605
      %1345 = vmatmul.mubr.bf16.gmra.mrb[0].mxu0 %v604
      %v1346 = vpop.f32.mrb[0].mxu0
      %v1347 = vadd.f32 %v1234, %v1346
      %v1348 = vpop.f32.mrb[0].mxu0
      %v1349 = vpop.f32.mrb[0].mxu0
      %v1350 = vadd.f32 %v1237, %v1349
      %v1351 = vpop.f32.mrb[0].mxu0
      %1352 = vmatprep.mubr.bf16.mxu0 %v612
      %1353 = vmatmul.mubr.bf16.gmra.mrb[0].mxu0 %v611
      %v1354 = vpop.f32.mrb[0].mxu0
      %v1355 = vadd.f32 %v1242, %v1354
      %v1356 = vpop.f32.mrb[0].mxu0
      %v1357 = vpop.f32.mrb[0].mxu0
      %v1358 = vadd.f32 %v1245, %v1357
      %v1359 = vpop.f32.mrb[0].mxu0
      %1360 = vmatprep.mubr.bf16.mxu0 %v619
      %1361 = vmatmul.mubr.bf16.gmra.mrb[0].mxu0 %v618
      %v1362 = vpop.f32.mrb[0].mxu0
      %v1363 = vadd.f32 %v1250, %v1362
      %v1364 = vpop.f32.mrb[0].mxu0
      %v1365 = vpop.f32.mrb[0].mxu0
      %v1366 = vadd.f32 %v1253, %v1365
      %v1367 = vpop.f32.mrb[0].mxu0
      %1368 = vmatprep.mubr.bf16.mxu0 %v626
      %1369 = vmatmul.mubr.bf16.gmra.mrb[0].mxu0 %v625
      %v1370 = vpop.f32.mrb[0].mxu0
      %v1371 = vadd.f32 %v1258, %v1370
      %v1372 = vpop.f32.mrb[0].mxu0
      %v1373 = vpop.f32.mrb[0].mxu0
      %v1374 = vadd.f32 %v1261, %v1373
      %v1375 = vpop.f32.mrb[0].mxu0
      %1376 = vmatprep.mubr.bf16.mxu0 %v633
      %1377 = vmatmul.mubr.bf16.gmra.mrb[0].mxu0 %v632
      %v1378 = vpop.f32.mrb[0].mxu0
      %v1379 = vadd.f32 %v1266, %v1378
      %v1380 = vpop.f32.mrb[0].mxu0
      %v1381 = vpop.f32.mrb[0].mxu0
      %v1382 = vadd.f32 %v1269, %v1381
      %v1383 = vpop.f32.mrb[0].mxu0
      %1384 = vmatprep.mubr.bf16.mxu0 %v640
      %1385 = vmatmul.mubr.bf16.gmra.mrb[0].mxu0 %v639
      %v1386 = vpop.f32.mrb[0].mxu0
      %v1387 = vadd.f32 %v1274, %v1386
      %v1388 = vpop.f32.mrb[0].mxu0
      %v1389 = vpop.f32.mrb[0].mxu0
      %v1390 = vadd.f32 %v1277, %v1389
      %v1391 = vpop.f32.mrb[0].mxu0
      %1392 = vmatprep.mubr.bf16.mxu0 %v647
      %1393 = vmatmul.mubr.bf16.gmra.mrb[0].mxu0 %v646
      %v1394 = vpop.f32.mrb[0].mxu0
      %v1395 = vadd.f32 %v1282, %v1394
      %v1396 = vpop.f32.mrb[0].mxu0
      %v1397 = vpop.f32.mrb[0].mxu0
      %v1398 = vadd.f32 %v1285, %v1397
      %v1399 = vpop.f32.mrb[0].mxu0
      %1400 = vmatprep.mubr.bf16.mxu0 %v654
      %1401 = vmatmul.mubr.bf16.gmra.mrb[0].mxu0 %v653
      %v1402 = vpop.f32.mrb[0].mxu0
      %v1403 = vadd.f32 %v1290, %v1402
      %v1404 = vpop.f32.mrb[0].mxu0
      %v1405 = vpop.f32.mrb[0].mxu0
      %v1406 = vadd.f32 %v1293, %v1405
      %v1407 = vpop.f32.mrb[0].mxu0
      %1408 = vmatprep.mubr.bf16.mxu0 %v661
      %1409 = vmatmul.mubr.bf16.gmra.mrb[0].mxu0 %v660
      %v1410 = vpop.f32.mrb[0].mxu0
      %v1411 = vadd.f32 %v1298, %v1410
      %v1412 = vpop.f32.mrb[0].mxu0
      %v1413 = vpop.f32.mrb[0].mxu0
      %v1414 = vadd.f32 %v1301, %v1413
      %v1415 = vpop.f32.mrb[0].mxu0
      %1416 = vdwg.mxu0
      %1417 = vmatprep.subr.bf16.mxu0 0
      %1418 = vmatpush1.bf16.msra.mxu0 %v987
      %1419 = vmatprep.subr.bf16.mxu0 0
      %1420 = vmatpush1.bf16.msra.mxu0 %v988
      %1421 = vmatprep.subr.bf16.mxu0 0
      %1422 = vmatpush1.bf16.msra.mxu0 %v989
      %1423 = vmatprep.subr.bf16.mxu0 0
      %1424 = vmatpush1.bf16.msra.mxu0 %v990
      %1425 = vmatprep.subr.bf16.mxu0 0
      %1426 = vmatpush1.bf16.msra.mxu0 %v991
      %1427 = vmatprep.subr.bf16.mxu0 0
      %1428 = vmatpush1.bf16.msra.mxu0 %v992
      %1429 = vmatprep.subr.bf16.mxu0 0
      %1430 = vmatpush1.bf16.msra.mxu0 0
      %1431 = vmatprep.subr.bf16.mxu0 0
      %1432 = vmatpush1.bf16.msra.mxu0 0
      %1433 = vmatprep.subr.bf16.mxu0 0
      %1434 = vmatpush1.bf16.msra.mxu0 0
      %1435 = vmatprep.subr.bf16.mxu0 0
      %1436 = vmatpush1.bf16.msra.mxu0 0
      %1437 = vmatprep.subr.bf16.mxu0 0
      %1438 = vmatpush1.bf16.msra.mxu0 0
      %1439 = vmatprep.subr.bf16.mxu0 0
      %1440 = vmatpush1.bf16.msra.mxu0 0
      %1441 = vmatprep.subr.bf16.mxu0 0
      %1442 = vmatpush1.bf16.msra.mxu0 0
      %1443 = vmatprep.subr.bf16.mxu0 0
      %1444 = vmatpush1.bf16.msra.mxu0 0
      %1445 = vmatprep.subr.bf16.mxu0 0
      %1446 = vmatpush1.bf16.msra.mxu0 0
      %1447 = vmatprep.subr.bf16.mxu0 0
      %1448 = vmatpush1.bf16.msra.mxu0 0
      %1449 = vmatprep.mubr.bf16.mxu0 0
      %1450 = vmatmul.mubr.bf16.gmra.mrb[0].mxu0 %v1049
      %v1451 = vpop.f32.mrb[0].mxu0
      %v1452 = vadd.f32 %v1339, %v1451
      %v1453 = vpop.f32.mrb[0].mxu0
      %v1454 = vpop.f32.mrb[0].mxu0
      %v1455 = vadd.f32 %v1342, %v1454
      %v1456 = vpop.f32.mrb[0].mxu0
      %1457 = vmatprep.mubr.bf16.mxu0 0
      %1458 = vmatmul.mubr.bf16.gmra.mrb[0].mxu0 %v1052
      %v1459 = vpop.f32.mrb[0].mxu0
      %v1460 = vadd.f32 %v1347, %v1459
      %v1461 = vpop.f32.mrb[0].mxu0
      %v1462 = vpop.f32.mrb[0].mxu0
      %v1463 = vadd.f32 %v1350, %v1462
      %v1464 = vpop.f32.mrb[0].mxu0
      %1465 = vmatprep.mubr.bf16.mxu0 0
      %1466 = vmatmul.mubr.bf16.gmra.mrb[0].mxu0 %v1055
      %v1467 = vpop.f32.mrb[0].mxu0
      %v1468 = vadd.f32 %v1355, %v1467
      %v1469 = vpop.f32.mrb[0].mxu0
      %v1470 = vpop.f32.mrb[0].mxu0
      %v1471 = vadd.f32 %v1358, %v1470
      %v1472 = vpop.f32.mrb[0].mxu0
      %1473 = vmatprep.mubr.bf16.mxu0 0
      %1474 = vmatmul.mubr.bf16.gmra.mrb[0].mxu0 %v1058
      %v1475 = vpop.f32.mrb[0].mxu0
      %v1476 = vadd.f32 %v1363, %v1475
      %v1477 = vpop.f32.mrb[0].mxu0
      %v1478 = vpop.f32.mrb[0].mxu0
      %v1479 = vadd.f32 %v1366, %v1478
      %v1480 = vpop.f32.mrb[0].mxu0
      %1481 = vmatprep.mubr.bf16.mxu0 0
      %1482 = vmatmul.mubr.bf16.gmra.mrb[0].mxu0 %v1061
      %v1483 = vpop.f32.mrb[0].mxu0
      %v1484 = vadd.f32 %v1371, %v1483
      %v1485 = vpop.f32.mrb[0].mxu0
      %v1486 = vpop.f32.mrb[0].mxu0
      %v1487 = vadd.f32 %v1374, %v1486
      %v1488 = vpop.f32.mrb[0].mxu0
      %1489 = vmatprep.mubr.bf16.mxu0 0
      %1490 = vmatmul.mubr.bf16.gmra.mrb[0].mxu0 %v1064
      %v1491 = vpop.f32.mrb[0].mxu0
      %v1492 = vadd.f32 %v1379, %v1491
      %v1493 = vpop.f32.mrb[0].mxu0
      %v1494 = vpop.f32.mrb[0].mxu0
      %v1495 = vadd.f32 %v1382, %v1494
      %v1496 = vpop.f32.mrb[0].mxu0
      %1497 = vmatprep.mubr.bf16.mxu0 0
      %1498 = vmatmul.mubr.bf16.gmra.mrb[0].mxu0 %v1067
      %v1499 = vpop.f32.mrb[0].mxu0
      %v1500 = vadd.f32 %v1387, %v1499
      %v1501 = vpop.f32.mrb[0].mxu0
      %v1502 = vpop.f32.mrb[0].mxu0
      %v1503 = vadd.f32 %v1390, %v1502
      %v1504 = vpop.f32.mrb[0].mxu0
      %1505 = vmatprep.mubr.bf16.mxu0 0
      %1506 = vmatmul.mubr.bf16.gmra.mrb[0].mxu0 %v1070
      %v1507 = vpop.f32.mrb[0].mxu0
      %v1508 = vadd.f32 %v1395, %v1507
      %v1509 = vpop.f32.mrb[0].mxu0
      %v1510 = vpop.f32.mrb[0].mxu0
      %v1511 = vadd.f32 %v1398, %v1510
      %v1512 = vpop.f32.mrb[0].mxu0
      %1513 = vmatprep.mubr.bf16.mxu0 0
      %1514 = vmatmul.mubr.bf16.gmra.mrb[0].mxu0 %v1073
      %v1515 = vpop.f32.mrb[0].mxu0
      %v1516 = vadd.f32 %v1403, %v1515
      %v1517 = vpop.f32.mrb[0].mxu0
      %v1518 = vpop.f32.mrb[0].mxu0
      %v1519 = vadd.f32 %v1406, %v1518
      %v1520 = vpop.f32.mrb[0].mxu0
      %1521 = vmatprep.mubr.bf16.mxu0 0
      %1522 = vmatmul.mubr.bf16.gmra.mrb[0].mxu0 %v1076
      %v1523 = vpop.f32.mrb[0].mxu0
      %v1524 = vadd.f32 %v1411, %v1523
      %v1525 = vpop.f32.mrb[0].mxu0
      %v1526 = vpop.f32.mrb[0].mxu0
      %v1527 = vadd.f32 %v1414, %v1526
      %v1528 = vpop.f32.mrb[0].mxu0
      %1529 = vdwg.mxu0
      %v1530 = vsub.f32 0.0, %v1452
      %v1531 = vsub.f32 0.0, %v1455
      %v1532 = vsub.f32 0.0, %v1460
      %v1533 = vsub.f32 0.0, %v1463
      %v1534 = vsub.f32 0.0, %v1468
      %v1535 = vsub.f32 0.0, %v1471
      %v1536 = vsub.f32 0.0, %v1476
      %v1537 = vsub.f32 0.0, %v1479
      %v1538 = vsub.f32 0.0, %v1484
      %v1539 = vsub.f32 0.0, %v1487
      %v1540 = vsub.f32 0.0, %v1492
      %v1541 = vsub.f32 0.0, %v1495
      %v1542 = vsub.f32 0.0, %v1500
      %v1543 = vsub.f32 0.0, %v1503
      %v1544 = vsub.f32 0.0, %v1508
      %v1545 = vsub.f32 0.0, %v1511
      %v1546 = vsub.f32 0.0, %v1516
      %v1547 = vsub.f32 0.0, %v1519
      %v1548 = vsub.f32 0.0, %v1524
      %v1549 = vsub.f32 0.0, %v1527
      %v1550 = vmul.f32 %v1530, 1.442695
      %v1551 = vpow.pop %v1550
      %v1552 = vmul.f32 %v1531, 1.442695
      %v1553 = vpow.pop %v1552
      %v1554 = vmul.f32 %v1532, 1.442695
      %v1555 = vpow.pop %v1554
      %v1556 = vmul.f32 %v1533, 1.442695
      %v1557 = vpow.pop %v1556
      %v1558 = vmul.f32 %v1534, 1.442695
      %v1559 = vpow.pop %v1558
      %v1560 = vmul.f32 %v1535, 1.442695
      %v1561 = vpow.pop %v1560
      %v1562 = vmul.f32 %v1536, 1.442695
      %v1563 = vpow.pop %v1562
      %v1564 = vmul.f32 %v1537, 1.442695
      %v1565 = vpow.pop %v1564
      %v1566 = vmul.f32 %v1538, 1.442695
      %v1567 = vpow.pop %v1566
      %v1568 = vmul.f32 %v1539, 1.442695
      %v1569 = vpow.pop %v1568
      %v1570 = vmul.f32 %v1540, 1.442695
      %v1571 = vpow.pop %v1570
      %v1572 = vmul.f32 %v1541, 1.442695
      %v1573 = vpow.pop %v1572
      %v1574 = vmul.f32 %v1542, 1.442695
      %v1575 = vpow.pop %v1574
      %v1576 = vmul.f32 %v1543, 1.442695
      %v1577 = vpow.pop %v1576
      %v1578 = vmul.f32 %v1544, 1.442695
      %v1579 = vpow.pop %v1578
      %v1580 = vmul.f32 %v1545, 1.442695
      %v1581 = vpow.pop %v1580
      %v1582 = vmul.f32 %v1546, 1.442695
      %v1583 = vpow.pop %v1582
      %v1584 = vmul.f32 %v1547, 1.442695
      %v1585 = vpow.pop %v1584
      %v1586 = vmul.f32 %v1548, 1.442695
      %v1587 = vpow.pop %v1586
      %v1588 = vmul.f32 %v1549, 1.442695
      %v1589 = vpow.pop %v1588
      %v1590 = vadd.f32 %v1551, 1.0
      %v1591 = vadd.f32 %v1553, 1.0
      %v1592 = vadd.f32 %v1555, 1.0
      %v1593 = vadd.f32 %v1557, 1.0
      %v1594 = vadd.f32 %v1559, 1.0
      %v1595 = vadd.f32 %v1561, 1.0
      %v1596 = vadd.f32 %v1563, 1.0
      %v1597 = vadd.f32 %v1565, 1.0
      %v1598 = vadd.f32 %v1567, 1.0
      %v1599 = vadd.f32 %v1569, 1.0
      %v1600 = vadd.f32 %v1571, 1.0
      %v1601 = vadd.f32 %v1573, 1.0
      %v1602 = vadd.f32 %v1575, 1.0
      %v1603 = vadd.f32 %v1577, 1.0
      %v1604 = vadd.f32 %v1579, 1.0
      %v1605 = vadd.f32 %v1581, 1.0
      %v1606 = vadd.f32 %v1583, 1.0
      %v1607 = vadd.f32 %v1585, 1.0
      %v1608 = vadd.f32 %v1587, 1.0
      %v1609 = vadd.f32 %v1589, 1.0
      %v1610 = vrcp.pop %v1590
      %v1611 = vrcp.pop %v1591
      %v1612 = vrcp.pop %v1592
      %v1613 = vrcp.pop %v1593
      %v1614 = vrcp.pop %v1594
      %v1615 = vrcp.pop %v1595
      %v1616 = vrcp.pop %v1596
      %v1617 = vrcp.pop %v1597
      %v1618 = vrcp.pop %v1598
      %v1619 = vrcp.pop %v1599
      %v1620 = vrcp.pop %v1600
      %v1621 = vrcp.pop %v1601
      %v1622 = vrcp.pop %v1602
      %v1623 = vrcp.pop %v1603
      %v1624 = vrcp.pop %v1604
      %v1625 = vrcp.pop %v1605
      %v1626 = vrcp.pop %v1606
      %v1627 = vrcp.pop %v1607
      %v1628 = vrcp.pop %v1608
      %v1629 = vrcp.pop %v1609
      %1650 = vrot.lane.b32.xlu0 %v1610, 96
      %v1651 = vpop.permute.xlu0 %1650
      %1652 = vrot.lane.b32.xlu0 %v1611, 96
      %v1653 = vpop.permute.xlu0 %1652
      %1654 = vrot.lane.b32.xlu0 %v1612, 96
      %v1655 = vpop.permute.xlu0 %1654
      %1656 = vrot.lane.b32.xlu0 %v1613, 96
      %v1657 = vpop.permute.xlu0 %1656
      %1658 = vrot.lane.b32.xlu0 %v1614, 96
      %v1659 = vpop.permute.xlu0 %1658
      %1660 = vrot.lane.b32.xlu0 %v1615, 96
      %v1661 = vpop.permute.xlu0 %1660
      %1662 = vrot.lane.b32.xlu0 %v1616, 96
      %v1663 = vpop.permute.xlu0 %1662
      %1664 = vrot.lane.b32.xlu0 %v1617, 96
      %v1665 = vpop.permute.xlu0 %1664
      %1666 = vrot.lane.b32.xlu0 %v1618, 96
      %v1667 = vpop.permute.xlu0 %1666
      %1668 = vrot.lane.b32.xlu0 %v1619, 96
      %v1669 = vpop.permute.xlu0 %1668
      %1670 = vrot.lane.b32.xlu0 %v1620, 96
      %v1671 = vpop.permute.xlu0 %1670
      %1672 = vrot.lane.b32.xlu0 %v1621, 96
      %v1673 = vpop.permute.xlu0 %1672
      %1674 = vrot.lane.b32.xlu0 %v1622, 96
      %v1675 = vpop.permute.xlu0 %1674
      %1676 = vrot.lane.b32.xlu0 %v1623, 96
      %v1677 = vpop.permute.xlu0 %1676
      %1678 = vrot.lane.b32.xlu0 %v1624, 96
      %v1679 = vpop.permute.xlu0 %1678
      %1680 = vrot.lane.b32.xlu0 %v1625, 96
      %v1681 = vpop.permute.xlu0 %1680
      %1682 = vrot.lane.b32.xlu0 %v1626, 96
      %v1683 = vpop.permute.xlu0 %1682
      %1684 = vrot.lane.b32.xlu0 %v1627, 96
      %v1685 = vpop.permute.xlu0 %1684
      %1686 = vrot.lane.b32.xlu0 %v1628, 96
      %v1687 = vpop.permute.xlu0 %1686
      %1688 = vrot.lane.b32.xlu0 %v1629, 96
      %v1689 = vpop.permute.xlu0 %1688
      %v1710 = vmul.f32 %v1452, %v1651
      %v1711 = vmul.f32 %v1455, %v1653
      %v1712 = vmul.f32 %v1460, %v1655
      %v1713 = vmul.f32 %v1463, %v1657
      %v1714 = vmul.f32 %v1468, %v1659
      %v1715 = vmul.f32 %v1471, %v1661
      %v1716 = vmul.f32 %v1476, %v1663
      %v1717 = vmul.f32 %v1479, %v1665
      %v1718 = vmul.f32 %v1484, %v1667
      %v1719 = vmul.f32 %v1487, %v1669
      %v1720 = vmul.f32 %v1492, %v1671
      %v1721 = vmul.f32 %v1495, %v1673
      %v1722 = vmul.f32 %v1500, %v1675
      %v1723 = vmul.f32 %v1503, %v1677
      %v1724 = vmul.f32 %v1508, %v1679
      %v1725 = vmul.f32 %v1511, %v1681
      %v1726 = vmul.f32 %v1516, %v1683
      %v1727 = vmul.f32 %v1519, %v1685
      %v1728 = vmul.f32 %v1524, %v1687
      %v1729 = vmul.f32 %v1527, %v1689
      %vm1730 = vcmask 261120
      %1731 = vst.msk [vmem:[%s175] sm:$0xff] %vm1730, %v1710
      %1732 = vst.msk [vmem:[%s175 + $0x8] sm:$0xff] %vm1730, %v1711
      %1733 = vst.msk [vmem:[%s175 + $0x10] sm:$0xff] %vm1730, %v1712
      %1734 = vst.msk [vmem:[%s175 + $0x18] sm:$0xff] %vm1730, %v1713
      %1735 = vst.msk [vmem:[%s175 + $0x20] sm:$0xff] %vm1730, %v1714
      %1736 = vst.msk [vmem:[%s175 + $0x28] sm:$0xff] %vm1730, %v1715
      %1737 = vst.msk [vmem:[%s175 + $0x30] sm:$0xff] %vm1730, %v1716
      %1738 = vst.msk [vmem:[%s175 + $0x38] sm:$0xff] %vm1730, %v1717
      %1739 = vst.msk [vmem:[%s175 + $0x40] sm:$0xff] %vm1730, %v1718
      %1740 = vst.msk [vmem:[%s175 + $0x48] sm:$0xff] %vm1730, %v1719
      %1741 = vst.msk [vmem:[%s175 + $0x50] sm:$0xff] %vm1730, %v1720
      %1742 = vst.msk [vmem:[%s175 + $0x58] sm:$0xff] %vm1730, %v1721
      %1743 = vst.msk [vmem:[%s175 + $0x60] sm:$0xff] %vm1730, %v1722
      %1744 = vst.msk [vmem:[%s175 + $0x68] sm:$0xff] %vm1730, %v1723
      %1745 = vst.msk [vmem:[%s175 + $0x70] sm:$0xff] %vm1730, %v1724
      %1746 = vst.msk [vmem:[%s175 + $0x78] sm:$0xff] %vm1730, %v1725
      %1747 = vst.msk [vmem:[%s175 + $0x80] sm:$0xff] %vm1730, %v1726
      %1748 = vst.msk [vmem:[%s175 + $0x88] sm:$0xff] %vm1730, %v1727
      %1749 = vst.msk [vmem:[%s175 + $0x90] sm:$0xff] %vm1730, %v1728
      %1750 = vst.msk [vmem:[%s175 + $0x98] sm:$0xff] %vm1730, %v1729
      %s1751 = smul.u32 20, %s14
      %p1752 = scmp.lt.s32.totalorder %s1751, 39
      %s1753 = scalar_select %p1752, %s1751, 39
      %s1754 = smul.addr %s1753, 8
      %s1755 = scalar_lea.vmem %s3, %s1754
      // Predicated region
      $region33: #{unified_discriminator_forward.10} parent=31 // pred_check
        %p1756 = pneg %p100
      $region34: #{unified_discriminator_forward.10} parent=31 // pred_check_branch
        %1758 = sbr.rel (%p1756) target = $region36
      $region35: #{unified_discriminator_forward.10} parent=31 // pred_region
        %s1759 = smul.u32 20, %s14
      $region36: #{unified_discriminator_forward.10} parent=31 // pred_fallthru
        _
    $region32: #{unified_discriminator_forward.10} parent=5 // pred_fallthru
      _
    %p1760 = scmp.le.s32.totalorder 2, %s9
    // Predicated region
    $region37: #{unified_discriminator_forward.10} parent=5 // pred_check
      %p1761 = pneg %p1760
    $region38: #{unified_discriminator_forward.10} parent=5 // pred_check_branch
      %1763 = sbr.rel (%p1761) target = $region40
    $region39: #{unified_discriminator_forward.10} parent=5 // pred_region
      %s1764 = ssub.s32 %s9, 2
      // Predicated region
      $region41: #{unified_discriminator_forward.10} parent=39 // pred_check
        %p1765 = pneg %p106
      $region42: #{unified_discriminator_forward.10} parent=39 // pred_check_branch
        %1767 = sbr.rel (%p1765) target = $region44
      $region43: #{unified_discriminator_forward.10} parent=39 // pred_region
        %s1768 = smul.u32 20, %s15
        %p1769 = scmp.lt.s32.totalorder %s1768, 39
        %s1770 = scalar_select %p1769, %s1768, 39
        %s1771 = smul.addr %s1770, 8
        %s1772 = scalar_lea.vmem %s3, %s1771
      $region44: #{unified_discriminator_forward.10} parent=39 // pred_fallthru
        _
    $region40: #{unified_discriminator_forward.10} parent=5 // pred_fallthru
      _
  $region6: #{unified_discriminator_forward.10} parent=0 // loop_footer
    %s13 = sadd.s32 1, %s9
  $region7: #{unified_discriminator_forward.10} parent=0 // loop_footer_branch
    %8 = sbr.rel target = $region3
  $region8: #{unified_discriminator_forward.10} parent=0 // loop_exit
    _

// kernel: unified_discriminator_forward.11
$region0: #{unified_discriminator_forward.11}
  #allocation0 [shape = 'u32[]', space=smem, size = 0x4, offset = 0x4, fixed_abs, tag = 'smem constant byte address 0x4 - core index']
  #allocation1 [shape = 'u32[144,128]{1,0:T(1,128)}', space=vmem, size = 0x12000, scoped, tag = 'internal scratch']
  %s0 = inlined_call_operand.vmem [shape: bf16[160,648], index: 0, kind: input, shape index: {}]
  %s1 = inlined_call_operand.vmem [shape: bf16[648,64], index: 1, kind: input, shape index: {}]
  %s2 = inlined_call_operand.vmem [shape: f32[1,64], index: 2, kind: input, shape index: {}]
  %s3 = inlined_call_operand.vmem [shape: f32[160,32], index: 3, kind: output, shape index: {}]
  %s4 = sld [smem:[#allocation0]]
  $region45: #{unified_discriminator_forward.11} parent=0
    _
  %s6 = ssub.s32 1, %s4
  %s7 = scalar_select 0, %s6, %s4
  loop: start=0, step=1, limit=4
  $region2: #{unified_discriminator_forward.11} parent=0 // loop_pre_header
    _
  $region3: #{unified_discriminator_forward.11} parent=0 // loop_header
    %s9 = sphi 0, %s13
    %p10 = scmp.ge.s32.totalorder %s9, 4
    %s19 = sphi 0, %s21
    %s22 = sphi 0, %s19
    %s23 = sphi 0, %s22
    %s39 = sphi 0, %s23
    %s43 = sphi 0, %s43
    %s45 = sphi 0, %s43
    %s46 = sphi 0, %s45
    %s60 = sphi 0, %s46
    %s64 = sphi 0, %s64
    %s66 = sphi 0, %s64
    %s67 = sphi 0, %s66
    %s81 = sphi 0, %s67
    %s87 = sphi 0, %s89
    %s90 = sphi 0, %s87
    %s91 = sphi 0, %s90
    %s107 = sphi 0, %s91
  $region4: #{unified_discriminator_forward.11} parent=0 // loop_header_branch
    %12 = sbr.rel (%p10) target = $region8
  $region5: #{unified_discriminator_forward.11} parent=0 // loop_body
    %s14 = ssub.s32 %s9, 1
    %s15 = ssub.s32 %s9, 2
    %s16 = sadd.s32 %s9, 1
    %s17 = ssub.s32 %s9, %s16
    %p18 = scmp.eq.s32.totalorder %s17, 0
    %s20 = sadd.s32 %s19, 1
    %s21 = scalar_select %p18, %s19, %s20
    %p24 = pneg %p18
    %p25 = scmp.eq.s32.totalorder %s9, 1
    %p26 = por %p24, %p25
    %p27 = scmp.ne.s32.totalorder %s19, %s22
    %p28 = scmp.eq.s32.totalorder %s9, 0
    %p29 = por %p27, %p28
    %p30 = scmp.ne.s32.totalorder %s19, %s22
    %p31 = scmp.eq.s32.totalorder %s14, 1
    %p32 = por %p30, %p31
    %p33 = scmp.ne.s32.totalorder %s22, %s23
    %p34 = scmp.eq.s32.totalorder %s14, 0
    %p35 = por %p33, %p34
    %p36 = scmp.ne.s32.totalorder %s22, %s23
    %p37 = scmp.eq.s32.totalorder %s15, 1
    %p38 = por %p36, %p37
    %p40 = scmp.ne.s32.totalorder %s23, %s39
    %p41 = scmp.eq.s32.totalorder %s15, 0
    %p42 = por %p40, %p41
    %s44 = sadd.s32 %s43, 1
    %p47 = scmp.eq.s32.totalorder %s9, 1
    %p48 = scmp.ne.s32.totalorder %s43, %s45
    %p49 = scmp.eq.s32.totalorder %s9, 0
    %p50 = por %p48, %p49
    %p51 = scmp.ne.s32.totalorder %s43, %s45
    %p52 = scmp.eq.s32.totalorder %s14, 1
    %p53 = por %p51, %p52
    %p54 = scmp.ne.s32.totalorder %s45, %s46
    %p55 = scmp.eq.s32.totalorder %s14, 0
    %p56 = por %p54, %p55
    %p57 = scmp.ne.s32.totalorder %s45, %s46
    %p58 = scmp.eq.s32.totalorder %s15, 1
    %p59 = por %p57, %p58
    %p61 = scmp.ne.s32.totalorder %s46, %s60
    %p62 = scmp.eq.s32.totalorder %s15, 0
    %p63 = por %p61, %p62
    %s65 = sadd.s32 %s64, 1
    %p68 = scmp.eq.s32.totalorder %s9, 1
    %p69 = scmp.ne.s32.totalorder %s64, %s66
    %p70 = scmp.eq.s32.totalorder %s9, 0
    %p71 = por %p69, %p70
    %p72 = scmp.ne.s32.totalorder %s64, %s66
    %p73 = scmp.eq.s32.totalorder %s14, 1
    %p74 = por %p72, %p73
    %p75 = scmp.ne.s32.totalorder %s66, %s67
    %p76 = scmp.eq.s32.totalorder %s14, 0
    %p77 = por %p75, %p76
    %p78 = scmp.ne.s32.totalorder %s66, %s67
    %p79 = scmp.eq.s32.totalorder %s15, 1
    %p80 = por %p78, %p79
    %p82 = scmp.ne.s32.totalorder %s67, %s81
    %p83 = scmp.eq.s32.totalorder %s15, 0
    %p84 = por %p82, %p83
    %s85 = ssub.s32 %s9, %s16
    %p86 = scmp.eq.s32.totalorder %s85, 0
    %s88 = sadd.s32 %s87, 1
    %s89 = scalar_select %p86, %s87, %s88
    %p92 = pneg %p86
    %p93 = scmp.eq.s32.totalorder %s9, 1
    %p94 = por %p92, %p93
    %p95 = scmp.ne.s32.totalorder %s87, %s90
    %p96 = scmp.eq.s32.totalorder %s9, 0
    %p97 = por %p95, %p96
    %p98 = scmp.ne.s32.totalorder %s87, %s90
    %p99 = scmp.eq.s32.totalorder %s14, 1
    %p100 = por %p98, %p99
    %p101 = scmp.ne.s32.totalorder %s90, %s91
    %p102 = scmp.eq.s32.totalorder %s14, 0
    %p103 = por %p101, %p102
    %p104 = scmp.ne.s32.totalorder %s90, %s91
    %p105 = scmp.eq.s32.totalorder %s15, 1
    %p106 = por %p104, %p105
    %p108 = scmp.ne.s32.totalorder %s91, %s107
    %p109 = scmp.eq.s32.totalorder %s15, 0
    %p110 = por %p108, %p109
    %p111 = scmp.le.s32.totalorder 1, %s9
    %p112 = scmp.lt.s32.totalorder %s9, 3
    %p113 = pnand %p111, %p112
    %p114 = pneg %p113
    // Predicated region
    $region9: #{unified_discriminator_forward.11} parent=5 // pred_check
      _
    $region10: #{unified_discriminator_forward.11} parent=5 // pred_check_branch
      %116 = sbr.rel (%p113) target = $region12
    $region11: #{unified_discriminator_forward.11} parent=5 // pred_region
      %s117 = ssub.s32 %s9, 1
      // Predicated region
      $region13: #{unified_discriminator_forward.11} parent=11 // pred_check
        %p118 = pneg %p56
      $region14: #{unified_discriminator_forward.11} parent=11 // pred_check_branch
        %120 = sbr.rel (%p118) target = $region16
      $region15: #{unified_discriminator_forward.11} parent=11 // pred_region
        _
      $region16: #{unified_discriminator_forward.11} parent=11 // pred_fallthru
        _
      // Predicated region
      $region17: #{unified_discriminator_forward.11} parent=11 // pred_check
        %p121 = pneg %p77
      $region18: #{unified_discriminator_forward.11} parent=11 // pred_check_branch
        %123 = sbr.rel (%p121) target = $region20
      $region19: #{unified_discriminator_forward.11} parent=11 // pred_region
        _
      $region20: #{unified_discriminator_forward.11} parent=11 // pred_fallthru
        _
    $region12: #{unified_discriminator_forward.11} parent=5 // pred_fallthru
      _
    %p124 = scmp.lt.s32.totalorder %s9, 2
    // Predicated region
    $region21: #{unified_discriminator_forward.11} parent=5 // pred_check
      %p125 = pneg %p124
    $region22: #{unified_discriminator_forward.11} parent=5 // pred_check_branch
      %127 = sbr.rel (%p125) target = $region24
    $region23: #{unified_discriminator_forward.11} parent=5 // pred_region
      // Predicated region
      $region25: #{unified_discriminator_forward.11} parent=23 // pred_check
        %p128 = pneg %p29
      $region26: #{unified_discriminator_forward.11} parent=23 // pred_check_branch
        %130 = sbr.rel (%p128) target = $region28
      $region27: #{unified_discriminator_forward.11} parent=23 // pred_region
        %s131 = smul.u32 10, %s9
        %p132 = scmp.lt.s32.totalorder %s131, 19
        %s133 = scalar_select %p132, %s131, 19
        %s134 = smul.addr %s133, 6
        %s135 = smul.addr %s134, 4
        %s136 = scalar_lea.vmem %s0, %s135
        %s137 = smul.u32 10, %s9
      $region28: #{unified_discriminator_forward.11} parent=23 // pred_fallthru
        _
    $region24: #{unified_discriminator_forward.11} parent=5 // pred_fallthru
      _
    %p138 = scmp.le.s32.totalorder 1, %s9
    %p139 = scmp.lt.s32.totalorder %s9, 3
    %p140 = pnand %p138, %p139
    %p141 = pneg %p140
    // Predicated region
    $region29: #{unified_discriminator_forward.11} parent=5 // pred_check
      _
    $region30: #{unified_discriminator_forward.11} parent=5 // pred_check_branch
      %143 = sbr.rel (%p140) target = $region32
    $region31: #{unified_discriminator_forward.11} parent=5 // pred_region
      %s144 = ssub.s32 %s9, 1
      %s145 = smul.u32 10, %s14
      %p146 = scmp.lt.s32.totalorder %s145, 19
      %s147 = scalar_select %p146, %s145, 19
      %s148 = smul.addr %s147, 6
      %s149 = smul.addr %s148, 4
      %s150 = scalar_lea.vmem %s0, %s149
      %p151 = pneg %p35
      %p152 = pneg %p32
      %p153 = pneg %p56
      %p154 = pneg %p53
      %p155 = pneg %p77
      %p156 = pneg %p74
      %p157 = pneg %p103
      %p158 = pneg %p100
      %s159 = smul.u32 10, %s14
      %p160 = scmp.lt.s32.totalorder %s159, 19
      %s161 = scalar_select %p160, %s159, 19
      %s162 = smul.addr %s161, 8
      %s163 = scalar_lea.vmem %s3, %s162
      %s164 = smul.u32 10, %s14
      %p165 = scmp.lt.s32.totalorder %s164, 19
      %s166 = scalar_select %p165, %s164, 19
      %s167 = smul.addr %s166, 6
      %s168 = smul.addr %s167, 4
      %s169 = scalar_lea.vmem %s0, %s168
      %s170 = smul.u32 10, %s14
      %s171 = smul.u32 10, %s14
      %p172 = scmp.lt.s32.totalorder %s171, 19
      %s173 = scalar_select %p172, %s171, 19
      %s174 = smul.addr %s173, 8
      %s175 = scalar_lea.vmem %s3, %s174
      %s176 = smul.u32 10, %s14
      %v178 = vld [vmem:[%s169] sm:$0xff]
      %v179 = vld [vmem:[%s169 + $0x8] sm:$0xff]
      %v180 = vld [vmem:[%s169 + $0x10] sm:$0xff]
      %v181 = vld [vmem:[%s169 + $0x18] sm:$0xff]
      %v182 = vld [vmem:[%s169 + $0x20] sm:$0xff]
      %v183 = vld [vmem:[%s169 + $0x28] sm:$0xff]
      %v184 = vld [vmem:[%s169 + $0x30] sm:$0xff]
      %v185 = vld [vmem:[%s169 + $0x38] sm:$0xff]
      %v186 = vld [vmem:[%s169 + $0x40] sm:$0xff]
      %v187 = vld [vmem:[%s169 + $0x48] sm:$0xff]
      %v188 = vld [vmem:[%s169 + $0x50] sm:$0xff]
      %v189 = vld [vmem:[%s169 + $0x58] sm:$0xff]
      %v190 = vld [vmem:[%s169 + $0x60] sm:$0xff]
      %v191 = vld [vmem:[%s169 + $0x68] sm:$0xff]
      %v192 = vld [vmem:[%s169 + $0x70] sm:$0xff]
      %v193 = vld [vmem:[%s169 + $0x78] sm:$0xff]
      %v194 = vld [vmem:[%s169 + $0x80] sm:$0xff]
      %v195 = vld [vmem:[%s169 + $0x88] sm:$0xff]
      %v196 = vld [vmem:[%s169 + $0x90] sm:$0xff]
      %v197 = vld [vmem:[%s169 + $0x98] sm:$0xff]
      %v198 = vld [vmem:[%s169 + $0xa0] sm:$0xff]
      %v199 = vld [vmem:[%s169 + $0xa8] sm:$0xff]
      %v200 = vld [vmem:[%s169 + $0xb0] sm:$0xff]
      %v201 = vld [vmem:[%s169 + $0xb8] sm:$0xff]
      %v202 = vld [vmem:[%s169 + $0xc0] sm:$0xff]
      %v203 = vld [vmem:[%s169 + $0xc8] sm:$0xff]
      %v204 = vld [vmem:[%s169 + $0xd0] sm:$0xff]
      %v205 = vld [vmem:[%s169 + $0xd8] sm:$0xff]
      %v206 = vld [vmem:[%s169 + $0xe0] sm:$0xff]
      %v207 = vld [vmem:[%s169 + $0xe8] sm:$0xff]
      %v208 = vld [vmem:[%s1] sm:$0xf]
      %v209 = vld [vmem:[%s1 + $0x4] sm:$0xf]
      %v210 = vld [vmem:[%s1 + $0x8] sm:$0xf]
      %v211 = vld [vmem:[%s1 + $0xc] sm:$0xf]
      %v212 = vld [vmem:[%s1 + $0x10] sm:$0xf]
      %v213 = vld [vmem:[%s1 + $0x14] sm:$0xf]
      %v214 = vld [vmem:[%s1 + $0x18] sm:$0xf]
      %v215 = vld [vmem:[%s1 + $0x1c] sm:$0xf]
      %v216 = vld [vmem:[%s1 + $0x20] sm:$0xf]
      %v217 = vld [vmem:[%s1 + $0x24] sm:$0xf]
      %v218 = vld [vmem:[%s1 + $0x28] sm:$0xf]
      %v219 = vld [vmem:[%s1 + $0x2c] sm:$0xf]
      %v220 = vld [vmem:[%s1 + $0x30] sm:$0xf]
      %v221 = vld [vmem:[%s1 + $0x34] sm:$0xf]
      %v222 = vld [vmem:[%s1 + $0x38] sm:$0xf]
      %v223 = vld [vmem:[%s1 + $0x3c] sm:$0xf]
      %v224 = vld [vmem:[%s1 + $0x40] sm:$0xf]
      %v225 = vld [vmem:[%s1 + $0x44] sm:$0xf]
      %v226 = vld [vmem:[%s1 + $0x48] sm:$0xf]
      %v227 = vld [vmem:[%s1 + $0x4c] sm:$0xf]
      %v228 = vld [vmem:[%s1 + $0x50] sm:$0xf]
      %v229 = vld [vmem:[%s1 + $0x54] sm:$0xf]
      %v230 = vld [vmem:[%s1 + $0x58] sm:$0xf]
      %v231 = vld [vmem:[%s1 + $0x5c] sm:$0xf]
      %v232 = vld [vmem:[%s1 + $0x60] sm:$0xf]
      %v233 = vld [vmem:[%s1 + $0x64] sm:$0xf]
      %v234 = vld [vmem:[%s1 + $0x68] sm:$0xf]
      %v235 = vld [vmem:[%s1 + $0x6c] sm:$0xf]
      %v236 = vld [vmem:[%s1 + $0x70] sm:$0xf]
      %v237 = vld [vmem:[%s1 + $0x74] sm:$0xf]
      %v238 = vld [vmem:[%s1 + $0x78] sm:$0xf]
      %v239 = vld [vmem:[%s1 + $0x7c] sm:$0xf]
      %v240 = vld [vmem:[%s1 + $0x80] sm:$0xf]
      %v241 = vld [vmem:[%s1 + $0x84] sm:$0xf]
      %v242 = vld [vmem:[%s1 + $0x88] sm:$0xf]
      %v243 = vld [vmem:[%s1 + $0x8c] sm:$0xf]
      %v244 = vld [vmem:[%s1 + $0x90] sm:$0xf]
      %v245 = vld [vmem:[%s1 + $0x94] sm:$0xf]
      %v246 = vld [vmem:[%s1 + $0x98] sm:$0xf]
      %v247 = vld [vmem:[%s1 + $0x9c] sm:$0xf]
      %v248 = vld [vmem:[%s1 + $0xa0] sm:$0xf]
      %v249 = vld [vmem:[%s1 + $0xa4] sm:$0xf]
      %v250 = vld [vmem:[%s1 + $0xa8] sm:$0xf]
      %v251 = vld [vmem:[%s1 + $0xac] sm:$0xf]
      %v252 = vld [vmem:[%s1 + $0xb0] sm:$0xf]
      %v253 = vld [vmem:[%s1 + $0xb4] sm:$0xf]
      %v254 = vld [vmem:[%s1 + $0xb8] sm:$0xf]
      %v255 = vld [vmem:[%s1 + $0xbc] sm:$0xf]
      %v256 = vld [vmem:[%s1 + $0xc0] sm:$0xf]
      %v257 = vld [vmem:[%s1 + $0xc4] sm:$0xf]
      %v258 = vld [vmem:[%s1 + $0xc8] sm:$0xf]
      %v259 = vld [vmem:[%s1 + $0xcc] sm:$0xf]
      %v260 = vld [vmem:[%s1 + $0xd0] sm:$0xf]
      %v261 = vld [vmem:[%s1 + $0xd4] sm:$0xf]
      %v262 = vld [vmem:[%s1 + $0xd8] sm:$0xf]
      %v263 = vld [vmem:[%s1 + $0xdc] sm:$0xf]
      %v264 = vld [vmem:[%s1 + $0xe0] sm:$0xf]
      %v265 = vld [vmem:[%s1 + $0xe4] sm:$0xf]
      %v266 = vld [vmem:[%s1 + $0xe8] sm:$0xf]
      %v267 = vld [vmem:[%s1 + $0xec] sm:$0xf]
      %v268 = vld [vmem:[%s1 + $0xf0] sm:$0xf]
      %v269 = vld [vmem:[%s1 + $0xf4] sm:$0xf]
      %v270 = vld [vmem:[%s1 + $0xf8] sm:$0xf]
      %v271 = vld [vmem:[%s1 + $0xfc] sm:$0xf]
      %v272 = vld [vmem:[%s1 + $0x100] sm:$0xf]
      %v273 = vld [vmem:[%s1 + $0x104] sm:$0xf]
      %v274 = vld [vmem:[%s1 + $0x108] sm:$0xf]
      %v275 = vld [vmem:[%s1 + $0x10c] sm:$0xf]
      %v276 = vld [vmem:[%s1 + $0x110] sm:$0xf]
      %v277 = vld [vmem:[%s1 + $0x114] sm:$0xf]
      %v278 = vld [vmem:[%s1 + $0x118] sm:$0xf]
      %v279 = vld [vmem:[%s1 + $0x11c] sm:$0xf]
      %v280 = vld [vmem:[%s1 + $0x120] sm:$0xf]
      %v281 = vld [vmem:[%s1 + $0x124] sm:$0xf]
      %v282 = vld [vmem:[%s1 + $0x128] sm:$0xf]
      %v283 = vld [vmem:[%s1 + $0x12c] sm:$0xf]
      %v284 = vld [vmem:[%s1 + $0x130] sm:$0xf]
      %v285 = vld [vmem:[%s1 + $0x134] sm:$0xf]
      %v286 = vld [vmem:[%s1 + $0x138] sm:$0xf]
      %v287 = vld [vmem:[%s1 + $0x13c] sm:$0xf]
      %v288 = vld [vmem:[%s1 + $0x140] sm:$0xf]
      %v289 = vld [vmem:[%s2] sm:$0x1]
      %v291 = vlaneseq
      %v292 = vshrl.u32 %v291, 7
      %v293 = vsub.s32 0, %v292
      %v294 = vrot.slane %v289, %v293
      %v326 = vunpack.c.l.b16 %v178
      %v327 = vunpack.c.h.b16 %v178
      %v328 = vunpack.c.l.b16 %v179
      %v329 = vunpack.c.h.b16 %v179
      %v330 = vunpack.c.l.b16 %v180
      %v331 = vunpack.c.h.b16 %v180
      %v332 = vunpack.c.l.b16 %v181
      %v333 = vunpack.c.h.b16 %v181
      %v334 = vunpack.c.l.b16 %v182
      %v335 = vunpack.c.h.b16 %v182
      %v336 = vunpack.c.l.b16 %v183
      %v337 = vunpack.c.h.b16 %v183
      %v338 = vunpack.c.l.b16 %v184
      %v339 = vunpack.c.h.b16 %v184
      %v340 = vunpack.c.l.b16 %v185
      %v341 = vunpack.c.h.b16 %v185
      %v342 = vunpack.c.l.b16 %v186
      %v343 = vunpack.c.h.b16 %v186
      %v344 = vunpack.c.l.b16 %v187
      %v345 = vunpack.c.h.b16 %v187
      %v346 = vunpack.c.l.b16 %v188
      %v347 = vunpack.c.h.b16 %v188
      %v348 = vunpack.c.l.b16 %v189
      %v349 = vunpack.c.h.b16 %v189
      %v350 = vunpack.c.l.b16 %v190
      %v351 = vunpack.c.h.b16 %v190
      %v352 = vunpack.c.l.b16 %v191
      %v353 = vunpack.c.h.b16 %v191
      %v354 = vunpack.c.l.b16 %v192
      %v355 = vunpack.c.h.b16 %v192
      %v356 = vunpack.c.l.b16 %v193
      %v357 = vunpack.c.h.b16 %v193
      %v358 = vunpack.c.l.b16 %v194
      %v359 = vunpack.c.h.b16 %v194
      %v360 = vunpack.c.l.b16 %v195
      %v361 = vunpack.c.h.b16 %v195
      %v362 = vunpack.c.l.b16 %v196
      %v363 = vunpack.c.h.b16 %v196
      %v364 = vunpack.c.l.b16 %v197
      %v365 = vunpack.c.h.b16 %v197
      %v366 = vunpack.c.l.b16 %v198
      %v367 = vunpack.c.h.b16 %v198
      %v368 = vunpack.c.l.b16 %v199
      %v369 = vunpack.c.h.b16 %v199
      %v370 = vunpack.c.l.b16 %v200
      %v371 = vunpack.c.h.b16 %v200
      %v372 = vunpack.c.l.b16 %v201
      %v373 = vunpack.c.h.b16 %v201
      %v374 = vunpack.c.l.b16 %v202
      %v375 = vunpack.c.h.b16 %v202
      %v376 = vunpack.c.l.b16 %v203
      %v377 = vunpack.c.h.b16 %v203
      %v378 = vunpack.c.l.b16 %v204
      %v379 = vunpack.c.h.b16 %v204
      %v380 = vunpack.c.l.b16 %v205
      %v381 = vunpack.c.h.b16 %v205
      %v382 = vunpack.c.l.b16 %v206
      %v383 = vunpack.c.h.b16 %v206
      %v384 = vunpack.c.l.b16 %v207
      %v385 = vunpack.c.h.b16 %v207
      %v386 = vpack.c.b16 %v332, %v326
      %v387 = vpack.c.b16 %v333, %v327
      %v388 = vpack.c.b16 %v334, %v328
      %v389 = vpack.c.b16 %v335, %v329
      %v390 = vpack.c.b16 %v336, %v330
      %v391 = vpack.c.b16 %v337, %v331
      %v392 = vpack.c.b16 %v344, %v338
      %v393 = vpack.c.b16 %v345, %v339
      %v394 = vpack.c.b16 %v346, %v340
      %v395 = vpack.c.b16 %v347, %v341
      %v396 = vpack.c.b16 %v348, %v342
      %v397 = vpack.c.b16 %v349, %v343
      %v398 = vpack.c.b16 %v356, %v350
      %v399 = vpack.c.b16 %v357, %v351
      %v400 = vpack.c.b16 %v358, %v352
      %v401 = vpack.c.b16 %v359, %v353
      %v402 = vpack.c.b16 %v360, %v354
      %v403 = vpack.c.b16 %v361, %v355
      %v404 = vpack.c.b16 %v368, %v362
      %v405 = vpack.c.b16 %v369, %v363
      %v406 = vpack.c.b16 %v370, %v364
      %v407 = vpack.c.b16 %v371, %v365
      %v408 = vpack.c.b16 %v372, %v366
      %v409 = vpack.c.b16 %v373, %v367
      %v410 = vpack.c.b16 %v380, %v374
      %v411 = vpack.c.b16 %v381, %v375
      %v412 = vpack.c.b16 %v382, %v376
      %v413 = vpack.c.b16 %v383, %v377
      %v414 = vpack.c.b16 %v384, %v378
      %v415 = vpack.c.b16 %v385, %v379
      %v522 = vunpack.c.l.b16 %v208
      %v523 = vunpack.c.l.b16 %v209
      %v524 = vunpack.c.l.b16 %v210
      %v525 = vunpack.c.l.b16 %v211
      %v526 = vunpack.c.l.b16 %v212
      %v527 = vunpack.c.l.b16 %v213
      %v528 = vunpack.c.l.b16 %v214
      %v529 = vunpack.c.l.b16 %v215
      %v530 = vunpack.c.l.b16 %v216
      %v531 = vunpack.c.l.b16 %v217
      %v532 = vunpack.c.l.b16 %v218
      %v533 = vunpack.c.l.b16 %v219
      %v534 = vunpack.c.l.b16 %v220
      %v535 = vunpack.c.l.b16 %v221
      %v536 = vunpack.c.l.b16 %v222
      %v537 = vunpack.c.l.b16 %v223
      %v538 = vunpack.c.l.b16 %v224
      %v539 = vunpack.c.l.b16 %v225
      %v540 = vunpack.c.l.b16 %v226
      %v541 = vunpack.c.l.b16 %v227
      %v542 = vunpack.c.l.b16 %v228
      %v543 = vunpack.c.l.b16 %v229
      %v544 = vunpack.c.l.b16 %v230
      %v545 = vunpack.c.l.b16 %v231
      %v546 = vunpack.c.l.b16 %v232
      %v547 = vunpack.c.l.b16 %v233
      %v548 = vunpack.c.l.b16 %v234
      %v549 = vunpack.c.l.b16 %v235
      %v550 = vunpack.c.l.b16 %v236
      %v551 = vunpack.c.l.b16 %v237
      %v552 = vunpack.c.l.b16 %v238
      %v553 = vunpack.c.l.b16 %v239
      %v554 = vunpack.c.l.b16 %v240
      %v555 = vunpack.c.l.b16 %v241
      %v556 = vunpack.c.l.b16 %v242
      %v557 = vunpack.c.l.b16 %v243
      %v558 = vunpack.c.l.b16 %v244
      %v559 = vunpack.c.l.b16 %v245
      %v560 = vunpack.c.l.b16 %v246
      %v561 = vunpack.c.l.b16 %v247
      %v562 = vunpack.c.l.b16 %v248
      %v563 = vunpack.c.l.b16 %v249
      %v564 = vunpack.c.l.b16 %v250
      %v565 = vunpack.c.l.b16 %v251
      %v566 = vunpack.c.l.b16 %v252
      %v567 = vunpack.c.l.b16 %v253
      %v568 = vunpack.c.l.b16 %v254
      %v569 = vunpack.c.l.b16 %v255
      %v570 = vunpack.c.l.b16 %v256
      %v571 = vunpack.c.l.b16 %v257
      %v572 = vunpack.c.l.b16 %v258
      %v573 = vunpack.c.l.b16 %v259
      %v574 = vunpack.c.l.b16 %v260
      %v575 = vunpack.c.l.b16 %v261
      %v576 = vunpack.c.l.b16 %v262
      %v577 = vunpack.c.l.b16 %v263
      %v578 = vunpack.c.l.b16 %v264
      %v579 = vunpack.c.l.b16 %v265
      %v580 = vunpack.c.l.b16 %v266
      %v581 = vunpack.c.l.b16 %v267
      %v582 = vunpack.c.l.b16 %v268
      %v583 = vunpack.c.l.b16 %v269
      %v584 = vunpack.c.l.b16 %v270
      %v585 = vunpack.c.l.b16 %v271
      %v586 = vunpack.c.l.b16 %v272
      %v587 = vunpack.c.l.b16 %v273
      %v588 = vunpack.c.l.b16 %v274
      %v589 = vunpack.c.l.b16 %v275
      %v590 = vunpack.c.l.b16 %v276
      %v591 = vunpack.c.l.b16 %v277
      %v592 = vunpack.c.l.b16 %v278
      %v593 = vunpack.c.l.b16 %v279
      %v594 = vunpack.c.l.b16 %v280
      %v595 = vunpack.c.l.b16 %v281
      %v596 = vunpack.c.l.b16 %v282
      %v597 = vunpack.c.l.b16 %v283
      %v598 = vunpack.c.l.b16 %v284
      %v599 = vunpack.c.l.b16 %v285
      %v600 = vunpack.c.l.b16 %v286
      %v601 = vunpack.c.l.b16 %v287
      %v602 = vunpack.c.l.b16 %v288
      %v603 = vpack.c.b16 %v523, %v522
      %v604 = vpack.c.b16 %v525, %v524
      %v605 = vpack.c.b16 %v527, %v526
      %v606 = vpack.c.b16 %v529, %v528
      %v607 = vpack.c.b16 %v531, %v530
      %v608 = vpack.c.b16 %v533, %v532
      %v609 = vpack.c.b16 %v535, %v534
      %v610 = vpack.c.b16 %v537, %v536
      %v611 = vpack.c.b16 %v539, %v538
      %v612 = vpack.c.b16 %v541, %v540
      %v613 = vpack.c.b16 %v543, %v542
      %v614 = vpack.c.b16 %v545, %v544
      %v615 = vpack.c.b16 %v547, %v546
      %v616 = vpack.c.b16 %v549, %v548
      %v617 = vpack.c.b16 %v551, %v550
      %v618 = vpack.c.b16 %v553, %v552
      %v619 = vpack.c.b16 %v555, %v554
      %v620 = vpack.c.b16 %v557, %v556
      %v621 = vpack.c.b16 %v559, %v558
      %v622 = vpack.c.b16 %v561, %v560
      %v623 = vpack.c.b16 %v563, %v562
      %v624 = vpack.c.b16 %v565, %v564
      %v625 = vpack.c.b16 %v567, %v566
      %v626 = vpack.c.b16 %v569, %v568
      %v627 = vpack.c.b16 %v571, %v570
      %v628 = vpack.c.b16 %v573, %v572
      %v629 = vpack.c.b16 %v575, %v574
      %v630 = vpack.c.b16 %v577, %v576
      %v631 = vpack.c.b16 %v579, %v578
      %v632 = vpack.c.b16 %v581, %v580
      %v633 = vpack.c.b16 %v583, %v582
      %v634 = vpack.c.b16 %v585, %v584
      %v635 = vpack.c.b16 %v587, %v586
      %v636 = vpack.c.b16 %v589, %v588
      %v637 = vpack.c.b16 %v591, %v590
      %v638 = vpack.c.b16 %v593, %v592
      %v639 = vpack.c.b16 %v595, %v594
      %v640 = vpack.c.b16 %v597, %v596
      %v641 = vpack.c.b16 %v599, %v598
      %v642 = vpack.c.b16 %v601, %v600
      %v643 = vpack.c.b16 %v602, %v602
      %vm684 = vcmask 64512
      %v686 = vsel %vm684, %v391, 0
      %v689 = vsel %vm684, %v397, 0
      %v692 = vsel %vm684, %v403, 0
      %v695 = vsel %vm684, %v409, 0
      %v698 = vsel %vm684, %v415, 0
      %vm700 = vcmask 1043456
      %v702 = vsel %vm700, %v643, 0
      %704 = vmatprep.subr.bf16.mxu0 0
      %705 = vmatpush1.bf16.msra.mxu0 %v603
      %706 = vmatprep.subr.bf16.mxu0 0
      %707 = vmatpush1.bf16.msra.mxu0 %v604
      %708 = vmatprep.subr.bf16.mxu0 0
      %709 = vmatpush1.bf16.msra.mxu0 %v605
      %710 = vmatprep.subr.bf16.mxu0 0
      %711 = vmatpush1.bf16.msra.mxu0 %v606
      %712 = vmatprep.subr.bf16.mxu0 0
      %713 = vmatpush1.bf16.msra.mxu0 %v607
      %714 = vmatprep.subr.bf16.mxu0 0
      %715 = vmatpush1.bf16.msra.mxu0 %v608
      %716 = vmatprep.subr.bf16.mxu0 0
      %717 = vmatpush1.bf16.msra.mxu0 %v609
      %718 = vmatprep.subr.bf16.mxu0 0
      %719 = vmatpush1.bf16.msra.mxu0 %v610
      %720 = vmatprep.subr.bf16.mxu0 0
      %721 = vmatpush1.bf16.msra.mxu0 %v611
      %722 = vmatprep.subr.bf16.mxu0 0
      %723 = vmatpush1.bf16.msra.mxu0 %v612
      %724 = vmatprep.subr.bf16.mxu0 0
      %725 = vmatpush1.bf16.msra.mxu0 %v613
      %726 = vmatprep.subr.bf16.mxu0 0
      %727 = vmatpush1.bf16.msra.mxu0 %v614
      %728 = vmatprep.subr.bf16.mxu0 0
      %729 = vmatpush1.bf16.msra.mxu0 %v615
      %730 = vmatprep.subr.bf16.mxu0 0
      %731 = vmatpush1.bf16.msra.mxu0 %v616
      %732 = vmatprep.subr.bf16.mxu0 0
      %733 = vmatpush1.bf16.msra.mxu0 %v617
      %734 = vmatprep.subr.bf16.mxu0 0
      %735 = vmatpush1.bf16.msra.mxu0 %v618
      %736 = vmatprep.mubr.bf16.mxu0 %v387
      %737 = vmatmul.mubr.bf16.gmra.mrb[0].mxu0 %v386
      %v738 = vpop.f32.mrb[0].mxu0
      %v739 = vadd.f32 %v294, %v738
      %v740 = vpop.f32.mrb[0].mxu0
      %v741 = vpop.f32.mrb[0].mxu0
      %v742 = vadd.f32 %v294, %v741
      %v743 = vpop.f32.mrb[0].mxu0
      %744 = vmatprep.mubr.bf16.mxu0 %v393
      %745 = vmatmul.mubr.bf16.gmra.mrb[0].mxu0 %v392
      %v746 = vpop.f32.mrb[0].mxu0
      %v747 = vadd.f32 %v294, %v746
      %v748 = vpop.f32.mrb[0].mxu0
      %v749 = vpop.f32.mrb[0].mxu0
      %v750 = vadd.f32 %v294, %v749
      %v751 = vpop.f32.mrb[0].mxu0
      %752 = vmatprep.mubr.bf16.mxu0 %v399
      %753 = vmatmul.mubr.bf16.gmra.mrb[0].mxu0 %v398
      %v754 = vpop.f32.mrb[0].mxu0
      %v755 = vadd.f32 %v294, %v754
      %v756 = vpop.f32.mrb[0].mxu0
      %v757 = vpop.f32.mrb[0].mxu0
      %v758 = vadd.f32 %v294, %v757
      %v759 = vpop.f32.mrb[0].mxu0
      %760 = vmatprep.mubr.bf16.mxu0 %v405
      %761 = vmatmul.mubr.bf16.gmra.mrb[0].mxu0 %v404
      %v762 = vpop.f32.mrb[0].mxu0
      %v763 = vadd.f32 %v294, %v762
      %v764 = vpop.f32.mrb[0].mxu0
      %v765 = vpop.f32.mrb[0].mxu0
      %v766 = vadd.f32 %v294, %v765
      %v767 = vpop.f32.mrb[0].mxu0
      %768 = vmatprep.mubr.bf16.mxu0 %v411
      %769 = vmatmul.mubr.bf16.gmra.mrb[0].mxu0 %v410
      %v770 = vpop.f32.mrb[0].mxu0
      %v771 = vadd.f32 %v294, %v770
      %v772 = vpop.f32.mrb[0].mxu0
      %v773 = vpop.f32.mrb[0].mxu0
      %v774 = vadd.f32 %v294, %v773
      %v775 = vpop.f32.mrb[0].mxu0
      %776 = vdwg.mxu0
      %777 = vmatprep.subr.bf16.mxu0 0
      %778 = vmatpush1.bf16.msra.mxu0 %v619
      %779 = vmatprep.subr.bf16.mxu0 0
      %780 = vmatpush1.bf16.msra.mxu0 %v620
      %781 = vmatprep.subr.bf16.mxu0 0
      %782 = vmatpush1.bf16.msra.mxu0 %v621
      %783 = vmatprep.subr.bf16.mxu0 0
      %784 = vmatpush1.bf16.msra.mxu0 %v622
      %785 = vmatprep.subr.bf16.mxu0 0
      %786 = vmatpush1.bf16.msra.mxu0 %v623
      %787 = vmatprep.subr.bf16.mxu0 0
      %788 = vmatpush1.bf16.msra.mxu0 %v624
      %789 = vmatprep.subr.bf16.mxu0 0
      %790 = vmatpush1.bf16.msra.mxu0 %v625
      %791 = vmatprep.subr.bf16.mxu0 0
      %792 = vmatpush1.bf16.msra.mxu0 %v626
      %793 = vmatprep.subr.bf16.mxu0 0
      %794 = vmatpush1.bf16.msra.mxu0 %v627
      %795 = vmatprep.subr.bf16.mxu0 0
      %796 = vmatpush1.bf16.msra.mxu0 %v628
      %797 = vmatprep.subr.bf16.mxu0 0
      %798 = vmatpush1.bf16.msra.mxu0 %v629
      %799 = vmatprep.subr.bf16.mxu0 0
      %800 = vmatpush1.bf16.msra.mxu0 %v630
      %801 = vmatprep.subr.bf16.mxu0 0
      %802 = vmatpush1.bf16.msra.mxu0 %v631
      %803 = vmatprep.subr.bf16.mxu0 0
      %804 = vmatpush1.bf16.msra.mxu0 %v632
      %805 = vmatprep.subr.bf16.mxu0 0
      %806 = vmatpush1.bf16.msra.mxu0 %v633
      %807 = vmatprep.subr.bf16.mxu0 0
      %808 = vmatpush1.bf16.msra.mxu0 %v634
      %809 = vmatprep.mubr.bf16.mxu0 %v389
      %810 = vmatmul.mubr.bf16.gmra.mrb[0].mxu0 %v388
      %v811 = vpop.f32.mrb[0].mxu0
      %v812 = vadd.f32 %v739, %v811
      %v813 = vpop.f32.mrb[0].mxu0
      %v814 = vpop.f32.mrb[0].mxu0
      %v815 = vadd.f32 %v742, %v814
      %v816 = vpop.f32.mrb[0].mxu0
      %817 = vmatprep.mubr.bf16.mxu0 %v395
      %818 = vmatmul.mubr.bf16.gmra.mrb[0].mxu0 %v394
      %v819 = vpop.f32.mrb[0].mxu0
      %v820 = vadd.f32 %v747, %v819
      %v821 = vpop.f32.mrb[0].mxu0
      %v822 = vpop.f32.mrb[0].mxu0
      %v823 = vadd.f32 %v750, %v822
      %v824 = vpop.f32.mrb[0].mxu0
      %825 = vmatprep.mubr.bf16.mxu0 %v401
      %826 = vmatmul.mubr.bf16.gmra.mrb[0].mxu0 %v400
      %v827 = vpop.f32.mrb[0].mxu0
      %v828 = vadd.f32 %v755, %v827
      %v829 = vpop.f32.mrb[0].mxu0
      %v830 = vpop.f32.mrb[0].mxu0
      %v831 = vadd.f32 %v758, %v830
      %v832 = vpop.f32.mrb[0].mxu0
      %833 = vmatprep.mubr.bf16.mxu0 %v407
      %834 = vmatmul.mubr.bf16.gmra.mrb[0].mxu0 %v406
      %v835 = vpop.f32.mrb[0].mxu0
      %v836 = vadd.f32 %v763, %v835
      %v837 = vpop.f32.mrb[0].mxu0
      %v838 = vpop.f32.mrb[0].mxu0
      %v839 = vadd.f32 %v766, %v838
      %v840 = vpop.f32.mrb[0].mxu0
      %841 = vmatprep.mubr.bf16.mxu0 %v413
      %842 = vmatmul.mubr.bf16.gmra.mrb[0].mxu0 %v412
      %v843 = vpop.f32.mrb[0].mxu0
      %v844 = vadd.f32 %v771, %v843
      %v845 = vpop.f32.mrb[0].mxu0
      %v846 = vpop.f32.mrb[0].mxu0
      %v847 = vadd.f32 %v774, %v846
      %v848 = vpop.f32.mrb[0].mxu0
      %849 = vdwg.mxu0
      %850 = vmatprep.subr.bf16.mxu0 0
      %851 = vmatpush1.bf16.msra.mxu0 %v635
      %852 = vmatprep.subr.bf16.mxu0 0
      %853 = vmatpush1.bf16.msra.mxu0 %v636
      %854 = vmatprep.subr.bf16.mxu0 0
      %855 = vmatpush1.bf16.msra.mxu0 %v637
      %856 = vmatprep.subr.bf16.mxu0 0
      %857 = vmatpush1.bf16.msra.mxu0 %v638
      %858 = vmatprep.subr.bf16.mxu0 0
      %859 = vmatpush1.bf16.msra.mxu0 %v639
      %860 = vmatprep.subr.bf16.mxu0 0
      %861 = vmatpush1.bf16.msra.mxu0 %v640
      %862 = vmatprep.subr.bf16.mxu0 0
      %863 = vmatpush1.bf16.msra.mxu0 %v641
      %864 = vmatprep.subr.bf16.mxu0 0
      %865 = vmatpush1.bf16.msra.mxu0 %v642
      %866 = vmatprep.subr.bf16.mxu0 0
      %867 = vmatpush1.bf16.msra.mxu0 %v702
      %868 = vmatprep.subr.bf16.mxu0 0
      %869 = vmatpush1.bf16.msra.mxu0 0
      %870 = vmatprep.subr.bf16.mxu0 0
      %871 = vmatpush1.bf16.msra.mxu0 0
      %872 = vmatprep.subr.bf16.mxu0 0
      %873 = vmatpush1.bf16.msra.mxu0 0
      %874 = vmatprep.subr.bf16.mxu0 0
      %875 = vmatpush1.bf16.msra.mxu0 0
      %876 = vmatprep.subr.bf16.mxu0 0
      %877 = vmatpush1.bf16.msra.mxu0 0
      %878 = vmatprep.subr.bf16.mxu0 0
      %879 = vmatpush1.bf16.msra.mxu0 0
      %880 = vmatprep.subr.bf16.mxu0 0
      %881 = vmatpush1.bf16.msra.mxu0 0
      %882 = vmatprep.mubr.bf16.mxu0 %v686
      %883 = vmatmul.mubr.bf16.gmra.mrb[0].mxu0 %v390
      %v884 = vpop.f32.mrb[0].mxu0
      %v885 = vadd.f32 %v812, %v884
      %v886 = vpop.f32.mrb[0].mxu0
      %v887 = vpop.f32.mrb[0].mxu0
      %v888 = vadd.f32 %v815, %v887
      %v889 = vpop.f32.mrb[0].mxu0
      %890 = vmatprep.mubr.bf16.mxu0 %v689
      %891 = vmatmul.mubr.bf16.gmra.mrb[0].mxu0 %v396
      %v892 = vpop.f32.mrb[0].mxu0
      %v893 = vadd.f32 %v820, %v892
      %v894 = vpop.f32.mrb[0].mxu0
      %v895 = vpop.f32.mrb[0].mxu0
      %v896 = vadd.f32 %v823, %v895
      %v897 = vpop.f32.mrb[0].mxu0
      %898 = vmatprep.mubr.bf16.mxu0 %v692
      %899 = vmatmul.mubr.bf16.gmra.mrb[0].mxu0 %v402
      %v900 = vpop.f32.mrb[0].mxu0
      %v901 = vadd.f32 %v828, %v900
      %v902 = vpop.f32.mrb[0].mxu0
      %v903 = vpop.f32.mrb[0].mxu0
      %v904 = vadd.f32 %v831, %v903
      %v905 = vpop.f32.mrb[0].mxu0
      %906 = vmatprep.mubr.bf16.mxu0 %v695
      %907 = vmatmul.mubr.bf16.gmra.mrb[0].mxu0 %v408
      %v908 = vpop.f32.mrb[0].mxu0
      %v909 = vadd.f32 %v836, %v908
      %v910 = vpop.f32.mrb[0].mxu0
      %v911 = vpop.f32.mrb[0].mxu0
      %v912 = vadd.f32 %v839, %v911
      %v913 = vpop.f32.mrb[0].mxu0
      %914 = vmatprep.mubr.bf16.mxu0 %v698
      %915 = vmatmul.mubr.bf16.gmra.mrb[0].mxu0 %v414
      %v916 = vpop.f32.mrb[0].mxu0
      %v917 = vadd.f32 %v844, %v916
      %v918 = vpop.f32.mrb[0].mxu0
      %v919 = vpop.f32.mrb[0].mxu0
      %v920 = vadd.f32 %v847, %v919
      %v921 = vpop.f32.mrb[0].mxu0
      %922 = vdwg.mxu0
      %v923 = vsub.f32 0.0, %v885
      %v924 = vsub.f32 0.0, %v888
      %v925 = vsub.f32 0.0, %v893
      %v926 = vsub.f32 0.0, %v896
      %v927 = vsub.f32 0.0, %v901
      %v928 = vsub.f32 0.0, %v904
      %v929 = vsub.f32 0.0, %v909
      %v930 = vsub.f32 0.0, %v912
      %v931 = vsub.f32 0.0, %v917
      %v932 = vsub.f32 0.0, %v920
      %v933 = vmul.f32 %v923, 1.442695
      %v934 = vpow.pop %v933
      %v935 = vmul.f32 %v924, 1.442695
      %v936 = vpow.pop %v935
      %v937 = vmul.f32 %v925, 1.442695
      %v938 = vpow.pop %v937
      %v939 = vmul.f32 %v926, 1.442695
      %v940 = vpow.pop %v939
      %v941 = vmul.f32 %v927, 1.442695
      %v942 = vpow.pop %v941
      %v943 = vmul.f32 %v928, 1.442695
      %v944 = vpow.pop %v943
      %v945 = vmul.f32 %v929, 1.442695
      %v946 = vpow.pop %v945
      %v947 = vmul.f32 %v930, 1.442695
      %v948 = vpow.pop %v947
      %v949 = vmul.f32 %v931, 1.442695
      %v950 = vpow.pop %v949
      %v951 = vmul.f32 %v932, 1.442695
      %v952 = vpow.pop %v951
      %v953 = vadd.f32 %v934, 1.0
      %v954 = vadd.f32 %v936, 1.0
      %v955 = vadd.f32 %v938, 1.0
      %v956 = vadd.f32 %v940, 1.0
      %v957 = vadd.f32 %v942, 1.0
      %v958 = vadd.f32 %v944, 1.0
      %v959 = vadd.f32 %v946, 1.0
      %v960 = vadd.f32 %v948, 1.0
      %v961 = vadd.f32 %v950, 1.0
      %v962 = vadd.f32 %v952, 1.0
      %v963 = vrcp.pop %v953
      %v964 = vrcp.pop %v954
      %v965 = vrcp.pop %v955
      %v966 = vrcp.pop %v956
      %v967 = vrcp.pop %v957
      %v968 = vrcp.pop %v958
      %v969 = vrcp.pop %v959
      %v970 = vrcp.pop %v960
      %v971 = vrcp.pop %v961
      %v972 = vrcp.pop %v962
      %983 = vrot.lane.b32.xlu0 %v963, 96
      %v984 = vpop.permute.xlu0 %983
      %985 = vrot.lane.b32.xlu0 %v964, 96
      %v986 = vpop.permute.xlu0 %985
      %987 = vrot.lane.b32.xlu0 %v965, 96
      %v988 = vpop.permute.xlu0 %987
      %989 = vrot.lane.b32.xlu0 %v966, 96
      %v990 = vpop.permute.xlu0 %989
      %991 = vrot.lane.b32.xlu0 %v967, 96
      %v992 = vpop.permute.xlu0 %991
      %993 = vrot.lane.b32.xlu0 %v968, 96
      %v994 = vpop.permute.xlu0 %993
      %995 = vrot.lane.b32.xlu0 %v969, 96
      %v996 = vpop.permute.xlu0 %995
      %997 = vrot.lane.b32.xlu0 %v970, 96
      %v998 = vpop.permute.xlu0 %997
      %999 = vrot.lane.b32.xlu0 %v971, 96
      %v1000 = vpop.permute.xlu0 %999
      %1001 = vrot.lane.b32.xlu0 %v972, 96
      %v1002 = vpop.permute.xlu0 %1001
      %v1013 = vmul.f32 %v885, %v984
      %v1014 = vmul.f32 %v888, %v986
      %v1015 = vmul.f32 %v893, %v988
      %v1016 = vmul.f32 %v896, %v990
      %v1017 = vmul.f32 %v901, %v992
      %v1018 = vmul.f32 %v904, %v994
      %v1019 = vmul.f32 %v909, %v996
      %v1020 = vmul.f32 %v912, %v998
      %v1021 = vmul.f32 %v917, %v1000
      %v1022 = vmul.f32 %v920, %v1002
      %vm1023 = vcmask 261120
      %1024 = vst.msk [vmem:[%s175] sm:$0xff] %vm1023, %v1013
      %1025 = vst.msk [vmem:[%s175 + $0x8] sm:$0xff] %vm1023, %v1014
      %1026 = vst.msk [vmem:[%s175 + $0x10] sm:$0xff] %vm1023, %v1015
      %1027 = vst.msk [vmem:[%s175 + $0x18] sm:$0xff] %vm1023, %v1016
      %1028 = vst.msk [vmem:[%s175 + $0x20] sm:$0xff] %vm1023, %v1017
      %1029 = vst.msk [vmem:[%s175 + $0x28] sm:$0xff] %vm1023, %v1018
      %1030 = vst.msk [vmem:[%s175 + $0x30] sm:$0xff] %vm1023, %v1019
      %1031 = vst.msk [vmem:[%s175 + $0x38] sm:$0xff] %vm1023, %v1020
      %1032 = vst.msk [vmem:[%s175 + $0x40] sm:$0xff] %vm1023, %v1021
      %1033 = vst.msk [vmem:[%s175 + $0x48] sm:$0xff] %vm1023, %v1022
      %s1034 = smul.u32 10, %s14
      %p1035 = scmp.lt.s32.totalorder %s1034, 19
      %s1036 = scalar_select %p1035, %s1034, 19
      %s1037 = smul.addr %s1036, 8
      %s1038 = scalar_lea.vmem %s3, %s1037
      // Predicated region
      $region33: #{unified_discriminator_forward.11} parent=31 // pred_check
        %p1039 = pneg %p100
      $region34: #{unified_discriminator_forward.11} parent=31 // pred_check_branch
        %1041 = sbr.rel (%p1039) target = $region36
      $region35: #{unified_discriminator_forward.11} parent=31 // pred_region
        %s1042 = smul.u32 10, %s14
      $region36: #{unified_discriminator_forward.11} parent=31 // pred_fallthru
        _
    $region32: #{unified_discriminator_forward.11} parent=5 // pred_fallthru
      _
    %p1043 = scmp.le.s32.totalorder 2, %s9
    // Predicated region
    $region37: #{unified_discriminator_forward.11} parent=5 // pred_check
      %p1044 = pneg %p1043
    $region38: #{unified_discriminator_forward.11} parent=5 // pred_check_branch
      %1046 = sbr.rel (%p1044) target = $region40
    $region39: #{unified_discriminator_forward.11} parent=5 // pred_region
      %s1047 = ssub.s32 %s9, 2
      // Predicated region
      $region41: #{unified_discriminator_forward.11} parent=39 // pred_check
        %p1048 = pneg %p106
      $region42: #{unified_discriminator_forward.11} parent=39 // pred_check_branch
        %1050 = sbr.rel (%p1048) target = $region44
      $region43: #{unified_discriminator_forward.11} parent=39 // pred_region
        %s1051 = smul.u32 10, %s15
        %p1052 = scmp.lt.s32.totalorder %s1051, 19
        %s1053 = scalar_select %p1052, %s1051, 19
        %s1054 = smul.addr %s1053, 8
        %s1055 = scalar_lea.vmem %s3, %s1054
      $region44: #{unified_discriminator_forward.11} parent=39 // pred_fallthru
        _
    $region40: #{unified_discriminator_forward.11} parent=5 // pred_fallthru
      _
  $region6: #{unified_discriminator_forward.11} parent=0 // loop_footer
    %s13 = sadd.s32 1, %s9
  $region7: #{unified_discriminator_forward.11} parent=0 // loop_footer_branch
    %8 = sbr.rel target = $region3
  $region8: #{unified_discriminator_forward.11} parent=0 // loop_exit
    _

// kernel: unified_discriminator_forward.12
$region0: #{unified_discriminator_forward.12}
  #allocation0 [shape = 'u32[]', space=smem, size = 0x4, offset = 0x4, fixed_abs, tag = 'smem constant byte address 0x4 - core index']
  #allocation1 [shape = 'u32[144,128]{1,0:T(1,128)}', space=vmem, size = 0x12000, scoped, tag = 'internal scratch']
  %s0 = inlined_call_operand.vmem [shape: bf16[4,7200], index: 0, kind: input, shape index: {}]
  %s1 = inlined_call_operand.vmem [shape: f32[1,7200], index: 1, kind: input, shape index: {}]
  %s2 = inlined_call_operand.vmem [shape: f32[4,1], index: 2, kind: output, shape index: {}]
  %s3 = sld [smem:[#allocation0]]
  $region18: #{unified_discriminator_forward.12} parent=0
    _
  %s5 = ssub.s32 1, %s3
  %s6 = scalar_select 0, %s5, %s3
  // Predicated region
  $region2: #{unified_discriminator_forward.12} parent=0 // pred_check
    _
  $region3: #{unified_discriminator_forward.12} parent=0 // pred_check_branch
    %8 = sbr.rel (0) target = $region5
  $region4: #{unified_discriminator_forward.12} parent=0 // pred_region
    _
  $region5: #{unified_discriminator_forward.12} parent=0 // pred_fallthru
    _
  // Predicated region
  $region6: #{unified_discriminator_forward.12} parent=0 // pred_check
    _
  $region7: #{unified_discriminator_forward.12} parent=0 // pred_check_branch
    %10 = sbr.rel (0) target = $region9
  $region8: #{unified_discriminator_forward.12} parent=0 // pred_region
    _
  $region9: #{unified_discriminator_forward.12} parent=0 // pred_fallthru
    _
  %v11 = vld [vmem:[%s0] sm:$0xff]
  %v12 = vld [vmem:[%s0 + $0x8] sm:$0xff]
  %v13 = vld [vmem:[%s0 + $0x10] sm:$0xff]
  %v14 = vld [vmem:[%s0 + $0x18] sm:$0xff]
  %v15 = vld [vmem:[%s0 + $0x20] sm:$0xff]
  %v16 = vld [vmem:[%s0 + $0x28] sm:$0xff]
  %v17 = vld [vmem:[%s0 + $0x30] sm:$0xff]
  %v18 = vld [vmem:[%s0 + $0x38] sm:$0xff]
  %v19 = vld [vmem:[%s0 + $0x40] sm:$0xff]
  %v20 = vld [vmem:[%s0 + $0x48] sm:$0xff]
  %v21 = vld [vmem:[%s0 + $0x50] sm:$0xff]
  %v22 = vld [vmem:[%s0 + $0x58] sm:$0xff]
  %v23 = vld [vmem:[%s0 + $0x60] sm:$0xff]
  %v24 = vld [vmem:[%s0 + $0x68] sm:$0xff]
  %v25 = vld [vmem:[%s0 + $0x70] sm:$0x3]
  %v26 = vunpack.c.l.bf16 %v11
  %v27 = vunpack.c.h.bf16 %v11
  %v28 = vunpack.c.l.bf16 %v12
  %v29 = vunpack.c.h.bf16 %v12
  %v30 = vunpack.c.l.bf16 %v13
  %v31 = vunpack.c.h.bf16 %v13
  %v32 = vunpack.c.l.bf16 %v14
  %v33 = vunpack.c.h.bf16 %v14
  %v34 = vunpack.c.l.bf16 %v15
  %v35 = vunpack.c.h.bf16 %v15
  %v36 = vunpack.c.l.bf16 %v16
  %v37 = vunpack.c.h.bf16 %v16
  %v38 = vunpack.c.l.bf16 %v17
  %v39 = vunpack.c.h.bf16 %v17
  %v40 = vunpack.c.l.bf16 %v18
  %v41 = vunpack.c.h.bf16 %v18
  %v42 = vunpack.c.l.bf16 %v19
  %v43 = vunpack.c.h.bf16 %v19
  %v44 = vunpack.c.l.bf16 %v20
  %v45 = vunpack.c.h.bf16 %v20
  %v46 = vunpack.c.l.bf16 %v21
  %v47 = vunpack.c.h.bf16 %v21
  %v48 = vunpack.c.l.bf16 %v22
  %v49 = vunpack.c.h.bf16 %v22
  %v50 = vunpack.c.l.bf16 %v23
  %v51 = vunpack.c.h.bf16 %v23
  %v52 = vunpack.c.l.bf16 %v24
  %v53 = vunpack.c.h.bf16 %v24
  %v54 = vunpack.c.l.bf16 %v25
  %v55 = vld [vmem:[%s1] sm:$0xff]
  %v56 = vld [vmem:[%s1 + $0x8] sm:$0xff]
  %v57 = vld [vmem:[%s1 + $0x10] sm:$0xff]
  %v58 = vld [vmem:[%s1 + $0x18] sm:$0xff]
  %v59 = vld [vmem:[%s1 + $0x20] sm:$0xff]
  %v60 = vld [vmem:[%s1 + $0x28] sm:$0xff]
  %v61 = vld [vmem:[%s1 + $0x30] sm:$0xff]
  %v62 = vld [vmem:[%s1 + $0x38] sm:$0x1]
  %v71 = vlaneseq
  %v72 = vshrl.u32 %v71, 7
  %v73 = vsub.s32 0, %v72
  %v74 = vrot.slane %v55, %v73
  %v75 = vlaneseq
  %v76 = vshrl.u32 %v75, 7
  %v77 = vsub.s32 1, %v76
  %v78 = vrot.slane %v55, %v77
  %v79 = vlaneseq
  %v80 = vshrl.u32 %v79, 7
  %v81 = vsub.s32 2, %v80
  %v82 = vrot.slane %v55, %v81
  %v83 = vlaneseq
  %v84 = vshrl.u32 %v83, 7
  %v85 = vsub.s32 3, %v84
  %v86 = vrot.slane %v55, %v85
  %v87 = vlaneseq
  %v88 = vshrl.u32 %v87, 7
  %v89 = vsub.s32 4, %v88
  %v90 = vrot.slane %v55, %v89
  %v91 = vlaneseq
  %v92 = vshrl.u32 %v91, 7
  %v93 = vsub.s32 5, %v92
  %v94 = vrot.slane %v55, %v93
  %v95 = vlaneseq
  %v96 = vshrl.u32 %v95, 7
  %v97 = vsub.s32 6, %v96
  %v98 = vrot.slane %v55, %v97
  %v99 = vlaneseq
  %v100 = vshrl.u32 %v99, 7
  %v101 = vsub.s32 7, %v100
  %v102 = vrot.slane %v55, %v101
  %v103 = vlaneseq
  %v104 = vshrl.u32 %v103, 7
  %v105 = vsub.s32 0, %v104
  %v106 = vrot.slane %v56, %v105
  %v107 = vlaneseq
  %v108 = vshrl.u32 %v107, 7
  %v109 = vsub.s32 1, %v108
  %v110 = vrot.slane %v56, %v109
  %v111 = vlaneseq
  %v112 = vshrl.u32 %v111, 7
  %v113 = vsub.s32 2, %v112
  %v114 = vrot.slane %v56, %v113
  %v115 = vlaneseq
  %v116 = vshrl.u32 %v115, 7
  %v117 = vsub.s32 3, %v116
  %v118 = vrot.slane %v56, %v117
  %v119 = vlaneseq
  %v120 = vshrl.u32 %v119, 7
  %v121 = vsub.s32 4, %v120
  %v122 = vrot.slane %v56, %v121
  %v123 = vlaneseq
  %v124 = vshrl.u32 %v123, 7
  %v125 = vsub.s32 5, %v124
  %v126 = vrot.slane %v56, %v125
  %v127 = vlaneseq
  %v128 = vshrl.u32 %v127, 7
  %v129 = vsub.s32 6, %v128
  %v130 = vrot.slane %v56, %v129
  %v131 = vlaneseq
  %v132 = vshrl.u32 %v131, 7
  %v133 = vsub.s32 7, %v132
  %v134 = vrot.slane %v56, %v133
  %v135 = vlaneseq
  %v136 = vshrl.u32 %v135, 7
  %v137 = vsub.s32 0, %v136
  %v138 = vrot.slane %v57, %v137
  %v139 = vlaneseq
  %v140 = vshrl.u32 %v139, 7
  %v141 = vsub.s32 1, %v140
  %v142 = vrot.slane %v57, %v141
  %v143 = vlaneseq
  %v144 = vshrl.u32 %v143, 7
  %v145 = vsub.s32 2, %v144
  %v146 = vrot.slane %v57, %v145
  %v147 = vlaneseq
  %v148 = vshrl.u32 %v147, 7
  %v149 = vsub.s32 3, %v148
  %v150 = vrot.slane %v57, %v149
  %v151 = vlaneseq
  %v152 = vshrl.u32 %v151, 7
  %v153 = vsub.s32 4, %v152
  %v154 = vrot.slane %v57, %v153
  %v155 = vlaneseq
  %v156 = vshrl.u32 %v155, 7
  %v157 = vsub.s32 5, %v156
  %v158 = vrot.slane %v57, %v157
  %v159 = vlaneseq
  %v160 = vshrl.u32 %v159, 7
  %v161 = vsub.s32 6, %v160
  %v162 = vrot.slane %v57, %v161
  %v163 = vlaneseq
  %v164 = vshrl.u32 %v163, 7
  %v165 = vsub.s32 7, %v164
  %v166 = vrot.slane %v57, %v165
  %v167 = vlaneseq
  %v168 = vshrl.u32 %v167, 7
  %v169 = vsub.s32 0, %v168
  %v170 = vrot.slane %v58, %v169
  %v171 = vlaneseq
  %v172 = vshrl.u32 %v171, 7
  %v173 = vsub.s32 1, %v172
  %v174 = vrot.slane %v58, %v173
  %v175 = vlaneseq
  %v176 = vshrl.u32 %v175, 7
  %v177 = vsub.s32 2, %v176
  %v178 = vrot.slane %v58, %v177
  %v179 = vlaneseq
  %v180 = vshrl.u32 %v179, 7
  %v181 = vsub.s32 3, %v180
  %v182 = vrot.slane %v58, %v181
  %v183 = vlaneseq
  %v184 = vshrl.u32 %v183, 7
  %v185 = vsub.s32 4, %v184
  %v186 = vrot.slane %v58, %v185
  %v187 = vlaneseq
  %v188 = vshrl.u32 %v187, 7
  %v189 = vsub.s32 5, %v188
  %v190 = vrot.slane %v58, %v189
  %v191 = vlaneseq
  %v192 = vshrl.u32 %v191, 7
  %v193 = vsub.s32 6, %v192
  %v194 = vrot.slane %v58, %v193
  %v195 = vlaneseq
  %v196 = vshrl.u32 %v195, 7
  %v197 = vsub.s32 7, %v196
  %v198 = vrot.slane %v58, %v197
  %v199 = vlaneseq
  %v200 = vshrl.u32 %v199, 7
  %v201 = vsub.s32 0, %v200
  %v202 = vrot.slane %v59, %v201
  %v203 = vlaneseq
  %v204 = vshrl.u32 %v203, 7
  %v205 = vsub.s32 1, %v204
  %v206 = vrot.slane %v59, %v205
  %v207 = vlaneseq
  %v208 = vshrl.u32 %v207, 7
  %v209 = vsub.s32 2, %v208
  %v210 = vrot.slane %v59, %v209
  %v211 = vlaneseq
  %v212 = vshrl.u32 %v211, 7
  %v213 = vsub.s32 3, %v212
  %v214 = vrot.slane %v59, %v213
  %v215 = vlaneseq
  %v216 = vshrl.u32 %v215, 7
  %v217 = vsub.s32 4, %v216
  %v218 = vrot.slane %v59, %v217
  %v219 = vlaneseq
  %v220 = vshrl.u32 %v219, 7
  %v221 = vsub.s32 5, %v220
  %v222 = vrot.slane %v59, %v221
  %v223 = vlaneseq
  %v224 = vshrl.u32 %v223, 7
  %v225 = vsub.s32 6, %v224
  %v226 = vrot.slane %v59, %v225
  %v227 = vlaneseq
  %v228 = vshrl.u32 %v227, 7
  %v229 = vsub.s32 7, %v228
  %v230 = vrot.slane %v59, %v229
  %v231 = vlaneseq
  %v232 = vshrl.u32 %v231, 7
  %v233 = vsub.s32 0, %v232
  %v234 = vrot.slane %v60, %v233
  %v235 = vlaneseq
  %v236 = vshrl.u32 %v235, 7
  %v237 = vsub.s32 1, %v236
  %v238 = vrot.slane %v60, %v237
  %v239 = vlaneseq
  %v240 = vshrl.u32 %v239, 7
  %v241 = vsub.s32 2, %v240
  %v242 = vrot.slane %v60, %v241
  %v243 = vlaneseq
  %v244 = vshrl.u32 %v243, 7
  %v245 = vsub.s32 3, %v244
  %v246 = vrot.slane %v60, %v245
  %v247 = vlaneseq
  %v248 = vshrl.u32 %v247, 7
  %v249 = vsub.s32 4, %v248
  %v250 = vrot.slane %v60, %v249
  %v251 = vlaneseq
  %v252 = vshrl.u32 %v251, 7
  %v253 = vsub.s32 5, %v252
  %v254 = vrot.slane %v60, %v253
  %v255 = vlaneseq
  %v256 = vshrl.u32 %v255, 7
  %v257 = vsub.s32 6, %v256
  %v258 = vrot.slane %v60, %v257
  %v259 = vlaneseq
  %v260 = vshrl.u32 %v259, 7
  %v261 = vsub.s32 7, %v260
  %v262 = vrot.slane %v60, %v261
  %v263 = vlaneseq
  %v264 = vshrl.u32 %v263, 7
  %v265 = vsub.s32 0, %v264
  %v266 = vrot.slane %v61, %v265
  %v267 = vlaneseq
  %v268 = vshrl.u32 %v267, 7
  %v269 = vsub.s32 1, %v268
  %v270 = vrot.slane %v61, %v269
  %v271 = vlaneseq
  %v272 = vshrl.u32 %v271, 7
  %v273 = vsub.s32 2, %v272
  %v274 = vrot.slane %v61, %v273
  %v275 = vlaneseq
  %v276 = vshrl.u32 %v275, 7
  %v277 = vsub.s32 3, %v276
  %v278 = vrot.slane %v61, %v277
  %v279 = vlaneseq
  %v280 = vshrl.u32 %v279, 7
  %v281 = vsub.s32 4, %v280
  %v282 = vrot.slane %v61, %v281
  %v283 = vlaneseq
  %v284 = vshrl.u32 %v283, 7
  %v285 = vsub.s32 5, %v284
  %v286 = vrot.slane %v61, %v285
  %v287 = vlaneseq
  %v288 = vshrl.u32 %v287, 7
  %v289 = vsub.s32 6, %v288
  %v290 = vrot.slane %v61, %v289
  %v291 = vlaneseq
  %v292 = vshrl.u32 %v291, 7
  %v293 = vsub.s32 7, %v292
  %v294 = vrot.slane %v61, %v293
  %v295 = vlaneseq
  %v296 = vshrl.u32 %v295, 7
  %v297 = vsub.s32 0, %v296
  %v298 = vrot.slane %v62, %v297
  %v300 = vcombine.low %v74, %v78
  %v301 = vcombine.low %v82, %v86
  %v302 = vcombine.low %v90, %v94
  %v303 = vcombine.low %v98, %v102
  %v304 = vcombine.low %v106, %v110
  %v305 = vcombine.low %v114, %v118
  %v306 = vcombine.low %v122, %v126
  %v307 = vcombine.low %v130, %v134
  %v308 = vcombine.low %v138, %v142
  %v309 = vcombine.low %v146, %v150
  %v310 = vcombine.low %v154, %v158
  %v311 = vcombine.low %v162, %v166
  %v312 = vcombine.low %v170, %v174
  %v313 = vcombine.low %v178, %v182
  %v314 = vcombine.low %v186, %v190
  %v315 = vcombine.low %v194, %v198
  %v316 = vcombine.low %v202, %v206
  %v317 = vcombine.low %v210, %v214
  %v318 = vcombine.low %v218, %v222
  %v319 = vcombine.low %v226, %v230
  %v320 = vcombine.low %v234, %v238
  %v321 = vcombine.low %v242, %v246
  %v322 = vcombine.low %v250, %v254
  %v323 = vcombine.low %v258, %v262
  %v324 = vcombine.low %v266, %v270
  %v325 = vcombine.low %v274, %v278
  %v326 = vcombine.low %v282, %v286
  %v327 = vcombine.low %v290, %v294
  %v356 = vmul.f32 %v26, %v300
  %v357 = vmul.f32 %v27, %v301
  %v358 = vmul.f32 %v28, %v302
  %v359 = vmul.f32 %v29, %v303
  %v360 = vmul.f32 %v30, %v304
  %v361 = vmul.f32 %v31, %v305
  %v362 = vmul.f32 %v32, %v306
  %v363 = vmul.f32 %v33, %v307
  %v364 = vmul.f32 %v34, %v308
  %v365 = vmul.f32 %v35, %v309
  %v366 = vmul.f32 %v36, %v310
  %v367 = vmul.f32 %v37, %v311
  %v368 = vmul.f32 %v38, %v312
  %v369 = vmul.f32 %v39, %v313
  %v370 = vmul.f32 %v40, %v314
  %v371 = vmul.f32 %v41, %v315
  %v372 = vmul.f32 %v42, %v316
  %v373 = vmul.f32 %v43, %v317
  %v374 = vmul.f32 %v44, %v318
  %v375 = vmul.f32 %v45, %v319
  %v376 = vmul.f32 %v46, %v320
  %v377 = vmul.f32 %v47, %v321
  %v378 = vmul.f32 %v48, %v322
  %v379 = vmul.f32 %v49, %v323
  %v380 = vmul.f32 %v50, %v324
  %v381 = vmul.f32 %v51, %v325
  %v382 = vmul.f32 %v52, %v326
  %v383 = vmul.f32 %v53, %v327
  %v384 = vmul.f32 %v54, %v298
  %v413 = vcombine.high %v356, %v356
  %v414 = vcombine.high %v357, %v357
  %v415 = vcombine.high %v358, %v358
  %v416 = vcombine.high %v359, %v359
  %v417 = vcombine.high %v360, %v360
  %v418 = vcombine.high %v361, %v361
  %v419 = vcombine.high %v362, %v362
  %v420 = vcombine.high %v363, %v363
  %v421 = vcombine.high %v364, %v364
  %v422 = vcombine.high %v365, %v365
  %v423 = vcombine.high %v366, %v366
  %v424 = vcombine.high %v367, %v367
  %v425 = vcombine.high %v368, %v368
  %v426 = vcombine.high %v369, %v369
  %v427 = vcombine.high %v370, %v370
  %v428 = vcombine.high %v371, %v371
  %v429 = vcombine.high %v372, %v372
  %v430 = vcombine.high %v373, %v373
  %v431 = vcombine.high %v374, %v374
  %v432 = vcombine.high %v375, %v375
  %v433 = vcombine.high %v376, %v376
  %v434 = vcombine.high %v377, %v377
  %v435 = vcombine.high %v378, %v378
  %v436 = vcombine.high %v379, %v379
  %v437 = vcombine.high %v380, %v380
  %v438 = vcombine.high %v381, %v381
  %v439 = vcombine.high %v382, %v382
  %v440 = vcombine.high %v383, %v383
  %vm469 = vcmask 1043456
  %v470 = vsel %vm469, %v356, 0.0
  %v471 = vsel %vm469, %v413, 0.0
  %v472 = vadd.f32 %v470, %v471
  %v473 = vsel %vm469, %v357, 0.0
  %v474 = vadd.f32 %v472, %v473
  %v475 = vsel %vm469, %v414, 0.0
  %v476 = vadd.f32 %v474, %v475
  %v477 = vsel %vm469, %v358, 0.0
  %v478 = vadd.f32 %v476, %v477
  %v479 = vsel %vm469, %v415, 0.0
  %v480 = vadd.f32 %v478, %v479
  %v481 = vsel %vm469, %v359, 0.0
  %v482 = vadd.f32 %v480, %v481
  %v483 = vsel %vm469, %v416, 0.0
  %v484 = vadd.f32 %v482, %v483
  %v485 = vsel %vm469, %v360, 0.0
  %v486 = vadd.f32 %v484, %v485
  %v487 = vsel %vm469, %v417, 0.0
  %v488 = vadd.f32 %v486, %v487
  %v489 = vsel %vm469, %v361, 0.0
  %v490 = vadd.f32 %v488, %v489
  %v491 = vsel %vm469, %v418, 0.0
  %v492 = vadd.f32 %v490, %v491
  %v493 = vsel %vm469, %v362, 0.0
  %v494 = vadd.f32 %v492, %v493
  %v495 = vsel %vm469, %v419, 0.0
  %v496 = vadd.f32 %v494, %v495
  %v497 = vsel %vm469, %v363, 0.0
  %v498 = vadd.f32 %v496, %v497
  %v499 = vsel %vm469, %v420, 0.0
  %v500 = vadd.f32 %v498, %v499
  %v501 = vsel %vm469, %v364, 0.0
  %v502 = vadd.f32 %v500, %v501
  %v503 = vsel %vm469, %v421, 0.0
  %v504 = vadd.f32 %v502, %v503
  %v505 = vsel %vm469, %v365, 0.0
  %v506 = vadd.f32 %v504, %v505
  %v507 = vsel %vm469, %v422, 0.0
  %v508 = vadd.f32 %v506, %v507
  %v509 = vsel %vm469, %v366, 0.0
  %v510 = vadd.f32 %v508, %v509
  %v511 = vsel %vm469, %v423, 0.0
  %v512 = vadd.f32 %v510, %v511
  %v513 = vsel %vm469, %v367, 0.0
  %v514 = vadd.f32 %v512, %v513
  %v515 = vsel %vm469, %v424, 0.0
  %v516 = vadd.f32 %v514, %v515
  %v517 = vsel %vm469, %v368, 0.0
  %v518 = vadd.f32 %v516, %v517
  %v519 = vsel %vm469, %v425, 0.0
  %v520 = vadd.f32 %v518, %v519
  %v521 = vsel %vm469, %v369, 0.0
  %v522 = vadd.f32 %v520, %v521
  %v523 = vsel %vm469, %v426, 0.0
  %v524 = vadd.f32 %v522, %v523
  %v525 = vsel %vm469, %v370, 0.0
  %v526 = vadd.f32 %v524, %v525
  %v527 = vsel %vm469, %v427, 0.0
  %v528 = vadd.f32 %v526, %v527
  %v529 = vsel %vm469, %v371, 0.0
  %v530 = vadd.f32 %v528, %v529
  %v531 = vsel %vm469, %v428, 0.0
  %v532 = vadd.f32 %v530, %v531
  %v533 = vsel %vm469, %v372, 0.0
  %v534 = vadd.f32 %v532, %v533
  %v535 = vsel %vm469, %v429, 0.0
  %v536 = vadd.f32 %v534, %v535
  %v537 = vsel %vm469, %v373, 0.0
  %v538 = vadd.f32 %v536, %v537
  %v539 = vsel %vm469, %v430, 0.0
  %v540 = vadd.f32 %v538, %v539
  %v541 = vsel %vm469, %v374, 0.0
  %v542 = vadd.f32 %v540, %v541
  %v543 = vsel %vm469, %v431, 0.0
  %v544 = vadd.f32 %v542, %v543
  %v545 = vsel %vm469, %v375, 0.0
  %v546 = vadd.f32 %v544, %v545
  %v547 = vsel %vm469, %v432, 0.0
  %v548 = vadd.f32 %v546, %v547
  %v549 = vsel %vm469, %v376, 0.0
  %v550 = vadd.f32 %v548, %v549
  %v551 = vsel %vm469, %v433, 0.0
  %v552 = vadd.f32 %v550, %v551
  %v553 = vsel %vm469, %v377, 0.0
  %v554 = vadd.f32 %v552, %v553
  %v555 = vsel %vm469, %v434, 0.0
  %v556 = vadd.f32 %v554, %v555
  %v557 = vsel %vm469, %v378, 0.0
  %v558 = vadd.f32 %v556, %v557
  %v559 = vsel %vm469, %v435, 0.0
  %v560 = vadd.f32 %v558, %v559
  %v561 = vsel %vm469, %v379, 0.0
  %v562 = vadd.f32 %v560, %v561
  %v563 = vsel %vm469, %v436, 0.0
  %v564 = vadd.f32 %v562, %v563
  %v565 = vsel %vm469, %v380, 0.0
  %v566 = vadd.f32 %v564, %v565
  %v567 = vsel %vm469, %v437, 0.0
  %v568 = vadd.f32 %v566, %v567
  %v569 = vsel %vm469, %v381, 0.0
  %v570 = vadd.f32 %v568, %v569
  %v571 = vsel %vm469, %v438, 0.0
  %v572 = vadd.f32 %v570, %v571
  %v573 = vsel %vm469, %v382, 0.0
  %v574 = vadd.f32 %v572, %v573
  %v575 = vsel %vm469, %v439, 0.0
  %v576 = vadd.f32 %v574, %v575
  %v577 = vsel %vm469, %v383, 0.0
  %v578 = vadd.f32 %v576, %v577
  %v579 = vsel %vm469, %v440, 0.0
  %v580 = vadd.f32 %v578, %v579
  %vm581 = vcmask 257024
  %v582 = vsel %vm581, %v384, 0.0
  %v583 = vadd.f32 %v580, %v582
  %584 = vadd.xlane.f32.xlu0 %v583
  %v585 = vpop.xlane.xlu0 %584
  %v586 = vsub.f32 0.0, %v585
  %v587 = vmul.f32 %v586, 1.442695
  %v588 = vpow.pop %v587
  %v589 = vadd.f32 %v588, 1.0
  %v590 = vrcp.pop %v589
  %vm591 = vcmask 3072
  %592 = vst.msk [vmem:[%s2] sm:$0xf] %vm591, %v590
  // Predicated region
  $region10: #{unified_discriminator_forward.12} parent=0 // pred_check
    _
  $region11: #{unified_discriminator_forward.12} parent=0 // pred_check_branch
    %594 = sbr.rel (0) target = $region13
  $region12: #{unified_discriminator_forward.12} parent=0 // pred_region
    _
  $region13: #{unified_discriminator_forward.12} parent=0 // pred_fallthru
    _
  // Predicated region
  $region14: #{unified_discriminator_forward.12} parent=0 // pred_check
    _
  $region15: #{unified_discriminator_forward.12} parent=0 // pred_check_branch
    %596 = sbr.rel (0) target = $region17
  $region16: #{unified_discriminator_forward.12} parent=0 // pred_region
    _
  $region17: #{unified_discriminator_forward.12} parent=0 // pred_fallthru
    _

</llo_original>
